<compile_context>
chip_gen: v6e
topology: v6e:2x2x1
jax: 0.10.0
libtpu: 0.0.40
codegen_flags: <defaults>
</compile_context>

<pallas_src>
import jax
import jax.numpy as jnp
from jax import lax
from jax.experimental import pallas as pl
from jax.experimental.pallas import tpu as pltpu

DIM = 33                       # LUT size per axis (module default, 2**n + 1)
DIM_PAD = 40                   # b axis / per-channel row stride, sublane aligned (mult of 8)
R_PAD = 40                     # r axis pad inside the contraction, sublane aligned
K = DIM * R_PAD                # fused contraction length (col = g*R_PAD + r) = 1320
M = 3 * DIM_PAD                # fused matmul M (row = c*DIM_PAD + b) = 120
TILE_P = 1024                  # pixels per grid step (v5e/v6e can use 2048; keep <=1024 on v7x)


def lut3d_kernel(x_ref, lut_ref, o_ref):
    # x_ref:   (3, TILE_P)  f32       channel-major RGB pixels in [0, 1] (pixels on lanes)
    # lut_ref: (M, K)       f32/bf16  fused LUT: row = c*DIM_PAD + b, col = g*R_PAD + r
    # o_ref:   (3, TILE_P)  f32       interpolated RGB (channel-major, lane-dense store)
    tile_p = x_ref.shape[1]
    x = x_ref[...]
    xc = jnp.clip(x, 0.0, 1.0) * jnp.float32(DIM - 1)    # continuous LUT coords in [0, DIM-1]
    cr = xc[0:1, :]                                      # (1, P)
    cg = xc[1:2, :]
    cb = xc[2:3, :]

    # Per-axis linear-interp "tent" weights (kept f32 on the VPU; v5e has no bf16 VALU).
    # Padded rows (index >= DIM) have |idx - coord| >= 1, so their weight is exactly 0.
    g_idx = lax.broadcasted_iota(jnp.int32, (DIM, 1), 0).astype(jnp.float32)
    r_idx = lax.broadcasted_iota(jnp.int32, (R_PAD, 1), 0).astype(jnp.float32)
    b_idx = lax.broadcasted_iota(jnp.int32, (DIM_PAD, 1), 0).astype(jnp.float32)
    w_g = jnp.maximum(0.0, 1.0 - jnp.abs(g_idx - cg))    # (DIM,     P)
    w_r = jnp.maximum(0.0, 1.0 - jnp.abs(r_idx - cr))    # (R_PAD,   P)
    w_b = jnp.maximum(0.0, 1.0 - jnp.abs(b_idx - cb))    # (DIM_PAD, P)

    # (g, r) weights as an outer product: one big multiply instead of ~9 full-K VALU passes.
    # R_PAD is a multiple of 8, so the (DIM, R_PAD, P) -> (K, P) reshape is layout-free.
    w_gr = (w_g[:, None, :] * w_r[None, :, :]).reshape(K, tile_p)

    # Single fused MXU matmul for all 3 channels: (M, K) x (K, P) -> (M, P), f32 accumulate.
    t = jnp.dot(lut_ref[...], w_gr.astype(lut_ref.dtype),
                preferred_element_type=jnp.float32)

    # Remaining b axis: small VPU multiply + sublane reduction per channel.
    outs = []
    for c in range(3):
        seg = t[c * DIM_PAD:(c + 1) * DIM_PAD, :]        # (DIM_PAD, P), sublane-aligned slice
        outs.append(jnp.sum(seg * w_b, axis=0, keepdims=True))
    o_ref[...] = jnp.concatenate(outs, axis=0)           # (3, P)


def generator_3dlut_forward(lut, x, *, tile_p=TILE_P, mxu_dtype=jnp.bfloat16):
    """lut: (3, DIM, DIM, DIM) f32 with LUT[c, b, g, r];  x: (N, 3, H, W) f32 in [0, 1]."""
    n, c, h, w = x.shape
    assert c == 3, "Generator3DLUT expects 3-channel RGB input"
    assert lut.shape == (3, DIM, DIM, DIM)

    # Channel-major pixel layout (3, Npix): lane-dense loads/stores inside the kernel.
    pix = jnp.transpose(x, (1, 0, 2, 3)).reshape(3, -1).astype(jnp.float32)
    npix = pix.shape[1]
    npad = pl.cdiv(npix, tile_p) * tile_p
    pix = jnp.pad(pix, ((0, 0), (0, npad - npix)))

    # Fused LUT operand: row = c*DIM_PAD + b (b zero-padded DIM -> DIM_PAD per channel),
    # col = g*R_PAD + r (r zero-padded DIM -> R_PAD per g).  Cast to MXU dtype host-side.
    lutf = jnp.pad(lut.astype(jnp.float32),
                   ((0, 0), (0, DIM_PAD - DIM), (0, 0), (0, R_PAD - DIM)))
    lut_fused = lutf.reshape(M, K).astype(mxu_dtype)
    lut_bytes = M * K * jnp.dtype(mxu_dtype).itemsize

    out = pl.pallas_call(
        lut3d_kernel,
        out_shape=jax.ShapeDtypeStruct((3, npad), jnp.float32),
        grid_spec=pltpu.PrefetchScalarGridSpec(
            num_scalar_prefetch=0,
            grid=(npad // tile_p,),
            in_specs=[
                pl.BlockSpec((3, tile_p), lambda i: (0, i)),
                # Constant index map: fused LUT is DMA'd once and stays VMEM-resident.
                pl.BlockSpec((M, K), lambda i: (0, 0)),
            ],
            out_specs=pl.BlockSpec((3, tile_p), lambda i: (0, i)),
        ),
        compiler_params=pltpu.CompilerParams(
            dimension_semantics=("parallel",),       # shards the pixel grid across v7x's 2 TCs
            vmem_limit_bytes=48 * 1024 * 1024,       # ~12 MiB used; safe on v5e/v6e/v7x
        ),
        cost_estimate=pl.CostEstimate(
            flops=2 * M * K * npad,
            transcendentals=0,
            bytes_accessed=2 * 3 * npad * 4 + lut_bytes,
        ),
    )(pix, lut_fused)

    out = out[:, :npix].reshape(3, n, h, w)
    return jnp.transpose(out, (1, 0, 2, 3))


def generator_3dlut_ref(lut, x):
    """Pure-JAX reference: classic floor/frac 8-corner trilinear LUT interpolation."""
    n, _, h, w = x.shape
    dim = lut.shape[1]
    pix = jnp.transpose(x, (0, 2, 3, 1)).reshape(-1, 3).astype(jnp.float32)
    xc = jnp.clip(pix, 0.0, 1.0) * (dim - 1)
    idx = jnp.minimum(jnp.floor(xc), dim - 2).astype(jnp.int32)
    frac = xc - idx.astype(jnp.float32)
    lut_flat = lut.reshape(3, dim ** 3)
    out = jnp.zeros_like(pix)
    for dr in (0, 1):
        wr = frac[:, 0] if dr else (1.0 - frac[:, 0])
        for dg in (0, 1):
            wg = frac[:, 1] if dg else (1.0 - frac[:, 1])
            for db in (0, 1):
                wb = frac[:, 2] if db else (1.0 - frac[:, 2])
                flat = (idx[:, 0] + dr) + (idx[:, 1] + dg) * dim + (idx[:, 2] + db) * (dim * dim)
                out = out + (wr * wg * wb)[:, None] * lut_flat[:, flat].T
    return jnp.transpose(out.reshape(n, h, w, 3), (0, 3, 1, 2))


if __name__ == "__main__":
    key = jax.random.PRNGKey(0)
    k_lut, k_x = jax.random.split(key)

    # Module default instance='zeros' gives an all-zero LUT (trivial output); use a
    # deterministic random LUT at the module's REAL size (dim=33) so the test is
    # non-trivial and validates the production configuration.
    lut = jax.random.normal(k_lut, (3, DIM, DIM, DIM), dtype=jnp.float32)
    x = jax.random.uniform(k_x, (2, 3, 32, 32), dtype=jnp.float32)   # NCHW RGB in [0, 1]

    ref = jax.block_until_ready(generator_3dlut_ref(lut, x))

    # f32-operand MXU path: validates the factorized-tent math against the 2e-3 tolerance.
    out_f32 = jax.block_until_ready(generator_3dlut_forward(lut, x, mxu_dtype=jnp.float32))
    assert out_f32.shape == x.shape and out_f32.dtype == jnp.float32
    err_f32 = float(jnp.max(jnp.abs(out_f32 - ref)))
    assert err_f32 < 2e-3, err_f32

    # bf16-operand MXU path (default, fast): error is bounded by the bf16 rounding of the
    # LUT values and of the (g, r) weights (each <= 2**-8 relative, weights sum to 1), so
    # |err| <= 2**-7 * max|LUT|; allow 2x that bound.
    out_bf16 = jax.block_until_ready(generator_3dlut_forward(lut, x))
    assert out_bf16.shape == x.shape and out_bf16.dtype == jnp.float32
    err_bf16 = float(jnp.max(jnp.abs(out_bf16 - ref)))
    bf16_bound = float(jnp.max(jnp.abs(lut))) * (2.0 ** -7)
    assert err_bf16 < 2.0 * bf16_bound, (err_bf16, bf16_bound)

    # TODO(synk): backward pass of the original custom CUDA TrilinearInterpolation op is not implemented.
    print("KERNEL_OK")
</pallas_src>

<mosaic_0001>
module attributes {stable_mosaic.version = 11 : i64} {
  func.func @lut3d_kernel(%arg0: i32, %arg1: memref<3x1024xf32, #tpu.memory_space<vmem>>, %arg2: memref<120x1320xf32, #tpu.memory_space<vmem>>, %arg3: memref<3x1024xf32, #tpu.memory_space<vmem>>) attributes {dimension_semantics = [#tpu.dimension_semantics<parallel>], iteration_bounds = array<i64: 2>, scalar_prefetch = 0 : i64, scratch_operands = 0 : i64, tpu.core_type = #tpu.core_type<tc>, window_params = [{transform_indices = @transform_0, window_bounds = array<i64: 3, 1024>}, {pipeline_mode = #tpu.pipeline_mode<synchronous>, transform_indices = @transform_1, window_bounds = array<i64: 120, 1320>}, {transform_indices = @transform_2, window_bounds = array<i64: 3, 1024>}]} {
    %c0 = arith.constant 0 : index
    %c0_0 = arith.constant 0 : index
    %0 = vector.load %arg1[%c0, %c0_0] : memref<3x1024xf32, #tpu.memory_space<vmem>>, vector<3x1024xf32>
    %cst = arith.constant 0.000000e+00 : f32
    %cst_1 = arith.constant 1.000000e+00 : f32
    %1 = vector.broadcast %cst : f32 to vector<3x1024xf32>
    %2 = arith.maximumf %1, %0 : vector<3x1024xf32>
    %3 = vector.broadcast %cst_1 : f32 to vector<3x1024xf32>
    %4 = arith.minimumf %3, %2 : vector<3x1024xf32>
    %cst_2 = arith.constant 3.200000e+01 : f32
    %5 = vector.broadcast %cst_2 : f32 to vector<3x1024xf32>
    %6 = arith.mulf %4, %5 : vector<3x1024xf32>
    %7 = vector.extract_strided_slice %6 {offsets = [0, 0], sizes = [1, 1024], strides = [1, 1]} : vector<3x1024xf32> to vector<1x1024xf32>
    %8 = vector.extract_strided_slice %6 {offsets = [1, 0], sizes = [1, 1024], strides = [1, 1]} : vector<3x1024xf32> to vector<1x1024xf32>
    %9 = vector.extract_strided_slice %6 {offsets = [2, 0], sizes = [1, 1024], strides = [1, 1]} : vector<3x1024xf32> to vector<1x1024xf32>
    %10 = tpu.iota {dimensions = array<i32: 0>} : vector<33x1xi32>
    %11 = arith.sitofp %10 : vector<33x1xi32> to vector<33x1xf32>
    %12 = tpu.iota {dimensions = array<i32: 0>} : vector<40x1xi32>
    %13 = arith.sitofp %12 : vector<40x1xi32> to vector<40x1xf32>
    %14 = tpu.iota {dimensions = array<i32: 0>} : vector<40x1xi32>
    %15 = arith.sitofp %14 : vector<40x1xi32> to vector<40x1xf32>
    %16 = vector.broadcast %11 : vector<33x1xf32> to vector<33x1024xf32>
    %17 = vector.broadcast %8 : vector<1x1024xf32> to vector<33x1024xf32>
    %18 = arith.subf %16, %17 : vector<33x1024xf32>
    %19 = math.absf %18 : vector<33x1024xf32>
    %cst_3 = arith.constant 1.000000e+00 : f32
    %20 = vector.broadcast %cst_3 : f32 to vector<33x1024xf32>
    %21 = arith.subf %20, %19 : vector<33x1024xf32>
    %cst_4 = arith.constant 0.000000e+00 : f32
    %22 = vector.broadcast %cst_4 : f32 to vector<33x1024xf32>
    %23 = arith.maximumf %22, %21 : vector<33x1024xf32>
    %24 = vector.broadcast %13 : vector<40x1xf32> to vector<40x1024xf32>
    %25 = vector.broadcast %7 : vector<1x1024xf32> to vector<40x1024xf32>
    %26 = arith.subf %24, %25 : vector<40x1024xf32>
    %27 = math.absf %26 : vector<40x1024xf32>
    %cst_5 = arith.constant 1.000000e+00 : f32
    %28 = vector.broadcast %cst_5 : f32 to vector<40x1024xf32>
    %29 = arith.subf %28, %27 : vector<40x1024xf32>
    %cst_6 = arith.constant 0.000000e+00 : f32
    %30 = vector.broadcast %cst_6 : f32 to vector<40x1024xf32>
    %31 = arith.maximumf %30, %29 : vector<40x1024xf32>
    %32 = vector.broadcast %15 : vector<40x1xf32> to vector<40x1024xf32>
    %33 = vector.broadcast %9 : vector<1x1024xf32> to vector<40x1024xf32>
    %34 = arith.subf %32, %33 : vector<40x1024xf32>
    %35 = math.absf %34 : vector<40x1024xf32>
    %cst_7 = arith.constant 1.000000e+00 : f32
    %36 = vector.broadcast %cst_7 : f32 to vector<40x1024xf32>
    %37 = arith.subf %36, %35 : vector<40x1024xf32>
    %cst_8 = arith.constant 0.000000e+00 : f32
    %38 = vector.broadcast %cst_8 : f32 to vector<40x1024xf32>
    %39 = arith.maximumf %38, %37 : vector<40x1024xf32>
    %40 = vector.shape_cast %23 : vector<33x1024xf32> to vector<33x1x1024xf32>
    %41 = vector.shape_cast %31 : vector<40x1024xf32> to vector<1x40x1024xf32>
    %42 = vector.broadcast %40 : vector<33x1x1024xf32> to vector<33x40x1024xf32>
    %43 = vector.broadcast %41 : vector<1x40x1024xf32> to vector<33x40x1024xf32>
    %44 = arith.mulf %42, %43 : vector<33x40x1024xf32>
    %45 = vector.shape_cast %44 : vector<33x40x1024xf32> to vector<1320x1024xf32>
    %c0_9 = arith.constant 0 : index
    %c0_10 = arith.constant 0 : index
    %46 = vector.load %arg2[%c0_9, %c0_10] : memref<120x1320xf32, #tpu.memory_space<vmem>>, vector<120x1320xf32>
    %cst_11 = arith.constant dense<0.000000e+00> : vector<120x1024xf32>
    %47 = tpu.matmul %46, %45, %cst_11 {dimension_numbers = #tpu.dot_dimension_numbers<[1], [0], [0], [1], [0, 0, 1, 1], [], []>} : vector<120x1320xf32>, vector<1320x1024xf32>, vector<120x1024xf32> -> vector<120x1024xf32>
    %48 = vector.extract_strided_slice %47 {offsets = [0, 0], sizes = [40, 1024], strides = [1, 1]} : vector<120x1024xf32> to vector<40x1024xf32>
    %49 = arith.mulf %48, %39 : vector<40x1024xf32>
    %cst_12 = arith.constant dense<0.000000e+00> : vector<1024xf32>
    %50 = vector.multi_reduction <add>, %49, %cst_12 [0] : vector<40x1024xf32> to vector<1024xf32>
    %51 = vector.shape_cast %50 : vector<1024xf32> to vector<1x1024xf32>
    %52 = vector.extract_strided_slice %47 {offsets = [40, 0], sizes = [40, 1024], strides = [1, 1]} : vector<120x1024xf32> to vector<40x1024xf32>
    %53 = arith.mulf %52, %39 : vector<40x1024xf32>
    %cst_13 = arith.constant dense<0.000000e+00> : vector<1024xf32>
    %54 = vector.multi_reduction <add>, %53, %cst_13 [0] : vector<40x1024xf32> to vector<1024xf32>
    %55 = vector.shape_cast %54 : vector<1024xf32> to vector<1x1024xf32>
    %56 = vector.extract_strided_slice %47 {offsets = [80, 0], sizes = [40, 1024], strides = [1, 1]} : vector<120x1024xf32> to vector<40x1024xf32>
    %57 = arith.mulf %56, %39 : vector<40x1024xf32>
    %cst_14 = arith.constant dense<0.000000e+00> : vector<1024xf32>
    %58 = vector.multi_reduction <add>, %57, %cst_14 [0] : vector<40x1024xf32> to vector<1024xf32>
    %59 = vector.shape_cast %58 : vector<1024xf32> to vector<1x1024xf32>
    %60 = tpu.concatenate %51, %55, %59 in 0 : vector<1x1024xf32>, vector<1x1024xf32>, vector<1x1024xf32> -> vector<3x1024xf32>
    %c0_15 = arith.constant 0 : index
    %c0_16 = arith.constant 0 : index
    %61 = vector.load %arg3[%c0_15, %c0_16] : memref<3x1024xf32, #tpu.memory_space<vmem>>, vector<3x1024xf32>
    tpu.vector_store %arg3[%c0_15, %c0_16], %60 {strides = array<i32>} : memref<3x1024xf32, #tpu.memory_space<vmem>>, vector<3x1024xf32>,
    return
  }
  func.func @transform_0(%arg0: i32) -> (i32, i32) {
    %c0_i32 = arith.constant 0 : i32
    %c0_i32_0 = arith.constant 0 : i32
    return %c0_i32, %arg0 : i32, i32
  }
  func.func @transform_1(%arg0: i32) -> (i32, i32) {
    %c0_i32 = arith.constant 0 : i32
    %c0_i32_0 = arith.constant 0 : i32
    %c0_i32_1 = arith.constant 0 : i32
    return %c0_i32, %c0_i32_0 : i32, i32
  }
  func.func @transform_2(%arg0: i32) -> (i32, i32) {
    %c0_i32 = arith.constant 0 : i32
    %c0_i32_0 = arith.constant 0 : i32
    return %c0_i32, %arg0 : i32, i32
  }
}

</mosaic_0001>

<llo_original>
// kernel: tpu_custom_call.1
$region0: #{tpu_custom_call.1}
  #allocation0 [shape = 'u32[]', space=smem, size = 0x4, offset = 0x4, fixed_abs, tag = 'smem constant byte address 0x4 - core index']
  #allocation1 [shape = 'u32[144,128]{1,0:T(1,128)}', space=vmem, size = 0x12000, scoped, tag = 'internal scratch']
  %s0 = inlined_call_operand.hbm [shape: f32[3,2048], index: 0, kind: input, shape index: {}]
  %s1 = inlined_call_operand.hbm [shape: f32[120,1320], index: 1, kind: input, shape index: {}]
  %s2 = inlined_call_operand.hbm [shape: f32[3,2048], index: 2, kind: output, shape index: {}]
  %s3 = sld [smem:[#allocation0]]
  $region49: #{tpu_custom_call.1} parent=0
    _
  %s5 = ssub.s32 1, %s3
  %s6 = scalar_select 0, %s5, %s3
  $region1: #{tpu_custom_call.1} parent=0
    #allocation2 [shape = 'u8[32768]{0}', space=vmem, size = 0x8000, scoped, tag = 'input window, operand 0']
    #allocation3 [shape = 's32[2]{0}', space=sflag, size = 0x8, scoped, tag = 'scoped memory for tpu_custom_call.1']
    #allocation4 [shape = 's32[2]{0}', space=sflag, size = 0x8, scoped, tag = 'scoped memory for tpu_custom_call.1']
    #allocation5 [shape = 'u8[675840]{0}', space=vmem, size = 0xa5000, scoped, tag = 'input window, operand 1, single buffered']
    #allocation6 [shape = 's32[1]{0}', space=sflag, size = 0x4, scoped, tag = 'scoped memory for tpu_custom_call.1']
    #allocation7 [shape = 'u8[32768]{0}', space=vmem, size = 0x8000, scoped, tag = 'output window, operand 0']
    %7 = vsyncpa [#allocation3], 0
    %s8 = scalar_lea.sflag [#allocation3], 1
    %9 = vsyncpa %s8, 0
    %10 = vsyncpa [#allocation6], 0
    %11 = vsyncpa [#allocation4], 0
    %s12 = scalar_lea.sflag [#allocation4], 1
    %13 = vsyncpa %s12, 0
    loop: start=0, step=1, limit=4
    $region2: #{tpu_custom_call.1} parent=1 // loop_pre_header
      _
    $region3: #{tpu_custom_call.1} parent=1 // loop_header
      %s15 = sphi 0, %s19
      %p16 = scmp.ge.s32.totalorder %s15, 4
      %s25 = sphi 0, %s27
      %s28 = sphi 0, %s25
      %s29 = sphi 0, %s28
      %s45 = sphi 0, %s29
      %s49 = sphi 0, %s49
      %s51 = sphi 0, %s49
      %s52 = sphi 0, %s51
      %s66 = sphi 0, %s52
      %s72 = sphi 0, %s74
      %s75 = sphi 0, %s72
      %s76 = sphi 0, %s75
      %s92 = sphi 0, %s76
    $region4: #{tpu_custom_call.1} parent=1 // loop_header_branch
      %18 = sbr.rel (%p16) target = $region8
    $region5: #{tpu_custom_call.1} parent=1 // loop_body
      %s20 = ssub.s32 %s15, 1
      %s21 = ssub.s32 %s15, 2
      %s22 = sadd.s32 %s15, 1
      %s23 = ssub.s32 %s15, %s22
      %p24 = scmp.eq.s32.totalorder %s23, 0
      %s26 = sadd.s32 %s25, 1
      %s27 = scalar_select %p24, %s25, %s26
      %p30 = pneg %p24
      %p31 = scmp.eq.s32.totalorder %s15, 1
      %p32 = por %p30, %p31
      %p33 = scmp.ne.s32.totalorder %s25, %s28
      %p34 = scmp.eq.s32.totalorder %s15, 0
      %p35 = por %p33, %p34
      %p36 = scmp.ne.s32.totalorder %s25, %s28
      %p37 = scmp.eq.s32.totalorder %s20, 1
      %p38 = por %p36, %p37
      %p39 = scmp.ne.s32.totalorder %s28, %s29
      %p40 = scmp.eq.s32.totalorder %s20, 0
      %p41 = por %p39, %p40
      %p42 = scmp.ne.s32.totalorder %s28, %s29
      %p43 = scmp.eq.s32.totalorder %s21, 1
      %p44 = por %p42, %p43
      %p46 = scmp.ne.s32.totalorder %s29, %s45
      %p47 = scmp.eq.s32.totalorder %s21, 0
      %p48 = por %p46, %p47
      %s50 = sadd.s32 %s49, 1
      %p53 = scmp.eq.s32.totalorder %s15, 1
      %p54 = scmp.ne.s32.totalorder %s49, %s51
      %p55 = scmp.eq.s32.totalorder %s15, 0
      %p56 = por %p54, %p55
      %p57 = scmp.ne.s32.totalorder %s49, %s51
      %p58 = scmp.eq.s32.totalorder %s20, 1
      %p59 = por %p57, %p58
      %p60 = scmp.ne.s32.totalorder %s51, %s52
      %p61 = scmp.eq.s32.totalorder %s20, 0
      %p62 = por %p60, %p61
      %p63 = scmp.ne.s32.totalorder %s51, %s52
      %p64 = scmp.eq.s32.totalorder %s21, 1
      %p65 = por %p63, %p64
      %p67 = scmp.ne.s32.totalorder %s52, %s66
      %p68 = scmp.eq.s32.totalorder %s21, 0
      %p69 = por %p67, %p68
      %s70 = ssub.s32 %s15, %s22
      %p71 = scmp.eq.s32.totalorder %s70, 0
      %s73 = sadd.s32 %s72, 1
      %s74 = scalar_select %p71, %s72, %s73
      %p77 = pneg %p71
      %p78 = scmp.eq.s32.totalorder %s15, 1
      %p79 = por %p77, %p78
      %p80 = scmp.ne.s32.totalorder %s72, %s75
      %p81 = scmp.eq.s32.totalorder %s15, 0
      %p82 = por %p80, %p81
      %p83 = scmp.ne.s32.totalorder %s72, %s75
      %p84 = scmp.eq.s32.totalorder %s20, 1
      %p85 = por %p83, %p84
      %p86 = scmp.ne.s32.totalorder %s75, %s76
      %p87 = scmp.eq.s32.totalorder %s20, 0
      %p88 = por %p86, %p87
      %p89 = scmp.ne.s32.totalorder %s75, %s76
      %p90 = scmp.eq.s32.totalorder %s21, 1
      %p91 = por %p89, %p90
      %p93 = scmp.ne.s32.totalorder %s76, %s92
      %p94 = scmp.eq.s32.totalorder %s21, 0
      %p95 = por %p93, %p94
      %p96 = scmp.le.s32.totalorder 1, %s15
      %p97 = scmp.lt.s32.totalorder %s15, 3
      %p98 = pnand %p96, %p97
      %p99 = pneg %p98
      // Predicated region
      $region9: #{tpu_custom_call.1} parent=5 // pred_check
        _
      $region10: #{tpu_custom_call.1} parent=5 // pred_check_branch
        %101 = sbr.rel (%p98) target = $region12
      $region11: #{tpu_custom_call.1} parent=5 // pred_region
        %s102 = ssub.s32 %s15, 1
        // Predicated region
        $region13: #{tpu_custom_call.1} parent=11 // pred_check
          %p103 = pneg %p62
        $region14: #{tpu_custom_call.1} parent=11 // pred_check_branch
          %105 = sbr.rel (%p103) target = $region16
        $region15: #{tpu_custom_call.1} parent=11 // pred_region
          %s107 = ssub.s32 21120, 21120
          %108 = vsyncadd [#allocation6], %s107
          %s109 = sshll.u32 [#allocation5], 4
          %s110 = int_to_ptr.vmem [resolvable:$true] %s109
          %115 = dma.hbm_to_vmem [thread:$0]  %s1, 21120, %s110, [#allocation6], 1408, 1408, 88
        $region16: #{tpu_custom_call.1} parent=11 // pred_fallthru
          _
      $region12: #{tpu_custom_call.1} parent=5 // pred_fallthru
        _
      %p116 = scmp.lt.s32.totalorder %s15, 2
      // Predicated region
      $region17: #{tpu_custom_call.1} parent=5 // pred_check
        %p117 = pneg %p116
      $region18: #{tpu_custom_call.1} parent=5 // pred_check_branch
        %119 = sbr.rel (%p117) target = $region20
      $region19: #{tpu_custom_call.1} parent=5 // pred_region
        // Predicated region
        $region21: #{tpu_custom_call.1} parent=19 // pred_check
          %p120 = pneg %p35
        $region22: #{tpu_custom_call.1} parent=19 // pred_check_branch
          %122 = sbr.rel (%p120) target = $region24
        $region23: #{tpu_custom_call.1} parent=19 // pred_region
          %s123 = sand.u32 %s25, 1
          %s124 = scalar_lea.sflag [#allocation3], %s123
          %s125 = sand.u32 %s25, 1
          %s126 = smul.addr %s125, 32
          %s127 = scalar_lea.vmem [#allocation2], %s126
          %s128 = smul.u32 8, %s15
          %s130 = ssub.s32 512, 512
          %131 = vsyncadd %s124, %s130
          %s132 = smul.addr %s128, 64
          %s133 = scalar_lea.hbm %s0, %s132
          %s135 = sshll.u32 %s127, 4
          %s136 = int_to_ptr.vmem [resolvable:$true] %s135
          %138 = dma.hbm_to_vmem [thread:$0]  %s133, 512, %s136, %s124
        $region24: #{tpu_custom_call.1} parent=19 // pred_fallthru
          _
      $region20: #{tpu_custom_call.1} parent=5 // pred_fallthru
        _
      %p139 = scmp.le.s32.totalorder 1, %s15
      %p140 = scmp.lt.s32.totalorder %s15, 3
      %p141 = pnand %p139, %p140
      %p142 = pneg %p141
      // Predicated region
      $region25: #{tpu_custom_call.1} parent=5 // pred_check
        _
      $region26: #{tpu_custom_call.1} parent=5 // pred_check_branch
        %144 = sbr.rel (%p141) target = $region28
      $region27: #{tpu_custom_call.1} parent=5 // pred_region
        %s145 = ssub.s32 %s15, 1
        %s146 = sand.u32 %s28, 1
        %s147 = scalar_lea.sflag [#allocation3], %s146
        %s148 = sand.u32 %s28, 1
        %s149 = smul.addr %s148, 32
        %s150 = scalar_lea.vmem [#allocation2], %s149
        // Predicated region
        $region29: #{tpu_custom_call.1} parent=27 // pred_check
          %p151 = pneg %p41
        $region30: #{tpu_custom_call.1} parent=27 // pred_check_branch
          %153 = sbr.rel (%p151) target = $region32
        $region31: #{tpu_custom_call.1} parent=27 // pred_region
          %154 = dma.done %s147, 512
        $region32: #{tpu_custom_call.1} parent=27 // pred_fallthru
          _
        // Predicated region
        $region33: #{tpu_custom_call.1} parent=27 // pred_check
          %p155 = pneg %p62
        $region34: #{tpu_custom_call.1} parent=27 // pred_check_branch
          %157 = sbr.rel (%p155) target = $region36
        $region35: #{tpu_custom_call.1} parent=27 // pred_region
          %158 = dma.done [#allocation6], 21120
        $region36: #{tpu_custom_call.1} parent=27 // pred_fallthru
          _
        %s159 = sand.u32 %s28, 1
        %s160 = scalar_lea.sflag [#allocation3], %s159
        %s161 = sand.u32 %s28, 1
        %s162 = smul.addr %s161, 32
        %s163 = scalar_lea.vmem [#allocation2], %s162
        %p164 = pneg %p41
        %p165 = pneg %p38
        %p166 = pneg %p62
        %p167 = pneg %p59
        %p168 = pneg %p88
        %p169 = pneg %p85
        %s170 = sand.u32 %s75, 1
        %s171 = scalar_lea.sflag [#allocation4], %s170
        %s172 = sand.u32 %s75, 1
        %s173 = smul.addr %s172, 32
        %s174 = scalar_lea.vmem [#allocation7], %s173
        %s175 = smul.u32 8, %s20
        %s176 = smul.u32 8, %s20
        %v177 = vld [vmem:[%s150] sm:$0x77]
        %v178 = vld [vmem:[%s150 + $0x8] sm:$0x77]
        %v179 = vld [vmem:[%s150 + $0x10] sm:$0x77]
        %v180 = vld [vmem:[%s150 + $0x18] sm:$0x77]
        %v181 = vmax.f32 %v177, 0.0
        %v182 = vmax.f32 %v178, 0.0
        %v183 = vmax.f32 %v179, 0.0
        %v184 = vmax.f32 %v180, 0.0
        %v185 = vmin.f32 %v181, 1.0
        %v186 = vmin.f32 %v182, 1.0
        %v187 = vmin.f32 %v183, 1.0
        %v188 = vmin.f32 %v184, 1.0
        %v189 = vmul.f32 %v185, 32.0
        %v190 = vmul.f32 %v186, 32.0
        %v191 = vmul.f32 %v187, 32.0
        %v192 = vmul.f32 %v188, 32.0
        %v193 = vlaneseq
        %v194 = vshrl.u32 %v193, 7
        %v195 = vadd.s32 %v194, 8
        %v196 = vadd.s32 %v194, 16
        %v197 = vadd.s32 %v194, 24
        %v198 = vadd.s32 %v194, 32
        %v199 = vcvt.s32.f32 %v194
        %v200 = vcvt.s32.f32 %v195
        %v201 = vcvt.s32.f32 %v196
        %v202 = vcvt.s32.f32 %v197
        %v203 = vcvt.s32.f32 %v198
        %v208 = vlaneseq
        %v209 = vshrl.u32 %v208, 7
        %v210 = vsub.s32 1, %v209
        %v211 = vrot.slane %v189, %v210
        %v212 = vlaneseq
        %v213 = vshrl.u32 %v212, 7
        %v214 = vsub.s32 5, %v213
        %v215 = vrot.slane %v189, %v214
        %v216 = vlaneseq
        %v217 = vshrl.u32 %v216, 7
        %v218 = vsub.s32 1, %v217
        %v219 = vrot.slane %v190, %v218
        %v220 = vlaneseq
        %v221 = vshrl.u32 %v220, 7
        %v222 = vsub.s32 5, %v221
        %v223 = vrot.slane %v190, %v222
        %v224 = vlaneseq
        %v225 = vshrl.u32 %v224, 7
        %v226 = vsub.s32 1, %v225
        %v227 = vrot.slane %v191, %v226
        %v228 = vlaneseq
        %v229 = vshrl.u32 %v228, 7
        %v230 = vsub.s32 5, %v229
        %v231 = vrot.slane %v191, %v230
        %v232 = vlaneseq
        %v233 = vshrl.u32 %v232, 7
        %v234 = vsub.s32 1, %v233
        %v235 = vrot.slane %v192, %v234
        %v236 = vlaneseq
        %v237 = vshrl.u32 %v236, 7
        %v238 = vsub.s32 5, %v237
        %v239 = vrot.slane %v192, %v238
        %v248 = vlaneseq
        %v249 = vshrl.u32 %v248, 7
        %v250 = vsub.s32 1, %v249
        %v251 = vrot.slane %v211, %v250
        %v252 = vlaneseq
        %v253 = vshrl.u32 %v252, 7
        %v254 = vsub.s32 1, %v253
        %v255 = vrot.slane %v215, %v254
        %v256 = vlaneseq
        %v257 = vshrl.u32 %v256, 7
        %v258 = vsub.s32 1, %v257
        %v259 = vrot.slane %v219, %v258
        %v260 = vlaneseq
        %v261 = vshrl.u32 %v260, 7
        %v262 = vsub.s32 1, %v261
        %v263 = vrot.slane %v223, %v262
        %v264 = vlaneseq
        %v265 = vshrl.u32 %v264, 7
        %v266 = vsub.s32 1, %v265
        %v267 = vrot.slane %v227, %v266
        %v268 = vlaneseq
        %v269 = vshrl.u32 %v268, 7
        %v270 = vsub.s32 1, %v269
        %v271 = vrot.slane %v231, %v270
        %v272 = vlaneseq
        %v273 = vshrl.u32 %v272, 7
        %v274 = vsub.s32 1, %v273
        %v275 = vrot.slane %v235, %v274
        %v276 = vlaneseq
        %v277 = vshrl.u32 %v276, 7
        %v278 = vsub.s32 1, %v277
        %v279 = vrot.slane %v239, %v278
        %v280 = vsub.f32 %v199, %v251
        %v281 = vsub.f32 %v199, %v255
        %v282 = vsub.f32 %v199, %v259
        %v283 = vsub.f32 %v199, %v263
        %v284 = vsub.f32 %v199, %v267
        %v285 = vsub.f32 %v199, %v271
        %v286 = vsub.f32 %v199, %v275
        %v287 = vsub.f32 %v199, %v279
        %v288 = vsub.f32 %v200, %v251
        %v289 = vsub.f32 %v200, %v255
        %v290 = vsub.f32 %v200, %v259
        %v291 = vsub.f32 %v200, %v263
        %v292 = vsub.f32 %v200, %v267
        %v293 = vsub.f32 %v200, %v271
        %v294 = vsub.f32 %v200, %v275
        %v295 = vsub.f32 %v200, %v279
        %v296 = vsub.f32 %v201, %v251
        %v297 = vsub.f32 %v201, %v255
        %v298 = vsub.f32 %v201, %v259
        %v299 = vsub.f32 %v201, %v263
        %v300 = vsub.f32 %v201, %v267
        %v301 = vsub.f32 %v201, %v271
        %v302 = vsub.f32 %v201, %v275
        %v303 = vsub.f32 %v201, %v279
        %v304 = vsub.f32 %v202, %v251
        %v305 = vsub.f32 %v202, %v255
        %v306 = vsub.f32 %v202, %v259
        %v307 = vsub.f32 %v202, %v263
        %v308 = vsub.f32 %v202, %v267
        %v309 = vsub.f32 %v202, %v271
        %v310 = vsub.f32 %v202, %v275
        %v311 = vsub.f32 %v202, %v279
        %v312 = vsub.f32 %v203, %v251
        %v313 = vsub.f32 %v203, %v255
        %v314 = vsub.f32 %v203, %v259
        %v315 = vsub.f32 %v203, %v263
        %v316 = vsub.f32 %v203, %v267
        %v317 = vsub.f32 %v203, %v271
        %v318 = vsub.f32 %v203, %v275
        %v319 = vsub.f32 %v203, %v279
        %v320 = vand.u32 2147483647, %v280
        %v321 = vand.u32 2147483647, %v281
        %v322 = vand.u32 2147483647, %v282
        %v323 = vand.u32 2147483647, %v283
        %v324 = vand.u32 2147483647, %v284
        %v325 = vand.u32 2147483647, %v285
        %v326 = vand.u32 2147483647, %v286
        %v327 = vand.u32 2147483647, %v287
        %v328 = vand.u32 2147483647, %v288
        %v329 = vand.u32 2147483647, %v289
        %v330 = vand.u32 2147483647, %v290
        %v331 = vand.u32 2147483647, %v291
        %v332 = vand.u32 2147483647, %v292
        %v333 = vand.u32 2147483647, %v293
        %v334 = vand.u32 2147483647, %v294
        %v335 = vand.u32 2147483647, %v295
        %v336 = vand.u32 2147483647, %v296
        %v337 = vand.u32 2147483647, %v297
        %v338 = vand.u32 2147483647, %v298
        %v339 = vand.u32 2147483647, %v299
        %v340 = vand.u32 2147483647, %v300
        %v341 = vand.u32 2147483647, %v301
        %v342 = vand.u32 2147483647, %v302
        %v343 = vand.u32 2147483647, %v303
        %v344 = vand.u32 2147483647, %v304
        %v345 = vand.u32 2147483647, %v305
        %v346 = vand.u32 2147483647, %v306
        %v347 = vand.u32 2147483647, %v307
        %v348 = vand.u32 2147483647, %v308
        %v349 = vand.u32 2147483647, %v309
        %v350 = vand.u32 2147483647, %v310
        %v351 = vand.u32 2147483647, %v311
        %v352 = vand.u32 2147483647, %v312
        %v353 = vand.u32 2147483647, %v313
        %v354 = vand.u32 2147483647, %v314
        %v355 = vand.u32 2147483647, %v315
        %v356 = vand.u32 2147483647, %v316
        %v357 = vand.u32 2147483647, %v317
        %v358 = vand.u32 2147483647, %v318
        %v359 = vand.u32 2147483647, %v319
        %v360 = vsub.f32 1.0, %v320
        %v361 = vsub.f32 1.0, %v321
        %v362 = vsub.f32 1.0, %v322
        %v363 = vsub.f32 1.0, %v323
        %v364 = vsub.f32 1.0, %v324
        %v365 = vsub.f32 1.0, %v325
        %v366 = vsub.f32 1.0, %v326
        %v367 = vsub.f32 1.0, %v327
        %v368 = vsub.f32 1.0, %v328
        %v369 = vsub.f32 1.0, %v329
        %v370 = vsub.f32 1.0, %v330
        %v371 = vsub.f32 1.0, %v331
        %v372 = vsub.f32 1.0, %v332
        %v373 = vsub.f32 1.0, %v333
        %v374 = vsub.f32 1.0, %v334
        %v375 = vsub.f32 1.0, %v335
        %v376 = vsub.f32 1.0, %v336
        %v377 = vsub.f32 1.0, %v337
        %v378 = vsub.f32 1.0, %v338
        %v379 = vsub.f32 1.0, %v339
        %v380 = vsub.f32 1.0, %v340
        %v381 = vsub.f32 1.0, %v341
        %v382 = vsub.f32 1.0, %v342
        %v383 = vsub.f32 1.0, %v343
        %v384 = vsub.f32 1.0, %v344
        %v385 = vsub.f32 1.0, %v345
        %v386 = vsub.f32 1.0, %v346
        %v387 = vsub.f32 1.0, %v347
        %v388 = vsub.f32 1.0, %v348
        %v389 = vsub.f32 1.0, %v349
        %v390 = vsub.f32 1.0, %v350
        %v391 = vsub.f32 1.0, %v351
        %v392 = vsub.f32 1.0, %v352
        %v393 = vsub.f32 1.0, %v353
        %v394 = vsub.f32 1.0, %v354
        %v395 = vsub.f32 1.0, %v355
        %v396 = vsub.f32 1.0, %v356
        %v397 = vsub.f32 1.0, %v357
        %v398 = vsub.f32 1.0, %v358
        %v399 = vsub.f32 1.0, %v359
        %v400 = vmax.f32 %v360, 0.0
        %v401 = vmax.f32 %v361, 0.0
        %v402 = vmax.f32 %v362, 0.0
        %v403 = vmax.f32 %v363, 0.0
        %v404 = vmax.f32 %v364, 0.0
        %v405 = vmax.f32 %v365, 0.0
        %v406 = vmax.f32 %v366, 0.0
        %v407 = vmax.f32 %v367, 0.0
        %v408 = vmax.f32 %v368, 0.0
        %v409 = vmax.f32 %v369, 0.0
        %v410 = vmax.f32 %v370, 0.0
        %v411 = vmax.f32 %v371, 0.0
        %v412 = vmax.f32 %v372, 0.0
        %v413 = vmax.f32 %v373, 0.0
        %v414 = vmax.f32 %v374, 0.0
        %v415 = vmax.f32 %v375, 0.0
        %v416 = vmax.f32 %v376, 0.0
        %v417 = vmax.f32 %v377, 0.0
        %v418 = vmax.f32 %v378, 0.0
        %v419 = vmax.f32 %v379, 0.0
        %v420 = vmax.f32 %v380, 0.0
        %v421 = vmax.f32 %v381, 0.0
        %v422 = vmax.f32 %v382, 0.0
        %v423 = vmax.f32 %v383, 0.0
        %v424 = vmax.f32 %v384, 0.0
        %v425 = vmax.f32 %v385, 0.0
        %v426 = vmax.f32 %v386, 0.0
        %v427 = vmax.f32 %v387, 0.0
        %v428 = vmax.f32 %v388, 0.0
        %v429 = vmax.f32 %v389, 0.0
        %v430 = vmax.f32 %v390, 0.0
        %v431 = vmax.f32 %v391, 0.0
        %v432 = vmax.f32 %v392, 0.0
        %v433 = vmax.f32 %v393, 0.0
        %v434 = vmax.f32 %v394, 0.0
        %v435 = vmax.f32 %v395, 0.0
        %v436 = vmax.f32 %v396, 0.0
        %v437 = vmax.f32 %v397, 0.0
        %v438 = vmax.f32 %v398, 0.0
        %v439 = vmax.f32 %v399, 0.0
        %v440 = vlaneseq
        %v441 = vshrl.u32 %v440, 7
        %v442 = vsub.s32 0, %v441
        %v443 = vrot.slane %v189, %v442
        %v444 = vlaneseq
        %v445 = vshrl.u32 %v444, 7
        %v446 = vsub.s32 4, %v445
        %v447 = vrot.slane %v189, %v446
        %v448 = vlaneseq
        %v449 = vshrl.u32 %v448, 7
        %v450 = vsub.s32 0, %v449
        %v451 = vrot.slane %v190, %v450
        %v452 = vlaneseq
        %v453 = vshrl.u32 %v452, 7
        %v454 = vsub.s32 4, %v453
        %v455 = vrot.slane %v190, %v454
        %v456 = vlaneseq
        %v457 = vshrl.u32 %v456, 7
        %v458 = vsub.s32 0, %v457
        %v459 = vrot.slane %v191, %v458
        %v460 = vlaneseq
        %v461 = vshrl.u32 %v460, 7
        %v462 = vsub.s32 4, %v461
        %v463 = vrot.slane %v191, %v462
        %v464 = vlaneseq
        %v465 = vshrl.u32 %v464, 7
        %v466 = vsub.s32 0, %v465
        %v467 = vrot.slane %v192, %v466
        %v468 = vlaneseq
        %v469 = vshrl.u32 %v468, 7
        %v470 = vsub.s32 4, %v469
        %v471 = vrot.slane %v192, %v470
        %v480 = vlaneseq
        %v481 = vshrl.u32 %v480, 7
        %v482 = vsub.s32 0, %v481
        %v483 = vrot.slane %v443, %v482
        %v484 = vlaneseq
        %v485 = vshrl.u32 %v484, 7
        %v486 = vsub.s32 0, %v485
        %v487 = vrot.slane %v447, %v486
        %v488 = vlaneseq
        %v489 = vshrl.u32 %v488, 7
        %v490 = vsub.s32 0, %v489
        %v491 = vrot.slane %v451, %v490
        %v492 = vlaneseq
        %v493 = vshrl.u32 %v492, 7
        %v494 = vsub.s32 0, %v493
        %v495 = vrot.slane %v455, %v494
        %v496 = vlaneseq
        %v497 = vshrl.u32 %v496, 7
        %v498 = vsub.s32 0, %v497
        %v499 = vrot.slane %v459, %v498
        %v500 = vlaneseq
        %v501 = vshrl.u32 %v500, 7
        %v502 = vsub.s32 0, %v501
        %v503 = vrot.slane %v463, %v502
        %v504 = vlaneseq
        %v505 = vshrl.u32 %v504, 7
        %v506 = vsub.s32 0, %v505
        %v507 = vrot.slane %v467, %v506
        %v508 = vlaneseq
        %v509 = vshrl.u32 %v508, 7
        %v510 = vsub.s32 0, %v509
        %v511 = vrot.slane %v471, %v510
        %v512 = vsub.f32 %v199, %v483
        %v513 = vsub.f32 %v199, %v487
        %v514 = vsub.f32 %v199, %v491
        %v515 = vsub.f32 %v199, %v495
        %v516 = vsub.f32 %v199, %v499
        %v517 = vsub.f32 %v199, %v503
        %v518 = vsub.f32 %v199, %v507
        %v519 = vsub.f32 %v199, %v511
        %v520 = vsub.f32 %v200, %v483
        %v521 = vsub.f32 %v200, %v487
        %v522 = vsub.f32 %v200, %v491
        %v523 = vsub.f32 %v200, %v495
        %v524 = vsub.f32 %v200, %v499
        %v525 = vsub.f32 %v200, %v503
        %v526 = vsub.f32 %v200, %v507
        %v527 = vsub.f32 %v200, %v511
        %v528 = vsub.f32 %v201, %v483
        %v529 = vsub.f32 %v201, %v487
        %v530 = vsub.f32 %v201, %v491
        %v531 = vsub.f32 %v201, %v495
        %v532 = vsub.f32 %v201, %v499
        %v533 = vsub.f32 %v201, %v503
        %v534 = vsub.f32 %v201, %v507
        %v535 = vsub.f32 %v201, %v511
        %v536 = vsub.f32 %v202, %v483
        %v537 = vsub.f32 %v202, %v487
        %v538 = vsub.f32 %v202, %v491
        %v539 = vsub.f32 %v202, %v495
        %v540 = vsub.f32 %v202, %v499
        %v541 = vsub.f32 %v202, %v503
        %v542 = vsub.f32 %v202, %v507
        %v543 = vsub.f32 %v202, %v511
        %v544 = vsub.f32 %v203, %v483
        %v545 = vsub.f32 %v203, %v487
        %v546 = vsub.f32 %v203, %v491
        %v547 = vsub.f32 %v203, %v495
        %v548 = vsub.f32 %v203, %v499
        %v549 = vsub.f32 %v203, %v503
        %v550 = vsub.f32 %v203, %v507
        %v551 = vsub.f32 %v203, %v511
        %v552 = vand.u32 2147483647, %v512
        %v553 = vand.u32 2147483647, %v513
        %v554 = vand.u32 2147483647, %v514
        %v555 = vand.u32 2147483647, %v515
        %v556 = vand.u32 2147483647, %v516
        %v557 = vand.u32 2147483647, %v517
        %v558 = vand.u32 2147483647, %v518
        %v559 = vand.u32 2147483647, %v519
        %v560 = vand.u32 2147483647, %v520
        %v561 = vand.u32 2147483647, %v521
        %v562 = vand.u32 2147483647, %v522
        %v563 = vand.u32 2147483647, %v523
        %v564 = vand.u32 2147483647, %v524
        %v565 = vand.u32 2147483647, %v525
        %v566 = vand.u32 2147483647, %v526
        %v567 = vand.u32 2147483647, %v527
        %v568 = vand.u32 2147483647, %v528
        %v569 = vand.u32 2147483647, %v529
        %v570 = vand.u32 2147483647, %v530
        %v571 = vand.u32 2147483647, %v531
        %v572 = vand.u32 2147483647, %v532
        %v573 = vand.u32 2147483647, %v533
        %v574 = vand.u32 2147483647, %v534
        %v575 = vand.u32 2147483647, %v535
        %v576 = vand.u32 2147483647, %v536
        %v577 = vand.u32 2147483647, %v537
        %v578 = vand.u32 2147483647, %v538
        %v579 = vand.u32 2147483647, %v539
        %v580 = vand.u32 2147483647, %v540
        %v581 = vand.u32 2147483647, %v541
        %v582 = vand.u32 2147483647, %v542
        %v583 = vand.u32 2147483647, %v543
        %v584 = vand.u32 2147483647, %v544
        %v585 = vand.u32 2147483647, %v545
        %v586 = vand.u32 2147483647, %v546
        %v587 = vand.u32 2147483647, %v547
        %v588 = vand.u32 2147483647, %v548
        %v589 = vand.u32 2147483647, %v549
        %v590 = vand.u32 2147483647, %v550
        %v591 = vand.u32 2147483647, %v551
        %v592 = vsub.f32 1.0, %v552
        %v593 = vsub.f32 1.0, %v553
        %v594 = vsub.f32 1.0, %v554
        %v595 = vsub.f32 1.0, %v555
        %v596 = vsub.f32 1.0, %v556
        %v597 = vsub.f32 1.0, %v557
        %v598 = vsub.f32 1.0, %v558
        %v599 = vsub.f32 1.0, %v559
        %v600 = vsub.f32 1.0, %v560
        %v601 = vsub.f32 1.0, %v561
        %v602 = vsub.f32 1.0, %v562
        %v603 = vsub.f32 1.0, %v563
        %v604 = vsub.f32 1.0, %v564
        %v605 = vsub.f32 1.0, %v565
        %v606 = vsub.f32 1.0, %v566
        %v607 = vsub.f32 1.0, %v567
        %v608 = vsub.f32 1.0, %v568
        %v609 = vsub.f32 1.0, %v569
        %v610 = vsub.f32 1.0, %v570
        %v611 = vsub.f32 1.0, %v571
        %v612 = vsub.f32 1.0, %v572
        %v613 = vsub.f32 1.0, %v573
        %v614 = vsub.f32 1.0, %v574
        %v615 = vsub.f32 1.0, %v575
        %v616 = vsub.f32 1.0, %v576
        %v617 = vsub.f32 1.0, %v577
        %v618 = vsub.f32 1.0, %v578
        %v619 = vsub.f32 1.0, %v579
        %v620 = vsub.f32 1.0, %v580
        %v621 = vsub.f32 1.0, %v581
        %v622 = vsub.f32 1.0, %v582
        %v623 = vsub.f32 1.0, %v583
        %v624 = vsub.f32 1.0, %v584
        %v625 = vsub.f32 1.0, %v585
        %v626 = vsub.f32 1.0, %v586
        %v627 = vsub.f32 1.0, %v587
        %v628 = vsub.f32 1.0, %v588
        %v629 = vsub.f32 1.0, %v589
        %v630 = vsub.f32 1.0, %v590
        %v631 = vsub.f32 1.0, %v591
        %v632 = vmax.f32 %v592, 0.0
        %v633 = vmax.f32 %v593, 0.0
        %v634 = vmax.f32 %v594, 0.0
        %v635 = vmax.f32 %v595, 0.0
        %v636 = vmax.f32 %v596, 0.0
        %v637 = vmax.f32 %v597, 0.0
        %v638 = vmax.f32 %v598, 0.0
        %v639 = vmax.f32 %v599, 0.0
        %v640 = vmax.f32 %v600, 0.0
        %v641 = vmax.f32 %v601, 0.0
        %v642 = vmax.f32 %v602, 0.0
        %v643 = vmax.f32 %v603, 0.0
        %v644 = vmax.f32 %v604, 0.0
        %v645 = vmax.f32 %v605, 0.0
        %v646 = vmax.f32 %v606, 0.0
        %v647 = vmax.f32 %v607, 0.0
        %v648 = vmax.f32 %v608, 0.0
        %v649 = vmax.f32 %v609, 0.0
        %v650 = vmax.f32 %v610, 0.0
        %v651 = vmax.f32 %v611, 0.0
        %v652 = vmax.f32 %v612, 0.0
        %v653 = vmax.f32 %v613, 0.0
        %v654 = vmax.f32 %v614, 0.0
        %v655 = vmax.f32 %v615, 0.0
        %v656 = vmax.f32 %v616, 0.0
        %v657 = vmax.f32 %v617, 0.0
        %v658 = vmax.f32 %v618, 0.0
        %v659 = vmax.f32 %v619, 0.0
        %v660 = vmax.f32 %v620, 0.0
        %v661 = vmax.f32 %v621, 0.0
        %v662 = vmax.f32 %v622, 0.0
        %v663 = vmax.f32 %v623, 0.0
        %v664 = vmax.f32 %v624, 0.0
        %v665 = vmax.f32 %v625, 0.0
        %v666 = vmax.f32 %v626, 0.0
        %v667 = vmax.f32 %v627, 0.0
        %v668 = vmax.f32 %v628, 0.0
        %v669 = vmax.f32 %v629, 0.0
        %v670 = vmax.f32 %v630, 0.0
        %v671 = vmax.f32 %v631, 0.0
        %v672 = vlaneseq
        %v673 = vshrl.u32 %v672, 7
        %v674 = vsub.s32 2, %v673
        %v675 = vrot.slane %v189, %v674
        %v676 = vlaneseq
        %v677 = vshrl.u32 %v676, 7
        %v678 = vsub.s32 6, %v677
        %v679 = vrot.slane %v189, %v678
        %v680 = vlaneseq
        %v681 = vshrl.u32 %v680, 7
        %v682 = vsub.s32 2, %v681
        %v683 = vrot.slane %v190, %v682
        %v684 = vlaneseq
        %v685 = vshrl.u32 %v684, 7
        %v686 = vsub.s32 6, %v685
        %v687 = vrot.slane %v190, %v686
        %v688 = vlaneseq
        %v689 = vshrl.u32 %v688, 7
        %v690 = vsub.s32 2, %v689
        %v691 = vrot.slane %v191, %v690
        %v692 = vlaneseq
        %v693 = vshrl.u32 %v692, 7
        %v694 = vsub.s32 6, %v693
        %v695 = vrot.slane %v191, %v694
        %v696 = vlaneseq
        %v697 = vshrl.u32 %v696, 7
        %v698 = vsub.s32 2, %v697
        %v699 = vrot.slane %v192, %v698
        %v700 = vlaneseq
        %v701 = vshrl.u32 %v700, 7
        %v702 = vsub.s32 6, %v701
        %v703 = vrot.slane %v192, %v702
        %v712 = vlaneseq
        %v713 = vshrl.u32 %v712, 7
        %v714 = vsub.s32 2, %v713
        %v715 = vrot.slane %v675, %v714
        %v716 = vlaneseq
        %v717 = vshrl.u32 %v716, 7
        %v718 = vsub.s32 2, %v717
        %v719 = vrot.slane %v679, %v718
        %v720 = vlaneseq
        %v721 = vshrl.u32 %v720, 7
        %v722 = vsub.s32 2, %v721
        %v723 = vrot.slane %v683, %v722
        %v724 = vlaneseq
        %v725 = vshrl.u32 %v724, 7
        %v726 = vsub.s32 2, %v725
        %v727 = vrot.slane %v687, %v726
        %v728 = vlaneseq
        %v729 = vshrl.u32 %v728, 7
        %v730 = vsub.s32 2, %v729
        %v731 = vrot.slane %v691, %v730
        %v732 = vlaneseq
        %v733 = vshrl.u32 %v732, 7
        %v734 = vsub.s32 2, %v733
        %v735 = vrot.slane %v695, %v734
        %v736 = vlaneseq
        %v737 = vshrl.u32 %v736, 7
        %v738 = vsub.s32 2, %v737
        %v739 = vrot.slane %v699, %v738
        %v740 = vlaneseq
        %v741 = vshrl.u32 %v740, 7
        %v742 = vsub.s32 2, %v741
        %v743 = vrot.slane %v703, %v742
        %v744 = vsub.f32 %v199, %v715
        %v745 = vsub.f32 %v199, %v719
        %v746 = vsub.f32 %v199, %v723
        %v747 = vsub.f32 %v199, %v727
        %v748 = vsub.f32 %v199, %v731
        %v749 = vsub.f32 %v199, %v735
        %v750 = vsub.f32 %v199, %v739
        %v751 = vsub.f32 %v199, %v743
        %v752 = vsub.f32 %v200, %v715
        %v753 = vsub.f32 %v200, %v719
        %v754 = vsub.f32 %v200, %v723
        %v755 = vsub.f32 %v200, %v727
        %v756 = vsub.f32 %v200, %v731
        %v757 = vsub.f32 %v200, %v735
        %v758 = vsub.f32 %v200, %v739
        %v759 = vsub.f32 %v200, %v743
        %v760 = vsub.f32 %v201, %v715
        %v761 = vsub.f32 %v201, %v719
        %v762 = vsub.f32 %v201, %v723
        %v763 = vsub.f32 %v201, %v727
        %v764 = vsub.f32 %v201, %v731
        %v765 = vsub.f32 %v201, %v735
        %v766 = vsub.f32 %v201, %v739
        %v767 = vsub.f32 %v201, %v743
        %v768 = vsub.f32 %v202, %v715
        %v769 = vsub.f32 %v202, %v719
        %v770 = vsub.f32 %v202, %v723
        %v771 = vsub.f32 %v202, %v727
        %v772 = vsub.f32 %v202, %v731
        %v773 = vsub.f32 %v202, %v735
        %v774 = vsub.f32 %v202, %v739
        %v775 = vsub.f32 %v202, %v743
        %v776 = vsub.f32 %v203, %v715
        %v777 = vsub.f32 %v203, %v719
        %v778 = vsub.f32 %v203, %v723
        %v779 = vsub.f32 %v203, %v727
        %v780 = vsub.f32 %v203, %v731
        %v781 = vsub.f32 %v203, %v735
        %v782 = vsub.f32 %v203, %v739
        %v783 = vsub.f32 %v203, %v743
        %v784 = vand.u32 2147483647, %v744
        %v785 = vand.u32 2147483647, %v745
        %v786 = vand.u32 2147483647, %v746
        %v787 = vand.u32 2147483647, %v747
        %v788 = vand.u32 2147483647, %v748
        %v789 = vand.u32 2147483647, %v749
        %v790 = vand.u32 2147483647, %v750
        %v791 = vand.u32 2147483647, %v751
        %v792 = vand.u32 2147483647, %v752
        %v793 = vand.u32 2147483647, %v753
        %v794 = vand.u32 2147483647, %v754
        %v795 = vand.u32 2147483647, %v755
        %v796 = vand.u32 2147483647, %v756
        %v797 = vand.u32 2147483647, %v757
        %v798 = vand.u32 2147483647, %v758
        %v799 = vand.u32 2147483647, %v759
        %v800 = vand.u32 2147483647, %v760
        %v801 = vand.u32 2147483647, %v761
        %v802 = vand.u32 2147483647, %v762
        %v803 = vand.u32 2147483647, %v763
        %v804 = vand.u32 2147483647, %v764
        %v805 = vand.u32 2147483647, %v765
        %v806 = vand.u32 2147483647, %v766
        %v807 = vand.u32 2147483647, %v767
        %v808 = vand.u32 2147483647, %v768
        %v809 = vand.u32 2147483647, %v769
        %v810 = vand.u32 2147483647, %v770
        %v811 = vand.u32 2147483647, %v771
        %v812 = vand.u32 2147483647, %v772
        %v813 = vand.u32 2147483647, %v773
        %v814 = vand.u32 2147483647, %v774
        %v815 = vand.u32 2147483647, %v775
        %v816 = vand.u32 2147483647, %v776
        %v817 = vand.u32 2147483647, %v777
        %v818 = vand.u32 2147483647, %v778
        %v819 = vand.u32 2147483647, %v779
        %v820 = vand.u32 2147483647, %v780
        %v821 = vand.u32 2147483647, %v781
        %v822 = vand.u32 2147483647, %v782
        %v823 = vand.u32 2147483647, %v783
        %v824 = vsub.f32 1.0, %v784
        %v825 = vsub.f32 1.0, %v785
        %v826 = vsub.f32 1.0, %v786
        %v827 = vsub.f32 1.0, %v787
        %v828 = vsub.f32 1.0, %v788
        %v829 = vsub.f32 1.0, %v789
        %v830 = vsub.f32 1.0, %v790
        %v831 = vsub.f32 1.0, %v791
        %v832 = vsub.f32 1.0, %v792
        %v833 = vsub.f32 1.0, %v793
        %v834 = vsub.f32 1.0, %v794
        %v835 = vsub.f32 1.0, %v795
        %v836 = vsub.f32 1.0, %v796
        %v837 = vsub.f32 1.0, %v797
        %v838 = vsub.f32 1.0, %v798
        %v839 = vsub.f32 1.0, %v799
        %v840 = vsub.f32 1.0, %v800
        %v841 = vsub.f32 1.0, %v801
        %v842 = vsub.f32 1.0, %v802
        %v843 = vsub.f32 1.0, %v803
        %v844 = vsub.f32 1.0, %v804
        %v845 = vsub.f32 1.0, %v805
        %v846 = vsub.f32 1.0, %v806
        %v847 = vsub.f32 1.0, %v807
        %v848 = vsub.f32 1.0, %v808
        %v849 = vsub.f32 1.0, %v809
        %v850 = vsub.f32 1.0, %v810
        %v851 = vsub.f32 1.0, %v811
        %v852 = vsub.f32 1.0, %v812
        %v853 = vsub.f32 1.0, %v813
        %v854 = vsub.f32 1.0, %v814
        %v855 = vsub.f32 1.0, %v815
        %v856 = vsub.f32 1.0, %v816
        %v857 = vsub.f32 1.0, %v817
        %v858 = vsub.f32 1.0, %v818
        %v859 = vsub.f32 1.0, %v819
        %v860 = vsub.f32 1.0, %v820
        %v861 = vsub.f32 1.0, %v821
        %v862 = vsub.f32 1.0, %v822
        %v863 = vsub.f32 1.0, %v823
        %v864 = vmax.f32 %v824, 0.0
        %v865 = vmax.f32 %v825, 0.0
        %v866 = vmax.f32 %v826, 0.0
        %v867 = vmax.f32 %v827, 0.0
        %v868 = vmax.f32 %v828, 0.0
        %v869 = vmax.f32 %v829, 0.0
        %v870 = vmax.f32 %v830, 0.0
        %v871 = vmax.f32 %v831, 0.0
        %v872 = vmax.f32 %v832, 0.0
        %v873 = vmax.f32 %v833, 0.0
        %v874 = vmax.f32 %v834, 0.0
        %v875 = vmax.f32 %v835, 0.0
        %v876 = vmax.f32 %v836, 0.0
        %v877 = vmax.f32 %v837, 0.0
        %v878 = vmax.f32 %v838, 0.0
        %v879 = vmax.f32 %v839, 0.0
        %v880 = vmax.f32 %v840, 0.0
        %v881 = vmax.f32 %v841, 0.0
        %v882 = vmax.f32 %v842, 0.0
        %v883 = vmax.f32 %v843, 0.0
        %v884 = vmax.f32 %v844, 0.0
        %v885 = vmax.f32 %v845, 0.0
        %v886 = vmax.f32 %v846, 0.0
        %v887 = vmax.f32 %v847, 0.0
        %v888 = vmax.f32 %v848, 0.0
        %v889 = vmax.f32 %v849, 0.0
        %v890 = vmax.f32 %v850, 0.0
        %v891 = vmax.f32 %v851, 0.0
        %v892 = vmax.f32 %v852, 0.0
        %v893 = vmax.f32 %v853, 0.0
        %v894 = vmax.f32 %v854, 0.0
        %v895 = vmax.f32 %v855, 0.0
        %v896 = vmax.f32 %v856, 0.0
        %v897 = vmax.f32 %v857, 0.0
        %v898 = vmax.f32 %v858, 0.0
        %v899 = vmax.f32 %v859, 0.0
        %v900 = vmax.f32 %v860, 0.0
        %v901 = vmax.f32 %v861, 0.0
        %v902 = vmax.f32 %v862, 0.0
        %v903 = vmax.f32 %v863, 0.0
        %v944 = vcombine.low %v400, %v401
        %v945 = vcombine.high %v400, %v401
        %v946 = vcombine.low %v402, %v403
        %v947 = vcombine.high %v402, %v403
        %v948 = vcombine.low %v404, %v405
        %v949 = vcombine.high %v404, %v405
        %v950 = vcombine.low %v406, %v407
        %v951 = vcombine.high %v406, %v407
        %v953 = vunpack.c.l.s4 1966171168
        %v954 = vunpack.c.0.s8 %v953
        %v955 = vlaneseq
        %v956 = vshrl.u32 %v955, 7
        %v957 = vsub.s32 %v954, %v956
        %v958 = vrot.slane %v944, %v957
        %v960 = vunpack.c.l.s4 1966171168
        %v961 = vunpack.c.0.s8 %v960
        %v962 = vlaneseq
        %v963 = vshrl.u32 %v962, 7
        %v964 = vsub.s32 %v961, %v963
        %v965 = vrot.slane %v945, %v964
        %v967 = vunpack.c.l.s4 1966171168
        %v968 = vunpack.c.0.s8 %v967
        %v969 = vlaneseq
        %v970 = vshrl.u32 %v969, 7
        %v971 = vsub.s32 %v968, %v970
        %v972 = vrot.slane %v946, %v971
        %v974 = vunpack.c.l.s4 1966171168
        %v975 = vunpack.c.0.s8 %v974
        %v976 = vlaneseq
        %v977 = vshrl.u32 %v976, 7
        %v978 = vsub.s32 %v975, %v977
        %v979 = vrot.slane %v947, %v978
        %v981 = vunpack.c.l.s4 1966171168
        %v982 = vunpack.c.0.s8 %v981
        %v983 = vlaneseq
        %v984 = vshrl.u32 %v983, 7
        %v985 = vsub.s32 %v982, %v984
        %v986 = vrot.slane %v948, %v985
        %v988 = vunpack.c.l.s4 1966171168
        %v989 = vunpack.c.0.s8 %v988
        %v990 = vlaneseq
        %v991 = vshrl.u32 %v990, 7
        %v992 = vsub.s32 %v989, %v991
        %v993 = vrot.slane %v949, %v992
        %v995 = vunpack.c.l.s4 1966171168
        %v996 = vunpack.c.0.s8 %v995
        %v997 = vlaneseq
        %v998 = vshrl.u32 %v997, 7
        %v999 = vsub.s32 %v996, %v998
        %v1000 = vrot.slane %v950, %v999
        %v1002 = vunpack.c.l.s4 1966171168
        %v1003 = vunpack.c.0.s8 %v1002
        %v1004 = vlaneseq
        %v1005 = vshrl.u32 %v1004, 7
        %v1006 = vsub.s32 %v1003, %v1005
        %v1007 = vrot.slane %v951, %v1006
        %v1008 = vcombine.low %v958, %v972
        %v1009 = vcombine.high %v958, %v972
        %v1010 = vcombine.low %v965, %v979
        %v1011 = vcombine.high %v965, %v979
        %v1012 = vcombine.low %v986, %v1000
        %v1013 = vcombine.high %v986, %v1000
        %v1014 = vcombine.low %v993, %v1007
        %v1015 = vcombine.high %v993, %v1007
        %v1017 = vunpack.c.l.s4 1966171168
        %v1018 = vunpack.c.0.s8 %v1017
        %v1019 = vlaneseq
        %v1020 = vshrl.u32 %v1019, 7
        %v1021 = vsub.s32 %v1018, %v1020
        %v1022 = vrot.slane %v1008, %v1021
        %v1024 = vunpack.c.l.s4 1966171168
        %v1025 = vunpack.c.0.s8 %v1024
        %v1026 = vlaneseq
        %v1027 = vshrl.u32 %v1026, 7
        %v1028 = vsub.s32 %v1025, %v1027
        %v1029 = vrot.slane %v1010, %v1028
        %v1031 = vunpack.c.l.s4 1966171168
        %v1032 = vunpack.c.0.s8 %v1031
        %v1033 = vlaneseq
        %v1034 = vshrl.u32 %v1033, 7
        %v1035 = vsub.s32 %v1032, %v1034
        %v1036 = vrot.slane %v1009, %v1035
        %v1038 = vunpack.c.l.s4 1966171168
        %v1039 = vunpack.c.0.s8 %v1038
        %v1040 = vlaneseq
        %v1041 = vshrl.u32 %v1040, 7
        %v1042 = vsub.s32 %v1039, %v1041
        %v1043 = vrot.slane %v1011, %v1042
        %v1045 = vunpack.c.l.s4 1966171168
        %v1046 = vunpack.c.0.s8 %v1045
        %v1047 = vlaneseq
        %v1048 = vshrl.u32 %v1047, 7
        %v1049 = vsub.s32 %v1046, %v1048
        %v1050 = vrot.slane %v1012, %v1049
        %v1052 = vunpack.c.l.s4 1966171168
        %v1053 = vunpack.c.0.s8 %v1052
        %v1054 = vlaneseq
        %v1055 = vshrl.u32 %v1054, 7
        %v1056 = vsub.s32 %v1053, %v1055
        %v1057 = vrot.slane %v1014, %v1056
        %v1059 = vunpack.c.l.s4 1966171168
        %v1060 = vunpack.c.0.s8 %v1059
        %v1061 = vlaneseq
        %v1062 = vshrl.u32 %v1061, 7
        %v1063 = vsub.s32 %v1060, %v1062
        %v1064 = vrot.slane %v1013, %v1063
        %v1066 = vunpack.c.l.s4 1966171168
        %v1067 = vunpack.c.0.s8 %v1066
        %v1068 = vlaneseq
        %v1069 = vshrl.u32 %v1068, 7
        %v1070 = vsub.s32 %v1067, %v1069
        %v1071 = vrot.slane %v1015, %v1070
        %v1072 = vcombine.low %v1022, %v1050
        %v1073 = vcombine.high %v1022, %v1050
        %v1074 = vcombine.low %v1029, %v1057
        %v1075 = vcombine.high %v1029, %v1057
        %v1076 = vcombine.low %v1036, %v1064
        %v1077 = vcombine.high %v1036, %v1064
        %v1078 = vcombine.low %v1043, %v1071
        %v1079 = vcombine.high %v1043, %v1071
        %v1080 = vcombine.low %v408, %v409
        %v1081 = vcombine.high %v408, %v409
        %v1082 = vcombine.low %v410, %v411
        %v1083 = vcombine.high %v410, %v411
        %v1084 = vcombine.low %v412, %v413
        %v1085 = vcombine.high %v412, %v413
        %v1086 = vcombine.low %v414, %v415
        %v1087 = vcombine.high %v414, %v415
        %v1089 = vunpack.c.l.s4 1966171168
        %v1090 = vunpack.c.0.s8 %v1089
        %v1091 = vlaneseq
        %v1092 = vshrl.u32 %v1091, 7
        %v1093 = vsub.s32 %v1090, %v1092
        %v1094 = vrot.slane %v1080, %v1093
        %v1096 = vunpack.c.l.s4 1966171168
        %v1097 = vunpack.c.0.s8 %v1096
        %v1098 = vlaneseq
        %v1099 = vshrl.u32 %v1098, 7
        %v1100 = vsub.s32 %v1097, %v1099
        %v1101 = vrot.slane %v1081, %v1100
        %v1103 = vunpack.c.l.s4 1966171168
        %v1104 = vunpack.c.0.s8 %v1103
        %v1105 = vlaneseq
        %v1106 = vshrl.u32 %v1105, 7
        %v1107 = vsub.s32 %v1104, %v1106
        %v1108 = vrot.slane %v1082, %v1107
        %v1110 = vunpack.c.l.s4 1966171168
        %v1111 = vunpack.c.0.s8 %v1110
        %v1112 = vlaneseq
        %v1113 = vshrl.u32 %v1112, 7
        %v1114 = vsub.s32 %v1111, %v1113
        %v1115 = vrot.slane %v1083, %v1114
        %v1117 = vunpack.c.l.s4 1966171168
        %v1118 = vunpack.c.0.s8 %v1117
        %v1119 = vlaneseq
        %v1120 = vshrl.u32 %v1119, 7
        %v1121 = vsub.s32 %v1118, %v1120
        %v1122 = vrot.slane %v1084, %v1121
        %v1124 = vunpack.c.l.s4 1966171168
        %v1125 = vunpack.c.0.s8 %v1124
        %v1126 = vlaneseq
        %v1127 = vshrl.u32 %v1126, 7
        %v1128 = vsub.s32 %v1125, %v1127
        %v1129 = vrot.slane %v1085, %v1128
        %v1131 = vunpack.c.l.s4 1966171168
        %v1132 = vunpack.c.0.s8 %v1131
        %v1133 = vlaneseq
        %v1134 = vshrl.u32 %v1133, 7
        %v1135 = vsub.s32 %v1132, %v1134
        %v1136 = vrot.slane %v1086, %v1135
        %v1138 = vunpack.c.l.s4 1966171168
        %v1139 = vunpack.c.0.s8 %v1138
        %v1140 = vlaneseq
        %v1141 = vshrl.u32 %v1140, 7
        %v1142 = vsub.s32 %v1139, %v1141
        %v1143 = vrot.slane %v1087, %v1142
        %v1144 = vcombine.low %v1094, %v1108
        %v1145 = vcombine.high %v1094, %v1108
        %v1146 = vcombine.low %v1101, %v1115
        %v1147 = vcombine.high %v1101, %v1115
        %v1148 = vcombine.low %v1122, %v1136
        %v1149 = vcombine.high %v1122, %v1136
        %v1150 = vcombine.low %v1129, %v1143
        %v1151 = vcombine.high %v1129, %v1143
        %v1153 = vunpack.c.l.s4 1966171168
        %v1154 = vunpack.c.0.s8 %v1153
        %v1155 = vlaneseq
        %v1156 = vshrl.u32 %v1155, 7
        %v1157 = vsub.s32 %v1154, %v1156
        %v1158 = vrot.slane %v1144, %v1157
        %v1160 = vunpack.c.l.s4 1966171168
        %v1161 = vunpack.c.0.s8 %v1160
        %v1162 = vlaneseq
        %v1163 = vshrl.u32 %v1162, 7
        %v1164 = vsub.s32 %v1161, %v1163
        %v1165 = vrot.slane %v1146, %v1164
        %v1167 = vunpack.c.l.s4 1966171168
        %v1168 = vunpack.c.0.s8 %v1167
        %v1169 = vlaneseq
        %v1170 = vshrl.u32 %v1169, 7
        %v1171 = vsub.s32 %v1168, %v1170
        %v1172 = vrot.slane %v1145, %v1171
        %v1174 = vunpack.c.l.s4 1966171168
        %v1175 = vunpack.c.0.s8 %v1174
        %v1176 = vlaneseq
        %v1177 = vshrl.u32 %v1176, 7
        %v1178 = vsub.s32 %v1175, %v1177
        %v1179 = vrot.slane %v1147, %v1178
        %v1181 = vunpack.c.l.s4 1966171168
        %v1182 = vunpack.c.0.s8 %v1181
        %v1183 = vlaneseq
        %v1184 = vshrl.u32 %v1183, 7
        %v1185 = vsub.s32 %v1182, %v1184
        %v1186 = vrot.slane %v1148, %v1185
        %v1188 = vunpack.c.l.s4 1966171168
        %v1189 = vunpack.c.0.s8 %v1188
        %v1190 = vlaneseq
        %v1191 = vshrl.u32 %v1190, 7
        %v1192 = vsub.s32 %v1189, %v1191
        %v1193 = vrot.slane %v1150, %v1192
        %v1195 = vunpack.c.l.s4 1966171168
        %v1196 = vunpack.c.0.s8 %v1195
        %v1197 = vlaneseq
        %v1198 = vshrl.u32 %v1197, 7
        %v1199 = vsub.s32 %v1196, %v1198
        %v1200 = vrot.slane %v1149, %v1199
        %v1202 = vunpack.c.l.s4 1966171168
        %v1203 = vunpack.c.0.s8 %v1202
        %v1204 = vlaneseq
        %v1205 = vshrl.u32 %v1204, 7
        %v1206 = vsub.s32 %v1203, %v1205
        %v1207 = vrot.slane %v1151, %v1206
        %v1208 = vcombine.low %v1158, %v1186
        %v1209 = vcombine.high %v1158, %v1186
        %v1210 = vcombine.low %v1165, %v1193
        %v1211 = vcombine.high %v1165, %v1193
        %v1212 = vcombine.low %v1172, %v1200
        %v1213 = vcombine.high %v1172, %v1200
        %v1214 = vcombine.low %v1179, %v1207
        %v1215 = vcombine.high %v1179, %v1207
        %v1216 = vcombine.low %v416, %v417
        %v1217 = vcombine.high %v416, %v417
        %v1218 = vcombine.low %v418, %v419
        %v1219 = vcombine.high %v418, %v419
        %v1220 = vcombine.low %v420, %v421
        %v1221 = vcombine.high %v420, %v421
        %v1222 = vcombine.low %v422, %v423
        %v1223 = vcombine.high %v422, %v423
        %v1225 = vunpack.c.l.s4 1966171168
        %v1226 = vunpack.c.0.s8 %v1225
        %v1227 = vlaneseq
        %v1228 = vshrl.u32 %v1227, 7
        %v1229 = vsub.s32 %v1226, %v1228
        %v1230 = vrot.slane %v1216, %v1229
        %v1232 = vunpack.c.l.s4 1966171168
        %v1233 = vunpack.c.0.s8 %v1232
        %v1234 = vlaneseq
        %v1235 = vshrl.u32 %v1234, 7
        %v1236 = vsub.s32 %v1233, %v1235
        %v1237 = vrot.slane %v1217, %v1236
        %v1239 = vunpack.c.l.s4 1966171168
        %v1240 = vunpack.c.0.s8 %v1239
        %v1241 = vlaneseq
        %v1242 = vshrl.u32 %v1241, 7
        %v1243 = vsub.s32 %v1240, %v1242
        %v1244 = vrot.slane %v1218, %v1243
        %v1246 = vunpack.c.l.s4 1966171168
        %v1247 = vunpack.c.0.s8 %v1246
        %v1248 = vlaneseq
        %v1249 = vshrl.u32 %v1248, 7
        %v1250 = vsub.s32 %v1247, %v1249
        %v1251 = vrot.slane %v1219, %v1250
        %v1253 = vunpack.c.l.s4 1966171168
        %v1254 = vunpack.c.0.s8 %v1253
        %v1255 = vlaneseq
        %v1256 = vshrl.u32 %v1255, 7
        %v1257 = vsub.s32 %v1254, %v1256
        %v1258 = vrot.slane %v1220, %v1257
        %v1260 = vunpack.c.l.s4 1966171168
        %v1261 = vunpack.c.0.s8 %v1260
        %v1262 = vlaneseq
        %v1263 = vshrl.u32 %v1262, 7
        %v1264 = vsub.s32 %v1261, %v1263
        %v1265 = vrot.slane %v1221, %v1264
        %v1267 = vunpack.c.l.s4 1966171168
        %v1268 = vunpack.c.0.s8 %v1267
        %v1269 = vlaneseq
        %v1270 = vshrl.u32 %v1269, 7
        %v1271 = vsub.s32 %v1268, %v1270
        %v1272 = vrot.slane %v1222, %v1271
        %v1274 = vunpack.c.l.s4 1966171168
        %v1275 = vunpack.c.0.s8 %v1274
        %v1276 = vlaneseq
        %v1277 = vshrl.u32 %v1276, 7
        %v1278 = vsub.s32 %v1275, %v1277
        %v1279 = vrot.slane %v1223, %v1278
        %v1280 = vcombine.low %v1230, %v1244
        %v1281 = vcombine.high %v1230, %v1244
        %v1282 = vcombine.low %v1237, %v1251
        %v1283 = vcombine.high %v1237, %v1251
        %v1284 = vcombine.low %v1258, %v1272
        %v1285 = vcombine.high %v1258, %v1272
        %v1286 = vcombine.low %v1265, %v1279
        %v1287 = vcombine.high %v1265, %v1279
        %v1289 = vunpack.c.l.s4 1966171168
        %v1290 = vunpack.c.0.s8 %v1289
        %v1291 = vlaneseq
        %v1292 = vshrl.u32 %v1291, 7
        %v1293 = vsub.s32 %v1290, %v1292
        %v1294 = vrot.slane %v1280, %v1293
        %v1296 = vunpack.c.l.s4 1966171168
        %v1297 = vunpack.c.0.s8 %v1296
        %v1298 = vlaneseq
        %v1299 = vshrl.u32 %v1298, 7
        %v1300 = vsub.s32 %v1297, %v1299
        %v1301 = vrot.slane %v1282, %v1300
        %v1303 = vunpack.c.l.s4 1966171168
        %v1304 = vunpack.c.0.s8 %v1303
        %v1305 = vlaneseq
        %v1306 = vshrl.u32 %v1305, 7
        %v1307 = vsub.s32 %v1304, %v1306
        %v1308 = vrot.slane %v1281, %v1307
        %v1310 = vunpack.c.l.s4 1966171168
        %v1311 = vunpack.c.0.s8 %v1310
        %v1312 = vlaneseq
        %v1313 = vshrl.u32 %v1312, 7
        %v1314 = vsub.s32 %v1311, %v1313
        %v1315 = vrot.slane %v1283, %v1314
        %v1317 = vunpack.c.l.s4 1966171168
        %v1318 = vunpack.c.0.s8 %v1317
        %v1319 = vlaneseq
        %v1320 = vshrl.u32 %v1319, 7
        %v1321 = vsub.s32 %v1318, %v1320
        %v1322 = vrot.slane %v1284, %v1321
        %v1324 = vunpack.c.l.s4 1966171168
        %v1325 = vunpack.c.0.s8 %v1324
        %v1326 = vlaneseq
        %v1327 = vshrl.u32 %v1326, 7
        %v1328 = vsub.s32 %v1325, %v1327
        %v1329 = vrot.slane %v1286, %v1328
        %v1331 = vunpack.c.l.s4 1966171168
        %v1332 = vunpack.c.0.s8 %v1331
        %v1333 = vlaneseq
        %v1334 = vshrl.u32 %v1333, 7
        %v1335 = vsub.s32 %v1332, %v1334
        %v1336 = vrot.slane %v1285, %v1335
        %v1338 = vunpack.c.l.s4 1966171168
        %v1339 = vunpack.c.0.s8 %v1338
        %v1340 = vlaneseq
        %v1341 = vshrl.u32 %v1340, 7
        %v1342 = vsub.s32 %v1339, %v1341
        %v1343 = vrot.slane %v1287, %v1342
        %v1344 = vcombine.low %v1294, %v1322
        %v1345 = vcombine.high %v1294, %v1322
        %v1346 = vcombine.low %v1301, %v1329
        %v1347 = vcombine.high %v1301, %v1329
        %v1348 = vcombine.low %v1308, %v1336
        %v1349 = vcombine.high %v1308, %v1336
        %v1350 = vcombine.low %v1315, %v1343
        %v1351 = vcombine.high %v1315, %v1343
        %v1352 = vcombine.low %v424, %v425
        %v1353 = vcombine.high %v424, %v425
        %v1354 = vcombine.low %v426, %v427
        %v1355 = vcombine.high %v426, %v427
        %v1356 = vcombine.low %v428, %v429
        %v1357 = vcombine.high %v428, %v429
        %v1358 = vcombine.low %v430, %v431
        %v1359 = vcombine.high %v430, %v431
        %v1361 = vunpack.c.l.s4 1966171168
        %v1362 = vunpack.c.0.s8 %v1361
        %v1363 = vlaneseq
        %v1364 = vshrl.u32 %v1363, 7
        %v1365 = vsub.s32 %v1362, %v1364
        %v1366 = vrot.slane %v1352, %v1365
        %v1368 = vunpack.c.l.s4 1966171168
        %v1369 = vunpack.c.0.s8 %v1368
        %v1370 = vlaneseq
        %v1371 = vshrl.u32 %v1370, 7
        %v1372 = vsub.s32 %v1369, %v1371
        %v1373 = vrot.slane %v1353, %v1372
        %v1375 = vunpack.c.l.s4 1966171168
        %v1376 = vunpack.c.0.s8 %v1375
        %v1377 = vlaneseq
        %v1378 = vshrl.u32 %v1377, 7
        %v1379 = vsub.s32 %v1376, %v1378
        %v1380 = vrot.slane %v1354, %v1379
        %v1382 = vunpack.c.l.s4 1966171168
        %v1383 = vunpack.c.0.s8 %v1382
        %v1384 = vlaneseq
        %v1385 = vshrl.u32 %v1384, 7
        %v1386 = vsub.s32 %v1383, %v1385
        %v1387 = vrot.slane %v1355, %v1386
        %v1389 = vunpack.c.l.s4 1966171168
        %v1390 = vunpack.c.0.s8 %v1389
        %v1391 = vlaneseq
        %v1392 = vshrl.u32 %v1391, 7
        %v1393 = vsub.s32 %v1390, %v1392
        %v1394 = vrot.slane %v1356, %v1393
        %v1396 = vunpack.c.l.s4 1966171168
        %v1397 = vunpack.c.0.s8 %v1396
        %v1398 = vlaneseq
        %v1399 = vshrl.u32 %v1398, 7
        %v1400 = vsub.s32 %v1397, %v1399
        %v1401 = vrot.slane %v1357, %v1400
        %v1403 = vunpack.c.l.s4 1966171168
        %v1404 = vunpack.c.0.s8 %v1403
        %v1405 = vlaneseq
        %v1406 = vshrl.u32 %v1405, 7
        %v1407 = vsub.s32 %v1404, %v1406
        %v1408 = vrot.slane %v1358, %v1407
        %v1410 = vunpack.c.l.s4 1966171168
        %v1411 = vunpack.c.0.s8 %v1410
        %v1412 = vlaneseq
        %v1413 = vshrl.u32 %v1412, 7
        %v1414 = vsub.s32 %v1411, %v1413
        %v1415 = vrot.slane %v1359, %v1414
        %v1416 = vcombine.low %v1366, %v1380
        %v1417 = vcombine.high %v1366, %v1380
        %v1418 = vcombine.low %v1373, %v1387
        %v1419 = vcombine.high %v1373, %v1387
        %v1420 = vcombine.low %v1394, %v1408
        %v1421 = vcombine.high %v1394, %v1408
        %v1422 = vcombine.low %v1401, %v1415
        %v1423 = vcombine.high %v1401, %v1415
        %v1425 = vunpack.c.l.s4 1966171168
        %v1426 = vunpack.c.0.s8 %v1425
        %v1427 = vlaneseq
        %v1428 = vshrl.u32 %v1427, 7
        %v1429 = vsub.s32 %v1426, %v1428
        %v1430 = vrot.slane %v1416, %v1429
        %v1432 = vunpack.c.l.s4 1966171168
        %v1433 = vunpack.c.0.s8 %v1432
        %v1434 = vlaneseq
        %v1435 = vshrl.u32 %v1434, 7
        %v1436 = vsub.s32 %v1433, %v1435
        %v1437 = vrot.slane %v1418, %v1436
        %v1439 = vunpack.c.l.s4 1966171168
        %v1440 = vunpack.c.0.s8 %v1439
        %v1441 = vlaneseq
        %v1442 = vshrl.u32 %v1441, 7
        %v1443 = vsub.s32 %v1440, %v1442
        %v1444 = vrot.slane %v1417, %v1443
        %v1446 = vunpack.c.l.s4 1966171168
        %v1447 = vunpack.c.0.s8 %v1446
        %v1448 = vlaneseq
        %v1449 = vshrl.u32 %v1448, 7
        %v1450 = vsub.s32 %v1447, %v1449
        %v1451 = vrot.slane %v1419, %v1450
        %v1453 = vunpack.c.l.s4 1966171168
        %v1454 = vunpack.c.0.s8 %v1453
        %v1455 = vlaneseq
        %v1456 = vshrl.u32 %v1455, 7
        %v1457 = vsub.s32 %v1454, %v1456
        %v1458 = vrot.slane %v1420, %v1457
        %v1460 = vunpack.c.l.s4 1966171168
        %v1461 = vunpack.c.0.s8 %v1460
        %v1462 = vlaneseq
        %v1463 = vshrl.u32 %v1462, 7
        %v1464 = vsub.s32 %v1461, %v1463
        %v1465 = vrot.slane %v1422, %v1464
        %v1467 = vunpack.c.l.s4 1966171168
        %v1468 = vunpack.c.0.s8 %v1467
        %v1469 = vlaneseq
        %v1470 = vshrl.u32 %v1469, 7
        %v1471 = vsub.s32 %v1468, %v1470
        %v1472 = vrot.slane %v1421, %v1471
        %v1474 = vunpack.c.l.s4 1966171168
        %v1475 = vunpack.c.0.s8 %v1474
        %v1476 = vlaneseq
        %v1477 = vshrl.u32 %v1476, 7
        %v1478 = vsub.s32 %v1475, %v1477
        %v1479 = vrot.slane %v1423, %v1478
        %v1480 = vcombine.low %v1430, %v1458
        %v1481 = vcombine.high %v1430, %v1458
        %v1482 = vcombine.low %v1437, %v1465
        %v1483 = vcombine.high %v1437, %v1465
        %v1484 = vcombine.low %v1444, %v1472
        %v1485 = vcombine.high %v1444, %v1472
        %v1486 = vcombine.low %v1451, %v1479
        %v1487 = vcombine.high %v1451, %v1479
        %v1488 = vcombine.low %v432, %v433
        %v1489 = vcombine.low %v434, %v435
        %v1490 = vcombine.low %v436, %v437
        %v1491 = vcombine.low %v438, %v439
        %v1493 = vunpack.c.l.s4 1966171168
        %v1494 = vunpack.c.0.s8 %v1493
        %v1495 = vlaneseq
        %v1496 = vshrl.u32 %v1495, 7
        %v1497 = vsub.s32 %v1494, %v1496
        %v1498 = vrot.slane %v1488, %v1497
        %v1500 = vunpack.c.l.s4 1966171168
        %v1501 = vunpack.c.0.s8 %v1500
        %v1502 = vlaneseq
        %v1503 = vshrl.u32 %v1502, 7
        %v1504 = vsub.s32 %v1501, %v1503
        %v1505 = vrot.slane %v1489, %v1504
        %v1507 = vunpack.c.l.s4 1966171168
        %v1508 = vunpack.c.0.s8 %v1507
        %v1509 = vlaneseq
        %v1510 = vshrl.u32 %v1509, 7
        %v1511 = vsub.s32 %v1508, %v1510
        %v1512 = vrot.slane %v1490, %v1511
        %v1514 = vunpack.c.l.s4 1966171168
        %v1515 = vunpack.c.0.s8 %v1514
        %v1516 = vlaneseq
        %v1517 = vshrl.u32 %v1516, 7
        %v1518 = vsub.s32 %v1515, %v1517
        %v1519 = vrot.slane %v1491, %v1518
        %v1520 = vcombine.low %v1498, %v1505
        %v1521 = vcombine.low %v1512, %v1519
        %v1523 = vunpack.c.l.s4 1966171168
        %v1524 = vunpack.c.0.s8 %v1523
        %v1525 = vlaneseq
        %v1526 = vshrl.u32 %v1525, 7
        %v1527 = vsub.s32 %v1524, %v1526
        %v1528 = vrot.slane %v1520, %v1527
        %v1530 = vunpack.c.l.s4 1966171168
        %v1531 = vunpack.c.0.s8 %v1530
        %v1532 = vlaneseq
        %v1533 = vshrl.u32 %v1532, 7
        %v1534 = vsub.s32 %v1531, %v1533
        %v1535 = vrot.slane %v1521, %v1534
        %v1536 = vcombine.low %v1528, %v1535
        %v1537 = vlaneseq
        %v1538 = vshrl.u32 %v1537, 7
        %v1539 = vsub.s32 0, %v1538
        %v1540 = vrot.slane %v1072, %v1539
        %v1541 = vlaneseq
        %v1542 = vshrl.u32 %v1541, 7
        %v1543 = vsub.s32 1, %v1542
        %v1544 = vrot.slane %v1072, %v1543
        %v1545 = vlaneseq
        %v1546 = vshrl.u32 %v1545, 7
        %v1547 = vsub.s32 2, %v1546
        %v1548 = vrot.slane %v1072, %v1547
        %v1549 = vlaneseq
        %v1550 = vshrl.u32 %v1549, 7
        %v1551 = vsub.s32 3, %v1550
        %v1552 = vrot.slane %v1072, %v1551
        %v1553 = vlaneseq
        %v1554 = vshrl.u32 %v1553, 7
        %v1555 = vsub.s32 4, %v1554
        %v1556 = vrot.slane %v1072, %v1555
        %v1557 = vlaneseq
        %v1558 = vshrl.u32 %v1557, 7
        %v1559 = vsub.s32 5, %v1558
        %v1560 = vrot.slane %v1072, %v1559
        %v1561 = vlaneseq
        %v1562 = vshrl.u32 %v1561, 7
        %v1563 = vsub.s32 6, %v1562
        %v1564 = vrot.slane %v1072, %v1563
        %v1565 = vlaneseq
        %v1566 = vshrl.u32 %v1565, 7
        %v1567 = vsub.s32 7, %v1566
        %v1568 = vrot.slane %v1072, %v1567
        %v1569 = vlaneseq
        %v1570 = vshrl.u32 %v1569, 7
        %v1571 = vsub.s32 0, %v1570
        %v1572 = vrot.slane %v1076, %v1571
        %v1573 = vlaneseq
        %v1574 = vshrl.u32 %v1573, 7
        %v1575 = vsub.s32 1, %v1574
        %v1576 = vrot.slane %v1076, %v1575
        %v1577 = vlaneseq
        %v1578 = vshrl.u32 %v1577, 7
        %v1579 = vsub.s32 2, %v1578
        %v1580 = vrot.slane %v1076, %v1579
        %v1581 = vlaneseq
        %v1582 = vshrl.u32 %v1581, 7
        %v1583 = vsub.s32 3, %v1582
        %v1584 = vrot.slane %v1076, %v1583
        %v1585 = vlaneseq
        %v1586 = vshrl.u32 %v1585, 7
        %v1587 = vsub.s32 4, %v1586
        %v1588 = vrot.slane %v1076, %v1587
        %v1589 = vlaneseq
        %v1590 = vshrl.u32 %v1589, 7
        %v1591 = vsub.s32 5, %v1590
        %v1592 = vrot.slane %v1076, %v1591
        %v1593 = vlaneseq
        %v1594 = vshrl.u32 %v1593, 7
        %v1595 = vsub.s32 6, %v1594
        %v1596 = vrot.slane %v1076, %v1595
        %v1597 = vlaneseq
        %v1598 = vshrl.u32 %v1597, 7
        %v1599 = vsub.s32 7, %v1598
        %v1600 = vrot.slane %v1076, %v1599
        %v1601 = vlaneseq
        %v1602 = vshrl.u32 %v1601, 7
        %v1603 = vsub.s32 0, %v1602
        %v1604 = vrot.slane %v1073, %v1603
        %v1605 = vlaneseq
        %v1606 = vshrl.u32 %v1605, 7
        %v1607 = vsub.s32 1, %v1606
        %v1608 = vrot.slane %v1073, %v1607
        %v1609 = vlaneseq
        %v1610 = vshrl.u32 %v1609, 7
        %v1611 = vsub.s32 2, %v1610
        %v1612 = vrot.slane %v1073, %v1611
        %v1613 = vlaneseq
        %v1614 = vshrl.u32 %v1613, 7
        %v1615 = vsub.s32 3, %v1614
        %v1616 = vrot.slane %v1073, %v1615
        %v1617 = vlaneseq
        %v1618 = vshrl.u32 %v1617, 7
        %v1619 = vsub.s32 4, %v1618
        %v1620 = vrot.slane %v1073, %v1619
        %v1621 = vlaneseq
        %v1622 = vshrl.u32 %v1621, 7
        %v1623 = vsub.s32 5, %v1622
        %v1624 = vrot.slane %v1073, %v1623
        %v1625 = vlaneseq
        %v1626 = vshrl.u32 %v1625, 7
        %v1627 = vsub.s32 6, %v1626
        %v1628 = vrot.slane %v1073, %v1627
        %v1629 = vlaneseq
        %v1630 = vshrl.u32 %v1629, 7
        %v1631 = vsub.s32 7, %v1630
        %v1632 = vrot.slane %v1073, %v1631
        %v1633 = vlaneseq
        %v1634 = vshrl.u32 %v1633, 7
        %v1635 = vsub.s32 0, %v1634
        %v1636 = vrot.slane %v1077, %v1635
        %v1637 = vlaneseq
        %v1638 = vshrl.u32 %v1637, 7
        %v1639 = vsub.s32 1, %v1638
        %v1640 = vrot.slane %v1077, %v1639
        %v1641 = vlaneseq
        %v1642 = vshrl.u32 %v1641, 7
        %v1643 = vsub.s32 2, %v1642
        %v1644 = vrot.slane %v1077, %v1643
        %v1645 = vlaneseq
        %v1646 = vshrl.u32 %v1645, 7
        %v1647 = vsub.s32 3, %v1646
        %v1648 = vrot.slane %v1077, %v1647
        %v1649 = vlaneseq
        %v1650 = vshrl.u32 %v1649, 7
        %v1651 = vsub.s32 4, %v1650
        %v1652 = vrot.slane %v1077, %v1651
        %v1653 = vlaneseq
        %v1654 = vshrl.u32 %v1653, 7
        %v1655 = vsub.s32 5, %v1654
        %v1656 = vrot.slane %v1077, %v1655
        %v1657 = vlaneseq
        %v1658 = vshrl.u32 %v1657, 7
        %v1659 = vsub.s32 6, %v1658
        %v1660 = vrot.slane %v1077, %v1659
        %v1661 = vlaneseq
        %v1662 = vshrl.u32 %v1661, 7
        %v1663 = vsub.s32 7, %v1662
        %v1664 = vrot.slane %v1077, %v1663
        %v1665 = vlaneseq
        %v1666 = vshrl.u32 %v1665, 7
        %v1667 = vsub.s32 0, %v1666
        %v1668 = vrot.slane %v1074, %v1667
        %v1669 = vlaneseq
        %v1670 = vshrl.u32 %v1669, 7
        %v1671 = vsub.s32 1, %v1670
        %v1672 = vrot.slane %v1074, %v1671
        %v1673 = vlaneseq
        %v1674 = vshrl.u32 %v1673, 7
        %v1675 = vsub.s32 2, %v1674
        %v1676 = vrot.slane %v1074, %v1675
        %v1677 = vlaneseq
        %v1678 = vshrl.u32 %v1677, 7
        %v1679 = vsub.s32 3, %v1678
        %v1680 = vrot.slane %v1074, %v1679
        %v1681 = vlaneseq
        %v1682 = vshrl.u32 %v1681, 7
        %v1683 = vsub.s32 4, %v1682
        %v1684 = vrot.slane %v1074, %v1683
        %v1685 = vlaneseq
        %v1686 = vshrl.u32 %v1685, 7
        %v1687 = vsub.s32 5, %v1686
        %v1688 = vrot.slane %v1074, %v1687
        %v1689 = vlaneseq
        %v1690 = vshrl.u32 %v1689, 7
        %v1691 = vsub.s32 6, %v1690
        %v1692 = vrot.slane %v1074, %v1691
        %v1693 = vlaneseq
        %v1694 = vshrl.u32 %v1693, 7
        %v1695 = vsub.s32 7, %v1694
        %v1696 = vrot.slane %v1074, %v1695
        %v1697 = vlaneseq
        %v1698 = vshrl.u32 %v1697, 7
        %v1699 = vsub.s32 0, %v1698
        %v1700 = vrot.slane %v1078, %v1699
        %v1701 = vlaneseq
        %v1702 = vshrl.u32 %v1701, 7
        %v1703 = vsub.s32 1, %v1702
        %v1704 = vrot.slane %v1078, %v1703
        %v1705 = vlaneseq
        %v1706 = vshrl.u32 %v1705, 7
        %v1707 = vsub.s32 2, %v1706
        %v1708 = vrot.slane %v1078, %v1707
        %v1709 = vlaneseq
        %v1710 = vshrl.u32 %v1709, 7
        %v1711 = vsub.s32 3, %v1710
        %v1712 = vrot.slane %v1078, %v1711
        %v1713 = vlaneseq
        %v1714 = vshrl.u32 %v1713, 7
        %v1715 = vsub.s32 4, %v1714
        %v1716 = vrot.slane %v1078, %v1715
        %v1717 = vlaneseq
        %v1718 = vshrl.u32 %v1717, 7
        %v1719 = vsub.s32 5, %v1718
        %v1720 = vrot.slane %v1078, %v1719
        %v1721 = vlaneseq
        %v1722 = vshrl.u32 %v1721, 7
        %v1723 = vsub.s32 6, %v1722
        %v1724 = vrot.slane %v1078, %v1723
        %v1725 = vlaneseq
        %v1726 = vshrl.u32 %v1725, 7
        %v1727 = vsub.s32 7, %v1726
        %v1728 = vrot.slane %v1078, %v1727
        %v1729 = vlaneseq
        %v1730 = vshrl.u32 %v1729, 7
        %v1731 = vsub.s32 0, %v1730
        %v1732 = vrot.slane %v1075, %v1731
        %v1733 = vlaneseq
        %v1734 = vshrl.u32 %v1733, 7
        %v1735 = vsub.s32 1, %v1734
        %v1736 = vrot.slane %v1075, %v1735
        %v1737 = vlaneseq
        %v1738 = vshrl.u32 %v1737, 7
        %v1739 = vsub.s32 2, %v1738
        %v1740 = vrot.slane %v1075, %v1739
        %v1741 = vlaneseq
        %v1742 = vshrl.u32 %v1741, 7
        %v1743 = vsub.s32 3, %v1742
        %v1744 = vrot.slane %v1075, %v1743
        %v1745 = vlaneseq
        %v1746 = vshrl.u32 %v1745, 7
        %v1747 = vsub.s32 4, %v1746
        %v1748 = vrot.slane %v1075, %v1747
        %v1749 = vlaneseq
        %v1750 = vshrl.u32 %v1749, 7
        %v1751 = vsub.s32 5, %v1750
        %v1752 = vrot.slane %v1075, %v1751
        %v1753 = vlaneseq
        %v1754 = vshrl.u32 %v1753, 7
        %v1755 = vsub.s32 6, %v1754
        %v1756 = vrot.slane %v1075, %v1755
        %v1757 = vlaneseq
        %v1758 = vshrl.u32 %v1757, 7
        %v1759 = vsub.s32 7, %v1758
        %v1760 = vrot.slane %v1075, %v1759
        %v1761 = vlaneseq
        %v1762 = vshrl.u32 %v1761, 7
        %v1763 = vsub.s32 0, %v1762
        %v1764 = vrot.slane %v1079, %v1763
        %v1765 = vlaneseq
        %v1766 = vshrl.u32 %v1765, 7
        %v1767 = vsub.s32 1, %v1766
        %v1768 = vrot.slane %v1079, %v1767
        %v1769 = vlaneseq
        %v1770 = vshrl.u32 %v1769, 7
        %v1771 = vsub.s32 2, %v1770
        %v1772 = vrot.slane %v1079, %v1771
        %v1773 = vlaneseq
        %v1774 = vshrl.u32 %v1773, 7
        %v1775 = vsub.s32 3, %v1774
        %v1776 = vrot.slane %v1079, %v1775
        %v1777 = vlaneseq
        %v1778 = vshrl.u32 %v1777, 7
        %v1779 = vsub.s32 4, %v1778
        %v1780 = vrot.slane %v1079, %v1779
        %v1781 = vlaneseq
        %v1782 = vshrl.u32 %v1781, 7
        %v1783 = vsub.s32 5, %v1782
        %v1784 = vrot.slane %v1079, %v1783
        %v1785 = vlaneseq
        %v1786 = vshrl.u32 %v1785, 7
        %v1787 = vsub.s32 6, %v1786
        %v1788 = vrot.slane %v1079, %v1787
        %v1789 = vlaneseq
        %v1790 = vshrl.u32 %v1789, 7
        %v1791 = vsub.s32 7, %v1790
        %v1792 = vrot.slane %v1079, %v1791
        %v1793 = vlaneseq
        %v1794 = vshrl.u32 %v1793, 7
        %v1795 = vsub.s32 0, %v1794
        %v1796 = vrot.slane %v1208, %v1795
        %v1797 = vlaneseq
        %v1798 = vshrl.u32 %v1797, 7
        %v1799 = vsub.s32 1, %v1798
        %v1800 = vrot.slane %v1208, %v1799
        %v1801 = vlaneseq
        %v1802 = vshrl.u32 %v1801, 7
        %v1803 = vsub.s32 2, %v1802
        %v1804 = vrot.slane %v1208, %v1803
        %v1805 = vlaneseq
        %v1806 = vshrl.u32 %v1805, 7
        %v1807 = vsub.s32 3, %v1806
        %v1808 = vrot.slane %v1208, %v1807
        %v1809 = vlaneseq
        %v1810 = vshrl.u32 %v1809, 7
        %v1811 = vsub.s32 4, %v1810
        %v1812 = vrot.slane %v1208, %v1811
        %v1813 = vlaneseq
        %v1814 = vshrl.u32 %v1813, 7
        %v1815 = vsub.s32 5, %v1814
        %v1816 = vrot.slane %v1208, %v1815
        %v1817 = vlaneseq
        %v1818 = vshrl.u32 %v1817, 7
        %v1819 = vsub.s32 6, %v1818
        %v1820 = vrot.slane %v1208, %v1819
        %v1821 = vlaneseq
        %v1822 = vshrl.u32 %v1821, 7
        %v1823 = vsub.s32 7, %v1822
        %v1824 = vrot.slane %v1208, %v1823
        %v1825 = vlaneseq
        %v1826 = vshrl.u32 %v1825, 7
        %v1827 = vsub.s32 0, %v1826
        %v1828 = vrot.slane %v1212, %v1827
        %v1829 = vlaneseq
        %v1830 = vshrl.u32 %v1829, 7
        %v1831 = vsub.s32 1, %v1830
        %v1832 = vrot.slane %v1212, %v1831
        %v1833 = vlaneseq
        %v1834 = vshrl.u32 %v1833, 7
        %v1835 = vsub.s32 2, %v1834
        %v1836 = vrot.slane %v1212, %v1835
        %v1837 = vlaneseq
        %v1838 = vshrl.u32 %v1837, 7
        %v1839 = vsub.s32 3, %v1838
        %v1840 = vrot.slane %v1212, %v1839
        %v1841 = vlaneseq
        %v1842 = vshrl.u32 %v1841, 7
        %v1843 = vsub.s32 4, %v1842
        %v1844 = vrot.slane %v1212, %v1843
        %v1845 = vlaneseq
        %v1846 = vshrl.u32 %v1845, 7
        %v1847 = vsub.s32 5, %v1846
        %v1848 = vrot.slane %v1212, %v1847
        %v1849 = vlaneseq
        %v1850 = vshrl.u32 %v1849, 7
        %v1851 = vsub.s32 6, %v1850
        %v1852 = vrot.slane %v1212, %v1851
        %v1853 = vlaneseq
        %v1854 = vshrl.u32 %v1853, 7
        %v1855 = vsub.s32 7, %v1854
        %v1856 = vrot.slane %v1212, %v1855
        %v1857 = vlaneseq
        %v1858 = vshrl.u32 %v1857, 7
        %v1859 = vsub.s32 0, %v1858
        %v1860 = vrot.slane %v1209, %v1859
        %v1861 = vlaneseq
        %v1862 = vshrl.u32 %v1861, 7
        %v1863 = vsub.s32 1, %v1862
        %v1864 = vrot.slane %v1209, %v1863
        %v1865 = vlaneseq
        %v1866 = vshrl.u32 %v1865, 7
        %v1867 = vsub.s32 2, %v1866
        %v1868 = vrot.slane %v1209, %v1867
        %v1869 = vlaneseq
        %v1870 = vshrl.u32 %v1869, 7
        %v1871 = vsub.s32 3, %v1870
        %v1872 = vrot.slane %v1209, %v1871
        %v1873 = vlaneseq
        %v1874 = vshrl.u32 %v1873, 7
        %v1875 = vsub.s32 4, %v1874
        %v1876 = vrot.slane %v1209, %v1875
        %v1877 = vlaneseq
        %v1878 = vshrl.u32 %v1877, 7
        %v1879 = vsub.s32 5, %v1878
        %v1880 = vrot.slane %v1209, %v1879
        %v1881 = vlaneseq
        %v1882 = vshrl.u32 %v1881, 7
        %v1883 = vsub.s32 6, %v1882
        %v1884 = vrot.slane %v1209, %v1883
        %v1885 = vlaneseq
        %v1886 = vshrl.u32 %v1885, 7
        %v1887 = vsub.s32 7, %v1886
        %v1888 = vrot.slane %v1209, %v1887
        %v1889 = vlaneseq
        %v1890 = vshrl.u32 %v1889, 7
        %v1891 = vsub.s32 0, %v1890
        %v1892 = vrot.slane %v1213, %v1891
        %v1893 = vlaneseq
        %v1894 = vshrl.u32 %v1893, 7
        %v1895 = vsub.s32 1, %v1894
        %v1896 = vrot.slane %v1213, %v1895
        %v1897 = vlaneseq
        %v1898 = vshrl.u32 %v1897, 7
        %v1899 = vsub.s32 2, %v1898
        %v1900 = vrot.slane %v1213, %v1899
        %v1901 = vlaneseq
        %v1902 = vshrl.u32 %v1901, 7
        %v1903 = vsub.s32 3, %v1902
        %v1904 = vrot.slane %v1213, %v1903
        %v1905 = vlaneseq
        %v1906 = vshrl.u32 %v1905, 7
        %v1907 = vsub.s32 4, %v1906
        %v1908 = vrot.slane %v1213, %v1907
        %v1909 = vlaneseq
        %v1910 = vshrl.u32 %v1909, 7
        %v1911 = vsub.s32 5, %v1910
        %v1912 = vrot.slane %v1213, %v1911
        %v1913 = vlaneseq
        %v1914 = vshrl.u32 %v1913, 7
        %v1915 = vsub.s32 6, %v1914
        %v1916 = vrot.slane %v1213, %v1915
        %v1917 = vlaneseq
        %v1918 = vshrl.u32 %v1917, 7
        %v1919 = vsub.s32 7, %v1918
        %v1920 = vrot.slane %v1213, %v1919
        %v1921 = vlaneseq
        %v1922 = vshrl.u32 %v1921, 7
        %v1923 = vsub.s32 0, %v1922
        %v1924 = vrot.slane %v1210, %v1923
        %v1925 = vlaneseq
        %v1926 = vshrl.u32 %v1925, 7
        %v1927 = vsub.s32 1, %v1926
        %v1928 = vrot.slane %v1210, %v1927
        %v1929 = vlaneseq
        %v1930 = vshrl.u32 %v1929, 7
        %v1931 = vsub.s32 2, %v1930
        %v1932 = vrot.slane %v1210, %v1931
        %v1933 = vlaneseq
        %v1934 = vshrl.u32 %v1933, 7
        %v1935 = vsub.s32 3, %v1934
        %v1936 = vrot.slane %v1210, %v1935
        %v1937 = vlaneseq
        %v1938 = vshrl.u32 %v1937, 7
        %v1939 = vsub.s32 4, %v1938
        %v1940 = vrot.slane %v1210, %v1939
        %v1941 = vlaneseq
        %v1942 = vshrl.u32 %v1941, 7
        %v1943 = vsub.s32 5, %v1942
        %v1944 = vrot.slane %v1210, %v1943
        %v1945 = vlaneseq
        %v1946 = vshrl.u32 %v1945, 7
        %v1947 = vsub.s32 6, %v1946
        %v1948 = vrot.slane %v1210, %v1947
        %v1949 = vlaneseq
        %v1950 = vshrl.u32 %v1949, 7
        %v1951 = vsub.s32 7, %v1950
        %v1952 = vrot.slane %v1210, %v1951
        %v1953 = vlaneseq
        %v1954 = vshrl.u32 %v1953, 7
        %v1955 = vsub.s32 0, %v1954
        %v1956 = vrot.slane %v1214, %v1955
        %v1957 = vlaneseq
        %v1958 = vshrl.u32 %v1957, 7
        %v1959 = vsub.s32 1, %v1958
        %v1960 = vrot.slane %v1214, %v1959
        %v1961 = vlaneseq
        %v1962 = vshrl.u32 %v1961, 7
        %v1963 = vsub.s32 2, %v1962
        %v1964 = vrot.slane %v1214, %v1963
        %v1965 = vlaneseq
        %v1966 = vshrl.u32 %v1965, 7
        %v1967 = vsub.s32 3, %v1966
        %v1968 = vrot.slane %v1214, %v1967
        %v1969 = vlaneseq
        %v1970 = vshrl.u32 %v1969, 7
        %v1971 = vsub.s32 4, %v1970
        %v1972 = vrot.slane %v1214, %v1971
        %v1973 = vlaneseq
        %v1974 = vshrl.u32 %v1973, 7
        %v1975 = vsub.s32 5, %v1974
        %v1976 = vrot.slane %v1214, %v1975
        %v1977 = vlaneseq
        %v1978 = vshrl.u32 %v1977, 7
        %v1979 = vsub.s32 6, %v1978
        %v1980 = vrot.slane %v1214, %v1979
        %v1981 = vlaneseq
        %v1982 = vshrl.u32 %v1981, 7
        %v1983 = vsub.s32 7, %v1982
        %v1984 = vrot.slane %v1214, %v1983
        %v1985 = vlaneseq
        %v1986 = vshrl.u32 %v1985, 7
        %v1987 = vsub.s32 0, %v1986
        %v1988 = vrot.slane %v1211, %v1987
        %v1989 = vlaneseq
        %v1990 = vshrl.u32 %v1989, 7
        %v1991 = vsub.s32 1, %v1990
        %v1992 = vrot.slane %v1211, %v1991
        %v1993 = vlaneseq
        %v1994 = vshrl.u32 %v1993, 7
        %v1995 = vsub.s32 2, %v1994
        %v1996 = vrot.slane %v1211, %v1995
        %v1997 = vlaneseq
        %v1998 = vshrl.u32 %v1997, 7
        %v1999 = vsub.s32 3, %v1998
        %v2000 = vrot.slane %v1211, %v1999
        %v2001 = vlaneseq
        %v2002 = vshrl.u32 %v2001, 7
        %v2003 = vsub.s32 4, %v2002
        %v2004 = vrot.slane %v1211, %v2003
        %v2005 = vlaneseq
        %v2006 = vshrl.u32 %v2005, 7
        %v2007 = vsub.s32 5, %v2006
        %v2008 = vrot.slane %v1211, %v2007
        %v2009 = vlaneseq
        %v2010 = vshrl.u32 %v2009, 7
        %v2011 = vsub.s32 6, %v2010
        %v2012 = vrot.slane %v1211, %v2011
        %v2013 = vlaneseq
        %v2014 = vshrl.u32 %v2013, 7
        %v2015 = vsub.s32 7, %v2014
        %v2016 = vrot.slane %v1211, %v2015
        %v2017 = vlaneseq
        %v2018 = vshrl.u32 %v2017, 7
        %v2019 = vsub.s32 0, %v2018
        %v2020 = vrot.slane %v1215, %v2019
        %v2021 = vlaneseq
        %v2022 = vshrl.u32 %v2021, 7
        %v2023 = vsub.s32 1, %v2022
        %v2024 = vrot.slane %v1215, %v2023
        %v2025 = vlaneseq
        %v2026 = vshrl.u32 %v2025, 7
        %v2027 = vsub.s32 2, %v2026
        %v2028 = vrot.slane %v1215, %v2027
        %v2029 = vlaneseq
        %v2030 = vshrl.u32 %v2029, 7
        %v2031 = vsub.s32 3, %v2030
        %v2032 = vrot.slane %v1215, %v2031
        %v2033 = vlaneseq
        %v2034 = vshrl.u32 %v2033, 7
        %v2035 = vsub.s32 4, %v2034
        %v2036 = vrot.slane %v1215, %v2035
        %v2037 = vlaneseq
        %v2038 = vshrl.u32 %v2037, 7
        %v2039 = vsub.s32 5, %v2038
        %v2040 = vrot.slane %v1215, %v2039
        %v2041 = vlaneseq
        %v2042 = vshrl.u32 %v2041, 7
        %v2043 = vsub.s32 6, %v2042
        %v2044 = vrot.slane %v1215, %v2043
        %v2045 = vlaneseq
        %v2046 = vshrl.u32 %v2045, 7
        %v2047 = vsub.s32 7, %v2046
        %v2048 = vrot.slane %v1215, %v2047
        %v2049 = vlaneseq
        %v2050 = vshrl.u32 %v2049, 7
        %v2051 = vsub.s32 0, %v2050
        %v2052 = vrot.slane %v1344, %v2051
        %v2053 = vlaneseq
        %v2054 = vshrl.u32 %v2053, 7
        %v2055 = vsub.s32 1, %v2054
        %v2056 = vrot.slane %v1344, %v2055
        %v2057 = vlaneseq
        %v2058 = vshrl.u32 %v2057, 7
        %v2059 = vsub.s32 2, %v2058
        %v2060 = vrot.slane %v1344, %v2059
        %v2061 = vlaneseq
        %v2062 = vshrl.u32 %v2061, 7
        %v2063 = vsub.s32 3, %v2062
        %v2064 = vrot.slane %v1344, %v2063
        %v2065 = vlaneseq
        %v2066 = vshrl.u32 %v2065, 7
        %v2067 = vsub.s32 4, %v2066
        %v2068 = vrot.slane %v1344, %v2067
        %v2069 = vlaneseq
        %v2070 = vshrl.u32 %v2069, 7
        %v2071 = vsub.s32 5, %v2070
        %v2072 = vrot.slane %v1344, %v2071
        %v2073 = vlaneseq
        %v2074 = vshrl.u32 %v2073, 7
        %v2075 = vsub.s32 6, %v2074
        %v2076 = vrot.slane %v1344, %v2075
        %v2077 = vlaneseq
        %v2078 = vshrl.u32 %v2077, 7
        %v2079 = vsub.s32 7, %v2078
        %v2080 = vrot.slane %v1344, %v2079
        %v2081 = vlaneseq
        %v2082 = vshrl.u32 %v2081, 7
        %v2083 = vsub.s32 0, %v2082
        %v2084 = vrot.slane %v1348, %v2083
        %v2085 = vlaneseq
        %v2086 = vshrl.u32 %v2085, 7
        %v2087 = vsub.s32 1, %v2086
        %v2088 = vrot.slane %v1348, %v2087
        %v2089 = vlaneseq
        %v2090 = vshrl.u32 %v2089, 7
        %v2091 = vsub.s32 2, %v2090
        %v2092 = vrot.slane %v1348, %v2091
        %v2093 = vlaneseq
        %v2094 = vshrl.u32 %v2093, 7
        %v2095 = vsub.s32 3, %v2094
        %v2096 = vrot.slane %v1348, %v2095
        %v2097 = vlaneseq
        %v2098 = vshrl.u32 %v2097, 7
        %v2099 = vsub.s32 4, %v2098
        %v2100 = vrot.slane %v1348, %v2099
        %v2101 = vlaneseq
        %v2102 = vshrl.u32 %v2101, 7
        %v2103 = vsub.s32 5, %v2102
        %v2104 = vrot.slane %v1348, %v2103
        %v2105 = vlaneseq
        %v2106 = vshrl.u32 %v2105, 7
        %v2107 = vsub.s32 6, %v2106
        %v2108 = vrot.slane %v1348, %v2107
        %v2109 = vlaneseq
        %v2110 = vshrl.u32 %v2109, 7
        %v2111 = vsub.s32 7, %v2110
        %v2112 = vrot.slane %v1348, %v2111
        %v2113 = vlaneseq
        %v2114 = vshrl.u32 %v2113, 7
        %v2115 = vsub.s32 0, %v2114
        %v2116 = vrot.slane %v1345, %v2115
        %v2117 = vlaneseq
        %v2118 = vshrl.u32 %v2117, 7
        %v2119 = vsub.s32 1, %v2118
        %v2120 = vrot.slane %v1345, %v2119
        %v2121 = vlaneseq
        %v2122 = vshrl.u32 %v2121, 7
        %v2123 = vsub.s32 2, %v2122
        %v2124 = vrot.slane %v1345, %v2123
        %v2125 = vlaneseq
        %v2126 = vshrl.u32 %v2125, 7
        %v2127 = vsub.s32 3, %v2126
        %v2128 = vrot.slane %v1345, %v2127
        %v2129 = vlaneseq
        %v2130 = vshrl.u32 %v2129, 7
        %v2131 = vsub.s32 4, %v2130
        %v2132 = vrot.slane %v1345, %v2131
        %v2133 = vlaneseq
        %v2134 = vshrl.u32 %v2133, 7
        %v2135 = vsub.s32 5, %v2134
        %v2136 = vrot.slane %v1345, %v2135
        %v2137 = vlaneseq
        %v2138 = vshrl.u32 %v2137, 7
        %v2139 = vsub.s32 6, %v2138
        %v2140 = vrot.slane %v1345, %v2139
        %v2141 = vlaneseq
        %v2142 = vshrl.u32 %v2141, 7
        %v2143 = vsub.s32 7, %v2142
        %v2144 = vrot.slane %v1345, %v2143
        %v2145 = vlaneseq
        %v2146 = vshrl.u32 %v2145, 7
        %v2147 = vsub.s32 0, %v2146
        %v2148 = vrot.slane %v1349, %v2147
        %v2149 = vlaneseq
        %v2150 = vshrl.u32 %v2149, 7
        %v2151 = vsub.s32 1, %v2150
        %v2152 = vrot.slane %v1349, %v2151
        %v2153 = vlaneseq
        %v2154 = vshrl.u32 %v2153, 7
        %v2155 = vsub.s32 2, %v2154
        %v2156 = vrot.slane %v1349, %v2155
        %v2157 = vlaneseq
        %v2158 = vshrl.u32 %v2157, 7
        %v2159 = vsub.s32 3, %v2158
        %v2160 = vrot.slane %v1349, %v2159
        %v2161 = vlaneseq
        %v2162 = vshrl.u32 %v2161, 7
        %v2163 = vsub.s32 4, %v2162
        %v2164 = vrot.slane %v1349, %v2163
        %v2165 = vlaneseq
        %v2166 = vshrl.u32 %v2165, 7
        %v2167 = vsub.s32 5, %v2166
        %v2168 = vrot.slane %v1349, %v2167
        %v2169 = vlaneseq
        %v2170 = vshrl.u32 %v2169, 7
        %v2171 = vsub.s32 6, %v2170
        %v2172 = vrot.slane %v1349, %v2171
        %v2173 = vlaneseq
        %v2174 = vshrl.u32 %v2173, 7
        %v2175 = vsub.s32 7, %v2174
        %v2176 = vrot.slane %v1349, %v2175
        %v2177 = vlaneseq
        %v2178 = vshrl.u32 %v2177, 7
        %v2179 = vsub.s32 0, %v2178
        %v2180 = vrot.slane %v1346, %v2179
        %v2181 = vlaneseq
        %v2182 = vshrl.u32 %v2181, 7
        %v2183 = vsub.s32 1, %v2182
        %v2184 = vrot.slane %v1346, %v2183
        %v2185 = vlaneseq
        %v2186 = vshrl.u32 %v2185, 7
        %v2187 = vsub.s32 2, %v2186
        %v2188 = vrot.slane %v1346, %v2187
        %v2189 = vlaneseq
        %v2190 = vshrl.u32 %v2189, 7
        %v2191 = vsub.s32 3, %v2190
        %v2192 = vrot.slane %v1346, %v2191
        %v2193 = vlaneseq
        %v2194 = vshrl.u32 %v2193, 7
        %v2195 = vsub.s32 4, %v2194
        %v2196 = vrot.slane %v1346, %v2195
        %v2197 = vlaneseq
        %v2198 = vshrl.u32 %v2197, 7
        %v2199 = vsub.s32 5, %v2198
        %v2200 = vrot.slane %v1346, %v2199
        %v2201 = vlaneseq
        %v2202 = vshrl.u32 %v2201, 7
        %v2203 = vsub.s32 6, %v2202
        %v2204 = vrot.slane %v1346, %v2203
        %v2205 = vlaneseq
        %v2206 = vshrl.u32 %v2205, 7
        %v2207 = vsub.s32 7, %v2206
        %v2208 = vrot.slane %v1346, %v2207
        %v2209 = vlaneseq
        %v2210 = vshrl.u32 %v2209, 7
        %v2211 = vsub.s32 0, %v2210
        %v2212 = vrot.slane %v1350, %v2211
        %v2213 = vlaneseq
        %v2214 = vshrl.u32 %v2213, 7
        %v2215 = vsub.s32 1, %v2214
        %v2216 = vrot.slane %v1350, %v2215
        %v2217 = vlaneseq
        %v2218 = vshrl.u32 %v2217, 7
        %v2219 = vsub.s32 2, %v2218
        %v2220 = vrot.slane %v1350, %v2219
        %v2221 = vlaneseq
        %v2222 = vshrl.u32 %v2221, 7
        %v2223 = vsub.s32 3, %v2222
        %v2224 = vrot.slane %v1350, %v2223
        %v2225 = vlaneseq
        %v2226 = vshrl.u32 %v2225, 7
        %v2227 = vsub.s32 4, %v2226
        %v2228 = vrot.slane %v1350, %v2227
        %v2229 = vlaneseq
        %v2230 = vshrl.u32 %v2229, 7
        %v2231 = vsub.s32 5, %v2230
        %v2232 = vrot.slane %v1350, %v2231
        %v2233 = vlaneseq
        %v2234 = vshrl.u32 %v2233, 7
        %v2235 = vsub.s32 6, %v2234
        %v2236 = vrot.slane %v1350, %v2235
        %v2237 = vlaneseq
        %v2238 = vshrl.u32 %v2237, 7
        %v2239 = vsub.s32 7, %v2238
        %v2240 = vrot.slane %v1350, %v2239
        %v2241 = vlaneseq
        %v2242 = vshrl.u32 %v2241, 7
        %v2243 = vsub.s32 0, %v2242
        %v2244 = vrot.slane %v1347, %v2243
        %v2245 = vlaneseq
        %v2246 = vshrl.u32 %v2245, 7
        %v2247 = vsub.s32 1, %v2246
        %v2248 = vrot.slane %v1347, %v2247
        %v2249 = vlaneseq
        %v2250 = vshrl.u32 %v2249, 7
        %v2251 = vsub.s32 2, %v2250
        %v2252 = vrot.slane %v1347, %v2251
        %v2253 = vlaneseq
        %v2254 = vshrl.u32 %v2253, 7
        %v2255 = vsub.s32 3, %v2254
        %v2256 = vrot.slane %v1347, %v2255
        %v2257 = vlaneseq
        %v2258 = vshrl.u32 %v2257, 7
        %v2259 = vsub.s32 4, %v2258
        %v2260 = vrot.slane %v1347, %v2259
        %v2261 = vlaneseq
        %v2262 = vshrl.u32 %v2261, 7
        %v2263 = vsub.s32 5, %v2262
        %v2264 = vrot.slane %v1347, %v2263
        %v2265 = vlaneseq
        %v2266 = vshrl.u32 %v2265, 7
        %v2267 = vsub.s32 6, %v2266
        %v2268 = vrot.slane %v1347, %v2267
        %v2269 = vlaneseq
        %v2270 = vshrl.u32 %v2269, 7
        %v2271 = vsub.s32 7, %v2270
        %v2272 = vrot.slane %v1347, %v2271
        %v2273 = vlaneseq
        %v2274 = vshrl.u32 %v2273, 7
        %v2275 = vsub.s32 0, %v2274
        %v2276 = vrot.slane %v1351, %v2275
        %v2277 = vlaneseq
        %v2278 = vshrl.u32 %v2277, 7
        %v2279 = vsub.s32 1, %v2278
        %v2280 = vrot.slane %v1351, %v2279
        %v2281 = vlaneseq
        %v2282 = vshrl.u32 %v2281, 7
        %v2283 = vsub.s32 2, %v2282
        %v2284 = vrot.slane %v1351, %v2283
        %v2285 = vlaneseq
        %v2286 = vshrl.u32 %v2285, 7
        %v2287 = vsub.s32 3, %v2286
        %v2288 = vrot.slane %v1351, %v2287
        %v2289 = vlaneseq
        %v2290 = vshrl.u32 %v2289, 7
        %v2291 = vsub.s32 4, %v2290
        %v2292 = vrot.slane %v1351, %v2291
        %v2293 = vlaneseq
        %v2294 = vshrl.u32 %v2293, 7
        %v2295 = vsub.s32 5, %v2294
        %v2296 = vrot.slane %v1351, %v2295
        %v2297 = vlaneseq
        %v2298 = vshrl.u32 %v2297, 7
        %v2299 = vsub.s32 6, %v2298
        %v2300 = vrot.slane %v1351, %v2299
        %v2301 = vlaneseq
        %v2302 = vshrl.u32 %v2301, 7
        %v2303 = vsub.s32 7, %v2302
        %v2304 = vrot.slane %v1351, %v2303
        %v2305 = vlaneseq
        %v2306 = vshrl.u32 %v2305, 7
        %v2307 = vsub.s32 0, %v2306
        %v2308 = vrot.slane %v1480, %v2307
        %v2309 = vlaneseq
        %v2310 = vshrl.u32 %v2309, 7
        %v2311 = vsub.s32 1, %v2310
        %v2312 = vrot.slane %v1480, %v2311
        %v2313 = vlaneseq
        %v2314 = vshrl.u32 %v2313, 7
        %v2315 = vsub.s32 2, %v2314
        %v2316 = vrot.slane %v1480, %v2315
        %v2317 = vlaneseq
        %v2318 = vshrl.u32 %v2317, 7
        %v2319 = vsub.s32 3, %v2318
        %v2320 = vrot.slane %v1480, %v2319
        %v2321 = vlaneseq
        %v2322 = vshrl.u32 %v2321, 7
        %v2323 = vsub.s32 4, %v2322
        %v2324 = vrot.slane %v1480, %v2323
        %v2325 = vlaneseq
        %v2326 = vshrl.u32 %v2325, 7
        %v2327 = vsub.s32 5, %v2326
        %v2328 = vrot.slane %v1480, %v2327
        %v2329 = vlaneseq
        %v2330 = vshrl.u32 %v2329, 7
        %v2331 = vsub.s32 6, %v2330
        %v2332 = vrot.slane %v1480, %v2331
        %v2333 = vlaneseq
        %v2334 = vshrl.u32 %v2333, 7
        %v2335 = vsub.s32 7, %v2334
        %v2336 = vrot.slane %v1480, %v2335
        %v2337 = vlaneseq
        %v2338 = vshrl.u32 %v2337, 7
        %v2339 = vsub.s32 0, %v2338
        %v2340 = vrot.slane %v1484, %v2339
        %v2341 = vlaneseq
        %v2342 = vshrl.u32 %v2341, 7
        %v2343 = vsub.s32 1, %v2342
        %v2344 = vrot.slane %v1484, %v2343
        %v2345 = vlaneseq
        %v2346 = vshrl.u32 %v2345, 7
        %v2347 = vsub.s32 2, %v2346
        %v2348 = vrot.slane %v1484, %v2347
        %v2349 = vlaneseq
        %v2350 = vshrl.u32 %v2349, 7
        %v2351 = vsub.s32 3, %v2350
        %v2352 = vrot.slane %v1484, %v2351
        %v2353 = vlaneseq
        %v2354 = vshrl.u32 %v2353, 7
        %v2355 = vsub.s32 4, %v2354
        %v2356 = vrot.slane %v1484, %v2355
        %v2357 = vlaneseq
        %v2358 = vshrl.u32 %v2357, 7
        %v2359 = vsub.s32 5, %v2358
        %v2360 = vrot.slane %v1484, %v2359
        %v2361 = vlaneseq
        %v2362 = vshrl.u32 %v2361, 7
        %v2363 = vsub.s32 6, %v2362
        %v2364 = vrot.slane %v1484, %v2363
        %v2365 = vlaneseq
        %v2366 = vshrl.u32 %v2365, 7
        %v2367 = vsub.s32 7, %v2366
        %v2368 = vrot.slane %v1484, %v2367
        %v2369 = vlaneseq
        %v2370 = vshrl.u32 %v2369, 7
        %v2371 = vsub.s32 0, %v2370
        %v2372 = vrot.slane %v1481, %v2371
        %v2373 = vlaneseq
        %v2374 = vshrl.u32 %v2373, 7
        %v2375 = vsub.s32 1, %v2374
        %v2376 = vrot.slane %v1481, %v2375
        %v2377 = vlaneseq
        %v2378 = vshrl.u32 %v2377, 7
        %v2379 = vsub.s32 2, %v2378
        %v2380 = vrot.slane %v1481, %v2379
        %v2381 = vlaneseq
        %v2382 = vshrl.u32 %v2381, 7
        %v2383 = vsub.s32 3, %v2382
        %v2384 = vrot.slane %v1481, %v2383
        %v2385 = vlaneseq
        %v2386 = vshrl.u32 %v2385, 7
        %v2387 = vsub.s32 4, %v2386
        %v2388 = vrot.slane %v1481, %v2387
        %v2389 = vlaneseq
        %v2390 = vshrl.u32 %v2389, 7
        %v2391 = vsub.s32 5, %v2390
        %v2392 = vrot.slane %v1481, %v2391
        %v2393 = vlaneseq
        %v2394 = vshrl.u32 %v2393, 7
        %v2395 = vsub.s32 6, %v2394
        %v2396 = vrot.slane %v1481, %v2395
        %v2397 = vlaneseq
        %v2398 = vshrl.u32 %v2397, 7
        %v2399 = vsub.s32 7, %v2398
        %v2400 = vrot.slane %v1481, %v2399
        %v2401 = vlaneseq
        %v2402 = vshrl.u32 %v2401, 7
        %v2403 = vsub.s32 0, %v2402
        %v2404 = vrot.slane %v1485, %v2403
        %v2405 = vlaneseq
        %v2406 = vshrl.u32 %v2405, 7
        %v2407 = vsub.s32 1, %v2406
        %v2408 = vrot.slane %v1485, %v2407
        %v2409 = vlaneseq
        %v2410 = vshrl.u32 %v2409, 7
        %v2411 = vsub.s32 2, %v2410
        %v2412 = vrot.slane %v1485, %v2411
        %v2413 = vlaneseq
        %v2414 = vshrl.u32 %v2413, 7
        %v2415 = vsub.s32 3, %v2414
        %v2416 = vrot.slane %v1485, %v2415
        %v2417 = vlaneseq
        %v2418 = vshrl.u32 %v2417, 7
        %v2419 = vsub.s32 4, %v2418
        %v2420 = vrot.slane %v1485, %v2419
        %v2421 = vlaneseq
        %v2422 = vshrl.u32 %v2421, 7
        %v2423 = vsub.s32 5, %v2422
        %v2424 = vrot.slane %v1485, %v2423
        %v2425 = vlaneseq
        %v2426 = vshrl.u32 %v2425, 7
        %v2427 = vsub.s32 6, %v2426
        %v2428 = vrot.slane %v1485, %v2427
        %v2429 = vlaneseq
        %v2430 = vshrl.u32 %v2429, 7
        %v2431 = vsub.s32 7, %v2430
        %v2432 = vrot.slane %v1485, %v2431
        %v2433 = vlaneseq
        %v2434 = vshrl.u32 %v2433, 7
        %v2435 = vsub.s32 0, %v2434
        %v2436 = vrot.slane %v1482, %v2435
        %v2437 = vlaneseq
        %v2438 = vshrl.u32 %v2437, 7
        %v2439 = vsub.s32 1, %v2438
        %v2440 = vrot.slane %v1482, %v2439
        %v2441 = vlaneseq
        %v2442 = vshrl.u32 %v2441, 7
        %v2443 = vsub.s32 2, %v2442
        %v2444 = vrot.slane %v1482, %v2443
        %v2445 = vlaneseq
        %v2446 = vshrl.u32 %v2445, 7
        %v2447 = vsub.s32 3, %v2446
        %v2448 = vrot.slane %v1482, %v2447
        %v2449 = vlaneseq
        %v2450 = vshrl.u32 %v2449, 7
        %v2451 = vsub.s32 4, %v2450
        %v2452 = vrot.slane %v1482, %v2451
        %v2453 = vlaneseq
        %v2454 = vshrl.u32 %v2453, 7
        %v2455 = vsub.s32 5, %v2454
        %v2456 = vrot.slane %v1482, %v2455
        %v2457 = vlaneseq
        %v2458 = vshrl.u32 %v2457, 7
        %v2459 = vsub.s32 6, %v2458
        %v2460 = vrot.slane %v1482, %v2459
        %v2461 = vlaneseq
        %v2462 = vshrl.u32 %v2461, 7
        %v2463 = vsub.s32 7, %v2462
        %v2464 = vrot.slane %v1482, %v2463
        %v2465 = vlaneseq
        %v2466 = vshrl.u32 %v2465, 7
        %v2467 = vsub.s32 0, %v2466
        %v2468 = vrot.slane %v1486, %v2467
        %v2469 = vlaneseq
        %v2470 = vshrl.u32 %v2469, 7
        %v2471 = vsub.s32 1, %v2470
        %v2472 = vrot.slane %v1486, %v2471
        %v2473 = vlaneseq
        %v2474 = vshrl.u32 %v2473, 7
        %v2475 = vsub.s32 2, %v2474
        %v2476 = vrot.slane %v1486, %v2475
        %v2477 = vlaneseq
        %v2478 = vshrl.u32 %v2477, 7
        %v2479 = vsub.s32 3, %v2478
        %v2480 = vrot.slane %v1486, %v2479
        %v2481 = vlaneseq
        %v2482 = vshrl.u32 %v2481, 7
        %v2483 = vsub.s32 4, %v2482
        %v2484 = vrot.slane %v1486, %v2483
        %v2485 = vlaneseq
        %v2486 = vshrl.u32 %v2485, 7
        %v2487 = vsub.s32 5, %v2486
        %v2488 = vrot.slane %v1486, %v2487
        %v2489 = vlaneseq
        %v2490 = vshrl.u32 %v2489, 7
        %v2491 = vsub.s32 6, %v2490
        %v2492 = vrot.slane %v1486, %v2491
        %v2493 = vlaneseq
        %v2494 = vshrl.u32 %v2493, 7
        %v2495 = vsub.s32 7, %v2494
        %v2496 = vrot.slane %v1486, %v2495
        %v2497 = vlaneseq
        %v2498 = vshrl.u32 %v2497, 7
        %v2499 = vsub.s32 0, %v2498
        %v2500 = vrot.slane %v1483, %v2499
        %v2501 = vlaneseq
        %v2502 = vshrl.u32 %v2501, 7
        %v2503 = vsub.s32 1, %v2502
        %v2504 = vrot.slane %v1483, %v2503
        %v2505 = vlaneseq
        %v2506 = vshrl.u32 %v2505, 7
        %v2507 = vsub.s32 2, %v2506
        %v2508 = vrot.slane %v1483, %v2507
        %v2509 = vlaneseq
        %v2510 = vshrl.u32 %v2509, 7
        %v2511 = vsub.s32 3, %v2510
        %v2512 = vrot.slane %v1483, %v2511
        %v2513 = vlaneseq
        %v2514 = vshrl.u32 %v2513, 7
        %v2515 = vsub.s32 4, %v2514
        %v2516 = vrot.slane %v1483, %v2515
        %v2517 = vlaneseq
        %v2518 = vshrl.u32 %v2517, 7
        %v2519 = vsub.s32 5, %v2518
        %v2520 = vrot.slane %v1483, %v2519
        %v2521 = vlaneseq
        %v2522 = vshrl.u32 %v2521, 7
        %v2523 = vsub.s32 6, %v2522
        %v2524 = vrot.slane %v1483, %v2523
        %v2525 = vlaneseq
        %v2526 = vshrl.u32 %v2525, 7
        %v2527 = vsub.s32 7, %v2526
        %v2528 = vrot.slane %v1483, %v2527
        %v2529 = vlaneseq
        %v2530 = vshrl.u32 %v2529, 7
        %v2531 = vsub.s32 0, %v2530
        %v2532 = vrot.slane %v1487, %v2531
        %v2533 = vlaneseq
        %v2534 = vshrl.u32 %v2533, 7
        %v2535 = vsub.s32 1, %v2534
        %v2536 = vrot.slane %v1487, %v2535
        %v2537 = vlaneseq
        %v2538 = vshrl.u32 %v2537, 7
        %v2539 = vsub.s32 2, %v2538
        %v2540 = vrot.slane %v1487, %v2539
        %v2541 = vlaneseq
        %v2542 = vshrl.u32 %v2541, 7
        %v2543 = vsub.s32 3, %v2542
        %v2544 = vrot.slane %v1487, %v2543
        %v2545 = vlaneseq
        %v2546 = vshrl.u32 %v2545, 7
        %v2547 = vsub.s32 4, %v2546
        %v2548 = vrot.slane %v1487, %v2547
        %v2549 = vlaneseq
        %v2550 = vshrl.u32 %v2549, 7
        %v2551 = vsub.s32 5, %v2550
        %v2552 = vrot.slane %v1487, %v2551
        %v2553 = vlaneseq
        %v2554 = vshrl.u32 %v2553, 7
        %v2555 = vsub.s32 6, %v2554
        %v2556 = vrot.slane %v1487, %v2555
        %v2557 = vlaneseq
        %v2558 = vshrl.u32 %v2557, 7
        %v2559 = vsub.s32 7, %v2558
        %v2560 = vrot.slane %v1487, %v2559
        %v2561 = vlaneseq
        %v2562 = vshrl.u32 %v2561, 7
        %v2563 = vsub.s32 0, %v2562
        %v2564 = vrot.slane %v1536, %v2563
        %v2565 = vlaneseq
        %v2566 = vshrl.u32 %v2565, 7
        %v2567 = vsub.s32 1, %v2566
        %v2568 = vrot.slane %v1536, %v2567
        %v2569 = vlaneseq
        %v2570 = vshrl.u32 %v2569, 7
        %v2571 = vsub.s32 2, %v2570
        %v2572 = vrot.slane %v1536, %v2571
        %v2573 = vlaneseq
        %v2574 = vshrl.u32 %v2573, 7
        %v2575 = vsub.s32 3, %v2574
        %v2576 = vrot.slane %v1536, %v2575
        %v2577 = vlaneseq
        %v2578 = vshrl.u32 %v2577, 7
        %v2579 = vsub.s32 4, %v2578
        %v2580 = vrot.slane %v1536, %v2579
        %v2581 = vlaneseq
        %v2582 = vshrl.u32 %v2581, 7
        %v2583 = vsub.s32 5, %v2582
        %v2584 = vrot.slane %v1536, %v2583
        %v2585 = vlaneseq
        %v2586 = vshrl.u32 %v2585, 7
        %v2587 = vsub.s32 6, %v2586
        %v2588 = vrot.slane %v1536, %v2587
        %v2589 = vlaneseq
        %v2590 = vshrl.u32 %v2589, 7
        %v2591 = vsub.s32 7, %v2590
        %v2592 = vrot.slane %v1536, %v2591
        %v2857 = vmul.f32 %v1540, %v632
        %v2858 = vmul.f32 %v1544, %v633
        %v2859 = vmul.f32 %v1548, %v634
        %v2860 = vmul.f32 %v1552, %v635
        %v2861 = vmul.f32 %v1556, %v636
        %v2862 = vmul.f32 %v1560, %v637
        %v2863 = vmul.f32 %v1564, %v638
        %v2864 = vmul.f32 %v1568, %v639
        %v2865 = vmul.f32 %v1540, %v640
        %v2866 = vmul.f32 %v1544, %v641
        %v2867 = vmul.f32 %v1548, %v642
        %v2868 = vmul.f32 %v1552, %v643
        %v2869 = vmul.f32 %v1556, %v644
        %v2870 = vmul.f32 %v1560, %v645
        %v2871 = vmul.f32 %v1564, %v646
        %v2872 = vmul.f32 %v1568, %v647
        %v2873 = vmul.f32 %v1540, %v648
        %v2874 = vmul.f32 %v1544, %v649
        %v2875 = vmul.f32 %v1548, %v650
        %v2876 = vmul.f32 %v1552, %v651
        %v2877 = vmul.f32 %v1556, %v652
        %v2878 = vmul.f32 %v1560, %v653
        %v2879 = vmul.f32 %v1564, %v654
        %v2880 = vmul.f32 %v1568, %v655
        %v2881 = vmul.f32 %v1540, %v656
        %v2882 = vmul.f32 %v1544, %v657
        %v2883 = vmul.f32 %v1548, %v658
        %v2884 = vmul.f32 %v1552, %v659
        %v2885 = vmul.f32 %v1556, %v660
        %v2886 = vmul.f32 %v1560, %v661
        %v2887 = vmul.f32 %v1564, %v662
        %v2888 = vmul.f32 %v1568, %v663
        %v2889 = vmul.f32 %v1540, %v664
        %v2890 = vmul.f32 %v1544, %v665
        %v2891 = vmul.f32 %v1548, %v666
        %v2892 = vmul.f32 %v1552, %v667
        %v2893 = vmul.f32 %v1556, %v668
        %v2894 = vmul.f32 %v1560, %v669
        %v2895 = vmul.f32 %v1564, %v670
        %v2896 = vmul.f32 %v1568, %v671
        %v2897 = vmul.f32 %v1572, %v632
        %v2898 = vmul.f32 %v1576, %v633
        %v2899 = vmul.f32 %v1580, %v634
        %v2900 = vmul.f32 %v1584, %v635
        %v2901 = vmul.f32 %v1588, %v636
        %v2902 = vmul.f32 %v1592, %v637
        %v2903 = vmul.f32 %v1596, %v638
        %v2904 = vmul.f32 %v1600, %v639
        %v2905 = vmul.f32 %v1572, %v640
        %v2906 = vmul.f32 %v1576, %v641
        %v2907 = vmul.f32 %v1580, %v642
        %v2908 = vmul.f32 %v1584, %v643
        %v2909 = vmul.f32 %v1588, %v644
        %v2910 = vmul.f32 %v1592, %v645
        %v2911 = vmul.f32 %v1596, %v646
        %v2912 = vmul.f32 %v1600, %v647
        %v2913 = vmul.f32 %v1572, %v648
        %v2914 = vmul.f32 %v1576, %v649
        %v2915 = vmul.f32 %v1580, %v650
        %v2916 = vmul.f32 %v1584, %v651
        %v2917 = vmul.f32 %v1588, %v652
        %v2918 = vmul.f32 %v1592, %v653
        %v2919 = vmul.f32 %v1596, %v654
        %v2920 = vmul.f32 %v1600, %v655
        %v2921 = vmul.f32 %v1572, %v656
        %v2922 = vmul.f32 %v1576, %v657
        %v2923 = vmul.f32 %v1580, %v658
        %v2924 = vmul.f32 %v1584, %v659
        %v2925 = vmul.f32 %v1588, %v660
        %v2926 = vmul.f32 %v1592, %v661
        %v2927 = vmul.f32 %v1596, %v662
        %v2928 = vmul.f32 %v1600, %v663
        %v2929 = vmul.f32 %v1572, %v664
        %v2930 = vmul.f32 %v1576, %v665
        %v2931 = vmul.f32 %v1580, %v666
        %v2932 = vmul.f32 %v1584, %v667
        %v2933 = vmul.f32 %v1588, %v668
        %v2934 = vmul.f32 %v1592, %v669
        %v2935 = vmul.f32 %v1596, %v670
        %v2936 = vmul.f32 %v1600, %v671
        %v2937 = vmul.f32 %v1604, %v632
        %v2938 = vmul.f32 %v1608, %v633
        %v2939 = vmul.f32 %v1612, %v634
        %v2940 = vmul.f32 %v1616, %v635
        %v2941 = vmul.f32 %v1620, %v636
        %v2942 = vmul.f32 %v1624, %v637
        %v2943 = vmul.f32 %v1628, %v638
        %v2944 = vmul.f32 %v1632, %v639
        %v2945 = vmul.f32 %v1604, %v640
        %v2946 = vmul.f32 %v1608, %v641
        %v2947 = vmul.f32 %v1612, %v642
        %v2948 = vmul.f32 %v1616, %v643
        %v2949 = vmul.f32 %v1620, %v644
        %v2950 = vmul.f32 %v1624, %v645
        %v2951 = vmul.f32 %v1628, %v646
        %v2952 = vmul.f32 %v1632, %v647
        %v2953 = vmul.f32 %v1604, %v648
        %v2954 = vmul.f32 %v1608, %v649
        %v2955 = vmul.f32 %v1612, %v650
        %v2956 = vmul.f32 %v1616, %v651
        %v2957 = vmul.f32 %v1620, %v652
        %v2958 = vmul.f32 %v1624, %v653
        %v2959 = vmul.f32 %v1628, %v654
        %v2960 = vmul.f32 %v1632, %v655
        %v2961 = vmul.f32 %v1604, %v656
        %v2962 = vmul.f32 %v1608, %v657
        %v2963 = vmul.f32 %v1612, %v658
        %v2964 = vmul.f32 %v1616, %v659
        %v2965 = vmul.f32 %v1620, %v660
        %v2966 = vmul.f32 %v1624, %v661
        %v2967 = vmul.f32 %v1628, %v662
        %v2968 = vmul.f32 %v1632, %v663
        %v2969 = vmul.f32 %v1604, %v664
        %v2970 = vmul.f32 %v1608, %v665
        %v2971 = vmul.f32 %v1612, %v666
        %v2972 = vmul.f32 %v1616, %v667
        %v2973 = vmul.f32 %v1620, %v668
        %v2974 = vmul.f32 %v1624, %v669
        %v2975 = vmul.f32 %v1628, %v670
        %v2976 = vmul.f32 %v1632, %v671
        %v2977 = vmul.f32 %v1636, %v632
        %v2978 = vmul.f32 %v1640, %v633
        %v2979 = vmul.f32 %v1644, %v634
        %v2980 = vmul.f32 %v1648, %v635
        %v2981 = vmul.f32 %v1652, %v636
        %v2982 = vmul.f32 %v1656, %v637
        %v2983 = vmul.f32 %v1660, %v638
        %v2984 = vmul.f32 %v1664, %v639
        %v2985 = vmul.f32 %v1636, %v640
        %v2986 = vmul.f32 %v1640, %v641
        %v2987 = vmul.f32 %v1644, %v642
        %v2988 = vmul.f32 %v1648, %v643
        %v2989 = vmul.f32 %v1652, %v644
        %v2990 = vmul.f32 %v1656, %v645
        %v2991 = vmul.f32 %v1660, %v646
        %v2992 = vmul.f32 %v1664, %v647
        %v2993 = vmul.f32 %v1636, %v648
        %v2994 = vmul.f32 %v1640, %v649
        %v2995 = vmul.f32 %v1644, %v650
        %v2996 = vmul.f32 %v1648, %v651
        %v2997 = vmul.f32 %v1652, %v652
        %v2998 = vmul.f32 %v1656, %v653
        %v2999 = vmul.f32 %v1660, %v654
        %v3000 = vmul.f32 %v1664, %v655
        %v3001 = vmul.f32 %v1636, %v656
        %v3002 = vmul.f32 %v1640, %v657
        %v3003 = vmul.f32 %v1644, %v658
        %v3004 = vmul.f32 %v1648, %v659
        %v3005 = vmul.f32 %v1652, %v660
        %v3006 = vmul.f32 %v1656, %v661
        %v3007 = vmul.f32 %v1660, %v662
        %v3008 = vmul.f32 %v1664, %v663
        %v3009 = vmul.f32 %v1636, %v664
        %v3010 = vmul.f32 %v1640, %v665
        %v3011 = vmul.f32 %v1644, %v666
        %v3012 = vmul.f32 %v1648, %v667
        %v3013 = vmul.f32 %v1652, %v668
        %v3014 = vmul.f32 %v1656, %v669
        %v3015 = vmul.f32 %v1660, %v670
        %v3016 = vmul.f32 %v1664, %v671
        %v3017 = vmul.f32 %v1668, %v632
        %v3018 = vmul.f32 %v1672, %v633
        %v3019 = vmul.f32 %v1676, %v634
        %v3020 = vmul.f32 %v1680, %v635
        %v3021 = vmul.f32 %v1684, %v636
        %v3022 = vmul.f32 %v1688, %v637
        %v3023 = vmul.f32 %v1692, %v638
        %v3024 = vmul.f32 %v1696, %v639
        %v3025 = vmul.f32 %v1668, %v640
        %v3026 = vmul.f32 %v1672, %v641
        %v3027 = vmul.f32 %v1676, %v642
        %v3028 = vmul.f32 %v1680, %v643
        %v3029 = vmul.f32 %v1684, %v644
        %v3030 = vmul.f32 %v1688, %v645
        %v3031 = vmul.f32 %v1692, %v646
        %v3032 = vmul.f32 %v1696, %v647
        %v3033 = vmul.f32 %v1668, %v648
        %v3034 = vmul.f32 %v1672, %v649
        %v3035 = vmul.f32 %v1676, %v650
        %v3036 = vmul.f32 %v1680, %v651
        %v3037 = vmul.f32 %v1684, %v652
        %v3038 = vmul.f32 %v1688, %v653
        %v3039 = vmul.f32 %v1692, %v654
        %v3040 = vmul.f32 %v1696, %v655
        %v3041 = vmul.f32 %v1668, %v656
        %v3042 = vmul.f32 %v1672, %v657
        %v3043 = vmul.f32 %v1676, %v658
        %v3044 = vmul.f32 %v1680, %v659
        %v3045 = vmul.f32 %v1684, %v660
        %v3046 = vmul.f32 %v1688, %v661
        %v3047 = vmul.f32 %v1692, %v662
        %v3048 = vmul.f32 %v1696, %v663
        %v3049 = vmul.f32 %v1668, %v664
        %v3050 = vmul.f32 %v1672, %v665
        %v3051 = vmul.f32 %v1676, %v666
        %v3052 = vmul.f32 %v1680, %v667
        %v3053 = vmul.f32 %v1684, %v668
        %v3054 = vmul.f32 %v1688, %v669
        %v3055 = vmul.f32 %v1692, %v670
        %v3056 = vmul.f32 %v1696, %v671
        %v3057 = vmul.f32 %v1700, %v632
        %v3058 = vmul.f32 %v1704, %v633
        %v3059 = vmul.f32 %v1708, %v634
        %v3060 = vmul.f32 %v1712, %v635
        %v3061 = vmul.f32 %v1716, %v636
        %v3062 = vmul.f32 %v1720, %v637
        %v3063 = vmul.f32 %v1724, %v638
        %v3064 = vmul.f32 %v1728, %v639
        %v3065 = vmul.f32 %v1700, %v640
        %v3066 = vmul.f32 %v1704, %v641
        %v3067 = vmul.f32 %v1708, %v642
        %v3068 = vmul.f32 %v1712, %v643
        %v3069 = vmul.f32 %v1716, %v644
        %v3070 = vmul.f32 %v1720, %v645
        %v3071 = vmul.f32 %v1724, %v646
        %v3072 = vmul.f32 %v1728, %v647
        %v3073 = vmul.f32 %v1700, %v648
        %v3074 = vmul.f32 %v1704, %v649
        %v3075 = vmul.f32 %v1708, %v650
        %v3076 = vmul.f32 %v1712, %v651
        %v3077 = vmul.f32 %v1716, %v652
        %v3078 = vmul.f32 %v1720, %v653
        %v3079 = vmul.f32 %v1724, %v654
        %v3080 = vmul.f32 %v1728, %v655
        %v3081 = vmul.f32 %v1700, %v656
        %v3082 = vmul.f32 %v1704, %v657
        %v3083 = vmul.f32 %v1708, %v658
        %v3084 = vmul.f32 %v1712, %v659
        %v3085 = vmul.f32 %v1716, %v660
        %v3086 = vmul.f32 %v1720, %v661
        %v3087 = vmul.f32 %v1724, %v662
        %v3088 = vmul.f32 %v1728, %v663
        %v3089 = vmul.f32 %v1700, %v664
        %v3090 = vmul.f32 %v1704, %v665
        %v3091 = vmul.f32 %v1708, %v666
        %v3092 = vmul.f32 %v1712, %v667
        %v3093 = vmul.f32 %v1716, %v668
        %v3094 = vmul.f32 %v1720, %v669
        %v3095 = vmul.f32 %v1724, %v670
        %v3096 = vmul.f32 %v1728, %v671
        %v3097 = vmul.f32 %v1732, %v632
        %v3098 = vmul.f32 %v1736, %v633
        %v3099 = vmul.f32 %v1740, %v634
        %v3100 = vmul.f32 %v1744, %v635
        %v3101 = vmul.f32 %v1748, %v636
        %v3102 = vmul.f32 %v1752, %v637
        %v3103 = vmul.f32 %v1756, %v638
        %v3104 = vmul.f32 %v1760, %v639
        %v3105 = vmul.f32 %v1732, %v640
        %v3106 = vmul.f32 %v1736, %v641
        %v3107 = vmul.f32 %v1740, %v642
        %v3108 = vmul.f32 %v1744, %v643
        %v3109 = vmul.f32 %v1748, %v644
        %v3110 = vmul.f32 %v1752, %v645
        %v3111 = vmul.f32 %v1756, %v646
        %v3112 = vmul.f32 %v1760, %v647
        %v3113 = vmul.f32 %v1732, %v648
        %v3114 = vmul.f32 %v1736, %v649
        %v3115 = vmul.f32 %v1740, %v650
        %v3116 = vmul.f32 %v1744, %v651
        %v3117 = vmul.f32 %v1748, %v652
        %v3118 = vmul.f32 %v1752, %v653
        %v3119 = vmul.f32 %v1756, %v654
        %v3120 = vmul.f32 %v1760, %v655
        %v3121 = vmul.f32 %v1732, %v656
        %v3122 = vmul.f32 %v1736, %v657
        %v3123 = vmul.f32 %v1740, %v658
        %v3124 = vmul.f32 %v1744, %v659
        %v3125 = vmul.f32 %v1748, %v660
        %v3126 = vmul.f32 %v1752, %v661
        %v3127 = vmul.f32 %v1756, %v662
        %v3128 = vmul.f32 %v1760, %v663
        %v3129 = vmul.f32 %v1732, %v664
        %v3130 = vmul.f32 %v1736, %v665
        %v3131 = vmul.f32 %v1740, %v666
        %v3132 = vmul.f32 %v1744, %v667
        %v3133 = vmul.f32 %v1748, %v668
        %v3134 = vmul.f32 %v1752, %v669
        %v3135 = vmul.f32 %v1756, %v670
        %v3136 = vmul.f32 %v1760, %v671
        %v3137 = vmul.f32 %v1764, %v632
        %v3138 = vmul.f32 %v1768, %v633
        %v3139 = vmul.f32 %v1772, %v634
        %v3140 = vmul.f32 %v1776, %v635
        %v3141 = vmul.f32 %v1780, %v636
        %v3142 = vmul.f32 %v1784, %v637
        %v3143 = vmul.f32 %v1788, %v638
        %v3144 = vmul.f32 %v1792, %v639
        %v3145 = vmul.f32 %v1764, %v640
        %v3146 = vmul.f32 %v1768, %v641
        %v3147 = vmul.f32 %v1772, %v642
        %v3148 = vmul.f32 %v1776, %v643
        %v3149 = vmul.f32 %v1780, %v644
        %v3150 = vmul.f32 %v1784, %v645
        %v3151 = vmul.f32 %v1788, %v646
        %v3152 = vmul.f32 %v1792, %v647
        %v3153 = vmul.f32 %v1764, %v648
        %v3154 = vmul.f32 %v1768, %v649
        %v3155 = vmul.f32 %v1772, %v650
        %v3156 = vmul.f32 %v1776, %v651
        %v3157 = vmul.f32 %v1780, %v652
        %v3158 = vmul.f32 %v1784, %v653
        %v3159 = vmul.f32 %v1788, %v654
        %v3160 = vmul.f32 %v1792, %v655
        %v3161 = vmul.f32 %v1764, %v656
        %v3162 = vmul.f32 %v1768, %v657
        %v3163 = vmul.f32 %v1772, %v658
        %v3164 = vmul.f32 %v1776, %v659
        %v3165 = vmul.f32 %v1780, %v660
        %v3166 = vmul.f32 %v1784, %v661
        %v3167 = vmul.f32 %v1788, %v662
        %v3168 = vmul.f32 %v1792, %v663
        %v3169 = vmul.f32 %v1764, %v664
        %v3170 = vmul.f32 %v1768, %v665
        %v3171 = vmul.f32 %v1772, %v666
        %v3172 = vmul.f32 %v1776, %v667
        %v3173 = vmul.f32 %v1780, %v668
        %v3174 = vmul.f32 %v1784, %v669
        %v3175 = vmul.f32 %v1788, %v670
        %v3176 = vmul.f32 %v1792, %v671
        %v3177 = vmul.f32 %v1796, %v632
        %v3178 = vmul.f32 %v1800, %v633
        %v3179 = vmul.f32 %v1804, %v634
        %v3180 = vmul.f32 %v1808, %v635
        %v3181 = vmul.f32 %v1812, %v636
        %v3182 = vmul.f32 %v1816, %v637
        %v3183 = vmul.f32 %v1820, %v638
        %v3184 = vmul.f32 %v1824, %v639
        %v3185 = vmul.f32 %v1796, %v640
        %v3186 = vmul.f32 %v1800, %v641
        %v3187 = vmul.f32 %v1804, %v642
        %v3188 = vmul.f32 %v1808, %v643
        %v3189 = vmul.f32 %v1812, %v644
        %v3190 = vmul.f32 %v1816, %v645
        %v3191 = vmul.f32 %v1820, %v646
        %v3192 = vmul.f32 %v1824, %v647
        %v3193 = vmul.f32 %v1796, %v648
        %v3194 = vmul.f32 %v1800, %v649
        %v3195 = vmul.f32 %v1804, %v650
        %v3196 = vmul.f32 %v1808, %v651
        %v3197 = vmul.f32 %v1812, %v652
        %v3198 = vmul.f32 %v1816, %v653
        %v3199 = vmul.f32 %v1820, %v654
        %v3200 = vmul.f32 %v1824, %v655
        %v3201 = vmul.f32 %v1796, %v656
        %v3202 = vmul.f32 %v1800, %v657
        %v3203 = vmul.f32 %v1804, %v658
        %v3204 = vmul.f32 %v1808, %v659
        %v3205 = vmul.f32 %v1812, %v660
        %v3206 = vmul.f32 %v1816, %v661
        %v3207 = vmul.f32 %v1820, %v662
        %v3208 = vmul.f32 %v1824, %v663
        %v3209 = vmul.f32 %v1796, %v664
        %v3210 = vmul.f32 %v1800, %v665
        %v3211 = vmul.f32 %v1804, %v666
        %v3212 = vmul.f32 %v1808, %v667
        %v3213 = vmul.f32 %v1812, %v668
        %v3214 = vmul.f32 %v1816, %v669
        %v3215 = vmul.f32 %v1820, %v670
        %v3216 = vmul.f32 %v1824, %v671
        %v3217 = vmul.f32 %v1828, %v632
        %v3218 = vmul.f32 %v1832, %v633
        %v3219 = vmul.f32 %v1836, %v634
        %v3220 = vmul.f32 %v1840, %v635
        %v3221 = vmul.f32 %v1844, %v636
        %v3222 = vmul.f32 %v1848, %v637
        %v3223 = vmul.f32 %v1852, %v638
        %v3224 = vmul.f32 %v1856, %v639
        %v3225 = vmul.f32 %v1828, %v640
        %v3226 = vmul.f32 %v1832, %v641
        %v3227 = vmul.f32 %v1836, %v642
        %v3228 = vmul.f32 %v1840, %v643
        %v3229 = vmul.f32 %v1844, %v644
        %v3230 = vmul.f32 %v1848, %v645
        %v3231 = vmul.f32 %v1852, %v646
        %v3232 = vmul.f32 %v1856, %v647
        %v3233 = vmul.f32 %v1828, %v648
        %v3234 = vmul.f32 %v1832, %v649
        %v3235 = vmul.f32 %v1836, %v650
        %v3236 = vmul.f32 %v1840, %v651
        %v3237 = vmul.f32 %v1844, %v652
        %v3238 = vmul.f32 %v1848, %v653
        %v3239 = vmul.f32 %v1852, %v654
        %v3240 = vmul.f32 %v1856, %v655
        %v3241 = vmul.f32 %v1828, %v656
        %v3242 = vmul.f32 %v1832, %v657
        %v3243 = vmul.f32 %v1836, %v658
        %v3244 = vmul.f32 %v1840, %v659
        %v3245 = vmul.f32 %v1844, %v660
        %v3246 = vmul.f32 %v1848, %v661
        %v3247 = vmul.f32 %v1852, %v662
        %v3248 = vmul.f32 %v1856, %v663
        %v3249 = vmul.f32 %v1828, %v664
        %v3250 = vmul.f32 %v1832, %v665
        %v3251 = vmul.f32 %v1836, %v666
        %v3252 = vmul.f32 %v1840, %v667
        %v3253 = vmul.f32 %v1844, %v668
        %v3254 = vmul.f32 %v1848, %v669
        %v3255 = vmul.f32 %v1852, %v670
        %v3256 = vmul.f32 %v1856, %v671
        %v3257 = vmul.f32 %v1860, %v632
        %v3258 = vmul.f32 %v1864, %v633
        %v3259 = vmul.f32 %v1868, %v634
        %v3260 = vmul.f32 %v1872, %v635
        %v3261 = vmul.f32 %v1876, %v636
        %v3262 = vmul.f32 %v1880, %v637
        %v3263 = vmul.f32 %v1884, %v638
        %v3264 = vmul.f32 %v1888, %v639
        %v3265 = vmul.f32 %v1860, %v640
        %v3266 = vmul.f32 %v1864, %v641
        %v3267 = vmul.f32 %v1868, %v642
        %v3268 = vmul.f32 %v1872, %v643
        %v3269 = vmul.f32 %v1876, %v644
        %v3270 = vmul.f32 %v1880, %v645
        %v3271 = vmul.f32 %v1884, %v646
        %v3272 = vmul.f32 %v1888, %v647
        %v3273 = vmul.f32 %v1860, %v648
        %v3274 = vmul.f32 %v1864, %v649
        %v3275 = vmul.f32 %v1868, %v650
        %v3276 = vmul.f32 %v1872, %v651
        %v3277 = vmul.f32 %v1876, %v652
        %v3278 = vmul.f32 %v1880, %v653
        %v3279 = vmul.f32 %v1884, %v654
        %v3280 = vmul.f32 %v1888, %v655
        %v3281 = vmul.f32 %v1860, %v656
        %v3282 = vmul.f32 %v1864, %v657
        %v3283 = vmul.f32 %v1868, %v658
        %v3284 = vmul.f32 %v1872, %v659
        %v3285 = vmul.f32 %v1876, %v660
        %v3286 = vmul.f32 %v1880, %v661
        %v3287 = vmul.f32 %v1884, %v662
        %v3288 = vmul.f32 %v1888, %v663
        %v3289 = vmul.f32 %v1860, %v664
        %v3290 = vmul.f32 %v1864, %v665
        %v3291 = vmul.f32 %v1868, %v666
        %v3292 = vmul.f32 %v1872, %v667
        %v3293 = vmul.f32 %v1876, %v668
        %v3294 = vmul.f32 %v1880, %v669
        %v3295 = vmul.f32 %v1884, %v670
        %v3296 = vmul.f32 %v1888, %v671
        %v3297 = vmul.f32 %v1892, %v632
        %v3298 = vmul.f32 %v1896, %v633
        %v3299 = vmul.f32 %v1900, %v634
        %v3300 = vmul.f32 %v1904, %v635
        %v3301 = vmul.f32 %v1908, %v636
        %v3302 = vmul.f32 %v1912, %v637
        %v3303 = vmul.f32 %v1916, %v638
        %v3304 = vmul.f32 %v1920, %v639
        %v3305 = vmul.f32 %v1892, %v640
        %v3306 = vmul.f32 %v1896, %v641
        %v3307 = vmul.f32 %v1900, %v642
        %v3308 = vmul.f32 %v1904, %v643
        %v3309 = vmul.f32 %v1908, %v644
        %v3310 = vmul.f32 %v1912, %v645
        %v3311 = vmul.f32 %v1916, %v646
        %v3312 = vmul.f32 %v1920, %v647
        %v3313 = vmul.f32 %v1892, %v648
        %v3314 = vmul.f32 %v1896, %v649
        %v3315 = vmul.f32 %v1900, %v650
        %v3316 = vmul.f32 %v1904, %v651
        %v3317 = vmul.f32 %v1908, %v652
        %v3318 = vmul.f32 %v1912, %v653
        %v3319 = vmul.f32 %v1916, %v654
        %v3320 = vmul.f32 %v1920, %v655
        %v3321 = vmul.f32 %v1892, %v656
        %v3322 = vmul.f32 %v1896, %v657
        %v3323 = vmul.f32 %v1900, %v658
        %v3324 = vmul.f32 %v1904, %v659
        %v3325 = vmul.f32 %v1908, %v660
        %v3326 = vmul.f32 %v1912, %v661
        %v3327 = vmul.f32 %v1916, %v662
        %v3328 = vmul.f32 %v1920, %v663
        %v3329 = vmul.f32 %v1892, %v664
        %v3330 = vmul.f32 %v1896, %v665
        %v3331 = vmul.f32 %v1900, %v666
        %v3332 = vmul.f32 %v1904, %v667
        %v3333 = vmul.f32 %v1908, %v668
        %v3334 = vmul.f32 %v1912, %v669
        %v3335 = vmul.f32 %v1916, %v670
        %v3336 = vmul.f32 %v1920, %v671
        %v3337 = vmul.f32 %v1924, %v632
        %v3338 = vmul.f32 %v1928, %v633
        %v3339 = vmul.f32 %v1932, %v634
        %v3340 = vmul.f32 %v1936, %v635
        %v3341 = vmul.f32 %v1940, %v636
        %v3342 = vmul.f32 %v1944, %v637
        %v3343 = vmul.f32 %v1948, %v638
        %v3344 = vmul.f32 %v1952, %v639
        %v3345 = vmul.f32 %v1924, %v640
        %v3346 = vmul.f32 %v1928, %v641
        %v3347 = vmul.f32 %v1932, %v642
        %v3348 = vmul.f32 %v1936, %v643
        %v3349 = vmul.f32 %v1940, %v644
        %v3350 = vmul.f32 %v1944, %v645
        %v3351 = vmul.f32 %v1948, %v646
        %v3352 = vmul.f32 %v1952, %v647
        %v3353 = vmul.f32 %v1924, %v648
        %v3354 = vmul.f32 %v1928, %v649
        %v3355 = vmul.f32 %v1932, %v650
        %v3356 = vmul.f32 %v1936, %v651
        %v3357 = vmul.f32 %v1940, %v652
        %v3358 = vmul.f32 %v1944, %v653
        %v3359 = vmul.f32 %v1948, %v654
        %v3360 = vmul.f32 %v1952, %v655
        %v3361 = vmul.f32 %v1924, %v656
        %v3362 = vmul.f32 %v1928, %v657
        %v3363 = vmul.f32 %v1932, %v658
        %v3364 = vmul.f32 %v1936, %v659
        %v3365 = vmul.f32 %v1940, %v660
        %v3366 = vmul.f32 %v1944, %v661
        %v3367 = vmul.f32 %v1948, %v662
        %v3368 = vmul.f32 %v1952, %v663
        %v3369 = vmul.f32 %v1924, %v664
        %v3370 = vmul.f32 %v1928, %v665
        %v3371 = vmul.f32 %v1932, %v666
        %v3372 = vmul.f32 %v1936, %v667
        %v3373 = vmul.f32 %v1940, %v668
        %v3374 = vmul.f32 %v1944, %v669
        %v3375 = vmul.f32 %v1948, %v670
        %v3376 = vmul.f32 %v1952, %v671
        %v3377 = vmul.f32 %v1956, %v632
        %v3378 = vmul.f32 %v1960, %v633
        %v3379 = vmul.f32 %v1964, %v634
        %v3380 = vmul.f32 %v1968, %v635
        %v3381 = vmul.f32 %v1972, %v636
        %v3382 = vmul.f32 %v1976, %v637
        %v3383 = vmul.f32 %v1980, %v638
        %v3384 = vmul.f32 %v1984, %v639
        %v3385 = vmul.f32 %v1956, %v640
        %v3386 = vmul.f32 %v1960, %v641
        %v3387 = vmul.f32 %v1964, %v642
        %v3388 = vmul.f32 %v1968, %v643
        %v3389 = vmul.f32 %v1972, %v644
        %v3390 = vmul.f32 %v1976, %v645
        %v3391 = vmul.f32 %v1980, %v646
        %v3392 = vmul.f32 %v1984, %v647
        %v3393 = vmul.f32 %v1956, %v648
        %v3394 = vmul.f32 %v1960, %v649
        %v3395 = vmul.f32 %v1964, %v650
        %v3396 = vmul.f32 %v1968, %v651
        %v3397 = vmul.f32 %v1972, %v652
        %v3398 = vmul.f32 %v1976, %v653
        %v3399 = vmul.f32 %v1980, %v654
        %v3400 = vmul.f32 %v1984, %v655
        %v3401 = vmul.f32 %v1956, %v656
        %v3402 = vmul.f32 %v1960, %v657
        %v3403 = vmul.f32 %v1964, %v658
        %v3404 = vmul.f32 %v1968, %v659
        %v3405 = vmul.f32 %v1972, %v660
        %v3406 = vmul.f32 %v1976, %v661
        %v3407 = vmul.f32 %v1980, %v662
        %v3408 = vmul.f32 %v1984, %v663
        %v3409 = vmul.f32 %v1956, %v664
        %v3410 = vmul.f32 %v1960, %v665
        %v3411 = vmul.f32 %v1964, %v666
        %v3412 = vmul.f32 %v1968, %v667
        %v3413 = vmul.f32 %v1972, %v668
        %v3414 = vmul.f32 %v1976, %v669
        %v3415 = vmul.f32 %v1980, %v670
        %v3416 = vmul.f32 %v1984, %v671
        %v3417 = vmul.f32 %v1988, %v632
        %v3418 = vmul.f32 %v1992, %v633
        %v3419 = vmul.f32 %v1996, %v634
        %v3420 = vmul.f32 %v2000, %v635
        %v3421 = vmul.f32 %v2004, %v636
        %v3422 = vmul.f32 %v2008, %v637
        %v3423 = vmul.f32 %v2012, %v638
        %v3424 = vmul.f32 %v2016, %v639
        %v3425 = vmul.f32 %v1988, %v640
        %v3426 = vmul.f32 %v1992, %v641
        %v3427 = vmul.f32 %v1996, %v642
        %v3428 = vmul.f32 %v2000, %v643
        %v3429 = vmul.f32 %v2004, %v644
        %v3430 = vmul.f32 %v2008, %v645
        %v3431 = vmul.f32 %v2012, %v646
        %v3432 = vmul.f32 %v2016, %v647
        %v3433 = vmul.f32 %v1988, %v648
        %v3434 = vmul.f32 %v1992, %v649
        %v3435 = vmul.f32 %v1996, %v650
        %v3436 = vmul.f32 %v2000, %v651
        %v3437 = vmul.f32 %v2004, %v652
        %v3438 = vmul.f32 %v2008, %v653
        %v3439 = vmul.f32 %v2012, %v654
        %v3440 = vmul.f32 %v2016, %v655
        %v3441 = vmul.f32 %v1988, %v656
        %v3442 = vmul.f32 %v1992, %v657
        %v3443 = vmul.f32 %v1996, %v658
        %v3444 = vmul.f32 %v2000, %v659
        %v3445 = vmul.f32 %v2004, %v660
        %v3446 = vmul.f32 %v2008, %v661
        %v3447 = vmul.f32 %v2012, %v662
        %v3448 = vmul.f32 %v2016, %v663
        %v3449 = vmul.f32 %v1988, %v664
        %v3450 = vmul.f32 %v1992, %v665
        %v3451 = vmul.f32 %v1996, %v666
        %v3452 = vmul.f32 %v2000, %v667
        %v3453 = vmul.f32 %v2004, %v668
        %v3454 = vmul.f32 %v2008, %v669
        %v3455 = vmul.f32 %v2012, %v670
        %v3456 = vmul.f32 %v2016, %v671
        %v3457 = vmul.f32 %v2020, %v632
        %v3458 = vmul.f32 %v2024, %v633
        %v3459 = vmul.f32 %v2028, %v634
        %v3460 = vmul.f32 %v2032, %v635
        %v3461 = vmul.f32 %v2036, %v636
        %v3462 = vmul.f32 %v2040, %v637
        %v3463 = vmul.f32 %v2044, %v638
        %v3464 = vmul.f32 %v2048, %v639
        %v3465 = vmul.f32 %v2020, %v640
        %v3466 = vmul.f32 %v2024, %v641
        %v3467 = vmul.f32 %v2028, %v642
        %v3468 = vmul.f32 %v2032, %v643
        %v3469 = vmul.f32 %v2036, %v644
        %v3470 = vmul.f32 %v2040, %v645
        %v3471 = vmul.f32 %v2044, %v646
        %v3472 = vmul.f32 %v2048, %v647
        %v3473 = vmul.f32 %v2020, %v648
        %v3474 = vmul.f32 %v2024, %v649
        %v3475 = vmul.f32 %v2028, %v650
        %v3476 = vmul.f32 %v2032, %v651
        %v3477 = vmul.f32 %v2036, %v652
        %v3478 = vmul.f32 %v2040, %v653
        %v3479 = vmul.f32 %v2044, %v654
        %v3480 = vmul.f32 %v2048, %v655
        %v3481 = vmul.f32 %v2020, %v656
        %v3482 = vmul.f32 %v2024, %v657
        %v3483 = vmul.f32 %v2028, %v658
        %v3484 = vmul.f32 %v2032, %v659
        %v3485 = vmul.f32 %v2036, %v660
        %v3486 = vmul.f32 %v2040, %v661
        %v3487 = vmul.f32 %v2044, %v662
        %v3488 = vmul.f32 %v2048, %v663
        %v3489 = vmul.f32 %v2020, %v664
        %v3490 = vmul.f32 %v2024, %v665
        %v3491 = vmul.f32 %v2028, %v666
        %v3492 = vmul.f32 %v2032, %v667
        %v3493 = vmul.f32 %v2036, %v668
        %v3494 = vmul.f32 %v2040, %v669
        %v3495 = vmul.f32 %v2044, %v670
        %v3496 = vmul.f32 %v2048, %v671
        %v3497 = vmul.f32 %v2052, %v632
        %v3498 = vmul.f32 %v2056, %v633
        %v3499 = vmul.f32 %v2060, %v634
        %v3500 = vmul.f32 %v2064, %v635
        %v3501 = vmul.f32 %v2068, %v636
        %v3502 = vmul.f32 %v2072, %v637
        %v3503 = vmul.f32 %v2076, %v638
        %v3504 = vmul.f32 %v2080, %v639
        %v3505 = vmul.f32 %v2052, %v640
        %v3506 = vmul.f32 %v2056, %v641
        %v3507 = vmul.f32 %v2060, %v642
        %v3508 = vmul.f32 %v2064, %v643
        %v3509 = vmul.f32 %v2068, %v644
        %v3510 = vmul.f32 %v2072, %v645
        %v3511 = vmul.f32 %v2076, %v646
        %v3512 = vmul.f32 %v2080, %v647
        %v3513 = vmul.f32 %v2052, %v648
        %v3514 = vmul.f32 %v2056, %v649
        %v3515 = vmul.f32 %v2060, %v650
        %v3516 = vmul.f32 %v2064, %v651
        %v3517 = vmul.f32 %v2068, %v652
        %v3518 = vmul.f32 %v2072, %v653
        %v3519 = vmul.f32 %v2076, %v654
        %v3520 = vmul.f32 %v2080, %v655
        %v3521 = vmul.f32 %v2052, %v656
        %v3522 = vmul.f32 %v2056, %v657
        %v3523 = vmul.f32 %v2060, %v658
        %v3524 = vmul.f32 %v2064, %v659
        %v3525 = vmul.f32 %v2068, %v660
        %v3526 = vmul.f32 %v2072, %v661
        %v3527 = vmul.f32 %v2076, %v662
        %v3528 = vmul.f32 %v2080, %v663
        %v3529 = vmul.f32 %v2052, %v664
        %v3530 = vmul.f32 %v2056, %v665
        %v3531 = vmul.f32 %v2060, %v666
        %v3532 = vmul.f32 %v2064, %v667
        %v3533 = vmul.f32 %v2068, %v668
        %v3534 = vmul.f32 %v2072, %v669
        %v3535 = vmul.f32 %v2076, %v670
        %v3536 = vmul.f32 %v2080, %v671
        %v3537 = vmul.f32 %v2084, %v632
        %v3538 = vmul.f32 %v2088, %v633
        %v3539 = vmul.f32 %v2092, %v634
        %v3540 = vmul.f32 %v2096, %v635
        %v3541 = vmul.f32 %v2100, %v636
        %v3542 = vmul.f32 %v2104, %v637
        %v3543 = vmul.f32 %v2108, %v638
        %v3544 = vmul.f32 %v2112, %v639
        %v3545 = vmul.f32 %v2084, %v640
        %v3546 = vmul.f32 %v2088, %v641
        %v3547 = vmul.f32 %v2092, %v642
        %v3548 = vmul.f32 %v2096, %v643
        %v3549 = vmul.f32 %v2100, %v644
        %v3550 = vmul.f32 %v2104, %v645
        %v3551 = vmul.f32 %v2108, %v646
        %v3552 = vmul.f32 %v2112, %v647
        %v3553 = vmul.f32 %v2084, %v648
        %v3554 = vmul.f32 %v2088, %v649
        %v3555 = vmul.f32 %v2092, %v650
        %v3556 = vmul.f32 %v2096, %v651
        %v3557 = vmul.f32 %v2100, %v652
        %v3558 = vmul.f32 %v2104, %v653
        %v3559 = vmul.f32 %v2108, %v654
        %v3560 = vmul.f32 %v2112, %v655
        %v3561 = vmul.f32 %v2084, %v656
        %v3562 = vmul.f32 %v2088, %v657
        %v3563 = vmul.f32 %v2092, %v658
        %v3564 = vmul.f32 %v2096, %v659
        %v3565 = vmul.f32 %v2100, %v660
        %v3566 = vmul.f32 %v2104, %v661
        %v3567 = vmul.f32 %v2108, %v662
        %v3568 = vmul.f32 %v2112, %v663
        %v3569 = vmul.f32 %v2084, %v664
        %v3570 = vmul.f32 %v2088, %v665
        %v3571 = vmul.f32 %v2092, %v666
        %v3572 = vmul.f32 %v2096, %v667
        %v3573 = vmul.f32 %v2100, %v668
        %v3574 = vmul.f32 %v2104, %v669
        %v3575 = vmul.f32 %v2108, %v670
        %v3576 = vmul.f32 %v2112, %v671
        %v3577 = vmul.f32 %v2116, %v632
        %v3578 = vmul.f32 %v2120, %v633
        %v3579 = vmul.f32 %v2124, %v634
        %v3580 = vmul.f32 %v2128, %v635
        %v3581 = vmul.f32 %v2132, %v636
        %v3582 = vmul.f32 %v2136, %v637
        %v3583 = vmul.f32 %v2140, %v638
        %v3584 = vmul.f32 %v2144, %v639
        %v3585 = vmul.f32 %v2116, %v640
        %v3586 = vmul.f32 %v2120, %v641
        %v3587 = vmul.f32 %v2124, %v642
        %v3588 = vmul.f32 %v2128, %v643
        %v3589 = vmul.f32 %v2132, %v644
        %v3590 = vmul.f32 %v2136, %v645
        %v3591 = vmul.f32 %v2140, %v646
        %v3592 = vmul.f32 %v2144, %v647
        %v3593 = vmul.f32 %v2116, %v648
        %v3594 = vmul.f32 %v2120, %v649
        %v3595 = vmul.f32 %v2124, %v650
        %v3596 = vmul.f32 %v2128, %v651
        %v3597 = vmul.f32 %v2132, %v652
        %v3598 = vmul.f32 %v2136, %v653
        %v3599 = vmul.f32 %v2140, %v654
        %v3600 = vmul.f32 %v2144, %v655
        %v3601 = vmul.f32 %v2116, %v656
        %v3602 = vmul.f32 %v2120, %v657
        %v3603 = vmul.f32 %v2124, %v658
        %v3604 = vmul.f32 %v2128, %v659
        %v3605 = vmul.f32 %v2132, %v660
        %v3606 = vmul.f32 %v2136, %v661
        %v3607 = vmul.f32 %v2140, %v662
        %v3608 = vmul.f32 %v2144, %v663
        %v3609 = vmul.f32 %v2116, %v664
        %v3610 = vmul.f32 %v2120, %v665
        %v3611 = vmul.f32 %v2124, %v666
        %v3612 = vmul.f32 %v2128, %v667
        %v3613 = vmul.f32 %v2132, %v668
        %v3614 = vmul.f32 %v2136, %v669
        %v3615 = vmul.f32 %v2140, %v670
        %v3616 = vmul.f32 %v2144, %v671
        %v3617 = vmul.f32 %v2148, %v632
        %v3618 = vmul.f32 %v2152, %v633
        %v3619 = vmul.f32 %v2156, %v634
        %v3620 = vmul.f32 %v2160, %v635
        %v3621 = vmul.f32 %v2164, %v636
        %v3622 = vmul.f32 %v2168, %v637
        %v3623 = vmul.f32 %v2172, %v638
        %v3624 = vmul.f32 %v2176, %v639
        %v3625 = vmul.f32 %v2148, %v640
        %v3626 = vmul.f32 %v2152, %v641
        %v3627 = vmul.f32 %v2156, %v642
        %v3628 = vmul.f32 %v2160, %v643
        %v3629 = vmul.f32 %v2164, %v644
        %v3630 = vmul.f32 %v2168, %v645
        %v3631 = vmul.f32 %v2172, %v646
        %v3632 = vmul.f32 %v2176, %v647
        %v3633 = vmul.f32 %v2148, %v648
        %v3634 = vmul.f32 %v2152, %v649
        %v3635 = vmul.f32 %v2156, %v650
        %v3636 = vmul.f32 %v2160, %v651
        %v3637 = vmul.f32 %v2164, %v652
        %v3638 = vmul.f32 %v2168, %v653
        %v3639 = vmul.f32 %v2172, %v654
        %v3640 = vmul.f32 %v2176, %v655
        %v3641 = vmul.f32 %v2148, %v656
        %v3642 = vmul.f32 %v2152, %v657
        %v3643 = vmul.f32 %v2156, %v658
        %v3644 = vmul.f32 %v2160, %v659
        %v3645 = vmul.f32 %v2164, %v660
        %v3646 = vmul.f32 %v2168, %v661
        %v3647 = vmul.f32 %v2172, %v662
        %v3648 = vmul.f32 %v2176, %v663
        %v3649 = vmul.f32 %v2148, %v664
        %v3650 = vmul.f32 %v2152, %v665
        %v3651 = vmul.f32 %v2156, %v666
        %v3652 = vmul.f32 %v2160, %v667
        %v3653 = vmul.f32 %v2164, %v668
        %v3654 = vmul.f32 %v2168, %v669
        %v3655 = vmul.f32 %v2172, %v670
        %v3656 = vmul.f32 %v2176, %v671
        %v3657 = vmul.f32 %v2180, %v632
        %v3658 = vmul.f32 %v2184, %v633
        %v3659 = vmul.f32 %v2188, %v634
        %v3660 = vmul.f32 %v2192, %v635
        %v3661 = vmul.f32 %v2196, %v636
        %v3662 = vmul.f32 %v2200, %v637
        %v3663 = vmul.f32 %v2204, %v638
        %v3664 = vmul.f32 %v2208, %v639
        %v3665 = vmul.f32 %v2180, %v640
        %v3666 = vmul.f32 %v2184, %v641
        %v3667 = vmul.f32 %v2188, %v642
        %v3668 = vmul.f32 %v2192, %v643
        %v3669 = vmul.f32 %v2196, %v644
        %v3670 = vmul.f32 %v2200, %v645
        %v3671 = vmul.f32 %v2204, %v646
        %v3672 = vmul.f32 %v2208, %v647
        %v3673 = vmul.f32 %v2180, %v648
        %v3674 = vmul.f32 %v2184, %v649
        %v3675 = vmul.f32 %v2188, %v650
        %v3676 = vmul.f32 %v2192, %v651
        %v3677 = vmul.f32 %v2196, %v652
        %v3678 = vmul.f32 %v2200, %v653
        %v3679 = vmul.f32 %v2204, %v654
        %v3680 = vmul.f32 %v2208, %v655
        %v3681 = vmul.f32 %v2180, %v656
        %v3682 = vmul.f32 %v2184, %v657
        %v3683 = vmul.f32 %v2188, %v658
        %v3684 = vmul.f32 %v2192, %v659
        %v3685 = vmul.f32 %v2196, %v660
        %v3686 = vmul.f32 %v2200, %v661
        %v3687 = vmul.f32 %v2204, %v662
        %v3688 = vmul.f32 %v2208, %v663
        %v3689 = vmul.f32 %v2180, %v664
        %v3690 = vmul.f32 %v2184, %v665
        %v3691 = vmul.f32 %v2188, %v666
        %v3692 = vmul.f32 %v2192, %v667
        %v3693 = vmul.f32 %v2196, %v668
        %v3694 = vmul.f32 %v2200, %v669
        %v3695 = vmul.f32 %v2204, %v670
        %v3696 = vmul.f32 %v2208, %v671
        %v3697 = vmul.f32 %v2212, %v632
        %v3698 = vmul.f32 %v2216, %v633
        %v3699 = vmul.f32 %v2220, %v634
        %v3700 = vmul.f32 %v2224, %v635
        %v3701 = vmul.f32 %v2228, %v636
        %v3702 = vmul.f32 %v2232, %v637
        %v3703 = vmul.f32 %v2236, %v638
        %v3704 = vmul.f32 %v2240, %v639
        %v3705 = vmul.f32 %v2212, %v640
        %v3706 = vmul.f32 %v2216, %v641
        %v3707 = vmul.f32 %v2220, %v642
        %v3708 = vmul.f32 %v2224, %v643
        %v3709 = vmul.f32 %v2228, %v644
        %v3710 = vmul.f32 %v2232, %v645
        %v3711 = vmul.f32 %v2236, %v646
        %v3712 = vmul.f32 %v2240, %v647
        %v3713 = vmul.f32 %v2212, %v648
        %v3714 = vmul.f32 %v2216, %v649
        %v3715 = vmul.f32 %v2220, %v650
        %v3716 = vmul.f32 %v2224, %v651
        %v3717 = vmul.f32 %v2228, %v652
        %v3718 = vmul.f32 %v2232, %v653
        %v3719 = vmul.f32 %v2236, %v654
        %v3720 = vmul.f32 %v2240, %v655
        %v3721 = vmul.f32 %v2212, %v656
        %v3722 = vmul.f32 %v2216, %v657
        %v3723 = vmul.f32 %v2220, %v658
        %v3724 = vmul.f32 %v2224, %v659
        %v3725 = vmul.f32 %v2228, %v660
        %v3726 = vmul.f32 %v2232, %v661
        %v3727 = vmul.f32 %v2236, %v662
        %v3728 = vmul.f32 %v2240, %v663
        %v3729 = vmul.f32 %v2212, %v664
        %v3730 = vmul.f32 %v2216, %v665
        %v3731 = vmul.f32 %v2220, %v666
        %v3732 = vmul.f32 %v2224, %v667
        %v3733 = vmul.f32 %v2228, %v668
        %v3734 = vmul.f32 %v2232, %v669
        %v3735 = vmul.f32 %v2236, %v670
        %v3736 = vmul.f32 %v2240, %v671
        %v3737 = vmul.f32 %v2244, %v632
        %v3738 = vmul.f32 %v2248, %v633
        %v3739 = vmul.f32 %v2252, %v634
        %v3740 = vmul.f32 %v2256, %v635
        %v3741 = vmul.f32 %v2260, %v636
        %v3742 = vmul.f32 %v2264, %v637
        %v3743 = vmul.f32 %v2268, %v638
        %v3744 = vmul.f32 %v2272, %v639
        %v3745 = vmul.f32 %v2244, %v640
        %v3746 = vmul.f32 %v2248, %v641
        %v3747 = vmul.f32 %v2252, %v642
        %v3748 = vmul.f32 %v2256, %v643
        %v3749 = vmul.f32 %v2260, %v644
        %v3750 = vmul.f32 %v2264, %v645
        %v3751 = vmul.f32 %v2268, %v646
        %v3752 = vmul.f32 %v2272, %v647
        %v3753 = vmul.f32 %v2244, %v648
        %v3754 = vmul.f32 %v2248, %v649
        %v3755 = vmul.f32 %v2252, %v650
        %v3756 = vmul.f32 %v2256, %v651
        %v3757 = vmul.f32 %v2260, %v652
        %v3758 = vmul.f32 %v2264, %v653
        %v3759 = vmul.f32 %v2268, %v654
        %v3760 = vmul.f32 %v2272, %v655
        %v3761 = vmul.f32 %v2244, %v656
        %v3762 = vmul.f32 %v2248, %v657
        %v3763 = vmul.f32 %v2252, %v658
        %v3764 = vmul.f32 %v2256, %v659
        %v3765 = vmul.f32 %v2260, %v660
        %v3766 = vmul.f32 %v2264, %v661
        %v3767 = vmul.f32 %v2268, %v662
        %v3768 = vmul.f32 %v2272, %v663
        %v3769 = vmul.f32 %v2244, %v664
        %v3770 = vmul.f32 %v2248, %v665
        %v3771 = vmul.f32 %v2252, %v666
        %v3772 = vmul.f32 %v2256, %v667
        %v3773 = vmul.f32 %v2260, %v668
        %v3774 = vmul.f32 %v2264, %v669
        %v3775 = vmul.f32 %v2268, %v670
        %v3776 = vmul.f32 %v2272, %v671
        %v3777 = vmul.f32 %v2276, %v632
        %v3778 = vmul.f32 %v2280, %v633
        %v3779 = vmul.f32 %v2284, %v634
        %v3780 = vmul.f32 %v2288, %v635
        %v3781 = vmul.f32 %v2292, %v636
        %v3782 = vmul.f32 %v2296, %v637
        %v3783 = vmul.f32 %v2300, %v638
        %v3784 = vmul.f32 %v2304, %v639
        %v3785 = vmul.f32 %v2276, %v640
        %v3786 = vmul.f32 %v2280, %v641
        %v3787 = vmul.f32 %v2284, %v642
        %v3788 = vmul.f32 %v2288, %v643
        %v3789 = vmul.f32 %v2292, %v644
        %v3790 = vmul.f32 %v2296, %v645
        %v3791 = vmul.f32 %v2300, %v646
        %v3792 = vmul.f32 %v2304, %v647
        %v3793 = vmul.f32 %v2276, %v648
        %v3794 = vmul.f32 %v2280, %v649
        %v3795 = vmul.f32 %v2284, %v650
        %v3796 = vmul.f32 %v2288, %v651
        %v3797 = vmul.f32 %v2292, %v652
        %v3798 = vmul.f32 %v2296, %v653
        %v3799 = vmul.f32 %v2300, %v654
        %v3800 = vmul.f32 %v2304, %v655
        %v3801 = vmul.f32 %v2276, %v656
        %v3802 = vmul.f32 %v2280, %v657
        %v3803 = vmul.f32 %v2284, %v658
        %v3804 = vmul.f32 %v2288, %v659
        %v3805 = vmul.f32 %v2292, %v660
        %v3806 = vmul.f32 %v2296, %v661
        %v3807 = vmul.f32 %v2300, %v662
        %v3808 = vmul.f32 %v2304, %v663
        %v3809 = vmul.f32 %v2276, %v664
        %v3810 = vmul.f32 %v2280, %v665
        %v3811 = vmul.f32 %v2284, %v666
        %v3812 = vmul.f32 %v2288, %v667
        %v3813 = vmul.f32 %v2292, %v668
        %v3814 = vmul.f32 %v2296, %v669
        %v3815 = vmul.f32 %v2300, %v670
        %v3816 = vmul.f32 %v2304, %v671
        %v3817 = vmul.f32 %v2308, %v632
        %v3818 = vmul.f32 %v2312, %v633
        %v3819 = vmul.f32 %v2316, %v634
        %v3820 = vmul.f32 %v2320, %v635
        %v3821 = vmul.f32 %v2324, %v636
        %v3822 = vmul.f32 %v2328, %v637
        %v3823 = vmul.f32 %v2332, %v638
        %v3824 = vmul.f32 %v2336, %v639
        %v3825 = vmul.f32 %v2308, %v640
        %v3826 = vmul.f32 %v2312, %v641
        %v3827 = vmul.f32 %v2316, %v642
        %v3828 = vmul.f32 %v2320, %v643
        %v3829 = vmul.f32 %v2324, %v644
        %v3830 = vmul.f32 %v2328, %v645
        %v3831 = vmul.f32 %v2332, %v646
        %v3832 = vmul.f32 %v2336, %v647
        %v3833 = vmul.f32 %v2308, %v648
        %v3834 = vmul.f32 %v2312, %v649
        %v3835 = vmul.f32 %v2316, %v650
        %v3836 = vmul.f32 %v2320, %v651
        %v3837 = vmul.f32 %v2324, %v652
        %v3838 = vmul.f32 %v2328, %v653
        %v3839 = vmul.f32 %v2332, %v654
        %v3840 = vmul.f32 %v2336, %v655
        %v3841 = vmul.f32 %v2308, %v656
        %v3842 = vmul.f32 %v2312, %v657
        %v3843 = vmul.f32 %v2316, %v658
        %v3844 = vmul.f32 %v2320, %v659
        %v3845 = vmul.f32 %v2324, %v660
        %v3846 = vmul.f32 %v2328, %v661
        %v3847 = vmul.f32 %v2332, %v662
        %v3848 = vmul.f32 %v2336, %v663
        %v3849 = vmul.f32 %v2308, %v664
        %v3850 = vmul.f32 %v2312, %v665
        %v3851 = vmul.f32 %v2316, %v666
        %v3852 = vmul.f32 %v2320, %v667
        %v3853 = vmul.f32 %v2324, %v668
        %v3854 = vmul.f32 %v2328, %v669
        %v3855 = vmul.f32 %v2332, %v670
        %v3856 = vmul.f32 %v2336, %v671
        %v3857 = vmul.f32 %v2340, %v632
        %v3858 = vmul.f32 %v2344, %v633
        %v3859 = vmul.f32 %v2348, %v634
        %v3860 = vmul.f32 %v2352, %v635
        %v3861 = vmul.f32 %v2356, %v636
        %v3862 = vmul.f32 %v2360, %v637
        %v3863 = vmul.f32 %v2364, %v638
        %v3864 = vmul.f32 %v2368, %v639
        %v3865 = vmul.f32 %v2340, %v640
        %v3866 = vmul.f32 %v2344, %v641
        %v3867 = vmul.f32 %v2348, %v642
        %v3868 = vmul.f32 %v2352, %v643
        %v3869 = vmul.f32 %v2356, %v644
        %v3870 = vmul.f32 %v2360, %v645
        %v3871 = vmul.f32 %v2364, %v646
        %v3872 = vmul.f32 %v2368, %v647
        %v3873 = vmul.f32 %v2340, %v648
        %v3874 = vmul.f32 %v2344, %v649
        %v3875 = vmul.f32 %v2348, %v650
        %v3876 = vmul.f32 %v2352, %v651
        %v3877 = vmul.f32 %v2356, %v652
        %v3878 = vmul.f32 %v2360, %v653
        %v3879 = vmul.f32 %v2364, %v654
        %v3880 = vmul.f32 %v2368, %v655
        %v3881 = vmul.f32 %v2340, %v656
        %v3882 = vmul.f32 %v2344, %v657
        %v3883 = vmul.f32 %v2348, %v658
        %v3884 = vmul.f32 %v2352, %v659
        %v3885 = vmul.f32 %v2356, %v660
        %v3886 = vmul.f32 %v2360, %v661
        %v3887 = vmul.f32 %v2364, %v662
        %v3888 = vmul.f32 %v2368, %v663
        %v3889 = vmul.f32 %v2340, %v664
        %v3890 = vmul.f32 %v2344, %v665
        %v3891 = vmul.f32 %v2348, %v666
        %v3892 = vmul.f32 %v2352, %v667
        %v3893 = vmul.f32 %v2356, %v668
        %v3894 = vmul.f32 %v2360, %v669
        %v3895 = vmul.f32 %v2364, %v670
        %v3896 = vmul.f32 %v2368, %v671
        %v3897 = vmul.f32 %v2372, %v632
        %v3898 = vmul.f32 %v2376, %v633
        %v3899 = vmul.f32 %v2380, %v634
        %v3900 = vmul.f32 %v2384, %v635
        %v3901 = vmul.f32 %v2388, %v636
        %v3902 = vmul.f32 %v2392, %v637
        %v3903 = vmul.f32 %v2396, %v638
        %v3904 = vmul.f32 %v2400, %v639
        %v3905 = vmul.f32 %v2372, %v640
        %v3906 = vmul.f32 %v2376, %v641
        %v3907 = vmul.f32 %v2380, %v642
        %v3908 = vmul.f32 %v2384, %v643
        %v3909 = vmul.f32 %v2388, %v644
        %v3910 = vmul.f32 %v2392, %v645
        %v3911 = vmul.f32 %v2396, %v646
        %v3912 = vmul.f32 %v2400, %v647
        %v3913 = vmul.f32 %v2372, %v648
        %v3914 = vmul.f32 %v2376, %v649
        %v3915 = vmul.f32 %v2380, %v650
        %v3916 = vmul.f32 %v2384, %v651
        %v3917 = vmul.f32 %v2388, %v652
        %v3918 = vmul.f32 %v2392, %v653
        %v3919 = vmul.f32 %v2396, %v654
        %v3920 = vmul.f32 %v2400, %v655
        %v3921 = vmul.f32 %v2372, %v656
        %v3922 = vmul.f32 %v2376, %v657
        %v3923 = vmul.f32 %v2380, %v658
        %v3924 = vmul.f32 %v2384, %v659
        %v3925 = vmul.f32 %v2388, %v660
        %v3926 = vmul.f32 %v2392, %v661
        %v3927 = vmul.f32 %v2396, %v662
        %v3928 = vmul.f32 %v2400, %v663
        %v3929 = vmul.f32 %v2372, %v664
        %v3930 = vmul.f32 %v2376, %v665
        %v3931 = vmul.f32 %v2380, %v666
        %v3932 = vmul.f32 %v2384, %v667
        %v3933 = vmul.f32 %v2388, %v668
        %v3934 = vmul.f32 %v2392, %v669
        %v3935 = vmul.f32 %v2396, %v670
        %v3936 = vmul.f32 %v2400, %v671
        %v3937 = vmul.f32 %v2404, %v632
        %v3938 = vmul.f32 %v2408, %v633
        %v3939 = vmul.f32 %v2412, %v634
        %v3940 = vmul.f32 %v2416, %v635
        %v3941 = vmul.f32 %v2420, %v636
        %v3942 = vmul.f32 %v2424, %v637
        %v3943 = vmul.f32 %v2428, %v638
        %v3944 = vmul.f32 %v2432, %v639
        %v3945 = vmul.f32 %v2404, %v640
        %v3946 = vmul.f32 %v2408, %v641
        %v3947 = vmul.f32 %v2412, %v642
        %v3948 = vmul.f32 %v2416, %v643
        %v3949 = vmul.f32 %v2420, %v644
        %v3950 = vmul.f32 %v2424, %v645
        %v3951 = vmul.f32 %v2428, %v646
        %v3952 = vmul.f32 %v2432, %v647
        %v3953 = vmul.f32 %v2404, %v648
        %v3954 = vmul.f32 %v2408, %v649
        %v3955 = vmul.f32 %v2412, %v650
        %v3956 = vmul.f32 %v2416, %v651
        %v3957 = vmul.f32 %v2420, %v652
        %v3958 = vmul.f32 %v2424, %v653
        %v3959 = vmul.f32 %v2428, %v654
        %v3960 = vmul.f32 %v2432, %v655
        %v3961 = vmul.f32 %v2404, %v656
        %v3962 = vmul.f32 %v2408, %v657
        %v3963 = vmul.f32 %v2412, %v658
        %v3964 = vmul.f32 %v2416, %v659
        %v3965 = vmul.f32 %v2420, %v660
        %v3966 = vmul.f32 %v2424, %v661
        %v3967 = vmul.f32 %v2428, %v662
        %v3968 = vmul.f32 %v2432, %v663
        %v3969 = vmul.f32 %v2404, %v664
        %v3970 = vmul.f32 %v2408, %v665
        %v3971 = vmul.f32 %v2412, %v666
        %v3972 = vmul.f32 %v2416, %v667
        %v3973 = vmul.f32 %v2420, %v668
        %v3974 = vmul.f32 %v2424, %v669
        %v3975 = vmul.f32 %v2428, %v670
        %v3976 = vmul.f32 %v2432, %v671
        %v3977 = vmul.f32 %v2436, %v632
        %v3978 = vmul.f32 %v2440, %v633
        %v3979 = vmul.f32 %v2444, %v634
        %v3980 = vmul.f32 %v2448, %v635
        %v3981 = vmul.f32 %v2452, %v636
        %v3982 = vmul.f32 %v2456, %v637
        %v3983 = vmul.f32 %v2460, %v638
        %v3984 = vmul.f32 %v2464, %v639
        %v3985 = vmul.f32 %v2436, %v640
        %v3986 = vmul.f32 %v2440, %v641
        %v3987 = vmul.f32 %v2444, %v642
        %v3988 = vmul.f32 %v2448, %v643
        %v3989 = vmul.f32 %v2452, %v644
        %v3990 = vmul.f32 %v2456, %v645
        %v3991 = vmul.f32 %v2460, %v646
        %v3992 = vmul.f32 %v2464, %v647
        %v3993 = vmul.f32 %v2436, %v648
        %v3994 = vmul.f32 %v2440, %v649
        %v3995 = vmul.f32 %v2444, %v650
        %v3996 = vmul.f32 %v2448, %v651
        %v3997 = vmul.f32 %v2452, %v652
        %v3998 = vmul.f32 %v2456, %v653
        %v3999 = vmul.f32 %v2460, %v654
        %v4000 = vmul.f32 %v2464, %v655
        %v4001 = vmul.f32 %v2436, %v656
        %v4002 = vmul.f32 %v2440, %v657
        %v4003 = vmul.f32 %v2444, %v658
        %v4004 = vmul.f32 %v2448, %v659
        %v4005 = vmul.f32 %v2452, %v660
        %v4006 = vmul.f32 %v2456, %v661
        %v4007 = vmul.f32 %v2460, %v662
        %v4008 = vmul.f32 %v2464, %v663
        %v4009 = vmul.f32 %v2436, %v664
        %v4010 = vmul.f32 %v2440, %v665
        %v4011 = vmul.f32 %v2444, %v666
        %v4012 = vmul.f32 %v2448, %v667
        %v4013 = vmul.f32 %v2452, %v668
        %v4014 = vmul.f32 %v2456, %v669
        %v4015 = vmul.f32 %v2460, %v670
        %v4016 = vmul.f32 %v2464, %v671
        %v4017 = vmul.f32 %v2468, %v632
        %v4018 = vmul.f32 %v2472, %v633
        %v4019 = vmul.f32 %v2476, %v634
        %v4020 = vmul.f32 %v2480, %v635
        %v4021 = vmul.f32 %v2484, %v636
        %v4022 = vmul.f32 %v2488, %v637
        %v4023 = vmul.f32 %v2492, %v638
        %v4024 = vmul.f32 %v2496, %v639
        %v4025 = vmul.f32 %v2468, %v640
        %v4026 = vmul.f32 %v2472, %v641
        %v4027 = vmul.f32 %v2476, %v642
        %v4028 = vmul.f32 %v2480, %v643
        %v4029 = vmul.f32 %v2484, %v644
        %v4030 = vmul.f32 %v2488, %v645
        %v4031 = vmul.f32 %v2492, %v646
        %v4032 = vmul.f32 %v2496, %v647
        %v4033 = vmul.f32 %v2468, %v648
        %v4034 = vmul.f32 %v2472, %v649
        %v4035 = vmul.f32 %v2476, %v650
        %v4036 = vmul.f32 %v2480, %v651
        %v4037 = vmul.f32 %v2484, %v652
        %v4038 = vmul.f32 %v2488, %v653
        %v4039 = vmul.f32 %v2492, %v654
        %v4040 = vmul.f32 %v2496, %v655
        %v4041 = vmul.f32 %v2468, %v656
        %v4042 = vmul.f32 %v2472, %v657
        %v4043 = vmul.f32 %v2476, %v658
        %v4044 = vmul.f32 %v2480, %v659
        %v4045 = vmul.f32 %v2484, %v660
        %v4046 = vmul.f32 %v2488, %v661
        %v4047 = vmul.f32 %v2492, %v662
        %v4048 = vmul.f32 %v2496, %v663
        %v4049 = vmul.f32 %v2468, %v664
        %v4050 = vmul.f32 %v2472, %v665
        %v4051 = vmul.f32 %v2476, %v666
        %v4052 = vmul.f32 %v2480, %v667
        %v4053 = vmul.f32 %v2484, %v668
        %v4054 = vmul.f32 %v2488, %v669
        %v4055 = vmul.f32 %v2492, %v670
        %v4056 = vmul.f32 %v2496, %v671
        %v4057 = vmul.f32 %v2500, %v632
        %v4058 = vmul.f32 %v2504, %v633
        %v4059 = vmul.f32 %v2508, %v634
        %v4060 = vmul.f32 %v2512, %v635
        %v4061 = vmul.f32 %v2516, %v636
        %v4062 = vmul.f32 %v2520, %v637
        %v4063 = vmul.f32 %v2524, %v638
        %v4064 = vmul.f32 %v2528, %v639
        %v4065 = vmul.f32 %v2500, %v640
        %v4066 = vmul.f32 %v2504, %v641
        %v4067 = vmul.f32 %v2508, %v642
        %v4068 = vmul.f32 %v2512, %v643
        %v4069 = vmul.f32 %v2516, %v644
        %v4070 = vmul.f32 %v2520, %v645
        %v4071 = vmul.f32 %v2524, %v646
        %v4072 = vmul.f32 %v2528, %v647
        %v4073 = vmul.f32 %v2500, %v648
        %v4074 = vmul.f32 %v2504, %v649
        %v4075 = vmul.f32 %v2508, %v650
        %v4076 = vmul.f32 %v2512, %v651
        %v4077 = vmul.f32 %v2516, %v652
        %v4078 = vmul.f32 %v2520, %v653
        %v4079 = vmul.f32 %v2524, %v654
        %v4080 = vmul.f32 %v2528, %v655
        %v4081 = vmul.f32 %v2500, %v656
        %v4082 = vmul.f32 %v2504, %v657
        %v4083 = vmul.f32 %v2508, %v658
        %v4084 = vmul.f32 %v2512, %v659
        %v4085 = vmul.f32 %v2516, %v660
        %v4086 = vmul.f32 %v2520, %v661
        %v4087 = vmul.f32 %v2524, %v662
        %v4088 = vmul.f32 %v2528, %v663
        %v4089 = vmul.f32 %v2500, %v664
        %v4090 = vmul.f32 %v2504, %v665
        %v4091 = vmul.f32 %v2508, %v666
        %v4092 = vmul.f32 %v2512, %v667
        %v4093 = vmul.f32 %v2516, %v668
        %v4094 = vmul.f32 %v2520, %v669
        %v4095 = vmul.f32 %v2524, %v670
        %v4096 = vmul.f32 %v2528, %v671
        %v4097 = vmul.f32 %v2532, %v632
        %v4098 = vmul.f32 %v2536, %v633
        %v4099 = vmul.f32 %v2540, %v634
        %v4100 = vmul.f32 %v2544, %v635
        %v4101 = vmul.f32 %v2548, %v636
        %v4102 = vmul.f32 %v2552, %v637
        %v4103 = vmul.f32 %v2556, %v638
        %v4104 = vmul.f32 %v2560, %v639
        %v4105 = vmul.f32 %v2532, %v640
        %v4106 = vmul.f32 %v2536, %v641
        %v4107 = vmul.f32 %v2540, %v642
        %v4108 = vmul.f32 %v2544, %v643
        %v4109 = vmul.f32 %v2548, %v644
        %v4110 = vmul.f32 %v2552, %v645
        %v4111 = vmul.f32 %v2556, %v646
        %v4112 = vmul.f32 %v2560, %v647
        %v4113 = vmul.f32 %v2532, %v648
        %v4114 = vmul.f32 %v2536, %v649
        %v4115 = vmul.f32 %v2540, %v650
        %v4116 = vmul.f32 %v2544, %v651
        %v4117 = vmul.f32 %v2548, %v652
        %v4118 = vmul.f32 %v2552, %v653
        %v4119 = vmul.f32 %v2556, %v654
        %v4120 = vmul.f32 %v2560, %v655
        %v4121 = vmul.f32 %v2532, %v656
        %v4122 = vmul.f32 %v2536, %v657
        %v4123 = vmul.f32 %v2540, %v658
        %v4124 = vmul.f32 %v2544, %v659
        %v4125 = vmul.f32 %v2548, %v660
        %v4126 = vmul.f32 %v2552, %v661
        %v4127 = vmul.f32 %v2556, %v662
        %v4128 = vmul.f32 %v2560, %v663
        %v4129 = vmul.f32 %v2532, %v664
        %v4130 = vmul.f32 %v2536, %v665
        %v4131 = vmul.f32 %v2540, %v666
        %v4132 = vmul.f32 %v2544, %v667
        %v4133 = vmul.f32 %v2548, %v668
        %v4134 = vmul.f32 %v2552, %v669
        %v4135 = vmul.f32 %v2556, %v670
        %v4136 = vmul.f32 %v2560, %v671
        %v4137 = vmul.f32 %v2564, %v632
        %v4138 = vmul.f32 %v2568, %v633
        %v4139 = vmul.f32 %v2572, %v634
        %v4140 = vmul.f32 %v2576, %v635
        %v4141 = vmul.f32 %v2580, %v636
        %v4142 = vmul.f32 %v2584, %v637
        %v4143 = vmul.f32 %v2588, %v638
        %v4144 = vmul.f32 %v2592, %v639
        %v4145 = vmul.f32 %v2564, %v640
        %v4146 = vmul.f32 %v2568, %v641
        %v4147 = vmul.f32 %v2572, %v642
        %v4148 = vmul.f32 %v2576, %v643
        %v4149 = vmul.f32 %v2580, %v644
        %v4150 = vmul.f32 %v2584, %v645
        %v4151 = vmul.f32 %v2588, %v646
        %v4152 = vmul.f32 %v2592, %v647
        %v4153 = vmul.f32 %v2564, %v648
        %v4154 = vmul.f32 %v2568, %v649
        %v4155 = vmul.f32 %v2572, %v650
        %v4156 = vmul.f32 %v2576, %v651
        %v4157 = vmul.f32 %v2580, %v652
        %v4158 = vmul.f32 %v2584, %v653
        %v4159 = vmul.f32 %v2588, %v654
        %v4160 = vmul.f32 %v2592, %v655
        %v4161 = vmul.f32 %v2564, %v656
        %v4162 = vmul.f32 %v2568, %v657
        %v4163 = vmul.f32 %v2572, %v658
        %v4164 = vmul.f32 %v2576, %v659
        %v4165 = vmul.f32 %v2580, %v660
        %v4166 = vmul.f32 %v2584, %v661
        %v4167 = vmul.f32 %v2588, %v662
        %v4168 = vmul.f32 %v2592, %v663
        %v4169 = vmul.f32 %v2564, %v664
        %v4170 = vmul.f32 %v2568, %v665
        %v4171 = vmul.f32 %v2572, %v666
        %v4172 = vmul.f32 %v2576, %v667
        %v4173 = vmul.f32 %v2580, %v668
        %v4174 = vmul.f32 %v2584, %v669
        %v4175 = vmul.f32 %v2588, %v670
        %v4176 = vmul.f32 %v2592, %v671
        %v4177 = vld [vmem:[#allocation5] sm:$0xff]
        %v4178 = vld [vmem:[#allocation5 + $0x8] sm:$0xff]
        %v4179 = vld [vmem:[#allocation5 + $0x10] sm:$0xff]
        %v4180 = vld [vmem:[#allocation5 + $0x18] sm:$0xff]
        %v4181 = vld [vmem:[#allocation5 + $0x20] sm:$0xff]
        %v4182 = vld [vmem:[#allocation5 + $0x28] sm:$0xff]
        %v4183 = vld [vmem:[#allocation5 + $0x30] sm:$0xff]
        %v4184 = vld [vmem:[#allocation5 + $0x38] sm:$0xff]
        %v4185 = vld [vmem:[#allocation5 + $0x40] sm:$0xff]
        %v4186 = vld [vmem:[#allocation5 + $0x48] sm:$0xff]
        %v4187 = vld [vmem:[#allocation5 + $0x50] sm:$0xff]
        %v4188 = vld [vmem:[#allocation5 + $0x58] sm:$0xff]
        %v4189 = vld [vmem:[#allocation5 + $0x60] sm:$0xff]
        %v4190 = vld [vmem:[#allocation5 + $0x68] sm:$0xff]
        %v4191 = vld [vmem:[#allocation5 + $0x70] sm:$0xff]
        %v4192 = vld [vmem:[#allocation5 + $0x78] sm:$0xff]
        %v4193 = vld [vmem:[#allocation5 + $0x80] sm:$0xff]
        %v4194 = vld [vmem:[#allocation5 + $0x88] sm:$0xff]
        %v4195 = vld [vmem:[#allocation5 + $0x90] sm:$0xff]
        %v4196 = vld [vmem:[#allocation5 + $0x98] sm:$0xff]
        %v4197 = vld [vmem:[#allocation5 + $0xa0] sm:$0xff]
        %v4198 = vld [vmem:[#allocation5 + $0xa8] sm:$0xff]
        %v4199 = vld [vmem:[#allocation5 + $0xb0] sm:$0xff]
        %v4200 = vld [vmem:[#allocation5 + $0xb8] sm:$0xff]
        %v4201 = vld [vmem:[#allocation5 + $0xc0] sm:$0xff]
        %v4202 = vld [vmem:[#allocation5 + $0xc8] sm:$0xff]
        %v4203 = vld [vmem:[#allocation5 + $0xd0] sm:$0xff]
        %v4204 = vld [vmem:[#allocation5 + $0xd8] sm:$0xff]
        %v4205 = vld [vmem:[#allocation5 + $0xe0] sm:$0xff]
        %v4206 = vld [vmem:[#allocation5 + $0xe8] sm:$0xff]
        %v4207 = vld [vmem:[#allocation5 + $0xf0] sm:$0xff]
        %v4208 = vld [vmem:[#allocation5 + $0xf8] sm:$0xff]
        %v4209 = vld [vmem:[#allocation5 + $0x100] sm:$0xff]
        %v4210 = vld [vmem:[#allocation5 + $0x108] sm:$0xff]
        %v4211 = vld [vmem:[#allocation5 + $0x110] sm:$0xff]
        %v4212 = vld [vmem:[#allocation5 + $0x118] sm:$0xff]
        %v4213 = vld [vmem:[#allocation5 + $0x120] sm:$0xff]
        %v4214 = vld [vmem:[#allocation5 + $0x128] sm:$0xff]
        %v4215 = vld [vmem:[#allocation5 + $0x130] sm:$0xff]
        %v4216 = vld [vmem:[#allocation5 + $0x138] sm:$0xff]
        %v4217 = vld [vmem:[#allocation5 + $0x140] sm:$0xff]
        %v4218 = vld [vmem:[#allocation5 + $0x148] sm:$0xff]
        %v4219 = vld [vmem:[#allocation5 + $0x150] sm:$0xff]
        %v4220 = vld [vmem:[#allocation5 + $0x158] sm:$0xff]
        %v4221 = vld [vmem:[#allocation5 + $0x160] sm:$0xff]
        %v4222 = vld [vmem:[#allocation5 + $0x168] sm:$0xff]
        %v4223 = vld [vmem:[#allocation5 + $0x170] sm:$0xff]
        %v4224 = vld [vmem:[#allocation5 + $0x178] sm:$0xff]
        %v4225 = vld [vmem:[#allocation5 + $0x180] sm:$0xff]
        %v4226 = vld [vmem:[#allocation5 + $0x188] sm:$0xff]
        %v4227 = vld [vmem:[#allocation5 + $0x190] sm:$0xff]
        %v4228 = vld [vmem:[#allocation5 + $0x198] sm:$0xff]
        %v4229 = vld [vmem:[#allocation5 + $0x1a0] sm:$0xff]
        %v4230 = vld [vmem:[#allocation5 + $0x1a8] sm:$0xff]
        %v4231 = vld [vmem:[#allocation5 + $0x1b0] sm:$0xff]
        %v4232 = vld [vmem:[#allocation5 + $0x1b8] sm:$0xff]
        %v4233 = vld [vmem:[#allocation5 + $0x1c0] sm:$0xff]
        %v4234 = vld [vmem:[#allocation5 + $0x1c8] sm:$0xff]
        %v4235 = vld [vmem:[#allocation5 + $0x1d0] sm:$0xff]
        %v4236 = vld [vmem:[#allocation5 + $0x1d8] sm:$0xff]
        %v4237 = vld [vmem:[#allocation5 + $0x1e0] sm:$0xff]
        %v4238 = vld [vmem:[#allocation5 + $0x1e8] sm:$0xff]
        %v4239 = vld [vmem:[#allocation5 + $0x1f0] sm:$0xff]
        %v4240 = vld [vmem:[#allocation5 + $0x1f8] sm:$0xff]
        %v4241 = vld [vmem:[#allocation5 + $0x200] sm:$0xff]
        %v4242 = vld [vmem:[#allocation5 + $0x208] sm:$0xff]
        %v4243 = vld [vmem:[#allocation5 + $0x210] sm:$0xff]
        %v4244 = vld [vmem:[#allocation5 + $0x218] sm:$0xff]
        %v4245 = vld [vmem:[#allocation5 + $0x220] sm:$0xff]
        %v4246 = vld [vmem:[#allocation5 + $0x228] sm:$0xff]
        %v4247 = vld [vmem:[#allocation5 + $0x230] sm:$0xff]
        %v4248 = vld [vmem:[#allocation5 + $0x238] sm:$0xff]
        %v4249 = vld [vmem:[#allocation5 + $0x240] sm:$0xff]
        %v4250 = vld [vmem:[#allocation5 + $0x248] sm:$0xff]
        %v4251 = vld [vmem:[#allocation5 + $0x250] sm:$0xff]
        %v4252 = vld [vmem:[#allocation5 + $0x258] sm:$0xff]
        %v4253 = vld [vmem:[#allocation5 + $0x260] sm:$0xff]
        %v4254 = vld [vmem:[#allocation5 + $0x268] sm:$0xff]
        %v4255 = vld [vmem:[#allocation5 + $0x270] sm:$0xff]
        %v4256 = vld [vmem:[#allocation5 + $0x278] sm:$0xff]
        %v4257 = vld [vmem:[#allocation5 + $0x280] sm:$0xff]
        %v4258 = vld [vmem:[#allocation5 + $0x288] sm:$0xff]
        %v4259 = vld [vmem:[#allocation5 + $0x290] sm:$0xff]
        %v4260 = vld [vmem:[#allocation5 + $0x298] sm:$0xff]
        %v4261 = vld [vmem:[#allocation5 + $0x2a0] sm:$0xff]
        %v4262 = vld [vmem:[#allocation5 + $0x2a8] sm:$0xff]
        %v4263 = vld [vmem:[#allocation5 + $0x2b0] sm:$0xff]
        %v4264 = vld [vmem:[#allocation5 + $0x2b8] sm:$0xff]
        %v4265 = vld [vmem:[#allocation5 + $0x2c0] sm:$0xff]
        %v4266 = vld [vmem:[#allocation5 + $0x2c8] sm:$0xff]
        %v4267 = vld [vmem:[#allocation5 + $0x2d0] sm:$0xff]
        %v4268 = vld [vmem:[#allocation5 + $0x2d8] sm:$0xff]
        %v4269 = vld [vmem:[#allocation5 + $0x2e0] sm:$0xff]
        %v4270 = vld [vmem:[#allocation5 + $0x2e8] sm:$0xff]
        %v4271 = vld [vmem:[#allocation5 + $0x2f0] sm:$0xff]
        %v4272 = vld [vmem:[#allocation5 + $0x2f8] sm:$0xff]
        %v4273 = vld [vmem:[#allocation5 + $0x300] sm:$0xff]
        %v4274 = vld [vmem:[#allocation5 + $0x308] sm:$0xff]
        %v4275 = vld [vmem:[#allocation5 + $0x310] sm:$0xff]
        %v4276 = vld [vmem:[#allocation5 + $0x318] sm:$0xff]
        %v4277 = vld [vmem:[#allocation5 + $0x320] sm:$0xff]
        %v4278 = vld [vmem:[#allocation5 + $0x328] sm:$0xff]
        %v4279 = vld [vmem:[#allocation5 + $0x330] sm:$0xff]
        %v4280 = vld [vmem:[#allocation5 + $0x338] sm:$0xff]
        %v4281 = vld [vmem:[#allocation5 + $0x340] sm:$0xff]
        %v4282 = vld [vmem:[#allocation5 + $0x348] sm:$0xff]
        %v4283 = vld [vmem:[#allocation5 + $0x350] sm:$0xff]
        %v4284 = vld [vmem:[#allocation5 + $0x358] sm:$0xff]
        %v4285 = vld [vmem:[#allocation5 + $0x360] sm:$0xff]
        %v4286 = vld [vmem:[#allocation5 + $0x368] sm:$0xff]
        %v4287 = vld [vmem:[#allocation5 + $0x370] sm:$0xff]
        %v4288 = vld [vmem:[#allocation5 + $0x378] sm:$0xff]
        %v4289 = vld [vmem:[#allocation5 + $0x380] sm:$0xff]
        %v4290 = vld [vmem:[#allocation5 + $0x388] sm:$0xff]
        %v4291 = vld [vmem:[#allocation5 + $0x390] sm:$0xff]
        %v4292 = vld [vmem:[#allocation5 + $0x398] sm:$0xff]
        %v4293 = vld [vmem:[#allocation5 + $0x3a0] sm:$0xff]
        %v4294 = vld [vmem:[#allocation5 + $0x3a8] sm:$0xff]
        %v4295 = vld [vmem:[#allocation5 + $0x3b0] sm:$0xff]
        %v4296 = vld [vmem:[#allocation5 + $0x3b8] sm:$0xff]
        %v4297 = vld [vmem:[#allocation5 + $0x3c0] sm:$0xff]
        %v4298 = vld [vmem:[#allocation5 + $0x3c8] sm:$0xff]
        %v4299 = vld [vmem:[#allocation5 + $0x3d0] sm:$0xff]
        %v4300 = vld [vmem:[#allocation5 + $0x3d8] sm:$0xff]
        %v4301 = vld [vmem:[#allocation5 + $0x3e0] sm:$0xff]
        %v4302 = vld [vmem:[#allocation5 + $0x3e8] sm:$0xff]
        %v4303 = vld [vmem:[#allocation5 + $0x3f0] sm:$0xff]
        %v4304 = vld [vmem:[#allocation5 + $0x3f8] sm:$0xff]
        %v4305 = vld [vmem:[#allocation5 + $0x400] sm:$0xff]
        %v4306 = vld [vmem:[#allocation5 + $0x408] sm:$0xff]
        %v4307 = vld [vmem:[#allocation5 + $0x410] sm:$0xff]
        %v4308 = vld [vmem:[#allocation5 + $0x418] sm:$0xff]
        %v4309 = vld [vmem:[#allocation5 + $0x420] sm:$0xff]
        %v4310 = vld [vmem:[#allocation5 + $0x428] sm:$0xff]
        %v4311 = vld [vmem:[#allocation5 + $0x430] sm:$0xff]
        %v4312 = vld [vmem:[#allocation5 + $0x438] sm:$0xff]
        %v4313 = vld [vmem:[#allocation5 + $0x440] sm:$0xff]
        %v4314 = vld [vmem:[#allocation5 + $0x448] sm:$0xff]
        %v4315 = vld [vmem:[#allocation5 + $0x450] sm:$0xff]
        %v4316 = vld [vmem:[#allocation5 + $0x458] sm:$0xff]
        %v4317 = vld [vmem:[#allocation5 + $0x460] sm:$0xff]
        %v4318 = vld [vmem:[#allocation5 + $0x468] sm:$0xff]
        %v4319 = vld [vmem:[#allocation5 + $0x470] sm:$0xff]
        %v4320 = vld [vmem:[#allocation5 + $0x478] sm:$0xff]
        %v4321 = vld [vmem:[#allocation5 + $0x480] sm:$0xff]
        %v4322 = vld [vmem:[#allocation5 + $0x488] sm:$0xff]
        %v4323 = vld [vmem:[#allocation5 + $0x490] sm:$0xff]
        %v4324 = vld [vmem:[#allocation5 + $0x498] sm:$0xff]
        %v4325 = vld [vmem:[#allocation5 + $0x4a0] sm:$0xff]
        %v4326 = vld [vmem:[#allocation5 + $0x4a8] sm:$0xff]
        %v4327 = vld [vmem:[#allocation5 + $0x4b0] sm:$0xff]
        %v4328 = vld [vmem:[#allocation5 + $0x4b8] sm:$0xff]
        %v4329 = vld [vmem:[#allocation5 + $0x4c0] sm:$0xff]
        %v4330 = vld [vmem:[#allocation5 + $0x4c8] sm:$0xff]
        %v4331 = vld [vmem:[#allocation5 + $0x4d0] sm:$0xff]
        %v4332 = vld [vmem:[#allocation5 + $0x4d8] sm:$0xff]
        %v4333 = vld [vmem:[#allocation5 + $0x4e0] sm:$0xff]
        %v4334 = vld [vmem:[#allocation5 + $0x4e8] sm:$0xff]
        %v4335 = vld [vmem:[#allocation5 + $0x4f0] sm:$0xff]
        %v4336 = vld [vmem:[#allocation5 + $0x4f8] sm:$0xff]
        %v4337 = vld [vmem:[#allocation5 + $0x500] sm:$0xff]
        %v4338 = vld [vmem:[#allocation5 + $0x508] sm:$0xff]
        %v4339 = vld [vmem:[#allocation5 + $0x510] sm:$0xff]
        %v4340 = vld [vmem:[#allocation5 + $0x518] sm:$0xff]
        %v4341 = vld [vmem:[#allocation5 + $0x520] sm:$0xff]
        %vm4342 = vcmask 326656
        %v4344 = vsel %vm4342, %v4187, 0
        %v4347 = vsel %vm4342, %v4198, 0
        %v4350 = vsel %vm4342, %v4209, 0
        %v4353 = vsel %vm4342, %v4220, 0
        %v4356 = vsel %vm4342, %v4231, 0
        %v4359 = vsel %vm4342, %v4242, 0
        %v4362 = vsel %vm4342, %v4253, 0
        %v4365 = vsel %vm4342, %v4264, 0
        %v4368 = vsel %vm4342, %v4275, 0
        %v4371 = vsel %vm4342, %v4286, 0
        %v4374 = vsel %vm4342, %v4297, 0
        %v4377 = vsel %vm4342, %v4308, 0
        %v4380 = vsel %vm4342, %v4319, 0
        %v4383 = vsel %vm4342, %v4330, 0
        %v4386 = vsel %vm4342, %v4341, 0
        %4388 = vmatprep.subr.mxu0 %v2978
        %4389 = vmatpush1.msra.mxu0 %v2977
        %4390 = vmatprep.subr.mxu0 %v2970
        %4391 = vmatpush1.msra.mxu0 %v2969
        %4392 = vmatprep.subr.mxu0 %v2962
        %4393 = vmatpush1.msra.mxu0 %v2961
        %4394 = vmatprep.subr.mxu0 %v2954
        %4395 = vmatpush1.msra.mxu0 %v2953
        %4396 = vmatprep.subr.mxu0 %v2946
        %4397 = vmatpush1.msra.mxu0 %v2945
        %4398 = vmatprep.subr.mxu0 %v2938
        %4399 = vmatpush1.msra.mxu0 %v2937
        %4400 = vmatprep.subr.mxu0 %v2930
        %4401 = vmatpush1.msra.mxu0 %v2929
        %4402 = vmatprep.subr.mxu0 %v2922
        %4403 = vmatpush1.msra.mxu0 %v2921
        %4404 = vmatprep.subr.mxu0 %v2914
        %4405 = vmatpush1.msra.mxu0 %v2913
        %4406 = vmatprep.subr.mxu0 %v2906
        %4407 = vmatpush1.msra.mxu0 %v2905
        %4408 = vmatprep.subr.mxu0 %v2898
        %4409 = vmatpush1.msra.mxu0 %v2897
        %4410 = vmatprep.subr.mxu0 %v2890
        %4411 = vmatpush1.msra.mxu0 %v2889
        %4412 = vmatprep.subr.mxu0 %v2882
        %4413 = vmatpush1.msra.mxu0 %v2881
        %4414 = vmatprep.subr.mxu0 %v2874
        %4415 = vmatpush1.msra.mxu0 %v2873
        %4416 = vmatprep.subr.mxu0 %v2866
        %4417 = vmatpush1.msra.mxu0 %v2865
        %4418 = vmatprep.subr.mxu0 %v2858
        %4419 = vmatpush1.msra.mxu0 %v2857
        %4420 = vmatprep.subr.mxu0 %v3106
        %4421 = vmatpush2.msra.mxu0 %v3105
        %4422 = vmatprep.subr.mxu0 %v3098
        %4423 = vmatpush2.msra.mxu0 %v3097
        %4424 = vmatprep.subr.mxu0 %v3090
        %4425 = vmatpush2.msra.mxu0 %v3089
        %4426 = vmatprep.subr.mxu0 %v3082
        %4427 = vmatpush2.msra.mxu0 %v3081
        %4428 = vmatprep.subr.mxu0 %v3074
        %4429 = vmatpush2.msra.mxu0 %v3073
        %4430 = vmatprep.subr.mxu0 %v3066
        %4431 = vmatpush2.msra.mxu0 %v3065
        %4432 = vmatprep.subr.mxu0 %v3058
        %4433 = vmatpush2.msra.mxu0 %v3057
        %4434 = vmatprep.subr.mxu0 %v3050
        %4435 = vmatpush2.msra.mxu0 %v3049
        %4436 = vmatprep.subr.mxu0 %v3042
        %4437 = vmatpush2.msra.mxu0 %v3041
        %4438 = vmatprep.subr.mxu0 %v3034
        %4439 = vmatpush2.msra.mxu0 %v3033
        %4440 = vmatprep.subr.mxu0 %v3026
        %4441 = vmatpush2.msra.mxu0 %v3025
        %4442 = vmatprep.subr.mxu0 %v3018
        %4443 = vmatpush2.msra.mxu0 %v3017
        %4444 = vmatprep.subr.mxu0 %v3010
        %4445 = vmatpush2.msra.mxu0 %v3009
        %4446 = vmatprep.subr.mxu0 %v3002
        %4447 = vmatpush2.msra.mxu0 %v3001
        %4448 = vmatprep.subr.mxu0 %v2994
        %4449 = vmatpush2.msra.mxu0 %v2993
        %4450 = vmatprep.subr.mxu0 %v2986
        %4451 = vmatpush2.msra.mxu0 %v2985
        %4452 = vmatprep.mubr.f32.mxu0 %v4178
        %4453 = vmatmul.mubr.f32.gmra.mxu0 %v4177
        %v4454 = vpop.f32.mrf.mxu0
        %v4455 = vadd.f32 0.0, %v4454
        %v4456 = vpop.f32.mrf.mxu0
        %v4457 = vadd.f32 0.0, %v4456
        %4458 = vmatprep.mubr.f32.mxu0 %v4189
        %4459 = vmatmul.mubr.f32.gmra.mxu0 %v4188
        %v4460 = vpop.f32.mrf.mxu0
        %v4461 = vadd.f32 0.0, %v4460
        %v4462 = vpop.f32.mrf.mxu0
        %v4463 = vadd.f32 0.0, %v4462
        %4464 = vmatprep.mubr.f32.mxu0 %v4200
        %4465 = vmatmul.mubr.f32.gmra.mxu0 %v4199
        %v4466 = vpop.f32.mrf.mxu0
        %v4467 = vadd.f32 0.0, %v4466
        %v4468 = vpop.f32.mrf.mxu0
        %v4469 = vadd.f32 0.0, %v4468
        %4470 = vmatprep.mubr.f32.mxu0 %v4211
        %4471 = vmatmul.mubr.f32.gmra.mxu0 %v4210
        %v4472 = vpop.f32.mrf.mxu0
        %v4473 = vadd.f32 0.0, %v4472
        %v4474 = vpop.f32.mrf.mxu0
        %v4475 = vadd.f32 0.0, %v4474
        %4476 = vmatprep.mubr.f32.mxu0 %v4222
        %4477 = vmatmul.mubr.f32.gmra.mxu0 %v4221
        %v4478 = vpop.f32.mrf.mxu0
        %v4479 = vadd.f32 0.0, %v4478
        %v4480 = vpop.f32.mrf.mxu0
        %v4481 = vadd.f32 0.0, %v4480
        %4482 = vmatprep.mubr.f32.mxu0 %v4233
        %4483 = vmatmul.mubr.f32.gmra.mxu0 %v4232
        %v4484 = vpop.f32.mrf.mxu0
        %v4485 = vadd.f32 0.0, %v4484
        %v4486 = vpop.f32.mrf.mxu0
        %v4487 = vadd.f32 0.0, %v4486
        %4488 = vmatprep.mubr.f32.mxu0 %v4244
        %4489 = vmatmul.mubr.f32.gmra.mxu0 %v4243
        %v4490 = vpop.f32.mrf.mxu0
        %v4491 = vadd.f32 0.0, %v4490
        %v4492 = vpop.f32.mrf.mxu0
        %v4493 = vadd.f32 0.0, %v4492
        %4494 = vmatprep.mubr.f32.mxu0 %v4255
        %4495 = vmatmul.mubr.f32.gmra.mxu0 %v4254
        %v4496 = vpop.f32.mrf.mxu0
        %v4497 = vadd.f32 0.0, %v4496
        %v4498 = vpop.f32.mrf.mxu0
        %v4499 = vadd.f32 0.0, %v4498
        %4500 = vmatprep.mubr.f32.mxu0 %v4266
        %4501 = vmatmul.mubr.f32.gmra.mxu0 %v4265
        %v4502 = vpop.f32.mrf.mxu0
        %v4503 = vadd.f32 0.0, %v4502
        %v4504 = vpop.f32.mrf.mxu0
        %v4505 = vadd.f32 0.0, %v4504
        %4506 = vmatprep.mubr.f32.mxu0 %v4277
        %4507 = vmatmul.mubr.f32.gmra.mxu0 %v4276
        %v4508 = vpop.f32.mrf.mxu0
        %v4509 = vadd.f32 0.0, %v4508
        %v4510 = vpop.f32.mrf.mxu0
        %v4511 = vadd.f32 0.0, %v4510
        %4512 = vmatprep.mubr.f32.mxu0 %v4288
        %4513 = vmatmul.mubr.f32.gmra.mxu0 %v4287
        %v4514 = vpop.f32.mrf.mxu0
        %v4515 = vadd.f32 0.0, %v4514
        %v4516 = vpop.f32.mrf.mxu0
        %v4517 = vadd.f32 0.0, %v4516
        %4518 = vmatprep.mubr.f32.mxu0 %v4299
        %4519 = vmatmul.mubr.f32.gmra.mxu0 %v4298
        %v4520 = vpop.f32.mrf.mxu0
        %v4521 = vadd.f32 0.0, %v4520
        %v4522 = vpop.f32.mrf.mxu0
        %v4523 = vadd.f32 0.0, %v4522
        %4524 = vmatprep.mubr.f32.mxu0 %v4310
        %4525 = vmatmul.mubr.f32.gmra.mxu0 %v4309
        %v4526 = vpop.f32.mrf.mxu0
        %v4527 = vadd.f32 0.0, %v4526
        %v4528 = vpop.f32.mrf.mxu0
        %v4529 = vadd.f32 0.0, %v4528
        %4530 = vmatprep.mubr.f32.mxu0 %v4321
        %4531 = vmatmul.mubr.f32.gmra.mxu0 %v4320
        %v4532 = vpop.f32.mrf.mxu0
        %v4533 = vadd.f32 0.0, %v4532
        %v4534 = vpop.f32.mrf.mxu0
        %v4535 = vadd.f32 0.0, %v4534
        %4536 = vmatprep.mubr.f32.mxu0 %v4332
        %4537 = vmatmul.mubr.f32.gmra.mxu0 %v4331
        %v4538 = vpop.f32.mrf.mxu0
        %v4539 = vadd.f32 0.0, %v4538
        %v4540 = vpop.f32.mrf.mxu0
        %v4541 = vadd.f32 0.0, %v4540
        %4542 = vdwg.mxu0
        %4543 = vmatprep.subr.mxu0 %v3234
        %4544 = vmatpush1.msra.mxu0 %v3233
        %4545 = vmatprep.subr.mxu0 %v3226
        %4546 = vmatpush1.msra.mxu0 %v3225
        %4547 = vmatprep.subr.mxu0 %v3218
        %4548 = vmatpush1.msra.mxu0 %v3217
        %4549 = vmatprep.subr.mxu0 %v3210
        %4550 = vmatpush1.msra.mxu0 %v3209
        %4551 = vmatprep.subr.mxu0 %v3202
        %4552 = vmatpush1.msra.mxu0 %v3201
        %4553 = vmatprep.subr.mxu0 %v3194
        %4554 = vmatpush1.msra.mxu0 %v3193
        %4555 = vmatprep.subr.mxu0 %v3186
        %4556 = vmatpush1.msra.mxu0 %v3185
        %4557 = vmatprep.subr.mxu0 %v3178
        %4558 = vmatpush1.msra.mxu0 %v3177
        %4559 = vmatprep.subr.mxu0 %v3170
        %4560 = vmatpush1.msra.mxu0 %v3169
        %4561 = vmatprep.subr.mxu0 %v3162
        %4562 = vmatpush1.msra.mxu0 %v3161
        %4563 = vmatprep.subr.mxu0 %v3154
        %4564 = vmatpush1.msra.mxu0 %v3153
        %4565 = vmatprep.subr.mxu0 %v3146
        %4566 = vmatpush1.msra.mxu0 %v3145
        %4567 = vmatprep.subr.mxu0 %v3138
        %4568 = vmatpush1.msra.mxu0 %v3137
        %4569 = vmatprep.subr.mxu0 %v3130
        %4570 = vmatpush1.msra.mxu0 %v3129
        %4571 = vmatprep.subr.mxu0 %v3122
        %4572 = vmatpush1.msra.mxu0 %v3121
        %4573 = vmatprep.subr.mxu0 %v3114
        %4574 = vmatpush1.msra.mxu0 %v3113
        %4575 = vmatprep.subr.mxu0 %v3362
        %4576 = vmatpush2.msra.mxu0 %v3361
        %4577 = vmatprep.subr.mxu0 %v3354
        %4578 = vmatpush2.msra.mxu0 %v3353
        %4579 = vmatprep.subr.mxu0 %v3346
        %4580 = vmatpush2.msra.mxu0 %v3345
        %4581 = vmatprep.subr.mxu0 %v3338
        %4582 = vmatpush2.msra.mxu0 %v3337
        %4583 = vmatprep.subr.mxu0 %v3330
        %4584 = vmatpush2.msra.mxu0 %v3329
        %4585 = vmatprep.subr.mxu0 %v3322
        %4586 = vmatpush2.msra.mxu0 %v3321
        %4587 = vmatprep.subr.mxu0 %v3314
        %4588 = vmatpush2.msra.mxu0 %v3313
        %4589 = vmatprep.subr.mxu0 %v3306
        %4590 = vmatpush2.msra.mxu0 %v3305
        %4591 = vmatprep.subr.mxu0 %v3298
        %4592 = vmatpush2.msra.mxu0 %v3297
        %4593 = vmatprep.subr.mxu0 %v3290
        %4594 = vmatpush2.msra.mxu0 %v3289
        %4595 = vmatprep.subr.mxu0 %v3282
        %4596 = vmatpush2.msra.mxu0 %v3281
        %4597 = vmatprep.subr.mxu0 %v3274
        %4598 = vmatpush2.msra.mxu0 %v3273
        %4599 = vmatprep.subr.mxu0 %v3266
        %4600 = vmatpush2.msra.mxu0 %v3265
        %4601 = vmatprep.subr.mxu0 %v3258
        %4602 = vmatpush2.msra.mxu0 %v3257
        %4603 = vmatprep.subr.mxu0 %v3250
        %4604 = vmatpush2.msra.mxu0 %v3249
        %4605 = vmatprep.subr.mxu0 %v3242
        %4606 = vmatpush2.msra.mxu0 %v3241
        %4607 = vmatprep.mubr.f32.mxu0 %v4180
        %4608 = vmatmul.mubr.f32.gmra.mxu0 %v4179
        %v4609 = vpop.f32.mrf.mxu0
        %v4610 = vadd.f32 %v4455, %v4609
        %v4611 = vpop.f32.mrf.mxu0
        %v4612 = vadd.f32 %v4457, %v4611
        %4613 = vmatprep.mubr.f32.mxu0 %v4191
        %4614 = vmatmul.mubr.f32.gmra.mxu0 %v4190
        %v4615 = vpop.f32.mrf.mxu0
        %v4616 = vadd.f32 %v4461, %v4615
        %v4617 = vpop.f32.mrf.mxu0
        %v4618 = vadd.f32 %v4463, %v4617
        %4619 = vmatprep.mubr.f32.mxu0 %v4202
        %4620 = vmatmul.mubr.f32.gmra.mxu0 %v4201
        %v4621 = vpop.f32.mrf.mxu0
        %v4622 = vadd.f32 %v4467, %v4621
        %v4623 = vpop.f32.mrf.mxu0
        %v4624 = vadd.f32 %v4469, %v4623
        %4625 = vmatprep.mubr.f32.mxu0 %v4213
        %4626 = vmatmul.mubr.f32.gmra.mxu0 %v4212
        %v4627 = vpop.f32.mrf.mxu0
        %v4628 = vadd.f32 %v4473, %v4627
        %v4629 = vpop.f32.mrf.mxu0
        %v4630 = vadd.f32 %v4475, %v4629
        %4631 = vmatprep.mubr.f32.mxu0 %v4224
        %4632 = vmatmul.mubr.f32.gmra.mxu0 %v4223
        %v4633 = vpop.f32.mrf.mxu0
        %v4634 = vadd.f32 %v4479, %v4633
        %v4635 = vpop.f32.mrf.mxu0
        %v4636 = vadd.f32 %v4481, %v4635
        %4637 = vmatprep.mubr.f32.mxu0 %v4235
        %4638 = vmatmul.mubr.f32.gmra.mxu0 %v4234
        %v4639 = vpop.f32.mrf.mxu0
        %v4640 = vadd.f32 %v4485, %v4639
        %v4641 = vpop.f32.mrf.mxu0
        %v4642 = vadd.f32 %v4487, %v4641
        %4643 = vmatprep.mubr.f32.mxu0 %v4246
        %4644 = vmatmul.mubr.f32.gmra.mxu0 %v4245
        %v4645 = vpop.f32.mrf.mxu0
        %v4646 = vadd.f32 %v4491, %v4645
        %v4647 = vpop.f32.mrf.mxu0
        %v4648 = vadd.f32 %v4493, %v4647
        %4649 = vmatprep.mubr.f32.mxu0 %v4257
        %4650 = vmatmul.mubr.f32.gmra.mxu0 %v4256
        %v4651 = vpop.f32.mrf.mxu0
        %v4652 = vadd.f32 %v4497, %v4651
        %v4653 = vpop.f32.mrf.mxu0
        %v4654 = vadd.f32 %v4499, %v4653
        %4655 = vmatprep.mubr.f32.mxu0 %v4268
        %4656 = vmatmul.mubr.f32.gmra.mxu0 %v4267
        %v4657 = vpop.f32.mrf.mxu0
        %v4658 = vadd.f32 %v4503, %v4657
        %v4659 = vpop.f32.mrf.mxu0
        %v4660 = vadd.f32 %v4505, %v4659
        %4661 = vmatprep.mubr.f32.mxu0 %v4279
        %4662 = vmatmul.mubr.f32.gmra.mxu0 %v4278
        %v4663 = vpop.f32.mrf.mxu0
        %v4664 = vadd.f32 %v4509, %v4663
        %v4665 = vpop.f32.mrf.mxu0
        %v4666 = vadd.f32 %v4511, %v4665
        %4667 = vmatprep.mubr.f32.mxu0 %v4290
        %4668 = vmatmul.mubr.f32.gmra.mxu0 %v4289
        %v4669 = vpop.f32.mrf.mxu0
        %v4670 = vadd.f32 %v4515, %v4669
        %v4671 = vpop.f32.mrf.mxu0
        %v4672 = vadd.f32 %v4517, %v4671
        %4673 = vmatprep.mubr.f32.mxu0 %v4301
        %4674 = vmatmul.mubr.f32.gmra.mxu0 %v4300
        %v4675 = vpop.f32.mrf.mxu0
        %v4676 = vadd.f32 %v4521, %v4675
        %v4677 = vpop.f32.mrf.mxu0
        %v4678 = vadd.f32 %v4523, %v4677
        %4679 = vmatprep.mubr.f32.mxu0 %v4312
        %4680 = vmatmul.mubr.f32.gmra.mxu0 %v4311
        %v4681 = vpop.f32.mrf.mxu0
        %v4682 = vadd.f32 %v4527, %v4681
        %v4683 = vpop.f32.mrf.mxu0
        %v4684 = vadd.f32 %v4529, %v4683
        %4685 = vmatprep.mubr.f32.mxu0 %v4323
        %4686 = vmatmul.mubr.f32.gmra.mxu0 %v4322
        %v4687 = vpop.f32.mrf.mxu0
        %v4688 = vadd.f32 %v4533, %v4687
        %v4689 = vpop.f32.mrf.mxu0
        %v4690 = vadd.f32 %v4535, %v4689
        %4691 = vmatprep.mubr.f32.mxu0 %v4334
        %4692 = vmatmul.mubr.f32.gmra.mxu0 %v4333
        %v4693 = vpop.f32.mrf.mxu0
        %v4694 = vadd.f32 %v4539, %v4693
        %v4695 = vpop.f32.mrf.mxu0
        %v4696 = vadd.f32 %v4541, %v4695
        %4697 = vdwg.mxu0
        %4698 = vmatprep.subr.mxu0 %v3490
        %4699 = vmatpush1.msra.mxu0 %v3489
        %4700 = vmatprep.subr.mxu0 %v3482
        %4701 = vmatpush1.msra.mxu0 %v3481
        %4702 = vmatprep.subr.mxu0 %v3474
        %4703 = vmatpush1.msra.mxu0 %v3473
        %4704 = vmatprep.subr.mxu0 %v3466
        %4705 = vmatpush1.msra.mxu0 %v3465
        %4706 = vmatprep.subr.mxu0 %v3458
        %4707 = vmatpush1.msra.mxu0 %v3457
        %4708 = vmatprep.subr.mxu0 %v3450
        %4709 = vmatpush1.msra.mxu0 %v3449
        %4710 = vmatprep.subr.mxu0 %v3442
        %4711 = vmatpush1.msra.mxu0 %v3441
        %4712 = vmatprep.subr.mxu0 %v3434
        %4713 = vmatpush1.msra.mxu0 %v3433
        %4714 = vmatprep.subr.mxu0 %v3426
        %4715 = vmatpush1.msra.mxu0 %v3425
        %4716 = vmatprep.subr.mxu0 %v3418
        %4717 = vmatpush1.msra.mxu0 %v3417
        %4718 = vmatprep.subr.mxu0 %v3410
        %4719 = vmatpush1.msra.mxu0 %v3409
        %4720 = vmatprep.subr.mxu0 %v3402
        %4721 = vmatpush1.msra.mxu0 %v3401
        %4722 = vmatprep.subr.mxu0 %v3394
        %4723 = vmatpush1.msra.mxu0 %v3393
        %4724 = vmatprep.subr.mxu0 %v3386
        %4725 = vmatpush1.msra.mxu0 %v3385
        %4726 = vmatprep.subr.mxu0 %v3378
        %4727 = vmatpush1.msra.mxu0 %v3377
        %4728 = vmatprep.subr.mxu0 %v3370
        %4729 = vmatpush1.msra.mxu0 %v3369
        %4730 = vmatprep.subr.mxu0 %v3618
        %4731 = vmatpush2.msra.mxu0 %v3617
        %4732 = vmatprep.subr.mxu0 %v3610
        %4733 = vmatpush2.msra.mxu0 %v3609
        %4734 = vmatprep.subr.mxu0 %v3602
        %4735 = vmatpush2.msra.mxu0 %v3601
        %4736 = vmatprep.subr.mxu0 %v3594
        %4737 = vmatpush2.msra.mxu0 %v3593
        %4738 = vmatprep.subr.mxu0 %v3586
        %4739 = vmatpush2.msra.mxu0 %v3585
        %4740 = vmatprep.subr.mxu0 %v3578
        %4741 = vmatpush2.msra.mxu0 %v3577
        %4742 = vmatprep.subr.mxu0 %v3570
        %4743 = vmatpush2.msra.mxu0 %v3569
        %4744 = vmatprep.subr.mxu0 %v3562
        %4745 = vmatpush2.msra.mxu0 %v3561
        %4746 = vmatprep.subr.mxu0 %v3554
        %4747 = vmatpush2.msra.mxu0 %v3553
        %4748 = vmatprep.subr.mxu0 %v3546
        %4749 = vmatpush2.msra.mxu0 %v3545
        %4750 = vmatprep.subr.mxu0 %v3538
        %4751 = vmatpush2.msra.mxu0 %v3537
        %4752 = vmatprep.subr.mxu0 %v3530
        %4753 = vmatpush2.msra.mxu0 %v3529
        %4754 = vmatprep.subr.mxu0 %v3522
        %4755 = vmatpush2.msra.mxu0 %v3521
        %4756 = vmatprep.subr.mxu0 %v3514
        %4757 = vmatpush2.msra.mxu0 %v3513
        %4758 = vmatprep.subr.mxu0 %v3506
        %4759 = vmatpush2.msra.mxu0 %v3505
        %4760 = vmatprep.subr.mxu0 %v3498
        %4761 = vmatpush2.msra.mxu0 %v3497
        %4762 = vmatprep.mubr.f32.mxu0 %v4182
        %4763 = vmatmul.mubr.f32.gmra.mxu0 %v4181
        %v4764 = vpop.f32.mrf.mxu0
        %v4765 = vadd.f32 %v4610, %v4764
        %v4766 = vpop.f32.mrf.mxu0
        %v4767 = vadd.f32 %v4612, %v4766
        %4768 = vmatprep.mubr.f32.mxu0 %v4193
        %4769 = vmatmul.mubr.f32.gmra.mxu0 %v4192
        %v4770 = vpop.f32.mrf.mxu0
        %v4771 = vadd.f32 %v4616, %v4770
        %v4772 = vpop.f32.mrf.mxu0
        %v4773 = vadd.f32 %v4618, %v4772
        %4774 = vmatprep.mubr.f32.mxu0 %v4204
        %4775 = vmatmul.mubr.f32.gmra.mxu0 %v4203
        %v4776 = vpop.f32.mrf.mxu0
        %v4777 = vadd.f32 %v4622, %v4776
        %v4778 = vpop.f32.mrf.mxu0
        %v4779 = vadd.f32 %v4624, %v4778
        %4780 = vmatprep.mubr.f32.mxu0 %v4215
        %4781 = vmatmul.mubr.f32.gmra.mxu0 %v4214
        %v4782 = vpop.f32.mrf.mxu0
        %v4783 = vadd.f32 %v4628, %v4782
        %v4784 = vpop.f32.mrf.mxu0
        %v4785 = vadd.f32 %v4630, %v4784
        %4786 = vmatprep.mubr.f32.mxu0 %v4226
        %4787 = vmatmul.mubr.f32.gmra.mxu0 %v4225
        %v4788 = vpop.f32.mrf.mxu0
        %v4789 = vadd.f32 %v4634, %v4788
        %v4790 = vpop.f32.mrf.mxu0
        %v4791 = vadd.f32 %v4636, %v4790
        %4792 = vmatprep.mubr.f32.mxu0 %v4237
        %4793 = vmatmul.mubr.f32.gmra.mxu0 %v4236
        %v4794 = vpop.f32.mrf.mxu0
        %v4795 = vadd.f32 %v4640, %v4794
        %v4796 = vpop.f32.mrf.mxu0
        %v4797 = vadd.f32 %v4642, %v4796
        %4798 = vmatprep.mubr.f32.mxu0 %v4248
        %4799 = vmatmul.mubr.f32.gmra.mxu0 %v4247
        %v4800 = vpop.f32.mrf.mxu0
        %v4801 = vadd.f32 %v4646, %v4800
        %v4802 = vpop.f32.mrf.mxu0
        %v4803 = vadd.f32 %v4648, %v4802
        %4804 = vmatprep.mubr.f32.mxu0 %v4259
        %4805 = vmatmul.mubr.f32.gmra.mxu0 %v4258
        %v4806 = vpop.f32.mrf.mxu0
        %v4807 = vadd.f32 %v4652, %v4806
        %v4808 = vpop.f32.mrf.mxu0
        %v4809 = vadd.f32 %v4654, %v4808
        %4810 = vmatprep.mubr.f32.mxu0 %v4270
        %4811 = vmatmul.mubr.f32.gmra.mxu0 %v4269
        %v4812 = vpop.f32.mrf.mxu0
        %v4813 = vadd.f32 %v4658, %v4812
        %v4814 = vpop.f32.mrf.mxu0
        %v4815 = vadd.f32 %v4660, %v4814
        %4816 = vmatprep.mubr.f32.mxu0 %v4281
        %4817 = vmatmul.mubr.f32.gmra.mxu0 %v4280
        %v4818 = vpop.f32.mrf.mxu0
        %v4819 = vadd.f32 %v4664, %v4818
        %v4820 = vpop.f32.mrf.mxu0
        %v4821 = vadd.f32 %v4666, %v4820
        %4822 = vmatprep.mubr.f32.mxu0 %v4292
        %4823 = vmatmul.mubr.f32.gmra.mxu0 %v4291
        %v4824 = vpop.f32.mrf.mxu0
        %v4825 = vadd.f32 %v4670, %v4824
        %v4826 = vpop.f32.mrf.mxu0
        %v4827 = vadd.f32 %v4672, %v4826
        %4828 = vmatprep.mubr.f32.mxu0 %v4303
        %4829 = vmatmul.mubr.f32.gmra.mxu0 %v4302
        %v4830 = vpop.f32.mrf.mxu0
        %v4831 = vadd.f32 %v4676, %v4830
        %v4832 = vpop.f32.mrf.mxu0
        %v4833 = vadd.f32 %v4678, %v4832
        %4834 = vmatprep.mubr.f32.mxu0 %v4314
        %4835 = vmatmul.mubr.f32.gmra.mxu0 %v4313
        %v4836 = vpop.f32.mrf.mxu0
        %v4837 = vadd.f32 %v4682, %v4836
        %v4838 = vpop.f32.mrf.mxu0
        %v4839 = vadd.f32 %v4684, %v4838
        %4840 = vmatprep.mubr.f32.mxu0 %v4325
        %4841 = vmatmul.mubr.f32.gmra.mxu0 %v4324
        %v4842 = vpop.f32.mrf.mxu0
        %v4843 = vadd.f32 %v4688, %v4842
        %v4844 = vpop.f32.mrf.mxu0
        %v4845 = vadd.f32 %v4690, %v4844
        %4846 = vmatprep.mubr.f32.mxu0 %v4336
        %4847 = vmatmul.mubr.f32.gmra.mxu0 %v4335
        %v4848 = vpop.f32.mrf.mxu0
        %v4849 = vadd.f32 %v4694, %v4848
        %v4850 = vpop.f32.mrf.mxu0
        %v4851 = vadd.f32 %v4696, %v4850
        %4852 = vdwg.mxu0
        %4853 = vmatprep.subr.mxu0 %v3746
        %4854 = vmatpush1.msra.mxu0 %v3745
        %4855 = vmatprep.subr.mxu0 %v3738
        %4856 = vmatpush1.msra.mxu0 %v3737
        %4857 = vmatprep.subr.mxu0 %v3730
        %4858 = vmatpush1.msra.mxu0 %v3729
        %4859 = vmatprep.subr.mxu0 %v3722
        %4860 = vmatpush1.msra.mxu0 %v3721
        %4861 = vmatprep.subr.mxu0 %v3714
        %4862 = vmatpush1.msra.mxu0 %v3713
        %4863 = vmatprep.subr.mxu0 %v3706
        %4864 = vmatpush1.msra.mxu0 %v3705
        %4865 = vmatprep.subr.mxu0 %v3698
        %4866 = vmatpush1.msra.mxu0 %v3697
        %4867 = vmatprep.subr.mxu0 %v3690
        %4868 = vmatpush1.msra.mxu0 %v3689
        %4869 = vmatprep.subr.mxu0 %v3682
        %4870 = vmatpush1.msra.mxu0 %v3681
        %4871 = vmatprep.subr.mxu0 %v3674
        %4872 = vmatpush1.msra.mxu0 %v3673
        %4873 = vmatprep.subr.mxu0 %v3666
        %4874 = vmatpush1.msra.mxu0 %v3665
        %4875 = vmatprep.subr.mxu0 %v3658
        %4876 = vmatpush1.msra.mxu0 %v3657
        %4877 = vmatprep.subr.mxu0 %v3650
        %4878 = vmatpush1.msra.mxu0 %v3649
        %4879 = vmatprep.subr.mxu0 %v3642
        %4880 = vmatpush1.msra.mxu0 %v3641
        %4881 = vmatprep.subr.mxu0 %v3634
        %4882 = vmatpush1.msra.mxu0 %v3633
        %4883 = vmatprep.subr.mxu0 %v3626
        %4884 = vmatpush1.msra.mxu0 %v3625
        %4885 = vmatprep.subr.mxu0 %v3874
        %4886 = vmatpush2.msra.mxu0 %v3873
        %4887 = vmatprep.subr.mxu0 %v3866
        %4888 = vmatpush2.msra.mxu0 %v3865
        %4889 = vmatprep.subr.mxu0 %v3858
        %4890 = vmatpush2.msra.mxu0 %v3857
        %4891 = vmatprep.subr.mxu0 %v3850
        %4892 = vmatpush2.msra.mxu0 %v3849
        %4893 = vmatprep.subr.mxu0 %v3842
        %4894 = vmatpush2.msra.mxu0 %v3841
        %4895 = vmatprep.subr.mxu0 %v3834
        %4896 = vmatpush2.msra.mxu0 %v3833
        %4897 = vmatprep.subr.mxu0 %v3826
        %4898 = vmatpush2.msra.mxu0 %v3825
        %4899 = vmatprep.subr.mxu0 %v3818
        %4900 = vmatpush2.msra.mxu0 %v3817
        %4901 = vmatprep.subr.mxu0 %v3810
        %4902 = vmatpush2.msra.mxu0 %v3809
        %4903 = vmatprep.subr.mxu0 %v3802
        %4904 = vmatpush2.msra.mxu0 %v3801
        %4905 = vmatprep.subr.mxu0 %v3794
        %4906 = vmatpush2.msra.mxu0 %v3793
        %4907 = vmatprep.subr.mxu0 %v3786
        %4908 = vmatpush2.msra.mxu0 %v3785
        %4909 = vmatprep.subr.mxu0 %v3778
        %4910 = vmatpush2.msra.mxu0 %v3777
        %4911 = vmatprep.subr.mxu0 %v3770
        %4912 = vmatpush2.msra.mxu0 %v3769
        %4913 = vmatprep.subr.mxu0 %v3762
        %4914 = vmatpush2.msra.mxu0 %v3761
        %4915 = vmatprep.subr.mxu0 %v3754
        %4916 = vmatpush2.msra.mxu0 %v3753
        %4917 = vmatprep.mubr.f32.mxu0 %v4184
        %4918 = vmatmul.mubr.f32.gmra.mxu0 %v4183
        %v4919 = vpop.f32.mrf.mxu0
        %v4920 = vadd.f32 %v4765, %v4919
        %v4921 = vpop.f32.mrf.mxu0
        %v4922 = vadd.f32 %v4767, %v4921
        %4923 = vmatprep.mubr.f32.mxu0 %v4195
        %4924 = vmatmul.mubr.f32.gmra.mxu0 %v4194
        %v4925 = vpop.f32.mrf.mxu0
        %v4926 = vadd.f32 %v4771, %v4925
        %v4927 = vpop.f32.mrf.mxu0
        %v4928 = vadd.f32 %v4773, %v4927
        %4929 = vmatprep.mubr.f32.mxu0 %v4206
        %4930 = vmatmul.mubr.f32.gmra.mxu0 %v4205
        %v4931 = vpop.f32.mrf.mxu0
        %v4932 = vadd.f32 %v4777, %v4931
        %v4933 = vpop.f32.mrf.mxu0
        %v4934 = vadd.f32 %v4779, %v4933
        %4935 = vmatprep.mubr.f32.mxu0 %v4217
        %4936 = vmatmul.mubr.f32.gmra.mxu0 %v4216
        %v4937 = vpop.f32.mrf.mxu0
        %v4938 = vadd.f32 %v4783, %v4937
        %v4939 = vpop.f32.mrf.mxu0
        %v4940 = vadd.f32 %v4785, %v4939
        %4941 = vmatprep.mubr.f32.mxu0 %v4228
        %4942 = vmatmul.mubr.f32.gmra.mxu0 %v4227
        %v4943 = vpop.f32.mrf.mxu0
        %v4944 = vadd.f32 %v4789, %v4943
        %v4945 = vpop.f32.mrf.mxu0
        %v4946 = vadd.f32 %v4791, %v4945
        %4947 = vmatprep.mubr.f32.mxu0 %v4239
        %4948 = vmatmul.mubr.f32.gmra.mxu0 %v4238
        %v4949 = vpop.f32.mrf.mxu0
        %v4950 = vadd.f32 %v4795, %v4949
        %v4951 = vpop.f32.mrf.mxu0
        %v4952 = vadd.f32 %v4797, %v4951
        %4953 = vmatprep.mubr.f32.mxu0 %v4250
        %4954 = vmatmul.mubr.f32.gmra.mxu0 %v4249
        %v4955 = vpop.f32.mrf.mxu0
        %v4956 = vadd.f32 %v4801, %v4955
        %v4957 = vpop.f32.mrf.mxu0
        %v4958 = vadd.f32 %v4803, %v4957
        %4959 = vmatprep.mubr.f32.mxu0 %v4261
        %4960 = vmatmul.mubr.f32.gmra.mxu0 %v4260
        %v4961 = vpop.f32.mrf.mxu0
        %v4962 = vadd.f32 %v4807, %v4961
        %v4963 = vpop.f32.mrf.mxu0
        %v4964 = vadd.f32 %v4809, %v4963
        %4965 = vmatprep.mubr.f32.mxu0 %v4272
        %4966 = vmatmul.mubr.f32.gmra.mxu0 %v4271
        %v4967 = vpop.f32.mrf.mxu0
        %v4968 = vadd.f32 %v4813, %v4967
        %v4969 = vpop.f32.mrf.mxu0
        %v4970 = vadd.f32 %v4815, %v4969
        %4971 = vmatprep.mubr.f32.mxu0 %v4283
        %4972 = vmatmul.mubr.f32.gmra.mxu0 %v4282
        %v4973 = vpop.f32.mrf.mxu0
        %v4974 = vadd.f32 %v4819, %v4973
        %v4975 = vpop.f32.mrf.mxu0
        %v4976 = vadd.f32 %v4821, %v4975
        %4977 = vmatprep.mubr.f32.mxu0 %v4294
        %4978 = vmatmul.mubr.f32.gmra.mxu0 %v4293
        %v4979 = vpop.f32.mrf.mxu0
        %v4980 = vadd.f32 %v4825, %v4979
        %v4981 = vpop.f32.mrf.mxu0
        %v4982 = vadd.f32 %v4827, %v4981
        %4983 = vmatprep.mubr.f32.mxu0 %v4305
        %4984 = vmatmul.mubr.f32.gmra.mxu0 %v4304
        %v4985 = vpop.f32.mrf.mxu0
        %v4986 = vadd.f32 %v4831, %v4985
        %v4987 = vpop.f32.mrf.mxu0
        %v4988 = vadd.f32 %v4833, %v4987
        %4989 = vmatprep.mubr.f32.mxu0 %v4316
        %4990 = vmatmul.mubr.f32.gmra.mxu0 %v4315
        %v4991 = vpop.f32.mrf.mxu0
        %v4992 = vadd.f32 %v4837, %v4991
        %v4993 = vpop.f32.mrf.mxu0
        %v4994 = vadd.f32 %v4839, %v4993
        %4995 = vmatprep.mubr.f32.mxu0 %v4327
        %4996 = vmatmul.mubr.f32.gmra.mxu0 %v4326
        %v4997 = vpop.f32.mrf.mxu0
        %v4998 = vadd.f32 %v4843, %v4997
        %v4999 = vpop.f32.mrf.mxu0
        %v5000 = vadd.f32 %v4845, %v4999
        %5001 = vmatprep.mubr.f32.mxu0 %v4338
        %5002 = vmatmul.mubr.f32.gmra.mxu0 %v4337
        %v5003 = vpop.f32.mrf.mxu0
        %v5004 = vadd.f32 %v4849, %v5003
        %v5005 = vpop.f32.mrf.mxu0
        %v5006 = vadd.f32 %v4851, %v5005
        %5007 = vdwg.mxu0
        %5008 = vmatprep.subr.mxu0 %v4002
        %5009 = vmatpush1.msra.mxu0 %v4001
        %5010 = vmatprep.subr.mxu0 %v3994
        %5011 = vmatpush1.msra.mxu0 %v3993
        %5012 = vmatprep.subr.mxu0 %v3986
        %5013 = vmatpush1.msra.mxu0 %v3985
        %5014 = vmatprep.subr.mxu0 %v3978
        %5015 = vmatpush1.msra.mxu0 %v3977
        %5016 = vmatprep.subr.mxu0 %v3970
        %5017 = vmatpush1.msra.mxu0 %v3969
        %5018 = vmatprep.subr.mxu0 %v3962
        %5019 = vmatpush1.msra.mxu0 %v3961
        %5020 = vmatprep.subr.mxu0 %v3954
        %5021 = vmatpush1.msra.mxu0 %v3953
        %5022 = vmatprep.subr.mxu0 %v3946
        %5023 = vmatpush1.msra.mxu0 %v3945
        %5024 = vmatprep.subr.mxu0 %v3938
        %5025 = vmatpush1.msra.mxu0 %v3937
        %5026 = vmatprep.subr.mxu0 %v3930
        %5027 = vmatpush1.msra.mxu0 %v3929
        %5028 = vmatprep.subr.mxu0 %v3922
        %5029 = vmatpush1.msra.mxu0 %v3921
        %5030 = vmatprep.subr.mxu0 %v3914
        %5031 = vmatpush1.msra.mxu0 %v3913
        %5032 = vmatprep.subr.mxu0 %v3906
        %5033 = vmatpush1.msra.mxu0 %v3905
        %5034 = vmatprep.subr.mxu0 %v3898
        %5035 = vmatpush1.msra.mxu0 %v3897
        %5036 = vmatprep.subr.mxu0 %v3890
        %5037 = vmatpush1.msra.mxu0 %v3889
        %5038 = vmatprep.subr.mxu0 %v3882
        %5039 = vmatpush1.msra.mxu0 %v3881
        %5040 = vmatprep.subr.mxu0 %v4130
        %5041 = vmatpush2.msra.mxu0 %v4129
        %5042 = vmatprep.subr.mxu0 %v4122
        %5043 = vmatpush2.msra.mxu0 %v4121
        %5044 = vmatprep.subr.mxu0 %v4114
        %5045 = vmatpush2.msra.mxu0 %v4113
        %5046 = vmatprep.subr.mxu0 %v4106
        %5047 = vmatpush2.msra.mxu0 %v4105
        %5048 = vmatprep.subr.mxu0 %v4098
        %5049 = vmatpush2.msra.mxu0 %v4097
        %5050 = vmatprep.subr.mxu0 %v4090
        %5051 = vmatpush2.msra.mxu0 %v4089
        %5052 = vmatprep.subr.mxu0 %v4082
        %5053 = vmatpush2.msra.mxu0 %v4081
        %5054 = vmatprep.subr.mxu0 %v4074
        %5055 = vmatpush2.msra.mxu0 %v4073
        %5056 = vmatprep.subr.mxu0 %v4066
        %5057 = vmatpush2.msra.mxu0 %v4065
        %5058 = vmatprep.subr.mxu0 %v4058
        %5059 = vmatpush2.msra.mxu0 %v4057
        %5060 = vmatprep.subr.mxu0 %v4050
        %5061 = vmatpush2.msra.mxu0 %v4049
        %5062 = vmatprep.subr.mxu0 %v4042
        %5063 = vmatpush2.msra.mxu0 %v4041
        %5064 = vmatprep.subr.mxu0 %v4034
        %5065 = vmatpush2.msra.mxu0 %v4033
        %5066 = vmatprep.subr.mxu0 %v4026
        %5067 = vmatpush2.msra.mxu0 %v4025
        %5068 = vmatprep.subr.mxu0 %v4018
        %5069 = vmatpush2.msra.mxu0 %v4017
        %5070 = vmatprep.subr.mxu0 %v4010
        %5071 = vmatpush2.msra.mxu0 %v4009
        %5072 = vmatprep.mubr.f32.mxu0 %v4186
        %5073 = vmatmul.mubr.f32.gmra.mxu0 %v4185
        %v5074 = vpop.f32.mrf.mxu0
        %v5075 = vadd.f32 %v4920, %v5074
        %v5076 = vpop.f32.mrf.mxu0
        %v5077 = vadd.f32 %v4922, %v5076
        %5078 = vmatprep.mubr.f32.mxu0 %v4197
        %5079 = vmatmul.mubr.f32.gmra.mxu0 %v4196
        %v5080 = vpop.f32.mrf.mxu0
        %v5081 = vadd.f32 %v4926, %v5080
        %v5082 = vpop.f32.mrf.mxu0
        %v5083 = vadd.f32 %v4928, %v5082
        %5084 = vmatprep.mubr.f32.mxu0 %v4208
        %5085 = vmatmul.mubr.f32.gmra.mxu0 %v4207
        %v5086 = vpop.f32.mrf.mxu0
        %v5087 = vadd.f32 %v4932, %v5086
        %v5088 = vpop.f32.mrf.mxu0
        %v5089 = vadd.f32 %v4934, %v5088
        %5090 = vmatprep.mubr.f32.mxu0 %v4219
        %5091 = vmatmul.mubr.f32.gmra.mxu0 %v4218
        %v5092 = vpop.f32.mrf.mxu0
        %v5093 = vadd.f32 %v4938, %v5092
        %v5094 = vpop.f32.mrf.mxu0
        %v5095 = vadd.f32 %v4940, %v5094
        %5096 = vmatprep.mubr.f32.mxu0 %v4230
        %5097 = vmatmul.mubr.f32.gmra.mxu0 %v4229
        %v5098 = vpop.f32.mrf.mxu0
        %v5099 = vadd.f32 %v4944, %v5098
        %v5100 = vpop.f32.mrf.mxu0
        %v5101 = vadd.f32 %v4946, %v5100
        %5102 = vmatprep.mubr.f32.mxu0 %v4241
        %5103 = vmatmul.mubr.f32.gmra.mxu0 %v4240
        %v5104 = vpop.f32.mrf.mxu0
        %v5105 = vadd.f32 %v4950, %v5104
        %v5106 = vpop.f32.mrf.mxu0
        %v5107 = vadd.f32 %v4952, %v5106
        %5108 = vmatprep.mubr.f32.mxu0 %v4252
        %5109 = vmatmul.mubr.f32.gmra.mxu0 %v4251
        %v5110 = vpop.f32.mrf.mxu0
        %v5111 = vadd.f32 %v4956, %v5110
        %v5112 = vpop.f32.mrf.mxu0
        %v5113 = vadd.f32 %v4958, %v5112
        %5114 = vmatprep.mubr.f32.mxu0 %v4263
        %5115 = vmatmul.mubr.f32.gmra.mxu0 %v4262
        %v5116 = vpop.f32.mrf.mxu0
        %v5117 = vadd.f32 %v4962, %v5116
        %v5118 = vpop.f32.mrf.mxu0
        %v5119 = vadd.f32 %v4964, %v5118
        %5120 = vmatprep.mubr.f32.mxu0 %v4274
        %5121 = vmatmul.mubr.f32.gmra.mxu0 %v4273
        %v5122 = vpop.f32.mrf.mxu0
        %v5123 = vadd.f32 %v4968, %v5122
        %v5124 = vpop.f32.mrf.mxu0
        %v5125 = vadd.f32 %v4970, %v5124
        %5126 = vmatprep.mubr.f32.mxu0 %v4285
        %5127 = vmatmul.mubr.f32.gmra.mxu0 %v4284
        %v5128 = vpop.f32.mrf.mxu0
        %v5129 = vadd.f32 %v4974, %v5128
        %v5130 = vpop.f32.mrf.mxu0
        %v5131 = vadd.f32 %v4976, %v5130
        %5132 = vmatprep.mubr.f32.mxu0 %v4296
        %5133 = vmatmul.mubr.f32.gmra.mxu0 %v4295
        %v5134 = vpop.f32.mrf.mxu0
        %v5135 = vadd.f32 %v4980, %v5134
        %v5136 = vpop.f32.mrf.mxu0
        %v5137 = vadd.f32 %v4982, %v5136
        %5138 = vmatprep.mubr.f32.mxu0 %v4307
        %5139 = vmatmul.mubr.f32.gmra.mxu0 %v4306
        %v5140 = vpop.f32.mrf.mxu0
        %v5141 = vadd.f32 %v4986, %v5140
        %v5142 = vpop.f32.mrf.mxu0
        %v5143 = vadd.f32 %v4988, %v5142
        %5144 = vmatprep.mubr.f32.mxu0 %v4318
        %5145 = vmatmul.mubr.f32.gmra.mxu0 %v4317
        %v5146 = vpop.f32.mrf.mxu0
        %v5147 = vadd.f32 %v4992, %v5146
        %v5148 = vpop.f32.mrf.mxu0
        %v5149 = vadd.f32 %v4994, %v5148
        %5150 = vmatprep.mubr.f32.mxu0 %v4329
        %5151 = vmatmul.mubr.f32.gmra.mxu0 %v4328
        %v5152 = vpop.f32.mrf.mxu0
        %v5153 = vadd.f32 %v4998, %v5152
        %v5154 = vpop.f32.mrf.mxu0
        %v5155 = vadd.f32 %v5000, %v5154
        %5156 = vmatprep.mubr.f32.mxu0 %v4340
        %5157 = vmatmul.mubr.f32.gmra.mxu0 %v4339
        %v5158 = vpop.f32.mrf.mxu0
        %v5159 = vadd.f32 %v5004, %v5158
        %v5160 = vpop.f32.mrf.mxu0
        %v5161 = vadd.f32 %v5006, %v5160
        %5162 = vdwg.mxu0
        %5163 = vmatprep.subr.mxu0 0.0
        %5164 = vmatpush1.msra.mxu0 0.0
        %5165 = vmatprep.subr.mxu0 0.0
        %5166 = vmatpush1.msra.mxu0 0.0
        %5167 = vmatprep.subr.mxu0 0.0
        %5168 = vmatpush1.msra.mxu0 0.0
        %5169 = vmatprep.subr.mxu0 0.0
        %5170 = vmatpush1.msra.mxu0 0.0
        %5171 = vmatprep.subr.mxu0 0.0
        %5172 = vmatpush1.msra.mxu0 0.0
        %5173 = vmatprep.subr.mxu0 0.0
        %5174 = vmatpush1.msra.mxu0 0.0
        %5175 = vmatprep.subr.mxu0 0.0
        %5176 = vmatpush1.msra.mxu0 0.0
        %5177 = vmatprep.subr.mxu0 0.0
        %5178 = vmatpush1.msra.mxu0 0.0
        %5179 = vmatprep.subr.mxu0 0.0
        %5180 = vmatpush1.msra.mxu0 0.0
        %5181 = vmatprep.subr.mxu0 0.0
        %5182 = vmatpush1.msra.mxu0 0.0
        %5183 = vmatprep.subr.mxu0 0.0
        %5184 = vmatpush1.msra.mxu0 0.0
        %5185 = vmatprep.subr.mxu0 %v4170
        %5186 = vmatpush1.msra.mxu0 %v4169
        %5187 = vmatprep.subr.mxu0 %v4162
        %5188 = vmatpush1.msra.mxu0 %v4161
        %5189 = vmatprep.subr.mxu0 %v4154
        %5190 = vmatpush1.msra.mxu0 %v4153
        %5191 = vmatprep.subr.mxu0 %v4146
        %5192 = vmatpush1.msra.mxu0 %v4145
        %5193 = vmatprep.subr.mxu0 %v4138
        %5194 = vmatpush1.msra.mxu0 %v4137
        %5195 = vmatprep.subr.mxu0 0.0
        %5196 = vmatpush2.msra.mxu0 0.0
        %5197 = vmatprep.subr.mxu0 0.0
        %5198 = vmatpush2.msra.mxu0 0.0
        %5199 = vmatprep.subr.mxu0 0.0
        %5200 = vmatpush2.msra.mxu0 0.0
        %5201 = vmatprep.subr.mxu0 0.0
        %5202 = vmatpush2.msra.mxu0 0.0
        %5203 = vmatprep.subr.mxu0 0.0
        %5204 = vmatpush2.msra.mxu0 0.0
        %5205 = vmatprep.subr.mxu0 0.0
        %5206 = vmatpush2.msra.mxu0 0.0
        %5207 = vmatprep.subr.mxu0 0.0
        %5208 = vmatpush2.msra.mxu0 0.0
        %5209 = vmatprep.subr.mxu0 0.0
        %5210 = vmatpush2.msra.mxu0 0.0
        %5211 = vmatprep.subr.mxu0 0.0
        %5212 = vmatpush2.msra.mxu0 0.0
        %5213 = vmatprep.subr.mxu0 0.0
        %5214 = vmatpush2.msra.mxu0 0.0
        %5215 = vmatprep.subr.mxu0 0.0
        %5216 = vmatpush2.msra.mxu0 0.0
        %5217 = vmatprep.subr.mxu0 0.0
        %5218 = vmatpush2.msra.mxu0 0.0
        %5219 = vmatprep.subr.mxu0 0.0
        %5220 = vmatpush2.msra.mxu0 0.0
        %5221 = vmatprep.subr.mxu0 0.0
        %5222 = vmatpush2.msra.mxu0 0.0
        %5223 = vmatprep.subr.mxu0 0.0
        %5224 = vmatpush2.msra.mxu0 0.0
        %5225 = vmatprep.subr.mxu0 0.0
        %5226 = vmatpush2.msra.mxu0 0.0
        %5227 = vmatprep.mubr.f32.mxu0 0.0
        %5228 = vmatmul.mubr.f32.gmra.mxu0 %v4344
        %v5229 = vpop.f32.mrf.mxu0
        %v5230 = vadd.f32 %v5075, %v5229
        %v5231 = vpop.f32.mrf.mxu0
        %v5232 = vadd.f32 %v5077, %v5231
        %5233 = vmatprep.mubr.f32.mxu0 0.0
        %5234 = vmatmul.mubr.f32.gmra.mxu0 %v4347
        %v5235 = vpop.f32.mrf.mxu0
        %v5236 = vadd.f32 %v5081, %v5235
        %v5237 = vpop.f32.mrf.mxu0
        %v5238 = vadd.f32 %v5083, %v5237
        %5239 = vmatprep.mubr.f32.mxu0 0.0
        %5240 = vmatmul.mubr.f32.gmra.mxu0 %v4350
        %v5241 = vpop.f32.mrf.mxu0
        %v5242 = vadd.f32 %v5087, %v5241
        %v5243 = vpop.f32.mrf.mxu0
        %v5244 = vadd.f32 %v5089, %v5243
        %5245 = vmatprep.mubr.f32.mxu0 0.0
        %5246 = vmatmul.mubr.f32.gmra.mxu0 %v4353
        %v5247 = vpop.f32.mrf.mxu0
        %v5248 = vadd.f32 %v5093, %v5247
        %v5249 = vpop.f32.mrf.mxu0
        %v5250 = vadd.f32 %v5095, %v5249
        %5251 = vmatprep.mubr.f32.mxu0 0.0
        %5252 = vmatmul.mubr.f32.gmra.mxu0 %v4356
        %v5253 = vpop.f32.mrf.mxu0
        %v5254 = vadd.f32 %v5099, %v5253
        %v5255 = vpop.f32.mrf.mxu0
        %v5256 = vadd.f32 %v5101, %v5255
        %5257 = vmatprep.mubr.f32.mxu0 0.0
        %5258 = vmatmul.mubr.f32.gmra.mxu0 %v4359
        %v5259 = vpop.f32.mrf.mxu0
        %v5260 = vadd.f32 %v5105, %v5259
        %v5261 = vpop.f32.mrf.mxu0
        %v5262 = vadd.f32 %v5107, %v5261
        %5263 = vmatprep.mubr.f32.mxu0 0.0
        %5264 = vmatmul.mubr.f32.gmra.mxu0 %v4362
        %v5265 = vpop.f32.mrf.mxu0
        %v5266 = vadd.f32 %v5111, %v5265
        %v5267 = vpop.f32.mrf.mxu0
        %v5268 = vadd.f32 %v5113, %v5267
        %5269 = vmatprep.mubr.f32.mxu0 0.0
        %5270 = vmatmul.mubr.f32.gmra.mxu0 %v4365
        %v5271 = vpop.f32.mrf.mxu0
        %v5272 = vadd.f32 %v5117, %v5271
        %v5273 = vpop.f32.mrf.mxu0
        %v5274 = vadd.f32 %v5119, %v5273
        %5275 = vmatprep.mubr.f32.mxu0 0.0
        %5276 = vmatmul.mubr.f32.gmra.mxu0 %v4368
        %v5277 = vpop.f32.mrf.mxu0
        %v5278 = vadd.f32 %v5123, %v5277
        %v5279 = vpop.f32.mrf.mxu0
        %v5280 = vadd.f32 %v5125, %v5279
        %5281 = vmatprep.mubr.f32.mxu0 0.0
        %5282 = vmatmul.mubr.f32.gmra.mxu0 %v4371
        %v5283 = vpop.f32.mrf.mxu0
        %v5284 = vadd.f32 %v5129, %v5283
        %v5285 = vpop.f32.mrf.mxu0
        %v5286 = vadd.f32 %v5131, %v5285
        %5287 = vmatprep.mubr.f32.mxu0 0.0
        %5288 = vmatmul.mubr.f32.gmra.mxu0 %v4374
        %v5289 = vpop.f32.mrf.mxu0
        %v5290 = vadd.f32 %v5135, %v5289
        %v5291 = vpop.f32.mrf.mxu0
        %v5292 = vadd.f32 %v5137, %v5291
        %5293 = vmatprep.mubr.f32.mxu0 0.0
        %5294 = vmatmul.mubr.f32.gmra.mxu0 %v4377
        %v5295 = vpop.f32.mrf.mxu0
        %v5296 = vadd.f32 %v5141, %v5295
        %v5297 = vpop.f32.mrf.mxu0
        %v5298 = vadd.f32 %v5143, %v5297
        %5299 = vmatprep.mubr.f32.mxu0 0.0
        %5300 = vmatmul.mubr.f32.gmra.mxu0 %v4380
        %v5301 = vpop.f32.mrf.mxu0
        %v5302 = vadd.f32 %v5147, %v5301
        %v5303 = vpop.f32.mrf.mxu0
        %v5304 = vadd.f32 %v5149, %v5303
        %5305 = vmatprep.mubr.f32.mxu0 0.0
        %5306 = vmatmul.mubr.f32.gmra.mxu0 %v4383
        %v5307 = vpop.f32.mrf.mxu0
        %v5308 = vadd.f32 %v5153, %v5307
        %v5309 = vpop.f32.mrf.mxu0
        %v5310 = vadd.f32 %v5155, %v5309
        %5311 = vmatprep.mubr.f32.mxu0 0.0
        %5312 = vmatmul.mubr.f32.gmra.mxu0 %v4386
        %v5313 = vpop.f32.mrf.mxu0
        %v5314 = vadd.f32 %v5159, %v5313
        %v5315 = vpop.f32.mrf.mxu0
        %v5316 = vadd.f32 %v5161, %v5315
        %5317 = vdwg.mxu0
        %5318 = vmatprep.subr.mxu0 %v2980
        %5319 = vmatpush1.msra.mxu0 %v2979
        %5320 = vmatprep.subr.mxu0 %v2972
        %5321 = vmatpush1.msra.mxu0 %v2971
        %5322 = vmatprep.subr.mxu0 %v2964
        %5323 = vmatpush1.msra.mxu0 %v2963
        %5324 = vmatprep.subr.mxu0 %v2956
        %5325 = vmatpush1.msra.mxu0 %v2955
        %5326 = vmatprep.subr.mxu0 %v2948
        %5327 = vmatpush1.msra.mxu0 %v2947
        %5328 = vmatprep.subr.mxu0 %v2940
        %5329 = vmatpush1.msra.mxu0 %v2939
        %5330 = vmatprep.subr.mxu0 %v2932
        %5331 = vmatpush1.msra.mxu0 %v2931
        %5332 = vmatprep.subr.mxu0 %v2924
        %5333 = vmatpush1.msra.mxu0 %v2923
        %5334 = vmatprep.subr.mxu0 %v2916
        %5335 = vmatpush1.msra.mxu0 %v2915
        %5336 = vmatprep.subr.mxu0 %v2908
        %5337 = vmatpush1.msra.mxu0 %v2907
        %5338 = vmatprep.subr.mxu0 %v2900
        %5339 = vmatpush1.msra.mxu0 %v2899
        %5340 = vmatprep.subr.mxu0 %v2892
        %5341 = vmatpush1.msra.mxu0 %v2891
        %5342 = vmatprep.subr.mxu0 %v2884
        %5343 = vmatpush1.msra.mxu0 %v2883
        %5344 = vmatprep.subr.mxu0 %v2876
        %5345 = vmatpush1.msra.mxu0 %v2875
        %5346 = vmatprep.subr.mxu0 %v2868
        %5347 = vmatpush1.msra.mxu0 %v2867
        %5348 = vmatprep.subr.mxu0 %v2860
        %5349 = vmatpush1.msra.mxu0 %v2859
        %5350 = vmatprep.subr.mxu0 %v3108
        %5351 = vmatpush2.msra.mxu0 %v3107
        %5352 = vmatprep.subr.mxu0 %v3100
        %5353 = vmatpush2.msra.mxu0 %v3099
        %5354 = vmatprep.subr.mxu0 %v3092
        %5355 = vmatpush2.msra.mxu0 %v3091
        %5356 = vmatprep.subr.mxu0 %v3084
        %5357 = vmatpush2.msra.mxu0 %v3083
        %5358 = vmatprep.subr.mxu0 %v3076
        %5359 = vmatpush2.msra.mxu0 %v3075
        %5360 = vmatprep.subr.mxu0 %v3068
        %5361 = vmatpush2.msra.mxu0 %v3067
        %5362 = vmatprep.subr.mxu0 %v3060
        %5363 = vmatpush2.msra.mxu0 %v3059
        %5364 = vmatprep.subr.mxu0 %v3052
        %5365 = vmatpush2.msra.mxu0 %v3051
        %5366 = vmatprep.subr.mxu0 %v3044
        %5367 = vmatpush2.msra.mxu0 %v3043
        %5368 = vmatprep.subr.mxu0 %v3036
        %5369 = vmatpush2.msra.mxu0 %v3035
        %5370 = vmatprep.subr.mxu0 %v3028
        %5371 = vmatpush2.msra.mxu0 %v3027
        %5372 = vmatprep.subr.mxu0 %v3020
        %5373 = vmatpush2.msra.mxu0 %v3019
        %5374 = vmatprep.subr.mxu0 %v3012
        %5375 = vmatpush2.msra.mxu0 %v3011
        %5376 = vmatprep.subr.mxu0 %v3004
        %5377 = vmatpush2.msra.mxu0 %v3003
        %5378 = vmatprep.subr.mxu0 %v2996
        %5379 = vmatpush2.msra.mxu0 %v2995
        %5380 = vmatprep.subr.mxu0 %v2988
        %5381 = vmatpush2.msra.mxu0 %v2987
        %5382 = vmatprep.mubr.f32.mxu0 %v4178
        %5383 = vmatmul.mubr.f32.gmra.mxu0 %v4177
        %v5384 = vpop.f32.mrf.mxu0
        %v5385 = vadd.f32 0.0, %v5384
        %v5386 = vpop.f32.mrf.mxu0
        %v5387 = vadd.f32 0.0, %v5386
        %5388 = vmatprep.mubr.f32.mxu0 %v4189
        %5389 = vmatmul.mubr.f32.gmra.mxu0 %v4188
        %v5390 = vpop.f32.mrf.mxu0
        %v5391 = vadd.f32 0.0, %v5390
        %v5392 = vpop.f32.mrf.mxu0
        %v5393 = vadd.f32 0.0, %v5392
        %5394 = vmatprep.mubr.f32.mxu0 %v4200
        %5395 = vmatmul.mubr.f32.gmra.mxu0 %v4199
        %v5396 = vpop.f32.mrf.mxu0
        %v5397 = vadd.f32 0.0, %v5396
        %v5398 = vpop.f32.mrf.mxu0
        %v5399 = vadd.f32 0.0, %v5398
        %5400 = vmatprep.mubr.f32.mxu0 %v4211
        %5401 = vmatmul.mubr.f32.gmra.mxu0 %v4210
        %v5402 = vpop.f32.mrf.mxu0
        %v5403 = vadd.f32 0.0, %v5402
        %v5404 = vpop.f32.mrf.mxu0
        %v5405 = vadd.f32 0.0, %v5404
        %5406 = vmatprep.mubr.f32.mxu0 %v4222
        %5407 = vmatmul.mubr.f32.gmra.mxu0 %v4221
        %v5408 = vpop.f32.mrf.mxu0
        %v5409 = vadd.f32 0.0, %v5408
        %v5410 = vpop.f32.mrf.mxu0
        %v5411 = vadd.f32 0.0, %v5410
        %5412 = vmatprep.mubr.f32.mxu0 %v4233
        %5413 = vmatmul.mubr.f32.gmra.mxu0 %v4232
        %v5414 = vpop.f32.mrf.mxu0
        %v5415 = vadd.f32 0.0, %v5414
        %v5416 = vpop.f32.mrf.mxu0
        %v5417 = vadd.f32 0.0, %v5416
        %5418 = vmatprep.mubr.f32.mxu0 %v4244
        %5419 = vmatmul.mubr.f32.gmra.mxu0 %v4243
        %v5420 = vpop.f32.mrf.mxu0
        %v5421 = vadd.f32 0.0, %v5420
        %v5422 = vpop.f32.mrf.mxu0
        %v5423 = vadd.f32 0.0, %v5422
        %5424 = vmatprep.mubr.f32.mxu0 %v4255
        %5425 = vmatmul.mubr.f32.gmra.mxu0 %v4254
        %v5426 = vpop.f32.mrf.mxu0
        %v5427 = vadd.f32 0.0, %v5426
        %v5428 = vpop.f32.mrf.mxu0
        %v5429 = vadd.f32 0.0, %v5428
        %5430 = vmatprep.mubr.f32.mxu0 %v4266
        %5431 = vmatmul.mubr.f32.gmra.mxu0 %v4265
        %v5432 = vpop.f32.mrf.mxu0
        %v5433 = vadd.f32 0.0, %v5432
        %v5434 = vpop.f32.mrf.mxu0
        %v5435 = vadd.f32 0.0, %v5434
        %5436 = vmatprep.mubr.f32.mxu0 %v4277
        %5437 = vmatmul.mubr.f32.gmra.mxu0 %v4276
        %v5438 = vpop.f32.mrf.mxu0
        %v5439 = vadd.f32 0.0, %v5438
        %v5440 = vpop.f32.mrf.mxu0
        %v5441 = vadd.f32 0.0, %v5440
        %5442 = vmatprep.mubr.f32.mxu0 %v4288
        %5443 = vmatmul.mubr.f32.gmra.mxu0 %v4287
        %v5444 = vpop.f32.mrf.mxu0
        %v5445 = vadd.f32 0.0, %v5444
        %v5446 = vpop.f32.mrf.mxu0
        %v5447 = vadd.f32 0.0, %v5446
        %5448 = vmatprep.mubr.f32.mxu0 %v4299
        %5449 = vmatmul.mubr.f32.gmra.mxu0 %v4298
        %v5450 = vpop.f32.mrf.mxu0
        %v5451 = vadd.f32 0.0, %v5450
        %v5452 = vpop.f32.mrf.mxu0
        %v5453 = vadd.f32 0.0, %v5452
        %5454 = vmatprep.mubr.f32.mxu0 %v4310
        %5455 = vmatmul.mubr.f32.gmra.mxu0 %v4309
        %v5456 = vpop.f32.mrf.mxu0
        %v5457 = vadd.f32 0.0, %v5456
        %v5458 = vpop.f32.mrf.mxu0
        %v5459 = vadd.f32 0.0, %v5458
        %5460 = vmatprep.mubr.f32.mxu0 %v4321
        %5461 = vmatmul.mubr.f32.gmra.mxu0 %v4320
        %v5462 = vpop.f32.mrf.mxu0
        %v5463 = vadd.f32 0.0, %v5462
        %v5464 = vpop.f32.mrf.mxu0
        %v5465 = vadd.f32 0.0, %v5464
        %5466 = vmatprep.mubr.f32.mxu0 %v4332
        %5467 = vmatmul.mubr.f32.gmra.mxu0 %v4331
        %v5468 = vpop.f32.mrf.mxu0
        %v5469 = vadd.f32 0.0, %v5468
        %v5470 = vpop.f32.mrf.mxu0
        %v5471 = vadd.f32 0.0, %v5470
        %5472 = vdwg.mxu0
        %5473 = vmatprep.subr.mxu0 %v3236
        %5474 = vmatpush1.msra.mxu0 %v3235
        %5475 = vmatprep.subr.mxu0 %v3228
        %5476 = vmatpush1.msra.mxu0 %v3227
        %5477 = vmatprep.subr.mxu0 %v3220
        %5478 = vmatpush1.msra.mxu0 %v3219
        %5479 = vmatprep.subr.mxu0 %v3212
        %5480 = vmatpush1.msra.mxu0 %v3211
        %5481 = vmatprep.subr.mxu0 %v3204
        %5482 = vmatpush1.msra.mxu0 %v3203
        %5483 = vmatprep.subr.mxu0 %v3196
        %5484 = vmatpush1.msra.mxu0 %v3195
        %5485 = vmatprep.subr.mxu0 %v3188
        %5486 = vmatpush1.msra.mxu0 %v3187
        %5487 = vmatprep.subr.mxu0 %v3180
        %5488 = vmatpush1.msra.mxu0 %v3179
        %5489 = vmatprep.subr.mxu0 %v3172
        %5490 = vmatpush1.msra.mxu0 %v3171
        %5491 = vmatprep.subr.mxu0 %v3164
        %5492 = vmatpush1.msra.mxu0 %v3163
        %5493 = vmatprep.subr.mxu0 %v3156
        %5494 = vmatpush1.msra.mxu0 %v3155
        %5495 = vmatprep.subr.mxu0 %v3148
        %5496 = vmatpush1.msra.mxu0 %v3147
        %5497 = vmatprep.subr.mxu0 %v3140
        %5498 = vmatpush1.msra.mxu0 %v3139
        %5499 = vmatprep.subr.mxu0 %v3132
        %5500 = vmatpush1.msra.mxu0 %v3131
        %5501 = vmatprep.subr.mxu0 %v3124
        %5502 = vmatpush1.msra.mxu0 %v3123
        %5503 = vmatprep.subr.mxu0 %v3116
        %5504 = vmatpush1.msra.mxu0 %v3115
        %5505 = vmatprep.subr.mxu0 %v3364
        %5506 = vmatpush2.msra.mxu0 %v3363
        %5507 = vmatprep.subr.mxu0 %v3356
        %5508 = vmatpush2.msra.mxu0 %v3355
        %5509 = vmatprep.subr.mxu0 %v3348
        %5510 = vmatpush2.msra.mxu0 %v3347
        %5511 = vmatprep.subr.mxu0 %v3340
        %5512 = vmatpush2.msra.mxu0 %v3339
        %5513 = vmatprep.subr.mxu0 %v3332
        %5514 = vmatpush2.msra.mxu0 %v3331
        %5515 = vmatprep.subr.mxu0 %v3324
        %5516 = vmatpush2.msra.mxu0 %v3323
        %5517 = vmatprep.subr.mxu0 %v3316
        %5518 = vmatpush2.msra.mxu0 %v3315
        %5519 = vmatprep.subr.mxu0 %v3308
        %5520 = vmatpush2.msra.mxu0 %v3307
        %5521 = vmatprep.subr.mxu0 %v3300
        %5522 = vmatpush2.msra.mxu0 %v3299
        %5523 = vmatprep.subr.mxu0 %v3292
        %5524 = vmatpush2.msra.mxu0 %v3291
        %5525 = vmatprep.subr.mxu0 %v3284
        %5526 = vmatpush2.msra.mxu0 %v3283
        %5527 = vmatprep.subr.mxu0 %v3276
        %5528 = vmatpush2.msra.mxu0 %v3275
        %5529 = vmatprep.subr.mxu0 %v3268
        %5530 = vmatpush2.msra.mxu0 %v3267
        %5531 = vmatprep.subr.mxu0 %v3260
        %5532 = vmatpush2.msra.mxu0 %v3259
        %5533 = vmatprep.subr.mxu0 %v3252
        %5534 = vmatpush2.msra.mxu0 %v3251
        %5535 = vmatprep.subr.mxu0 %v3244
        %5536 = vmatpush2.msra.mxu0 %v3243
        %5537 = vmatprep.mubr.f32.mxu0 %v4180
        %5538 = vmatmul.mubr.f32.gmra.mxu0 %v4179
        %v5539 = vpop.f32.mrf.mxu0
        %v5540 = vadd.f32 %v5385, %v5539
        %v5541 = vpop.f32.mrf.mxu0
        %v5542 = vadd.f32 %v5387, %v5541
        %5543 = vmatprep.mubr.f32.mxu0 %v4191
        %5544 = vmatmul.mubr.f32.gmra.mxu0 %v4190
        %v5545 = vpop.f32.mrf.mxu0
        %v5546 = vadd.f32 %v5391, %v5545
        %v5547 = vpop.f32.mrf.mxu0
        %v5548 = vadd.f32 %v5393, %v5547
        %5549 = vmatprep.mubr.f32.mxu0 %v4202
        %5550 = vmatmul.mubr.f32.gmra.mxu0 %v4201
        %v5551 = vpop.f32.mrf.mxu0
        %v5552 = vadd.f32 %v5397, %v5551
        %v5553 = vpop.f32.mrf.mxu0
        %v5554 = vadd.f32 %v5399, %v5553
        %5555 = vmatprep.mubr.f32.mxu0 %v4213
        %5556 = vmatmul.mubr.f32.gmra.mxu0 %v4212
        %v5557 = vpop.f32.mrf.mxu0
        %v5558 = vadd.f32 %v5403, %v5557
        %v5559 = vpop.f32.mrf.mxu0
        %v5560 = vadd.f32 %v5405, %v5559
        %5561 = vmatprep.mubr.f32.mxu0 %v4224
        %5562 = vmatmul.mubr.f32.gmra.mxu0 %v4223
        %v5563 = vpop.f32.mrf.mxu0
        %v5564 = vadd.f32 %v5409, %v5563
        %v5565 = vpop.f32.mrf.mxu0
        %v5566 = vadd.f32 %v5411, %v5565
        %5567 = vmatprep.mubr.f32.mxu0 %v4235
        %5568 = vmatmul.mubr.f32.gmra.mxu0 %v4234
        %v5569 = vpop.f32.mrf.mxu0
        %v5570 = vadd.f32 %v5415, %v5569
        %v5571 = vpop.f32.mrf.mxu0
        %v5572 = vadd.f32 %v5417, %v5571
        %5573 = vmatprep.mubr.f32.mxu0 %v4246
        %5574 = vmatmul.mubr.f32.gmra.mxu0 %v4245
        %v5575 = vpop.f32.mrf.mxu0
        %v5576 = vadd.f32 %v5421, %v5575
        %v5577 = vpop.f32.mrf.mxu0
        %v5578 = vadd.f32 %v5423, %v5577
        %5579 = vmatprep.mubr.f32.mxu0 %v4257
        %5580 = vmatmul.mubr.f32.gmra.mxu0 %v4256
        %v5581 = vpop.f32.mrf.mxu0
        %v5582 = vadd.f32 %v5427, %v5581
        %v5583 = vpop.f32.mrf.mxu0
        %v5584 = vadd.f32 %v5429, %v5583
        %5585 = vmatprep.mubr.f32.mxu0 %v4268
        %5586 = vmatmul.mubr.f32.gmra.mxu0 %v4267
        %v5587 = vpop.f32.mrf.mxu0
        %v5588 = vadd.f32 %v5433, %v5587
        %v5589 = vpop.f32.mrf.mxu0
        %v5590 = vadd.f32 %v5435, %v5589
        %5591 = vmatprep.mubr.f32.mxu0 %v4279
        %5592 = vmatmul.mubr.f32.gmra.mxu0 %v4278
        %v5593 = vpop.f32.mrf.mxu0
        %v5594 = vadd.f32 %v5439, %v5593
        %v5595 = vpop.f32.mrf.mxu0
        %v5596 = vadd.f32 %v5441, %v5595
        %5597 = vmatprep.mubr.f32.mxu0 %v4290
        %5598 = vmatmul.mubr.f32.gmra.mxu0 %v4289
        %v5599 = vpop.f32.mrf.mxu0
        %v5600 = vadd.f32 %v5445, %v5599
        %v5601 = vpop.f32.mrf.mxu0
        %v5602 = vadd.f32 %v5447, %v5601
        %5603 = vmatprep.mubr.f32.mxu0 %v4301
        %5604 = vmatmul.mubr.f32.gmra.mxu0 %v4300
        %v5605 = vpop.f32.mrf.mxu0
        %v5606 = vadd.f32 %v5451, %v5605
        %v5607 = vpop.f32.mrf.mxu0
        %v5608 = vadd.f32 %v5453, %v5607
        %5609 = vmatprep.mubr.f32.mxu0 %v4312
        %5610 = vmatmul.mubr.f32.gmra.mxu0 %v4311
        %v5611 = vpop.f32.mrf.mxu0
        %v5612 = vadd.f32 %v5457, %v5611
        %v5613 = vpop.f32.mrf.mxu0
        %v5614 = vadd.f32 %v5459, %v5613
        %5615 = vmatprep.mubr.f32.mxu0 %v4323
        %5616 = vmatmul.mubr.f32.gmra.mxu0 %v4322
        %v5617 = vpop.f32.mrf.mxu0
        %v5618 = vadd.f32 %v5463, %v5617
        %v5619 = vpop.f32.mrf.mxu0
        %v5620 = vadd.f32 %v5465, %v5619
        %5621 = vmatprep.mubr.f32.mxu0 %v4334
        %5622 = vmatmul.mubr.f32.gmra.mxu0 %v4333
        %v5623 = vpop.f32.mrf.mxu0
        %v5624 = vadd.f32 %v5469, %v5623
        %v5625 = vpop.f32.mrf.mxu0
        %v5626 = vadd.f32 %v5471, %v5625
        %5627 = vdwg.mxu0
        %5628 = vmatprep.subr.mxu0 %v3492
        %5629 = vmatpush1.msra.mxu0 %v3491
        %5630 = vmatprep.subr.mxu0 %v3484
        %5631 = vmatpush1.msra.mxu0 %v3483
        %5632 = vmatprep.subr.mxu0 %v3476
        %5633 = vmatpush1.msra.mxu0 %v3475
        %5634 = vmatprep.subr.mxu0 %v3468
        %5635 = vmatpush1.msra.mxu0 %v3467
        %5636 = vmatprep.subr.mxu0 %v3460
        %5637 = vmatpush1.msra.mxu0 %v3459
        %5638 = vmatprep.subr.mxu0 %v3452
        %5639 = vmatpush1.msra.mxu0 %v3451
        %5640 = vmatprep.subr.mxu0 %v3444
        %5641 = vmatpush1.msra.mxu0 %v3443
        %5642 = vmatprep.subr.mxu0 %v3436
        %5643 = vmatpush1.msra.mxu0 %v3435
        %5644 = vmatprep.subr.mxu0 %v3428
        %5645 = vmatpush1.msra.mxu0 %v3427
        %5646 = vmatprep.subr.mxu0 %v3420
        %5647 = vmatpush1.msra.mxu0 %v3419
        %5648 = vmatprep.subr.mxu0 %v3412
        %5649 = vmatpush1.msra.mxu0 %v3411
        %5650 = vmatprep.subr.mxu0 %v3404
        %5651 = vmatpush1.msra.mxu0 %v3403
        %5652 = vmatprep.subr.mxu0 %v3396
        %5653 = vmatpush1.msra.mxu0 %v3395
        %5654 = vmatprep.subr.mxu0 %v3388
        %5655 = vmatpush1.msra.mxu0 %v3387
        %5656 = vmatprep.subr.mxu0 %v3380
        %5657 = vmatpush1.msra.mxu0 %v3379
        %5658 = vmatprep.subr.mxu0 %v3372
        %5659 = vmatpush1.msra.mxu0 %v3371
        %5660 = vmatprep.subr.mxu0 %v3620
        %5661 = vmatpush2.msra.mxu0 %v3619
        %5662 = vmatprep.subr.mxu0 %v3612
        %5663 = vmatpush2.msra.mxu0 %v3611
        %5664 = vmatprep.subr.mxu0 %v3604
        %5665 = vmatpush2.msra.mxu0 %v3603
        %5666 = vmatprep.subr.mxu0 %v3596
        %5667 = vmatpush2.msra.mxu0 %v3595
        %5668 = vmatprep.subr.mxu0 %v3588
        %5669 = vmatpush2.msra.mxu0 %v3587
        %5670 = vmatprep.subr.mxu0 %v3580
        %5671 = vmatpush2.msra.mxu0 %v3579
        %5672 = vmatprep.subr.mxu0 %v3572
        %5673 = vmatpush2.msra.mxu0 %v3571
        %5674 = vmatprep.subr.mxu0 %v3564
        %5675 = vmatpush2.msra.mxu0 %v3563
        %5676 = vmatprep.subr.mxu0 %v3556
        %5677 = vmatpush2.msra.mxu0 %v3555
        %5678 = vmatprep.subr.mxu0 %v3548
        %5679 = vmatpush2.msra.mxu0 %v3547
        %5680 = vmatprep.subr.mxu0 %v3540
        %5681 = vmatpush2.msra.mxu0 %v3539
        %5682 = vmatprep.subr.mxu0 %v3532
        %5683 = vmatpush2.msra.mxu0 %v3531
        %5684 = vmatprep.subr.mxu0 %v3524
        %5685 = vmatpush2.msra.mxu0 %v3523
        %5686 = vmatprep.subr.mxu0 %v3516
        %5687 = vmatpush2.msra.mxu0 %v3515
        %5688 = vmatprep.subr.mxu0 %v3508
        %5689 = vmatpush2.msra.mxu0 %v3507
        %5690 = vmatprep.subr.mxu0 %v3500
        %5691 = vmatpush2.msra.mxu0 %v3499
        %5692 = vmatprep.mubr.f32.mxu0 %v4182
        %5693 = vmatmul.mubr.f32.gmra.mxu0 %v4181
        %v5694 = vpop.f32.mrf.mxu0
        %v5695 = vadd.f32 %v5540, %v5694
        %v5696 = vpop.f32.mrf.mxu0
        %v5697 = vadd.f32 %v5542, %v5696
        %5698 = vmatprep.mubr.f32.mxu0 %v4193
        %5699 = vmatmul.mubr.f32.gmra.mxu0 %v4192
        %v5700 = vpop.f32.mrf.mxu0
        %v5701 = vadd.f32 %v5546, %v5700
        %v5702 = vpop.f32.mrf.mxu0
        %v5703 = vadd.f32 %v5548, %v5702
        %5704 = vmatprep.mubr.f32.mxu0 %v4204
        %5705 = vmatmul.mubr.f32.gmra.mxu0 %v4203
        %v5706 = vpop.f32.mrf.mxu0
        %v5707 = vadd.f32 %v5552, %v5706
        %v5708 = vpop.f32.mrf.mxu0
        %v5709 = vadd.f32 %v5554, %v5708
        %5710 = vmatprep.mubr.f32.mxu0 %v4215
        %5711 = vmatmul.mubr.f32.gmra.mxu0 %v4214
        %v5712 = vpop.f32.mrf.mxu0
        %v5713 = vadd.f32 %v5558, %v5712
        %v5714 = vpop.f32.mrf.mxu0
        %v5715 = vadd.f32 %v5560, %v5714
        %5716 = vmatprep.mubr.f32.mxu0 %v4226
        %5717 = vmatmul.mubr.f32.gmra.mxu0 %v4225
        %v5718 = vpop.f32.mrf.mxu0
        %v5719 = vadd.f32 %v5564, %v5718
        %v5720 = vpop.f32.mrf.mxu0
        %v5721 = vadd.f32 %v5566, %v5720
        %5722 = vmatprep.mubr.f32.mxu0 %v4237
        %5723 = vmatmul.mubr.f32.gmra.mxu0 %v4236
        %v5724 = vpop.f32.mrf.mxu0
        %v5725 = vadd.f32 %v5570, %v5724
        %v5726 = vpop.f32.mrf.mxu0
        %v5727 = vadd.f32 %v5572, %v5726
        %5728 = vmatprep.mubr.f32.mxu0 %v4248
        %5729 = vmatmul.mubr.f32.gmra.mxu0 %v4247
        %v5730 = vpop.f32.mrf.mxu0
        %v5731 = vadd.f32 %v5576, %v5730
        %v5732 = vpop.f32.mrf.mxu0
        %v5733 = vadd.f32 %v5578, %v5732
        %5734 = vmatprep.mubr.f32.mxu0 %v4259
        %5735 = vmatmul.mubr.f32.gmra.mxu0 %v4258
        %v5736 = vpop.f32.mrf.mxu0
        %v5737 = vadd.f32 %v5582, %v5736
        %v5738 = vpop.f32.mrf.mxu0
        %v5739 = vadd.f32 %v5584, %v5738
        %5740 = vmatprep.mubr.f32.mxu0 %v4270
        %5741 = vmatmul.mubr.f32.gmra.mxu0 %v4269
        %v5742 = vpop.f32.mrf.mxu0
        %v5743 = vadd.f32 %v5588, %v5742
        %v5744 = vpop.f32.mrf.mxu0
        %v5745 = vadd.f32 %v5590, %v5744
        %5746 = vmatprep.mubr.f32.mxu0 %v4281
        %5747 = vmatmul.mubr.f32.gmra.mxu0 %v4280
        %v5748 = vpop.f32.mrf.mxu0
        %v5749 = vadd.f32 %v5594, %v5748
        %v5750 = vpop.f32.mrf.mxu0
        %v5751 = vadd.f32 %v5596, %v5750
        %5752 = vmatprep.mubr.f32.mxu0 %v4292
        %5753 = vmatmul.mubr.f32.gmra.mxu0 %v4291
        %v5754 = vpop.f32.mrf.mxu0
        %v5755 = vadd.f32 %v5600, %v5754
        %v5756 = vpop.f32.mrf.mxu0
        %v5757 = vadd.f32 %v5602, %v5756
        %5758 = vmatprep.mubr.f32.mxu0 %v4303
        %5759 = vmatmul.mubr.f32.gmra.mxu0 %v4302
        %v5760 = vpop.f32.mrf.mxu0
        %v5761 = vadd.f32 %v5606, %v5760
        %v5762 = vpop.f32.mrf.mxu0
        %v5763 = vadd.f32 %v5608, %v5762
        %5764 = vmatprep.mubr.f32.mxu0 %v4314
        %5765 = vmatmul.mubr.f32.gmra.mxu0 %v4313
        %v5766 = vpop.f32.mrf.mxu0
        %v5767 = vadd.f32 %v5612, %v5766
        %v5768 = vpop.f32.mrf.mxu0
        %v5769 = vadd.f32 %v5614, %v5768
        %5770 = vmatprep.mubr.f32.mxu0 %v4325
        %5771 = vmatmul.mubr.f32.gmra.mxu0 %v4324
        %v5772 = vpop.f32.mrf.mxu0
        %v5773 = vadd.f32 %v5618, %v5772
        %v5774 = vpop.f32.mrf.mxu0
        %v5775 = vadd.f32 %v5620, %v5774
        %5776 = vmatprep.mubr.f32.mxu0 %v4336
        %5777 = vmatmul.mubr.f32.gmra.mxu0 %v4335
        %v5778 = vpop.f32.mrf.mxu0
        %v5779 = vadd.f32 %v5624, %v5778
        %v5780 = vpop.f32.mrf.mxu0
        %v5781 = vadd.f32 %v5626, %v5780
        %5782 = vdwg.mxu0
        %5783 = vmatprep.subr.mxu0 %v3748
        %5784 = vmatpush1.msra.mxu0 %v3747
        %5785 = vmatprep.subr.mxu0 %v3740
        %5786 = vmatpush1.msra.mxu0 %v3739
        %5787 = vmatprep.subr.mxu0 %v3732
        %5788 = vmatpush1.msra.mxu0 %v3731
        %5789 = vmatprep.subr.mxu0 %v3724
        %5790 = vmatpush1.msra.mxu0 %v3723
        %5791 = vmatprep.subr.mxu0 %v3716
        %5792 = vmatpush1.msra.mxu0 %v3715
        %5793 = vmatprep.subr.mxu0 %v3708
        %5794 = vmatpush1.msra.mxu0 %v3707
        %5795 = vmatprep.subr.mxu0 %v3700
        %5796 = vmatpush1.msra.mxu0 %v3699
        %5797 = vmatprep.subr.mxu0 %v3692
        %5798 = vmatpush1.msra.mxu0 %v3691
        %5799 = vmatprep.subr.mxu0 %v3684
        %5800 = vmatpush1.msra.mxu0 %v3683
        %5801 = vmatprep.subr.mxu0 %v3676
        %5802 = vmatpush1.msra.mxu0 %v3675
        %5803 = vmatprep.subr.mxu0 %v3668
        %5804 = vmatpush1.msra.mxu0 %v3667
        %5805 = vmatprep.subr.mxu0 %v3660
        %5806 = vmatpush1.msra.mxu0 %v3659
        %5807 = vmatprep.subr.mxu0 %v3652
        %5808 = vmatpush1.msra.mxu0 %v3651
        %5809 = vmatprep.subr.mxu0 %v3644
        %5810 = vmatpush1.msra.mxu0 %v3643
        %5811 = vmatprep.subr.mxu0 %v3636
        %5812 = vmatpush1.msra.mxu0 %v3635
        %5813 = vmatprep.subr.mxu0 %v3628
        %5814 = vmatpush1.msra.mxu0 %v3627
        %5815 = vmatprep.subr.mxu0 %v3876
        %5816 = vmatpush2.msra.mxu0 %v3875
        %5817 = vmatprep.subr.mxu0 %v3868
        %5818 = vmatpush2.msra.mxu0 %v3867
        %5819 = vmatprep.subr.mxu0 %v3860
        %5820 = vmatpush2.msra.mxu0 %v3859
        %5821 = vmatprep.subr.mxu0 %v3852
        %5822 = vmatpush2.msra.mxu0 %v3851
        %5823 = vmatprep.subr.mxu0 %v3844
        %5824 = vmatpush2.msra.mxu0 %v3843
        %5825 = vmatprep.subr.mxu0 %v3836
        %5826 = vmatpush2.msra.mxu0 %v3835
        %5827 = vmatprep.subr.mxu0 %v3828
        %5828 = vmatpush2.msra.mxu0 %v3827
        %5829 = vmatprep.subr.mxu0 %v3820
        %5830 = vmatpush2.msra.mxu0 %v3819
        %5831 = vmatprep.subr.mxu0 %v3812
        %5832 = vmatpush2.msra.mxu0 %v3811
        %5833 = vmatprep.subr.mxu0 %v3804
        %5834 = vmatpush2.msra.mxu0 %v3803
        %5835 = vmatprep.subr.mxu0 %v3796
        %5836 = vmatpush2.msra.mxu0 %v3795
        %5837 = vmatprep.subr.mxu0 %v3788
        %5838 = vmatpush2.msra.mxu0 %v3787
        %5839 = vmatprep.subr.mxu0 %v3780
        %5840 = vmatpush2.msra.mxu0 %v3779
        %5841 = vmatprep.subr.mxu0 %v3772
        %5842 = vmatpush2.msra.mxu0 %v3771
        %5843 = vmatprep.subr.mxu0 %v3764
        %5844 = vmatpush2.msra.mxu0 %v3763
        %5845 = vmatprep.subr.mxu0 %v3756
        %5846 = vmatpush2.msra.mxu0 %v3755
        %5847 = vmatprep.mubr.f32.mxu0 %v4184
        %5848 = vmatmul.mubr.f32.gmra.mxu0 %v4183
        %v5849 = vpop.f32.mrf.mxu0
        %v5850 = vadd.f32 %v5695, %v5849
        %v5851 = vpop.f32.mrf.mxu0
        %v5852 = vadd.f32 %v5697, %v5851
        %5853 = vmatprep.mubr.f32.mxu0 %v4195
        %5854 = vmatmul.mubr.f32.gmra.mxu0 %v4194
        %v5855 = vpop.f32.mrf.mxu0
        %v5856 = vadd.f32 %v5701, %v5855
        %v5857 = vpop.f32.mrf.mxu0
        %v5858 = vadd.f32 %v5703, %v5857
        %5859 = vmatprep.mubr.f32.mxu0 %v4206
        %5860 = vmatmul.mubr.f32.gmra.mxu0 %v4205
        %v5861 = vpop.f32.mrf.mxu0
        %v5862 = vadd.f32 %v5707, %v5861
        %v5863 = vpop.f32.mrf.mxu0
        %v5864 = vadd.f32 %v5709, %v5863
        %5865 = vmatprep.mubr.f32.mxu0 %v4217
        %5866 = vmatmul.mubr.f32.gmra.mxu0 %v4216
        %v5867 = vpop.f32.mrf.mxu0
        %v5868 = vadd.f32 %v5713, %v5867
        %v5869 = vpop.f32.mrf.mxu0
        %v5870 = vadd.f32 %v5715, %v5869
        %5871 = vmatprep.mubr.f32.mxu0 %v4228
        %5872 = vmatmul.mubr.f32.gmra.mxu0 %v4227
        %v5873 = vpop.f32.mrf.mxu0
        %v5874 = vadd.f32 %v5719, %v5873
        %v5875 = vpop.f32.mrf.mxu0
        %v5876 = vadd.f32 %v5721, %v5875
        %5877 = vmatprep.mubr.f32.mxu0 %v4239
        %5878 = vmatmul.mubr.f32.gmra.mxu0 %v4238
        %v5879 = vpop.f32.mrf.mxu0
        %v5880 = vadd.f32 %v5725, %v5879
        %v5881 = vpop.f32.mrf.mxu0
        %v5882 = vadd.f32 %v5727, %v5881
        %5883 = vmatprep.mubr.f32.mxu0 %v4250
        %5884 = vmatmul.mubr.f32.gmra.mxu0 %v4249
        %v5885 = vpop.f32.mrf.mxu0
        %v5886 = vadd.f32 %v5731, %v5885
        %v5887 = vpop.f32.mrf.mxu0
        %v5888 = vadd.f32 %v5733, %v5887
        %5889 = vmatprep.mubr.f32.mxu0 %v4261
        %5890 = vmatmul.mubr.f32.gmra.mxu0 %v4260
        %v5891 = vpop.f32.mrf.mxu0
        %v5892 = vadd.f32 %v5737, %v5891
        %v5893 = vpop.f32.mrf.mxu0
        %v5894 = vadd.f32 %v5739, %v5893
        %5895 = vmatprep.mubr.f32.mxu0 %v4272
        %5896 = vmatmul.mubr.f32.gmra.mxu0 %v4271
        %v5897 = vpop.f32.mrf.mxu0
        %v5898 = vadd.f32 %v5743, %v5897
        %v5899 = vpop.f32.mrf.mxu0
        %v5900 = vadd.f32 %v5745, %v5899
        %5901 = vmatprep.mubr.f32.mxu0 %v4283
        %5902 = vmatmul.mubr.f32.gmra.mxu0 %v4282
        %v5903 = vpop.f32.mrf.mxu0
        %v5904 = vadd.f32 %v5749, %v5903
        %v5905 = vpop.f32.mrf.mxu0
        %v5906 = vadd.f32 %v5751, %v5905
        %5907 = vmatprep.mubr.f32.mxu0 %v4294
        %5908 = vmatmul.mubr.f32.gmra.mxu0 %v4293
        %v5909 = vpop.f32.mrf.mxu0
        %v5910 = vadd.f32 %v5755, %v5909
        %v5911 = vpop.f32.mrf.mxu0
        %v5912 = vadd.f32 %v5757, %v5911
        %5913 = vmatprep.mubr.f32.mxu0 %v4305
        %5914 = vmatmul.mubr.f32.gmra.mxu0 %v4304
        %v5915 = vpop.f32.mrf.mxu0
        %v5916 = vadd.f32 %v5761, %v5915
        %v5917 = vpop.f32.mrf.mxu0
        %v5918 = vadd.f32 %v5763, %v5917
        %5919 = vmatprep.mubr.f32.mxu0 %v4316
        %5920 = vmatmul.mubr.f32.gmra.mxu0 %v4315
        %v5921 = vpop.f32.mrf.mxu0
        %v5922 = vadd.f32 %v5767, %v5921
        %v5923 = vpop.f32.mrf.mxu0
        %v5924 = vadd.f32 %v5769, %v5923
        %5925 = vmatprep.mubr.f32.mxu0 %v4327
        %5926 = vmatmul.mubr.f32.gmra.mxu0 %v4326
        %v5927 = vpop.f32.mrf.mxu0
        %v5928 = vadd.f32 %v5773, %v5927
        %v5929 = vpop.f32.mrf.mxu0
        %v5930 = vadd.f32 %v5775, %v5929
        %5931 = vmatprep.mubr.f32.mxu0 %v4338
        %5932 = vmatmul.mubr.f32.gmra.mxu0 %v4337
        %v5933 = vpop.f32.mrf.mxu0
        %v5934 = vadd.f32 %v5779, %v5933
        %v5935 = vpop.f32.mrf.mxu0
        %v5936 = vadd.f32 %v5781, %v5935
        %5937 = vdwg.mxu0
        %5938 = vmatprep.subr.mxu0 %v4004
        %5939 = vmatpush1.msra.mxu0 %v4003
        %5940 = vmatprep.subr.mxu0 %v3996
        %5941 = vmatpush1.msra.mxu0 %v3995
        %5942 = vmatprep.subr.mxu0 %v3988
        %5943 = vmatpush1.msra.mxu0 %v3987
        %5944 = vmatprep.subr.mxu0 %v3980
        %5945 = vmatpush1.msra.mxu0 %v3979
        %5946 = vmatprep.subr.mxu0 %v3972
        %5947 = vmatpush1.msra.mxu0 %v3971
        %5948 = vmatprep.subr.mxu0 %v3964
        %5949 = vmatpush1.msra.mxu0 %v3963
        %5950 = vmatprep.subr.mxu0 %v3956
        %5951 = vmatpush1.msra.mxu0 %v3955
        %5952 = vmatprep.subr.mxu0 %v3948
        %5953 = vmatpush1.msra.mxu0 %v3947
        %5954 = vmatprep.subr.mxu0 %v3940
        %5955 = vmatpush1.msra.mxu0 %v3939
        %5956 = vmatprep.subr.mxu0 %v3932
        %5957 = vmatpush1.msra.mxu0 %v3931
        %5958 = vmatprep.subr.mxu0 %v3924
        %5959 = vmatpush1.msra.mxu0 %v3923
        %5960 = vmatprep.subr.mxu0 %v3916
        %5961 = vmatpush1.msra.mxu0 %v3915
        %5962 = vmatprep.subr.mxu0 %v3908
        %5963 = vmatpush1.msra.mxu0 %v3907
        %5964 = vmatprep.subr.mxu0 %v3900
        %5965 = vmatpush1.msra.mxu0 %v3899
        %5966 = vmatprep.subr.mxu0 %v3892
        %5967 = vmatpush1.msra.mxu0 %v3891
        %5968 = vmatprep.subr.mxu0 %v3884
        %5969 = vmatpush1.msra.mxu0 %v3883
        %5970 = vmatprep.subr.mxu0 %v4132
        %5971 = vmatpush2.msra.mxu0 %v4131
        %5972 = vmatprep.subr.mxu0 %v4124
        %5973 = vmatpush2.msra.mxu0 %v4123
        %5974 = vmatprep.subr.mxu0 %v4116
        %5975 = vmatpush2.msra.mxu0 %v4115
        %5976 = vmatprep.subr.mxu0 %v4108
        %5977 = vmatpush2.msra.mxu0 %v4107
        %5978 = vmatprep.subr.mxu0 %v4100
        %5979 = vmatpush2.msra.mxu0 %v4099
        %5980 = vmatprep.subr.mxu0 %v4092
        %5981 = vmatpush2.msra.mxu0 %v4091
        %5982 = vmatprep.subr.mxu0 %v4084
        %5983 = vmatpush2.msra.mxu0 %v4083
        %5984 = vmatprep.subr.mxu0 %v4076
        %5985 = vmatpush2.msra.mxu0 %v4075
        %5986 = vmatprep.subr.mxu0 %v4068
        %5987 = vmatpush2.msra.mxu0 %v4067
        %5988 = vmatprep.subr.mxu0 %v4060
        %5989 = vmatpush2.msra.mxu0 %v4059
        %5990 = vmatprep.subr.mxu0 %v4052
        %5991 = vmatpush2.msra.mxu0 %v4051
        %5992 = vmatprep.subr.mxu0 %v4044
        %5993 = vmatpush2.msra.mxu0 %v4043
        %5994 = vmatprep.subr.mxu0 %v4036
        %5995 = vmatpush2.msra.mxu0 %v4035
        %5996 = vmatprep.subr.mxu0 %v4028
        %5997 = vmatpush2.msra.mxu0 %v4027
        %5998 = vmatprep.subr.mxu0 %v4020
        %5999 = vmatpush2.msra.mxu0 %v4019
        %6000 = vmatprep.subr.mxu0 %v4012
        %6001 = vmatpush2.msra.mxu0 %v4011
        %6002 = vmatprep.mubr.f32.mxu0 %v4186
        %6003 = vmatmul.mubr.f32.gmra.mxu0 %v4185
        %v6004 = vpop.f32.mrf.mxu0
        %v6005 = vadd.f32 %v5850, %v6004
        %v6006 = vpop.f32.mrf.mxu0
        %v6007 = vadd.f32 %v5852, %v6006
        %6008 = vmatprep.mubr.f32.mxu0 %v4197
        %6009 = vmatmul.mubr.f32.gmra.mxu0 %v4196
        %v6010 = vpop.f32.mrf.mxu0
        %v6011 = vadd.f32 %v5856, %v6010
        %v6012 = vpop.f32.mrf.mxu0
        %v6013 = vadd.f32 %v5858, %v6012
        %6014 = vmatprep.mubr.f32.mxu0 %v4208
        %6015 = vmatmul.mubr.f32.gmra.mxu0 %v4207
        %v6016 = vpop.f32.mrf.mxu0
        %v6017 = vadd.f32 %v5862, %v6016
        %v6018 = vpop.f32.mrf.mxu0
        %v6019 = vadd.f32 %v5864, %v6018
        %6020 = vmatprep.mubr.f32.mxu0 %v4219
        %6021 = vmatmul.mubr.f32.gmra.mxu0 %v4218
        %v6022 = vpop.f32.mrf.mxu0
        %v6023 = vadd.f32 %v5868, %v6022
        %v6024 = vpop.f32.mrf.mxu0
        %v6025 = vadd.f32 %v5870, %v6024
        %6026 = vmatprep.mubr.f32.mxu0 %v4230
        %6027 = vmatmul.mubr.f32.gmra.mxu0 %v4229
        %v6028 = vpop.f32.mrf.mxu0
        %v6029 = vadd.f32 %v5874, %v6028
        %v6030 = vpop.f32.mrf.mxu0
        %v6031 = vadd.f32 %v5876, %v6030
        %6032 = vmatprep.mubr.f32.mxu0 %v4241
        %6033 = vmatmul.mubr.f32.gmra.mxu0 %v4240
        %v6034 = vpop.f32.mrf.mxu0
        %v6035 = vadd.f32 %v5880, %v6034
        %v6036 = vpop.f32.mrf.mxu0
        %v6037 = vadd.f32 %v5882, %v6036
        %6038 = vmatprep.mubr.f32.mxu0 %v4252
        %6039 = vmatmul.mubr.f32.gmra.mxu0 %v4251
        %v6040 = vpop.f32.mrf.mxu0
        %v6041 = vadd.f32 %v5886, %v6040
        %v6042 = vpop.f32.mrf.mxu0
        %v6043 = vadd.f32 %v5888, %v6042
        %6044 = vmatprep.mubr.f32.mxu0 %v4263
        %6045 = vmatmul.mubr.f32.gmra.mxu0 %v4262
        %v6046 = vpop.f32.mrf.mxu0
        %v6047 = vadd.f32 %v5892, %v6046
        %v6048 = vpop.f32.mrf.mxu0
        %v6049 = vadd.f32 %v5894, %v6048
        %6050 = vmatprep.mubr.f32.mxu0 %v4274
        %6051 = vmatmul.mubr.f32.gmra.mxu0 %v4273
        %v6052 = vpop.f32.mrf.mxu0
        %v6053 = vadd.f32 %v5898, %v6052
        %v6054 = vpop.f32.mrf.mxu0
        %v6055 = vadd.f32 %v5900, %v6054
        %6056 = vmatprep.mubr.f32.mxu0 %v4285
        %6057 = vmatmul.mubr.f32.gmra.mxu0 %v4284
        %v6058 = vpop.f32.mrf.mxu0
        %v6059 = vadd.f32 %v5904, %v6058
        %v6060 = vpop.f32.mrf.mxu0
        %v6061 = vadd.f32 %v5906, %v6060
        %6062 = vmatprep.mubr.f32.mxu0 %v4296
        %6063 = vmatmul.mubr.f32.gmra.mxu0 %v4295
        %v6064 = vpop.f32.mrf.mxu0
        %v6065 = vadd.f32 %v5910, %v6064
        %v6066 = vpop.f32.mrf.mxu0
        %v6067 = vadd.f32 %v5912, %v6066
        %6068 = vmatprep.mubr.f32.mxu0 %v4307
        %6069 = vmatmul.mubr.f32.gmra.mxu0 %v4306
        %v6070 = vpop.f32.mrf.mxu0
        %v6071 = vadd.f32 %v5916, %v6070
        %v6072 = vpop.f32.mrf.mxu0
        %v6073 = vadd.f32 %v5918, %v6072
        %6074 = vmatprep.mubr.f32.mxu0 %v4318
        %6075 = vmatmul.mubr.f32.gmra.mxu0 %v4317
        %v6076 = vpop.f32.mrf.mxu0
        %v6077 = vadd.f32 %v5922, %v6076
        %v6078 = vpop.f32.mrf.mxu0
        %v6079 = vadd.f32 %v5924, %v6078
        %6080 = vmatprep.mubr.f32.mxu0 %v4329
        %6081 = vmatmul.mubr.f32.gmra.mxu0 %v4328
        %v6082 = vpop.f32.mrf.mxu0
        %v6083 = vadd.f32 %v5928, %v6082
        %v6084 = vpop.f32.mrf.mxu0
        %v6085 = vadd.f32 %v5930, %v6084
        %6086 = vmatprep.mubr.f32.mxu0 %v4340
        %6087 = vmatmul.mubr.f32.gmra.mxu0 %v4339
        %v6088 = vpop.f32.mrf.mxu0
        %v6089 = vadd.f32 %v5934, %v6088
        %v6090 = vpop.f32.mrf.mxu0
        %v6091 = vadd.f32 %v5936, %v6090
        %6092 = vdwg.mxu0
        %6093 = vmatprep.subr.mxu0 0.0
        %6094 = vmatpush1.msra.mxu0 0.0
        %6095 = vmatprep.subr.mxu0 0.0
        %6096 = vmatpush1.msra.mxu0 0.0
        %6097 = vmatprep.subr.mxu0 0.0
        %6098 = vmatpush1.msra.mxu0 0.0
        %6099 = vmatprep.subr.mxu0 0.0
        %6100 = vmatpush1.msra.mxu0 0.0
        %6101 = vmatprep.subr.mxu0 0.0
        %6102 = vmatpush1.msra.mxu0 0.0
        %6103 = vmatprep.subr.mxu0 0.0
        %6104 = vmatpush1.msra.mxu0 0.0
        %6105 = vmatprep.subr.mxu0 0.0
        %6106 = vmatpush1.msra.mxu0 0.0
        %6107 = vmatprep.subr.mxu0 0.0
        %6108 = vmatpush1.msra.mxu0 0.0
        %6109 = vmatprep.subr.mxu0 0.0
        %6110 = vmatpush1.msra.mxu0 0.0
        %6111 = vmatprep.subr.mxu0 0.0
        %6112 = vmatpush1.msra.mxu0 0.0
        %6113 = vmatprep.subr.mxu0 0.0
        %6114 = vmatpush1.msra.mxu0 0.0
        %6115 = vmatprep.subr.mxu0 %v4172
        %6116 = vmatpush1.msra.mxu0 %v4171
        %6117 = vmatprep.subr.mxu0 %v4164
        %6118 = vmatpush1.msra.mxu0 %v4163
        %6119 = vmatprep.subr.mxu0 %v4156
        %6120 = vmatpush1.msra.mxu0 %v4155
        %6121 = vmatprep.subr.mxu0 %v4148
        %6122 = vmatpush1.msra.mxu0 %v4147
        %6123 = vmatprep.subr.mxu0 %v4140
        %6124 = vmatpush1.msra.mxu0 %v4139
        %6125 = vmatprep.subr.mxu0 0.0
        %6126 = vmatpush2.msra.mxu0 0.0
        %6127 = vmatprep.subr.mxu0 0.0
        %6128 = vmatpush2.msra.mxu0 0.0
        %6129 = vmatprep.subr.mxu0 0.0
        %6130 = vmatpush2.msra.mxu0 0.0
        %6131 = vmatprep.subr.mxu0 0.0
        %6132 = vmatpush2.msra.mxu0 0.0
        %6133 = vmatprep.subr.mxu0 0.0
        %6134 = vmatpush2.msra.mxu0 0.0
        %6135 = vmatprep.subr.mxu0 0.0
        %6136 = vmatpush2.msra.mxu0 0.0
        %6137 = vmatprep.subr.mxu0 0.0
        %6138 = vmatpush2.msra.mxu0 0.0
        %6139 = vmatprep.subr.mxu0 0.0
        %6140 = vmatpush2.msra.mxu0 0.0
        %6141 = vmatprep.subr.mxu0 0.0
        %6142 = vmatpush2.msra.mxu0 0.0
        %6143 = vmatprep.subr.mxu0 0.0
        %6144 = vmatpush2.msra.mxu0 0.0
        %6145 = vmatprep.subr.mxu0 0.0
        %6146 = vmatpush2.msra.mxu0 0.0
        %6147 = vmatprep.subr.mxu0 0.0
        %6148 = vmatpush2.msra.mxu0 0.0
        %6149 = vmatprep.subr.mxu0 0.0
        %6150 = vmatpush2.msra.mxu0 0.0
        %6151 = vmatprep.subr.mxu0 0.0
        %6152 = vmatpush2.msra.mxu0 0.0
        %6153 = vmatprep.subr.mxu0 0.0
        %6154 = vmatpush2.msra.mxu0 0.0
        %6155 = vmatprep.subr.mxu0 0.0
        %6156 = vmatpush2.msra.mxu0 0.0
        %6157 = vmatprep.mubr.f32.mxu0 0.0
        %6158 = vmatmul.mubr.f32.gmra.mxu0 %v4344
        %v6159 = vpop.f32.mrf.mxu0
        %v6160 = vadd.f32 %v6005, %v6159
        %v6161 = vpop.f32.mrf.mxu0
        %v6162 = vadd.f32 %v6007, %v6161
        %6163 = vmatprep.mubr.f32.mxu0 0.0
        %6164 = vmatmul.mubr.f32.gmra.mxu0 %v4347
        %v6165 = vpop.f32.mrf.mxu0
        %v6166 = vadd.f32 %v6011, %v6165
        %v6167 = vpop.f32.mrf.mxu0
        %v6168 = vadd.f32 %v6013, %v6167
        %6169 = vmatprep.mubr.f32.mxu0 0.0
        %6170 = vmatmul.mubr.f32.gmra.mxu0 %v4350
        %v6171 = vpop.f32.mrf.mxu0
        %v6172 = vadd.f32 %v6017, %v6171
        %v6173 = vpop.f32.mrf.mxu0
        %v6174 = vadd.f32 %v6019, %v6173
        %6175 = vmatprep.mubr.f32.mxu0 0.0
        %6176 = vmatmul.mubr.f32.gmra.mxu0 %v4353
        %v6177 = vpop.f32.mrf.mxu0
        %v6178 = vadd.f32 %v6023, %v6177
        %v6179 = vpop.f32.mrf.mxu0
        %v6180 = vadd.f32 %v6025, %v6179
        %6181 = vmatprep.mubr.f32.mxu0 0.0
        %6182 = vmatmul.mubr.f32.gmra.mxu0 %v4356
        %v6183 = vpop.f32.mrf.mxu0
        %v6184 = vadd.f32 %v6029, %v6183
        %v6185 = vpop.f32.mrf.mxu0
        %v6186 = vadd.f32 %v6031, %v6185
        %6187 = vmatprep.mubr.f32.mxu0 0.0
        %6188 = vmatmul.mubr.f32.gmra.mxu0 %v4359
        %v6189 = vpop.f32.mrf.mxu0
        %v6190 = vadd.f32 %v6035, %v6189
        %v6191 = vpop.f32.mrf.mxu0
        %v6192 = vadd.f32 %v6037, %v6191
        %6193 = vmatprep.mubr.f32.mxu0 0.0
        %6194 = vmatmul.mubr.f32.gmra.mxu0 %v4362
        %v6195 = vpop.f32.mrf.mxu0
        %v6196 = vadd.f32 %v6041, %v6195
        %v6197 = vpop.f32.mrf.mxu0
        %v6198 = vadd.f32 %v6043, %v6197
        %6199 = vmatprep.mubr.f32.mxu0 0.0
        %6200 = vmatmul.mubr.f32.gmra.mxu0 %v4365
        %v6201 = vpop.f32.mrf.mxu0
        %v6202 = vadd.f32 %v6047, %v6201
        %v6203 = vpop.f32.mrf.mxu0
        %v6204 = vadd.f32 %v6049, %v6203
        %6205 = vmatprep.mubr.f32.mxu0 0.0
        %6206 = vmatmul.mubr.f32.gmra.mxu0 %v4368
        %v6207 = vpop.f32.mrf.mxu0
        %v6208 = vadd.f32 %v6053, %v6207
        %v6209 = vpop.f32.mrf.mxu0
        %v6210 = vadd.f32 %v6055, %v6209
        %6211 = vmatprep.mubr.f32.mxu0 0.0
        %6212 = vmatmul.mubr.f32.gmra.mxu0 %v4371
        %v6213 = vpop.f32.mrf.mxu0
        %v6214 = vadd.f32 %v6059, %v6213
        %v6215 = vpop.f32.mrf.mxu0
        %v6216 = vadd.f32 %v6061, %v6215
        %6217 = vmatprep.mubr.f32.mxu0 0.0
        %6218 = vmatmul.mubr.f32.gmra.mxu0 %v4374
        %v6219 = vpop.f32.mrf.mxu0
        %v6220 = vadd.f32 %v6065, %v6219
        %v6221 = vpop.f32.mrf.mxu0
        %v6222 = vadd.f32 %v6067, %v6221
        %6223 = vmatprep.mubr.f32.mxu0 0.0
        %6224 = vmatmul.mubr.f32.gmra.mxu0 %v4377
        %v6225 = vpop.f32.mrf.mxu0
        %v6226 = vadd.f32 %v6071, %v6225
        %v6227 = vpop.f32.mrf.mxu0
        %v6228 = vadd.f32 %v6073, %v6227
        %6229 = vmatprep.mubr.f32.mxu0 0.0
        %6230 = vmatmul.mubr.f32.gmra.mxu0 %v4380
        %v6231 = vpop.f32.mrf.mxu0
        %v6232 = vadd.f32 %v6077, %v6231
        %v6233 = vpop.f32.mrf.mxu0
        %v6234 = vadd.f32 %v6079, %v6233
        %6235 = vmatprep.mubr.f32.mxu0 0.0
        %6236 = vmatmul.mubr.f32.gmra.mxu0 %v4383
        %v6237 = vpop.f32.mrf.mxu0
        %v6238 = vadd.f32 %v6083, %v6237
        %v6239 = vpop.f32.mrf.mxu0
        %v6240 = vadd.f32 %v6085, %v6239
        %6241 = vmatprep.mubr.f32.mxu0 0.0
        %6242 = vmatmul.mubr.f32.gmra.mxu0 %v4386
        %v6243 = vpop.f32.mrf.mxu0
        %v6244 = vadd.f32 %v6089, %v6243
        %v6245 = vpop.f32.mrf.mxu0
        %v6246 = vadd.f32 %v6091, %v6245
        %6247 = vdwg.mxu0
        %6248 = vmatprep.subr.mxu0 %v2982
        %6249 = vmatpush1.msra.mxu0 %v2981
        %6250 = vmatprep.subr.mxu0 %v2974
        %6251 = vmatpush1.msra.mxu0 %v2973
        %6252 = vmatprep.subr.mxu0 %v2966
        %6253 = vmatpush1.msra.mxu0 %v2965
        %6254 = vmatprep.subr.mxu0 %v2958
        %6255 = vmatpush1.msra.mxu0 %v2957
        %6256 = vmatprep.subr.mxu0 %v2950
        %6257 = vmatpush1.msra.mxu0 %v2949
        %6258 = vmatprep.subr.mxu0 %v2942
        %6259 = vmatpush1.msra.mxu0 %v2941
        %6260 = vmatprep.subr.mxu0 %v2934
        %6261 = vmatpush1.msra.mxu0 %v2933
        %6262 = vmatprep.subr.mxu0 %v2926
        %6263 = vmatpush1.msra.mxu0 %v2925
        %6264 = vmatprep.subr.mxu0 %v2918
        %6265 = vmatpush1.msra.mxu0 %v2917
        %6266 = vmatprep.subr.mxu0 %v2910
        %6267 = vmatpush1.msra.mxu0 %v2909
        %6268 = vmatprep.subr.mxu0 %v2902
        %6269 = vmatpush1.msra.mxu0 %v2901
        %6270 = vmatprep.subr.mxu0 %v2894
        %6271 = vmatpush1.msra.mxu0 %v2893
        %6272 = vmatprep.subr.mxu0 %v2886
        %6273 = vmatpush1.msra.mxu0 %v2885
        %6274 = vmatprep.subr.mxu0 %v2878
        %6275 = vmatpush1.msra.mxu0 %v2877
        %6276 = vmatprep.subr.mxu0 %v2870
        %6277 = vmatpush1.msra.mxu0 %v2869
        %6278 = vmatprep.subr.mxu0 %v2862
        %6279 = vmatpush1.msra.mxu0 %v2861
        %6280 = vmatprep.subr.mxu0 %v3110
        %6281 = vmatpush2.msra.mxu0 %v3109
        %6282 = vmatprep.subr.mxu0 %v3102
        %6283 = vmatpush2.msra.mxu0 %v3101
        %6284 = vmatprep.subr.mxu0 %v3094
        %6285 = vmatpush2.msra.mxu0 %v3093
        %6286 = vmatprep.subr.mxu0 %v3086
        %6287 = vmatpush2.msra.mxu0 %v3085
        %6288 = vmatprep.subr.mxu0 %v3078
        %6289 = vmatpush2.msra.mxu0 %v3077
        %6290 = vmatprep.subr.mxu0 %v3070
        %6291 = vmatpush2.msra.mxu0 %v3069
        %6292 = vmatprep.subr.mxu0 %v3062
        %6293 = vmatpush2.msra.mxu0 %v3061
        %6294 = vmatprep.subr.mxu0 %v3054
        %6295 = vmatpush2.msra.mxu0 %v3053
        %6296 = vmatprep.subr.mxu0 %v3046
        %6297 = vmatpush2.msra.mxu0 %v3045
        %6298 = vmatprep.subr.mxu0 %v3038
        %6299 = vmatpush2.msra.mxu0 %v3037
        %6300 = vmatprep.subr.mxu0 %v3030
        %6301 = vmatpush2.msra.mxu0 %v3029
        %6302 = vmatprep.subr.mxu0 %v3022
        %6303 = vmatpush2.msra.mxu0 %v3021
        %6304 = vmatprep.subr.mxu0 %v3014
        %6305 = vmatpush2.msra.mxu0 %v3013
        %6306 = vmatprep.subr.mxu0 %v3006
        %6307 = vmatpush2.msra.mxu0 %v3005
        %6308 = vmatprep.subr.mxu0 %v2998
        %6309 = vmatpush2.msra.mxu0 %v2997
        %6310 = vmatprep.subr.mxu0 %v2990
        %6311 = vmatpush2.msra.mxu0 %v2989
        %6312 = vmatprep.mubr.f32.mxu0 %v4178
        %6313 = vmatmul.mubr.f32.gmra.mxu0 %v4177
        %v6314 = vpop.f32.mrf.mxu0
        %v6315 = vadd.f32 0.0, %v6314
        %v6316 = vpop.f32.mrf.mxu0
        %v6317 = vadd.f32 0.0, %v6316
        %6318 = vmatprep.mubr.f32.mxu0 %v4189
        %6319 = vmatmul.mubr.f32.gmra.mxu0 %v4188
        %v6320 = vpop.f32.mrf.mxu0
        %v6321 = vadd.f32 0.0, %v6320
        %v6322 = vpop.f32.mrf.mxu0
        %v6323 = vadd.f32 0.0, %v6322
        %6324 = vmatprep.mubr.f32.mxu0 %v4200
        %6325 = vmatmul.mubr.f32.gmra.mxu0 %v4199
        %v6326 = vpop.f32.mrf.mxu0
        %v6327 = vadd.f32 0.0, %v6326
        %v6328 = vpop.f32.mrf.mxu0
        %v6329 = vadd.f32 0.0, %v6328
        %6330 = vmatprep.mubr.f32.mxu0 %v4211
        %6331 = vmatmul.mubr.f32.gmra.mxu0 %v4210
        %v6332 = vpop.f32.mrf.mxu0
        %v6333 = vadd.f32 0.0, %v6332
        %v6334 = vpop.f32.mrf.mxu0
        %v6335 = vadd.f32 0.0, %v6334
        %6336 = vmatprep.mubr.f32.mxu0 %v4222
        %6337 = vmatmul.mubr.f32.gmra.mxu0 %v4221
        %v6338 = vpop.f32.mrf.mxu0
        %v6339 = vadd.f32 0.0, %v6338
        %v6340 = vpop.f32.mrf.mxu0
        %v6341 = vadd.f32 0.0, %v6340
        %6342 = vmatprep.mubr.f32.mxu0 %v4233
        %6343 = vmatmul.mubr.f32.gmra.mxu0 %v4232
        %v6344 = vpop.f32.mrf.mxu0
        %v6345 = vadd.f32 0.0, %v6344
        %v6346 = vpop.f32.mrf.mxu0
        %v6347 = vadd.f32 0.0, %v6346
        %6348 = vmatprep.mubr.f32.mxu0 %v4244
        %6349 = vmatmul.mubr.f32.gmra.mxu0 %v4243
        %v6350 = vpop.f32.mrf.mxu0
        %v6351 = vadd.f32 0.0, %v6350
        %v6352 = vpop.f32.mrf.mxu0
        %v6353 = vadd.f32 0.0, %v6352
        %6354 = vmatprep.mubr.f32.mxu0 %v4255
        %6355 = vmatmul.mubr.f32.gmra.mxu0 %v4254
        %v6356 = vpop.f32.mrf.mxu0
        %v6357 = vadd.f32 0.0, %v6356
        %v6358 = vpop.f32.mrf.mxu0
        %v6359 = vadd.f32 0.0, %v6358
        %6360 = vmatprep.mubr.f32.mxu0 %v4266
        %6361 = vmatmul.mubr.f32.gmra.mxu0 %v4265
        %v6362 = vpop.f32.mrf.mxu0
        %v6363 = vadd.f32 0.0, %v6362
        %v6364 = vpop.f32.mrf.mxu0
        %v6365 = vadd.f32 0.0, %v6364
        %6366 = vmatprep.mubr.f32.mxu0 %v4277
        %6367 = vmatmul.mubr.f32.gmra.mxu0 %v4276
        %v6368 = vpop.f32.mrf.mxu0
        %v6369 = vadd.f32 0.0, %v6368
        %v6370 = vpop.f32.mrf.mxu0
        %v6371 = vadd.f32 0.0, %v6370
        %6372 = vmatprep.mubr.f32.mxu0 %v4288
        %6373 = vmatmul.mubr.f32.gmra.mxu0 %v4287
        %v6374 = vpop.f32.mrf.mxu0
        %v6375 = vadd.f32 0.0, %v6374
        %v6376 = vpop.f32.mrf.mxu0
        %v6377 = vadd.f32 0.0, %v6376
        %6378 = vmatprep.mubr.f32.mxu0 %v4299
        %6379 = vmatmul.mubr.f32.gmra.mxu0 %v4298
        %v6380 = vpop.f32.mrf.mxu0
        %v6381 = vadd.f32 0.0, %v6380
        %v6382 = vpop.f32.mrf.mxu0
        %v6383 = vadd.f32 0.0, %v6382
        %6384 = vmatprep.mubr.f32.mxu0 %v4310
        %6385 = vmatmul.mubr.f32.gmra.mxu0 %v4309
        %v6386 = vpop.f32.mrf.mxu0
        %v6387 = vadd.f32 0.0, %v6386
        %v6388 = vpop.f32.mrf.mxu0
        %v6389 = vadd.f32 0.0, %v6388
        %6390 = vmatprep.mubr.f32.mxu0 %v4321
        %6391 = vmatmul.mubr.f32.gmra.mxu0 %v4320
        %v6392 = vpop.f32.mrf.mxu0
        %v6393 = vadd.f32 0.0, %v6392
        %v6394 = vpop.f32.mrf.mxu0
        %v6395 = vadd.f32 0.0, %v6394
        %6396 = vmatprep.mubr.f32.mxu0 %v4332
        %6397 = vmatmul.mubr.f32.gmra.mxu0 %v4331
        %v6398 = vpop.f32.mrf.mxu0
        %v6399 = vadd.f32 0.0, %v6398
        %v6400 = vpop.f32.mrf.mxu0
        %v6401 = vadd.f32 0.0, %v6400
        %6402 = vdwg.mxu0
        %6403 = vmatprep.subr.mxu0 %v3238
        %6404 = vmatpush1.msra.mxu0 %v3237
        %6405 = vmatprep.subr.mxu0 %v3230
        %6406 = vmatpush1.msra.mxu0 %v3229
        %6407 = vmatprep.subr.mxu0 %v3222
        %6408 = vmatpush1.msra.mxu0 %v3221
        %6409 = vmatprep.subr.mxu0 %v3214
        %6410 = vmatpush1.msra.mxu0 %v3213
        %6411 = vmatprep.subr.mxu0 %v3206
        %6412 = vmatpush1.msra.mxu0 %v3205
        %6413 = vmatprep.subr.mxu0 %v3198
        %6414 = vmatpush1.msra.mxu0 %v3197
        %6415 = vmatprep.subr.mxu0 %v3190
        %6416 = vmatpush1.msra.mxu0 %v3189
        %6417 = vmatprep.subr.mxu0 %v3182
        %6418 = vmatpush1.msra.mxu0 %v3181
        %6419 = vmatprep.subr.mxu0 %v3174
        %6420 = vmatpush1.msra.mxu0 %v3173
        %6421 = vmatprep.subr.mxu0 %v3166
        %6422 = vmatpush1.msra.mxu0 %v3165
        %6423 = vmatprep.subr.mxu0 %v3158
        %6424 = vmatpush1.msra.mxu0 %v3157
        %6425 = vmatprep.subr.mxu0 %v3150
        %6426 = vmatpush1.msra.mxu0 %v3149
        %6427 = vmatprep.subr.mxu0 %v3142
        %6428 = vmatpush1.msra.mxu0 %v3141
        %6429 = vmatprep.subr.mxu0 %v3134
        %6430 = vmatpush1.msra.mxu0 %v3133
        %6431 = vmatprep.subr.mxu0 %v3126
        %6432 = vmatpush1.msra.mxu0 %v3125
        %6433 = vmatprep.subr.mxu0 %v3118
        %6434 = vmatpush1.msra.mxu0 %v3117
        %6435 = vmatprep.subr.mxu0 %v3366
        %6436 = vmatpush2.msra.mxu0 %v3365
        %6437 = vmatprep.subr.mxu0 %v3358
        %6438 = vmatpush2.msra.mxu0 %v3357
        %6439 = vmatprep.subr.mxu0 %v3350
        %6440 = vmatpush2.msra.mxu0 %v3349
        %6441 = vmatprep.subr.mxu0 %v3342
        %6442 = vmatpush2.msra.mxu0 %v3341
        %6443 = vmatprep.subr.mxu0 %v3334
        %6444 = vmatpush2.msra.mxu0 %v3333
        %6445 = vmatprep.subr.mxu0 %v3326
        %6446 = vmatpush2.msra.mxu0 %v3325
        %6447 = vmatprep.subr.mxu0 %v3318
        %6448 = vmatpush2.msra.mxu0 %v3317
        %6449 = vmatprep.subr.mxu0 %v3310
        %6450 = vmatpush2.msra.mxu0 %v3309
        %6451 = vmatprep.subr.mxu0 %v3302
        %6452 = vmatpush2.msra.mxu0 %v3301
        %6453 = vmatprep.subr.mxu0 %v3294
        %6454 = vmatpush2.msra.mxu0 %v3293
        %6455 = vmatprep.subr.mxu0 %v3286
        %6456 = vmatpush2.msra.mxu0 %v3285
        %6457 = vmatprep.subr.mxu0 %v3278
        %6458 = vmatpush2.msra.mxu0 %v3277
        %6459 = vmatprep.subr.mxu0 %v3270
        %6460 = vmatpush2.msra.mxu0 %v3269
        %6461 = vmatprep.subr.mxu0 %v3262
        %6462 = vmatpush2.msra.mxu0 %v3261
        %6463 = vmatprep.subr.mxu0 %v3254
        %6464 = vmatpush2.msra.mxu0 %v3253
        %6465 = vmatprep.subr.mxu0 %v3246
        %6466 = vmatpush2.msra.mxu0 %v3245
        %6467 = vmatprep.mubr.f32.mxu0 %v4180
        %6468 = vmatmul.mubr.f32.gmra.mxu0 %v4179
        %v6469 = vpop.f32.mrf.mxu0
        %v6470 = vadd.f32 %v6315, %v6469
        %v6471 = vpop.f32.mrf.mxu0
        %v6472 = vadd.f32 %v6317, %v6471
        %6473 = vmatprep.mubr.f32.mxu0 %v4191
        %6474 = vmatmul.mubr.f32.gmra.mxu0 %v4190
        %v6475 = vpop.f32.mrf.mxu0
        %v6476 = vadd.f32 %v6321, %v6475
        %v6477 = vpop.f32.mrf.mxu0
        %v6478 = vadd.f32 %v6323, %v6477
        %6479 = vmatprep.mubr.f32.mxu0 %v4202
        %6480 = vmatmul.mubr.f32.gmra.mxu0 %v4201
        %v6481 = vpop.f32.mrf.mxu0
        %v6482 = vadd.f32 %v6327, %v6481
        %v6483 = vpop.f32.mrf.mxu0
        %v6484 = vadd.f32 %v6329, %v6483
        %6485 = vmatprep.mubr.f32.mxu0 %v4213
        %6486 = vmatmul.mubr.f32.gmra.mxu0 %v4212
        %v6487 = vpop.f32.mrf.mxu0
        %v6488 = vadd.f32 %v6333, %v6487
        %v6489 = vpop.f32.mrf.mxu0
        %v6490 = vadd.f32 %v6335, %v6489
        %6491 = vmatprep.mubr.f32.mxu0 %v4224
        %6492 = vmatmul.mubr.f32.gmra.mxu0 %v4223
        %v6493 = vpop.f32.mrf.mxu0
        %v6494 = vadd.f32 %v6339, %v6493
        %v6495 = vpop.f32.mrf.mxu0
        %v6496 = vadd.f32 %v6341, %v6495
        %6497 = vmatprep.mubr.f32.mxu0 %v4235
        %6498 = vmatmul.mubr.f32.gmra.mxu0 %v4234
        %v6499 = vpop.f32.mrf.mxu0
        %v6500 = vadd.f32 %v6345, %v6499
        %v6501 = vpop.f32.mrf.mxu0
        %v6502 = vadd.f32 %v6347, %v6501
        %6503 = vmatprep.mubr.f32.mxu0 %v4246
        %6504 = vmatmul.mubr.f32.gmra.mxu0 %v4245
        %v6505 = vpop.f32.mrf.mxu0
        %v6506 = vadd.f32 %v6351, %v6505
        %v6507 = vpop.f32.mrf.mxu0
        %v6508 = vadd.f32 %v6353, %v6507
        %6509 = vmatprep.mubr.f32.mxu0 %v4257
        %6510 = vmatmul.mubr.f32.gmra.mxu0 %v4256
        %v6511 = vpop.f32.mrf.mxu0
        %v6512 = vadd.f32 %v6357, %v6511
        %v6513 = vpop.f32.mrf.mxu0
        %v6514 = vadd.f32 %v6359, %v6513
        %6515 = vmatprep.mubr.f32.mxu0 %v4268
        %6516 = vmatmul.mubr.f32.gmra.mxu0 %v4267
        %v6517 = vpop.f32.mrf.mxu0
        %v6518 = vadd.f32 %v6363, %v6517
        %v6519 = vpop.f32.mrf.mxu0
        %v6520 = vadd.f32 %v6365, %v6519
        %6521 = vmatprep.mubr.f32.mxu0 %v4279
        %6522 = vmatmul.mubr.f32.gmra.mxu0 %v4278
        %v6523 = vpop.f32.mrf.mxu0
        %v6524 = vadd.f32 %v6369, %v6523
        %v6525 = vpop.f32.mrf.mxu0
        %v6526 = vadd.f32 %v6371, %v6525
        %6527 = vmatprep.mubr.f32.mxu0 %v4290
        %6528 = vmatmul.mubr.f32.gmra.mxu0 %v4289
        %v6529 = vpop.f32.mrf.mxu0
        %v6530 = vadd.f32 %v6375, %v6529
        %v6531 = vpop.f32.mrf.mxu0
        %v6532 = vadd.f32 %v6377, %v6531
        %6533 = vmatprep.mubr.f32.mxu0 %v4301
        %6534 = vmatmul.mubr.f32.gmra.mxu0 %v4300
        %v6535 = vpop.f32.mrf.mxu0
        %v6536 = vadd.f32 %v6381, %v6535
        %v6537 = vpop.f32.mrf.mxu0
        %v6538 = vadd.f32 %v6383, %v6537
        %6539 = vmatprep.mubr.f32.mxu0 %v4312
        %6540 = vmatmul.mubr.f32.gmra.mxu0 %v4311
        %v6541 = vpop.f32.mrf.mxu0
        %v6542 = vadd.f32 %v6387, %v6541
        %v6543 = vpop.f32.mrf.mxu0
        %v6544 = vadd.f32 %v6389, %v6543
        %6545 = vmatprep.mubr.f32.mxu0 %v4323
        %6546 = vmatmul.mubr.f32.gmra.mxu0 %v4322
        %v6547 = vpop.f32.mrf.mxu0
        %v6548 = vadd.f32 %v6393, %v6547
        %v6549 = vpop.f32.mrf.mxu0
        %v6550 = vadd.f32 %v6395, %v6549
        %6551 = vmatprep.mubr.f32.mxu0 %v4334
        %6552 = vmatmul.mubr.f32.gmra.mxu0 %v4333
        %v6553 = vpop.f32.mrf.mxu0
        %v6554 = vadd.f32 %v6399, %v6553
        %v6555 = vpop.f32.mrf.mxu0
        %v6556 = vadd.f32 %v6401, %v6555
        %6557 = vdwg.mxu0
        %6558 = vmatprep.subr.mxu0 %v3494
        %6559 = vmatpush1.msra.mxu0 %v3493
        %6560 = vmatprep.subr.mxu0 %v3486
        %6561 = vmatpush1.msra.mxu0 %v3485
        %6562 = vmatprep.subr.mxu0 %v3478
        %6563 = vmatpush1.msra.mxu0 %v3477
        %6564 = vmatprep.subr.mxu0 %v3470
        %6565 = vmatpush1.msra.mxu0 %v3469
        %6566 = vmatprep.subr.mxu0 %v3462
        %6567 = vmatpush1.msra.mxu0 %v3461
        %6568 = vmatprep.subr.mxu0 %v3454
        %6569 = vmatpush1.msra.mxu0 %v3453
        %6570 = vmatprep.subr.mxu0 %v3446
        %6571 = vmatpush1.msra.mxu0 %v3445
        %6572 = vmatprep.subr.mxu0 %v3438
        %6573 = vmatpush1.msra.mxu0 %v3437
        %6574 = vmatprep.subr.mxu0 %v3430
        %6575 = vmatpush1.msra.mxu0 %v3429
        %6576 = vmatprep.subr.mxu0 %v3422
        %6577 = vmatpush1.msra.mxu0 %v3421
        %6578 = vmatprep.subr.mxu0 %v3414
        %6579 = vmatpush1.msra.mxu0 %v3413
        %6580 = vmatprep.subr.mxu0 %v3406
        %6581 = vmatpush1.msra.mxu0 %v3405
        %6582 = vmatprep.subr.mxu0 %v3398
        %6583 = vmatpush1.msra.mxu0 %v3397
        %6584 = vmatprep.subr.mxu0 %v3390
        %6585 = vmatpush1.msra.mxu0 %v3389
        %6586 = vmatprep.subr.mxu0 %v3382
        %6587 = vmatpush1.msra.mxu0 %v3381
        %6588 = vmatprep.subr.mxu0 %v3374
        %6589 = vmatpush1.msra.mxu0 %v3373
        %6590 = vmatprep.subr.mxu0 %v3622
        %6591 = vmatpush2.msra.mxu0 %v3621
        %6592 = vmatprep.subr.mxu0 %v3614
        %6593 = vmatpush2.msra.mxu0 %v3613
        %6594 = vmatprep.subr.mxu0 %v3606
        %6595 = vmatpush2.msra.mxu0 %v3605
        %6596 = vmatprep.subr.mxu0 %v3598
        %6597 = vmatpush2.msra.mxu0 %v3597
        %6598 = vmatprep.subr.mxu0 %v3590
        %6599 = vmatpush2.msra.mxu0 %v3589
        %6600 = vmatprep.subr.mxu0 %v3582
        %6601 = vmatpush2.msra.mxu0 %v3581
        %6602 = vmatprep.subr.mxu0 %v3574
        %6603 = vmatpush2.msra.mxu0 %v3573
        %6604 = vmatprep.subr.mxu0 %v3566
        %6605 = vmatpush2.msra.mxu0 %v3565
        %6606 = vmatprep.subr.mxu0 %v3558
        %6607 = vmatpush2.msra.mxu0 %v3557
        %6608 = vmatprep.subr.mxu0 %v3550
        %6609 = vmatpush2.msra.mxu0 %v3549
        %6610 = vmatprep.subr.mxu0 %v3542
        %6611 = vmatpush2.msra.mxu0 %v3541
        %6612 = vmatprep.subr.mxu0 %v3534
        %6613 = vmatpush2.msra.mxu0 %v3533
        %6614 = vmatprep.subr.mxu0 %v3526
        %6615 = vmatpush2.msra.mxu0 %v3525
        %6616 = vmatprep.subr.mxu0 %v3518
        %6617 = vmatpush2.msra.mxu0 %v3517
        %6618 = vmatprep.subr.mxu0 %v3510
        %6619 = vmatpush2.msra.mxu0 %v3509
        %6620 = vmatprep.subr.mxu0 %v3502
        %6621 = vmatpush2.msra.mxu0 %v3501
        %6622 = vmatprep.mubr.f32.mxu0 %v4182
        %6623 = vmatmul.mubr.f32.gmra.mxu0 %v4181
        %v6624 = vpop.f32.mrf.mxu0
        %v6625 = vadd.f32 %v6470, %v6624
        %v6626 = vpop.f32.mrf.mxu0
        %v6627 = vadd.f32 %v6472, %v6626
        %6628 = vmatprep.mubr.f32.mxu0 %v4193
        %6629 = vmatmul.mubr.f32.gmra.mxu0 %v4192
        %v6630 = vpop.f32.mrf.mxu0
        %v6631 = vadd.f32 %v6476, %v6630
        %v6632 = vpop.f32.mrf.mxu0
        %v6633 = vadd.f32 %v6478, %v6632
        %6634 = vmatprep.mubr.f32.mxu0 %v4204
        %6635 = vmatmul.mubr.f32.gmra.mxu0 %v4203
        %v6636 = vpop.f32.mrf.mxu0
        %v6637 = vadd.f32 %v6482, %v6636
        %v6638 = vpop.f32.mrf.mxu0
        %v6639 = vadd.f32 %v6484, %v6638
        %6640 = vmatprep.mubr.f32.mxu0 %v4215
        %6641 = vmatmul.mubr.f32.gmra.mxu0 %v4214
        %v6642 = vpop.f32.mrf.mxu0
        %v6643 = vadd.f32 %v6488, %v6642
        %v6644 = vpop.f32.mrf.mxu0
        %v6645 = vadd.f32 %v6490, %v6644
        %6646 = vmatprep.mubr.f32.mxu0 %v4226
        %6647 = vmatmul.mubr.f32.gmra.mxu0 %v4225
        %v6648 = vpop.f32.mrf.mxu0
        %v6649 = vadd.f32 %v6494, %v6648
        %v6650 = vpop.f32.mrf.mxu0
        %v6651 = vadd.f32 %v6496, %v6650
        %6652 = vmatprep.mubr.f32.mxu0 %v4237
        %6653 = vmatmul.mubr.f32.gmra.mxu0 %v4236
        %v6654 = vpop.f32.mrf.mxu0
        %v6655 = vadd.f32 %v6500, %v6654
        %v6656 = vpop.f32.mrf.mxu0
        %v6657 = vadd.f32 %v6502, %v6656
        %6658 = vmatprep.mubr.f32.mxu0 %v4248
        %6659 = vmatmul.mubr.f32.gmra.mxu0 %v4247
        %v6660 = vpop.f32.mrf.mxu0
        %v6661 = vadd.f32 %v6506, %v6660
        %v6662 = vpop.f32.mrf.mxu0
        %v6663 = vadd.f32 %v6508, %v6662
        %6664 = vmatprep.mubr.f32.mxu0 %v4259
        %6665 = vmatmul.mubr.f32.gmra.mxu0 %v4258
        %v6666 = vpop.f32.mrf.mxu0
        %v6667 = vadd.f32 %v6512, %v6666
        %v6668 = vpop.f32.mrf.mxu0
        %v6669 = vadd.f32 %v6514, %v6668
        %6670 = vmatprep.mubr.f32.mxu0 %v4270
        %6671 = vmatmul.mubr.f32.gmra.mxu0 %v4269
        %v6672 = vpop.f32.mrf.mxu0
        %v6673 = vadd.f32 %v6518, %v6672
        %v6674 = vpop.f32.mrf.mxu0
        %v6675 = vadd.f32 %v6520, %v6674
        %6676 = vmatprep.mubr.f32.mxu0 %v4281
        %6677 = vmatmul.mubr.f32.gmra.mxu0 %v4280
        %v6678 = vpop.f32.mrf.mxu0
        %v6679 = vadd.f32 %v6524, %v6678
        %v6680 = vpop.f32.mrf.mxu0
        %v6681 = vadd.f32 %v6526, %v6680
        %6682 = vmatprep.mubr.f32.mxu0 %v4292
        %6683 = vmatmul.mubr.f32.gmra.mxu0 %v4291
        %v6684 = vpop.f32.mrf.mxu0
        %v6685 = vadd.f32 %v6530, %v6684
        %v6686 = vpop.f32.mrf.mxu0
        %v6687 = vadd.f32 %v6532, %v6686
        %6688 = vmatprep.mubr.f32.mxu0 %v4303
        %6689 = vmatmul.mubr.f32.gmra.mxu0 %v4302
        %v6690 = vpop.f32.mrf.mxu0
        %v6691 = vadd.f32 %v6536, %v6690
        %v6692 = vpop.f32.mrf.mxu0
        %v6693 = vadd.f32 %v6538, %v6692
        %6694 = vmatprep.mubr.f32.mxu0 %v4314
        %6695 = vmatmul.mubr.f32.gmra.mxu0 %v4313
        %v6696 = vpop.f32.mrf.mxu0
        %v6697 = vadd.f32 %v6542, %v6696
        %v6698 = vpop.f32.mrf.mxu0
        %v6699 = vadd.f32 %v6544, %v6698
        %6700 = vmatprep.mubr.f32.mxu0 %v4325
        %6701 = vmatmul.mubr.f32.gmra.mxu0 %v4324
        %v6702 = vpop.f32.mrf.mxu0
        %v6703 = vadd.f32 %v6548, %v6702
        %v6704 = vpop.f32.mrf.mxu0
        %v6705 = vadd.f32 %v6550, %v6704
        %6706 = vmatprep.mubr.f32.mxu0 %v4336
        %6707 = vmatmul.mubr.f32.gmra.mxu0 %v4335
        %v6708 = vpop.f32.mrf.mxu0
        %v6709 = vadd.f32 %v6554, %v6708
        %v6710 = vpop.f32.mrf.mxu0
        %v6711 = vadd.f32 %v6556, %v6710
        %6712 = vdwg.mxu0
        %6713 = vmatprep.subr.mxu0 %v3750
        %6714 = vmatpush1.msra.mxu0 %v3749
        %6715 = vmatprep.subr.mxu0 %v3742
        %6716 = vmatpush1.msra.mxu0 %v3741
        %6717 = vmatprep.subr.mxu0 %v3734
        %6718 = vmatpush1.msra.mxu0 %v3733
        %6719 = vmatprep.subr.mxu0 %v3726
        %6720 = vmatpush1.msra.mxu0 %v3725
        %6721 = vmatprep.subr.mxu0 %v3718
        %6722 = vmatpush1.msra.mxu0 %v3717
        %6723 = vmatprep.subr.mxu0 %v3710
        %6724 = vmatpush1.msra.mxu0 %v3709
        %6725 = vmatprep.subr.mxu0 %v3702
        %6726 = vmatpush1.msra.mxu0 %v3701
        %6727 = vmatprep.subr.mxu0 %v3694
        %6728 = vmatpush1.msra.mxu0 %v3693
        %6729 = vmatprep.subr.mxu0 %v3686
        %6730 = vmatpush1.msra.mxu0 %v3685
        %6731 = vmatprep.subr.mxu0 %v3678
        %6732 = vmatpush1.msra.mxu0 %v3677
        %6733 = vmatprep.subr.mxu0 %v3670
        %6734 = vmatpush1.msra.mxu0 %v3669
        %6735 = vmatprep.subr.mxu0 %v3662
        %6736 = vmatpush1.msra.mxu0 %v3661
        %6737 = vmatprep.subr.mxu0 %v3654
        %6738 = vmatpush1.msra.mxu0 %v3653
        %6739 = vmatprep.subr.mxu0 %v3646
        %6740 = vmatpush1.msra.mxu0 %v3645
        %6741 = vmatprep.subr.mxu0 %v3638
        %6742 = vmatpush1.msra.mxu0 %v3637
        %6743 = vmatprep.subr.mxu0 %v3630
        %6744 = vmatpush1.msra.mxu0 %v3629
        %6745 = vmatprep.subr.mxu0 %v3878
        %6746 = vmatpush2.msra.mxu0 %v3877
        %6747 = vmatprep.subr.mxu0 %v3870
        %6748 = vmatpush2.msra.mxu0 %v3869
        %6749 = vmatprep.subr.mxu0 %v3862
        %6750 = vmatpush2.msra.mxu0 %v3861
        %6751 = vmatprep.subr.mxu0 %v3854
        %6752 = vmatpush2.msra.mxu0 %v3853
        %6753 = vmatprep.subr.mxu0 %v3846
        %6754 = vmatpush2.msra.mxu0 %v3845
        %6755 = vmatprep.subr.mxu0 %v3838
        %6756 = vmatpush2.msra.mxu0 %v3837
        %6757 = vmatprep.subr.mxu0 %v3830
        %6758 = vmatpush2.msra.mxu0 %v3829
        %6759 = vmatprep.subr.mxu0 %v3822
        %6760 = vmatpush2.msra.mxu0 %v3821
        %6761 = vmatprep.subr.mxu0 %v3814
        %6762 = vmatpush2.msra.mxu0 %v3813
        %6763 = vmatprep.subr.mxu0 %v3806
        %6764 = vmatpush2.msra.mxu0 %v3805
        %6765 = vmatprep.subr.mxu0 %v3798
        %6766 = vmatpush2.msra.mxu0 %v3797
        %6767 = vmatprep.subr.mxu0 %v3790
        %6768 = vmatpush2.msra.mxu0 %v3789
        %6769 = vmatprep.subr.mxu0 %v3782
        %6770 = vmatpush2.msra.mxu0 %v3781
        %6771 = vmatprep.subr.mxu0 %v3774
        %6772 = vmatpush2.msra.mxu0 %v3773
        %6773 = vmatprep.subr.mxu0 %v3766
        %6774 = vmatpush2.msra.mxu0 %v3765
        %6775 = vmatprep.subr.mxu0 %v3758
        %6776 = vmatpush2.msra.mxu0 %v3757
        %6777 = vmatprep.mubr.f32.mxu0 %v4184
        %6778 = vmatmul.mubr.f32.gmra.mxu0 %v4183
        %v6779 = vpop.f32.mrf.mxu0
        %v6780 = vadd.f32 %v6625, %v6779
        %v6781 = vpop.f32.mrf.mxu0
        %v6782 = vadd.f32 %v6627, %v6781
        %6783 = vmatprep.mubr.f32.mxu0 %v4195
        %6784 = vmatmul.mubr.f32.gmra.mxu0 %v4194
        %v6785 = vpop.f32.mrf.mxu0
        %v6786 = vadd.f32 %v6631, %v6785
        %v6787 = vpop.f32.mrf.mxu0
        %v6788 = vadd.f32 %v6633, %v6787
        %6789 = vmatprep.mubr.f32.mxu0 %v4206
        %6790 = vmatmul.mubr.f32.gmra.mxu0 %v4205
        %v6791 = vpop.f32.mrf.mxu0
        %v6792 = vadd.f32 %v6637, %v6791
        %v6793 = vpop.f32.mrf.mxu0
        %v6794 = vadd.f32 %v6639, %v6793
        %6795 = vmatprep.mubr.f32.mxu0 %v4217
        %6796 = vmatmul.mubr.f32.gmra.mxu0 %v4216
        %v6797 = vpop.f32.mrf.mxu0
        %v6798 = vadd.f32 %v6643, %v6797
        %v6799 = vpop.f32.mrf.mxu0
        %v6800 = vadd.f32 %v6645, %v6799
        %6801 = vmatprep.mubr.f32.mxu0 %v4228
        %6802 = vmatmul.mubr.f32.gmra.mxu0 %v4227
        %v6803 = vpop.f32.mrf.mxu0
        %v6804 = vadd.f32 %v6649, %v6803
        %v6805 = vpop.f32.mrf.mxu0
        %v6806 = vadd.f32 %v6651, %v6805
        %6807 = vmatprep.mubr.f32.mxu0 %v4239
        %6808 = vmatmul.mubr.f32.gmra.mxu0 %v4238
        %v6809 = vpop.f32.mrf.mxu0
        %v6810 = vadd.f32 %v6655, %v6809
        %v6811 = vpop.f32.mrf.mxu0
        %v6812 = vadd.f32 %v6657, %v6811
        %6813 = vmatprep.mubr.f32.mxu0 %v4250
        %6814 = vmatmul.mubr.f32.gmra.mxu0 %v4249
        %v6815 = vpop.f32.mrf.mxu0
        %v6816 = vadd.f32 %v6661, %v6815
        %v6817 = vpop.f32.mrf.mxu0
        %v6818 = vadd.f32 %v6663, %v6817
        %6819 = vmatprep.mubr.f32.mxu0 %v4261
        %6820 = vmatmul.mubr.f32.gmra.mxu0 %v4260
        %v6821 = vpop.f32.mrf.mxu0
        %v6822 = vadd.f32 %v6667, %v6821
        %v6823 = vpop.f32.mrf.mxu0
        %v6824 = vadd.f32 %v6669, %v6823
        %6825 = vmatprep.mubr.f32.mxu0 %v4272
        %6826 = vmatmul.mubr.f32.gmra.mxu0 %v4271
        %v6827 = vpop.f32.mrf.mxu0
        %v6828 = vadd.f32 %v6673, %v6827
        %v6829 = vpop.f32.mrf.mxu0
        %v6830 = vadd.f32 %v6675, %v6829
        %6831 = vmatprep.mubr.f32.mxu0 %v4283
        %6832 = vmatmul.mubr.f32.gmra.mxu0 %v4282
        %v6833 = vpop.f32.mrf.mxu0
        %v6834 = vadd.f32 %v6679, %v6833
        %v6835 = vpop.f32.mrf.mxu0
        %v6836 = vadd.f32 %v6681, %v6835
        %6837 = vmatprep.mubr.f32.mxu0 %v4294
        %6838 = vmatmul.mubr.f32.gmra.mxu0 %v4293
        %v6839 = vpop.f32.mrf.mxu0
        %v6840 = vadd.f32 %v6685, %v6839
        %v6841 = vpop.f32.mrf.mxu0
        %v6842 = vadd.f32 %v6687, %v6841
        %6843 = vmatprep.mubr.f32.mxu0 %v4305
        %6844 = vmatmul.mubr.f32.gmra.mxu0 %v4304
        %v6845 = vpop.f32.mrf.mxu0
        %v6846 = vadd.f32 %v6691, %v6845
        %v6847 = vpop.f32.mrf.mxu0
        %v6848 = vadd.f32 %v6693, %v6847
        %6849 = vmatprep.mubr.f32.mxu0 %v4316
        %6850 = vmatmul.mubr.f32.gmra.mxu0 %v4315
        %v6851 = vpop.f32.mrf.mxu0
        %v6852 = vadd.f32 %v6697, %v6851
        %v6853 = vpop.f32.mrf.mxu0
        %v6854 = vadd.f32 %v6699, %v6853
        %6855 = vmatprep.mubr.f32.mxu0 %v4327
        %6856 = vmatmul.mubr.f32.gmra.mxu0 %v4326
        %v6857 = vpop.f32.mrf.mxu0
        %v6858 = vadd.f32 %v6703, %v6857
        %v6859 = vpop.f32.mrf.mxu0
        %v6860 = vadd.f32 %v6705, %v6859
        %6861 = vmatprep.mubr.f32.mxu0 %v4338
        %6862 = vmatmul.mubr.f32.gmra.mxu0 %v4337
        %v6863 = vpop.f32.mrf.mxu0
        %v6864 = vadd.f32 %v6709, %v6863
        %v6865 = vpop.f32.mrf.mxu0
        %v6866 = vadd.f32 %v6711, %v6865
        %6867 = vdwg.mxu0
        %6868 = vmatprep.subr.mxu0 %v4006
        %6869 = vmatpush1.msra.mxu0 %v4005
        %6870 = vmatprep.subr.mxu0 %v3998
        %6871 = vmatpush1.msra.mxu0 %v3997
        %6872 = vmatprep.subr.mxu0 %v3990
        %6873 = vmatpush1.msra.mxu0 %v3989
        %6874 = vmatprep.subr.mxu0 %v3982
        %6875 = vmatpush1.msra.mxu0 %v3981
        %6876 = vmatprep.subr.mxu0 %v3974
        %6877 = vmatpush1.msra.mxu0 %v3973
        %6878 = vmatprep.subr.mxu0 %v3966
        %6879 = vmatpush1.msra.mxu0 %v3965
        %6880 = vmatprep.subr.mxu0 %v3958
        %6881 = vmatpush1.msra.mxu0 %v3957
        %6882 = vmatprep.subr.mxu0 %v3950
        %6883 = vmatpush1.msra.mxu0 %v3949
        %6884 = vmatprep.subr.mxu0 %v3942
        %6885 = vmatpush1.msra.mxu0 %v3941
        %6886 = vmatprep.subr.mxu0 %v3934
        %6887 = vmatpush1.msra.mxu0 %v3933
        %6888 = vmatprep.subr.mxu0 %v3926
        %6889 = vmatpush1.msra.mxu0 %v3925
        %6890 = vmatprep.subr.mxu0 %v3918
        %6891 = vmatpush1.msra.mxu0 %v3917
        %6892 = vmatprep.subr.mxu0 %v3910
        %6893 = vmatpush1.msra.mxu0 %v3909
        %6894 = vmatprep.subr.mxu0 %v3902
        %6895 = vmatpush1.msra.mxu0 %v3901
        %6896 = vmatprep.subr.mxu0 %v3894
        %6897 = vmatpush1.msra.mxu0 %v3893
        %6898 = vmatprep.subr.mxu0 %v3886
        %6899 = vmatpush1.msra.mxu0 %v3885
        %6900 = vmatprep.subr.mxu0 %v4134
        %6901 = vmatpush2.msra.mxu0 %v4133
        %6902 = vmatprep.subr.mxu0 %v4126
        %6903 = vmatpush2.msra.mxu0 %v4125
        %6904 = vmatprep.subr.mxu0 %v4118
        %6905 = vmatpush2.msra.mxu0 %v4117
        %6906 = vmatprep.subr.mxu0 %v4110
        %6907 = vmatpush2.msra.mxu0 %v4109
        %6908 = vmatprep.subr.mxu0 %v4102
        %6909 = vmatpush2.msra.mxu0 %v4101
        %6910 = vmatprep.subr.mxu0 %v4094
        %6911 = vmatpush2.msra.mxu0 %v4093
        %6912 = vmatprep.subr.mxu0 %v4086
        %6913 = vmatpush2.msra.mxu0 %v4085
        %6914 = vmatprep.subr.mxu0 %v4078
        %6915 = vmatpush2.msra.mxu0 %v4077
        %6916 = vmatprep.subr.mxu0 %v4070
        %6917 = vmatpush2.msra.mxu0 %v4069
        %6918 = vmatprep.subr.mxu0 %v4062
        %6919 = vmatpush2.msra.mxu0 %v4061
        %6920 = vmatprep.subr.mxu0 %v4054
        %6921 = vmatpush2.msra.mxu0 %v4053
        %6922 = vmatprep.subr.mxu0 %v4046
        %6923 = vmatpush2.msra.mxu0 %v4045
        %6924 = vmatprep.subr.mxu0 %v4038
        %6925 = vmatpush2.msra.mxu0 %v4037
        %6926 = vmatprep.subr.mxu0 %v4030
        %6927 = vmatpush2.msra.mxu0 %v4029
        %6928 = vmatprep.subr.mxu0 %v4022
        %6929 = vmatpush2.msra.mxu0 %v4021
        %6930 = vmatprep.subr.mxu0 %v4014
        %6931 = vmatpush2.msra.mxu0 %v4013
        %6932 = vmatprep.mubr.f32.mxu0 %v4186
        %6933 = vmatmul.mubr.f32.gmra.mxu0 %v4185
        %v6934 = vpop.f32.mrf.mxu0
        %v6935 = vadd.f32 %v6780, %v6934
        %v6936 = vpop.f32.mrf.mxu0
        %v6937 = vadd.f32 %v6782, %v6936
        %6938 = vmatprep.mubr.f32.mxu0 %v4197
        %6939 = vmatmul.mubr.f32.gmra.mxu0 %v4196
        %v6940 = vpop.f32.mrf.mxu0
        %v6941 = vadd.f32 %v6786, %v6940
        %v6942 = vpop.f32.mrf.mxu0
        %v6943 = vadd.f32 %v6788, %v6942
        %6944 = vmatprep.mubr.f32.mxu0 %v4208
        %6945 = vmatmul.mubr.f32.gmra.mxu0 %v4207
        %v6946 = vpop.f32.mrf.mxu0
        %v6947 = vadd.f32 %v6792, %v6946
        %v6948 = vpop.f32.mrf.mxu0
        %v6949 = vadd.f32 %v6794, %v6948
        %6950 = vmatprep.mubr.f32.mxu0 %v4219
        %6951 = vmatmul.mubr.f32.gmra.mxu0 %v4218
        %v6952 = vpop.f32.mrf.mxu0
        %v6953 = vadd.f32 %v6798, %v6952
        %v6954 = vpop.f32.mrf.mxu0
        %v6955 = vadd.f32 %v6800, %v6954
        %6956 = vmatprep.mubr.f32.mxu0 %v4230
        %6957 = vmatmul.mubr.f32.gmra.mxu0 %v4229
        %v6958 = vpop.f32.mrf.mxu0
        %v6959 = vadd.f32 %v6804, %v6958
        %v6960 = vpop.f32.mrf.mxu0
        %v6961 = vadd.f32 %v6806, %v6960
        %6962 = vmatprep.mubr.f32.mxu0 %v4241
        %6963 = vmatmul.mubr.f32.gmra.mxu0 %v4240
        %v6964 = vpop.f32.mrf.mxu0
        %v6965 = vadd.f32 %v6810, %v6964
        %v6966 = vpop.f32.mrf.mxu0
        %v6967 = vadd.f32 %v6812, %v6966
        %6968 = vmatprep.mubr.f32.mxu0 %v4252
        %6969 = vmatmul.mubr.f32.gmra.mxu0 %v4251
        %v6970 = vpop.f32.mrf.mxu0
        %v6971 = vadd.f32 %v6816, %v6970
        %v6972 = vpop.f32.mrf.mxu0
        %v6973 = vadd.f32 %v6818, %v6972
        %6974 = vmatprep.mubr.f32.mxu0 %v4263
        %6975 = vmatmul.mubr.f32.gmra.mxu0 %v4262
        %v6976 = vpop.f32.mrf.mxu0
        %v6977 = vadd.f32 %v6822, %v6976
        %v6978 = vpop.f32.mrf.mxu0
        %v6979 = vadd.f32 %v6824, %v6978
        %6980 = vmatprep.mubr.f32.mxu0 %v4274
        %6981 = vmatmul.mubr.f32.gmra.mxu0 %v4273
        %v6982 = vpop.f32.mrf.mxu0
        %v6983 = vadd.f32 %v6828, %v6982
        %v6984 = vpop.f32.mrf.mxu0
        %v6985 = vadd.f32 %v6830, %v6984
        %6986 = vmatprep.mubr.f32.mxu0 %v4285
        %6987 = vmatmul.mubr.f32.gmra.mxu0 %v4284
        %v6988 = vpop.f32.mrf.mxu0
        %v6989 = vadd.f32 %v6834, %v6988
        %v6990 = vpop.f32.mrf.mxu0
        %v6991 = vadd.f32 %v6836, %v6990
        %6992 = vmatprep.mubr.f32.mxu0 %v4296
        %6993 = vmatmul.mubr.f32.gmra.mxu0 %v4295
        %v6994 = vpop.f32.mrf.mxu0
        %v6995 = vadd.f32 %v6840, %v6994
        %v6996 = vpop.f32.mrf.mxu0
        %v6997 = vadd.f32 %v6842, %v6996
        %6998 = vmatprep.mubr.f32.mxu0 %v4307
        %6999 = vmatmul.mubr.f32.gmra.mxu0 %v4306
        %v7000 = vpop.f32.mrf.mxu0
        %v7001 = vadd.f32 %v6846, %v7000
        %v7002 = vpop.f32.mrf.mxu0
        %v7003 = vadd.f32 %v6848, %v7002
        %7004 = vmatprep.mubr.f32.mxu0 %v4318
        %7005 = vmatmul.mubr.f32.gmra.mxu0 %v4317
        %v7006 = vpop.f32.mrf.mxu0
        %v7007 = vadd.f32 %v6852, %v7006
        %v7008 = vpop.f32.mrf.mxu0
        %v7009 = vadd.f32 %v6854, %v7008
        %7010 = vmatprep.mubr.f32.mxu0 %v4329
        %7011 = vmatmul.mubr.f32.gmra.mxu0 %v4328
        %v7012 = vpop.f32.mrf.mxu0
        %v7013 = vadd.f32 %v6858, %v7012
        %v7014 = vpop.f32.mrf.mxu0
        %v7015 = vadd.f32 %v6860, %v7014
        %7016 = vmatprep.mubr.f32.mxu0 %v4340
        %7017 = vmatmul.mubr.f32.gmra.mxu0 %v4339
        %v7018 = vpop.f32.mrf.mxu0
        %v7019 = vadd.f32 %v6864, %v7018
        %v7020 = vpop.f32.mrf.mxu0
        %v7021 = vadd.f32 %v6866, %v7020
        %7022 = vdwg.mxu0
        %7023 = vmatprep.subr.mxu0 0.0
        %7024 = vmatpush1.msra.mxu0 0.0
        %7025 = vmatprep.subr.mxu0 0.0
        %7026 = vmatpush1.msra.mxu0 0.0
        %7027 = vmatprep.subr.mxu0 0.0
        %7028 = vmatpush1.msra.mxu0 0.0
        %7029 = vmatprep.subr.mxu0 0.0
        %7030 = vmatpush1.msra.mxu0 0.0
        %7031 = vmatprep.subr.mxu0 0.0
        %7032 = vmatpush1.msra.mxu0 0.0
        %7033 = vmatprep.subr.mxu0 0.0
        %7034 = vmatpush1.msra.mxu0 0.0
        %7035 = vmatprep.subr.mxu0 0.0
        %7036 = vmatpush1.msra.mxu0 0.0
        %7037 = vmatprep.subr.mxu0 0.0
        %7038 = vmatpush1.msra.mxu0 0.0
        %7039 = vmatprep.subr.mxu0 0.0
        %7040 = vmatpush1.msra.mxu0 0.0
        %7041 = vmatprep.subr.mxu0 0.0
        %7042 = vmatpush1.msra.mxu0 0.0
        %7043 = vmatprep.subr.mxu0 0.0
        %7044 = vmatpush1.msra.mxu0 0.0
        %7045 = vmatprep.subr.mxu0 %v4174
        %7046 = vmatpush1.msra.mxu0 %v4173
        %7047 = vmatprep.subr.mxu0 %v4166
        %7048 = vmatpush1.msra.mxu0 %v4165
        %7049 = vmatprep.subr.mxu0 %v4158
        %7050 = vmatpush1.msra.mxu0 %v4157
        %7051 = vmatprep.subr.mxu0 %v4150
        %7052 = vmatpush1.msra.mxu0 %v4149
        %7053 = vmatprep.subr.mxu0 %v4142
        %7054 = vmatpush1.msra.mxu0 %v4141
        %7055 = vmatprep.subr.mxu0 0.0
        %7056 = vmatpush2.msra.mxu0 0.0
        %7057 = vmatprep.subr.mxu0 0.0
        %7058 = vmatpush2.msra.mxu0 0.0
        %7059 = vmatprep.subr.mxu0 0.0
        %7060 = vmatpush2.msra.mxu0 0.0
        %7061 = vmatprep.subr.mxu0 0.0
        %7062 = vmatpush2.msra.mxu0 0.0
        %7063 = vmatprep.subr.mxu0 0.0
        %7064 = vmatpush2.msra.mxu0 0.0
        %7065 = vmatprep.subr.mxu0 0.0
        %7066 = vmatpush2.msra.mxu0 0.0
        %7067 = vmatprep.subr.mxu0 0.0
        %7068 = vmatpush2.msra.mxu0 0.0
        %7069 = vmatprep.subr.mxu0 0.0
        %7070 = vmatpush2.msra.mxu0 0.0
        %7071 = vmatprep.subr.mxu0 0.0
        %7072 = vmatpush2.msra.mxu0 0.0
        %7073 = vmatprep.subr.mxu0 0.0
        %7074 = vmatpush2.msra.mxu0 0.0
        %7075 = vmatprep.subr.mxu0 0.0
        %7076 = vmatpush2.msra.mxu0 0.0
        %7077 = vmatprep.subr.mxu0 0.0
        %7078 = vmatpush2.msra.mxu0 0.0
        %7079 = vmatprep.subr.mxu0 0.0
        %7080 = vmatpush2.msra.mxu0 0.0
        %7081 = vmatprep.subr.mxu0 0.0
        %7082 = vmatpush2.msra.mxu0 0.0
        %7083 = vmatprep.subr.mxu0 0.0
        %7084 = vmatpush2.msra.mxu0 0.0
        %7085 = vmatprep.subr.mxu0 0.0
        %7086 = vmatpush2.msra.mxu0 0.0
        %7087 = vmatprep.mubr.f32.mxu0 0.0
        %7088 = vmatmul.mubr.f32.gmra.mxu0 %v4344
        %v7089 = vpop.f32.mrf.mxu0
        %v7090 = vadd.f32 %v6935, %v7089
        %v7091 = vpop.f32.mrf.mxu0
        %v7092 = vadd.f32 %v6937, %v7091
        %7093 = vmatprep.mubr.f32.mxu0 0.0
        %7094 = vmatmul.mubr.f32.gmra.mxu0 %v4347
        %v7095 = vpop.f32.mrf.mxu0
        %v7096 = vadd.f32 %v6941, %v7095
        %v7097 = vpop.f32.mrf.mxu0
        %v7098 = vadd.f32 %v6943, %v7097
        %7099 = vmatprep.mubr.f32.mxu0 0.0
        %7100 = vmatmul.mubr.f32.gmra.mxu0 %v4350
        %v7101 = vpop.f32.mrf.mxu0
        %v7102 = vadd.f32 %v6947, %v7101
        %v7103 = vpop.f32.mrf.mxu0
        %v7104 = vadd.f32 %v6949, %v7103
        %7105 = vmatprep.mubr.f32.mxu0 0.0
        %7106 = vmatmul.mubr.f32.gmra.mxu0 %v4353
        %v7107 = vpop.f32.mrf.mxu0
        %v7108 = vadd.f32 %v6953, %v7107
        %v7109 = vpop.f32.mrf.mxu0
        %v7110 = vadd.f32 %v6955, %v7109
        %7111 = vmatprep.mubr.f32.mxu0 0.0
        %7112 = vmatmul.mubr.f32.gmra.mxu0 %v4356
        %v7113 = vpop.f32.mrf.mxu0
        %v7114 = vadd.f32 %v6959, %v7113
        %v7115 = vpop.f32.mrf.mxu0
        %v7116 = vadd.f32 %v6961, %v7115
        %7117 = vmatprep.mubr.f32.mxu0 0.0
        %7118 = vmatmul.mubr.f32.gmra.mxu0 %v4359
        %v7119 = vpop.f32.mrf.mxu0
        %v7120 = vadd.f32 %v6965, %v7119
        %v7121 = vpop.f32.mrf.mxu0
        %v7122 = vadd.f32 %v6967, %v7121
        %7123 = vmatprep.mubr.f32.mxu0 0.0
        %7124 = vmatmul.mubr.f32.gmra.mxu0 %v4362
        %v7125 = vpop.f32.mrf.mxu0
        %v7126 = vadd.f32 %v6971, %v7125
        %v7127 = vpop.f32.mrf.mxu0
        %v7128 = vadd.f32 %v6973, %v7127
        %7129 = vmatprep.mubr.f32.mxu0 0.0
        %7130 = vmatmul.mubr.f32.gmra.mxu0 %v4365
        %v7131 = vpop.f32.mrf.mxu0
        %v7132 = vadd.f32 %v6977, %v7131
        %v7133 = vpop.f32.mrf.mxu0
        %v7134 = vadd.f32 %v6979, %v7133
        %7135 = vmatprep.mubr.f32.mxu0 0.0
        %7136 = vmatmul.mubr.f32.gmra.mxu0 %v4368
        %v7137 = vpop.f32.mrf.mxu0
        %v7138 = vadd.f32 %v6983, %v7137
        %v7139 = vpop.f32.mrf.mxu0
        %v7140 = vadd.f32 %v6985, %v7139
        %7141 = vmatprep.mubr.f32.mxu0 0.0
        %7142 = vmatmul.mubr.f32.gmra.mxu0 %v4371
        %v7143 = vpop.f32.mrf.mxu0
        %v7144 = vadd.f32 %v6989, %v7143
        %v7145 = vpop.f32.mrf.mxu0
        %v7146 = vadd.f32 %v6991, %v7145
        %7147 = vmatprep.mubr.f32.mxu0 0.0
        %7148 = vmatmul.mubr.f32.gmra.mxu0 %v4374
        %v7149 = vpop.f32.mrf.mxu0
        %v7150 = vadd.f32 %v6995, %v7149
        %v7151 = vpop.f32.mrf.mxu0
        %v7152 = vadd.f32 %v6997, %v7151
        %7153 = vmatprep.mubr.f32.mxu0 0.0
        %7154 = vmatmul.mubr.f32.gmra.mxu0 %v4377
        %v7155 = vpop.f32.mrf.mxu0
        %v7156 = vadd.f32 %v7001, %v7155
        %v7157 = vpop.f32.mrf.mxu0
        %v7158 = vadd.f32 %v7003, %v7157
        %7159 = vmatprep.mubr.f32.mxu0 0.0
        %7160 = vmatmul.mubr.f32.gmra.mxu0 %v4380
        %v7161 = vpop.f32.mrf.mxu0
        %v7162 = vadd.f32 %v7007, %v7161
        %v7163 = vpop.f32.mrf.mxu0
        %v7164 = vadd.f32 %v7009, %v7163
        %7165 = vmatprep.mubr.f32.mxu0 0.0
        %7166 = vmatmul.mubr.f32.gmra.mxu0 %v4383
        %v7167 = vpop.f32.mrf.mxu0
        %v7168 = vadd.f32 %v7013, %v7167
        %v7169 = vpop.f32.mrf.mxu0
        %v7170 = vadd.f32 %v7015, %v7169
        %7171 = vmatprep.mubr.f32.mxu0 0.0
        %7172 = vmatmul.mubr.f32.gmra.mxu0 %v4386
        %v7173 = vpop.f32.mrf.mxu0
        %v7174 = vadd.f32 %v7019, %v7173
        %v7175 = vpop.f32.mrf.mxu0
        %v7176 = vadd.f32 %v7021, %v7175
        %7177 = vdwg.mxu0
        %7178 = vmatprep.subr.mxu0 %v2984
        %7179 = vmatpush1.msra.mxu0 %v2983
        %7180 = vmatprep.subr.mxu0 %v2976
        %7181 = vmatpush1.msra.mxu0 %v2975
        %7182 = vmatprep.subr.mxu0 %v2968
        %7183 = vmatpush1.msra.mxu0 %v2967
        %7184 = vmatprep.subr.mxu0 %v2960
        %7185 = vmatpush1.msra.mxu0 %v2959
        %7186 = vmatprep.subr.mxu0 %v2952
        %7187 = vmatpush1.msra.mxu0 %v2951
        %7188 = vmatprep.subr.mxu0 %v2944
        %7189 = vmatpush1.msra.mxu0 %v2943
        %7190 = vmatprep.subr.mxu0 %v2936
        %7191 = vmatpush1.msra.mxu0 %v2935
        %7192 = vmatprep.subr.mxu0 %v2928
        %7193 = vmatpush1.msra.mxu0 %v2927
        %7194 = vmatprep.subr.mxu0 %v2920
        %7195 = vmatpush1.msra.mxu0 %v2919
        %7196 = vmatprep.subr.mxu0 %v2912
        %7197 = vmatpush1.msra.mxu0 %v2911
        %7198 = vmatprep.subr.mxu0 %v2904
        %7199 = vmatpush1.msra.mxu0 %v2903
        %7200 = vmatprep.subr.mxu0 %v2896
        %7201 = vmatpush1.msra.mxu0 %v2895
        %7202 = vmatprep.subr.mxu0 %v2888
        %7203 = vmatpush1.msra.mxu0 %v2887
        %7204 = vmatprep.subr.mxu0 %v2880
        %7205 = vmatpush1.msra.mxu0 %v2879
        %7206 = vmatprep.subr.mxu0 %v2872
        %7207 = vmatpush1.msra.mxu0 %v2871
        %7208 = vmatprep.subr.mxu0 %v2864
        %7209 = vmatpush1.msra.mxu0 %v2863
        %7210 = vmatprep.subr.mxu0 %v3112
        %7211 = vmatpush2.msra.mxu0 %v3111
        %7212 = vmatprep.subr.mxu0 %v3104
        %7213 = vmatpush2.msra.mxu0 %v3103
        %7214 = vmatprep.subr.mxu0 %v3096
        %7215 = vmatpush2.msra.mxu0 %v3095
        %7216 = vmatprep.subr.mxu0 %v3088
        %7217 = vmatpush2.msra.mxu0 %v3087
        %7218 = vmatprep.subr.mxu0 %v3080
        %7219 = vmatpush2.msra.mxu0 %v3079
        %7220 = vmatprep.subr.mxu0 %v3072
        %7221 = vmatpush2.msra.mxu0 %v3071
        %7222 = vmatprep.subr.mxu0 %v3064
        %7223 = vmatpush2.msra.mxu0 %v3063
        %7224 = vmatprep.subr.mxu0 %v3056
        %7225 = vmatpush2.msra.mxu0 %v3055
        %7226 = vmatprep.subr.mxu0 %v3048
        %7227 = vmatpush2.msra.mxu0 %v3047
        %7228 = vmatprep.subr.mxu0 %v3040
        %7229 = vmatpush2.msra.mxu0 %v3039
        %7230 = vmatprep.subr.mxu0 %v3032
        %7231 = vmatpush2.msra.mxu0 %v3031
        %7232 = vmatprep.subr.mxu0 %v3024
        %7233 = vmatpush2.msra.mxu0 %v3023
        %7234 = vmatprep.subr.mxu0 %v3016
        %7235 = vmatpush2.msra.mxu0 %v3015
        %7236 = vmatprep.subr.mxu0 %v3008
        %7237 = vmatpush2.msra.mxu0 %v3007
        %7238 = vmatprep.subr.mxu0 %v3000
        %7239 = vmatpush2.msra.mxu0 %v2999
        %7240 = vmatprep.subr.mxu0 %v2992
        %7241 = vmatpush2.msra.mxu0 %v2991
        %7242 = vmatprep.mubr.f32.mxu0 %v4178
        %7243 = vmatmul.mubr.f32.gmra.mxu0 %v4177
        %v7244 = vpop.f32.mrf.mxu0
        %v7245 = vadd.f32 0.0, %v7244
        %v7246 = vpop.f32.mrf.mxu0
        %v7247 = vadd.f32 0.0, %v7246
        %7248 = vmatprep.mubr.f32.mxu0 %v4189
        %7249 = vmatmul.mubr.f32.gmra.mxu0 %v4188
        %v7250 = vpop.f32.mrf.mxu0
        %v7251 = vadd.f32 0.0, %v7250
        %v7252 = vpop.f32.mrf.mxu0
        %v7253 = vadd.f32 0.0, %v7252
        %7254 = vmatprep.mubr.f32.mxu0 %v4200
        %7255 = vmatmul.mubr.f32.gmra.mxu0 %v4199
        %v7256 = vpop.f32.mrf.mxu0
        %v7257 = vadd.f32 0.0, %v7256
        %v7258 = vpop.f32.mrf.mxu0
        %v7259 = vadd.f32 0.0, %v7258
        %7260 = vmatprep.mubr.f32.mxu0 %v4211
        %7261 = vmatmul.mubr.f32.gmra.mxu0 %v4210
        %v7262 = vpop.f32.mrf.mxu0
        %v7263 = vadd.f32 0.0, %v7262
        %v7264 = vpop.f32.mrf.mxu0
        %v7265 = vadd.f32 0.0, %v7264
        %7266 = vmatprep.mubr.f32.mxu0 %v4222
        %7267 = vmatmul.mubr.f32.gmra.mxu0 %v4221
        %v7268 = vpop.f32.mrf.mxu0
        %v7269 = vadd.f32 0.0, %v7268
        %v7270 = vpop.f32.mrf.mxu0
        %v7271 = vadd.f32 0.0, %v7270
        %7272 = vmatprep.mubr.f32.mxu0 %v4233
        %7273 = vmatmul.mubr.f32.gmra.mxu0 %v4232
        %v7274 = vpop.f32.mrf.mxu0
        %v7275 = vadd.f32 0.0, %v7274
        %v7276 = vpop.f32.mrf.mxu0
        %v7277 = vadd.f32 0.0, %v7276
        %7278 = vmatprep.mubr.f32.mxu0 %v4244
        %7279 = vmatmul.mubr.f32.gmra.mxu0 %v4243
        %v7280 = vpop.f32.mrf.mxu0
        %v7281 = vadd.f32 0.0, %v7280
        %v7282 = vpop.f32.mrf.mxu0
        %v7283 = vadd.f32 0.0, %v7282
        %7284 = vmatprep.mubr.f32.mxu0 %v4255
        %7285 = vmatmul.mubr.f32.gmra.mxu0 %v4254
        %v7286 = vpop.f32.mrf.mxu0
        %v7287 = vadd.f32 0.0, %v7286
        %v7288 = vpop.f32.mrf.mxu0
        %v7289 = vadd.f32 0.0, %v7288
        %7290 = vmatprep.mubr.f32.mxu0 %v4266
        %7291 = vmatmul.mubr.f32.gmra.mxu0 %v4265
        %v7292 = vpop.f32.mrf.mxu0
        %v7293 = vadd.f32 0.0, %v7292
        %v7294 = vpop.f32.mrf.mxu0
        %v7295 = vadd.f32 0.0, %v7294
        %7296 = vmatprep.mubr.f32.mxu0 %v4277
        %7297 = vmatmul.mubr.f32.gmra.mxu0 %v4276
        %v7298 = vpop.f32.mrf.mxu0
        %v7299 = vadd.f32 0.0, %v7298
        %v7300 = vpop.f32.mrf.mxu0
        %v7301 = vadd.f32 0.0, %v7300
        %7302 = vmatprep.mubr.f32.mxu0 %v4288
        %7303 = vmatmul.mubr.f32.gmra.mxu0 %v4287
        %v7304 = vpop.f32.mrf.mxu0
        %v7305 = vadd.f32 0.0, %v7304
        %v7306 = vpop.f32.mrf.mxu0
        %v7307 = vadd.f32 0.0, %v7306
        %7308 = vmatprep.mubr.f32.mxu0 %v4299
        %7309 = vmatmul.mubr.f32.gmra.mxu0 %v4298
        %v7310 = vpop.f32.mrf.mxu0
        %v7311 = vadd.f32 0.0, %v7310
        %v7312 = vpop.f32.mrf.mxu0
        %v7313 = vadd.f32 0.0, %v7312
        %7314 = vmatprep.mubr.f32.mxu0 %v4310
        %7315 = vmatmul.mubr.f32.gmra.mxu0 %v4309
        %v7316 = vpop.f32.mrf.mxu0
        %v7317 = vadd.f32 0.0, %v7316
        %v7318 = vpop.f32.mrf.mxu0
        %v7319 = vadd.f32 0.0, %v7318
        %7320 = vmatprep.mubr.f32.mxu0 %v4321
        %7321 = vmatmul.mubr.f32.gmra.mxu0 %v4320
        %v7322 = vpop.f32.mrf.mxu0
        %v7323 = vadd.f32 0.0, %v7322
        %v7324 = vpop.f32.mrf.mxu0
        %v7325 = vadd.f32 0.0, %v7324
        %7326 = vmatprep.mubr.f32.mxu0 %v4332
        %7327 = vmatmul.mubr.f32.gmra.mxu0 %v4331
        %v7328 = vpop.f32.mrf.mxu0
        %v7329 = vadd.f32 0.0, %v7328
        %v7330 = vpop.f32.mrf.mxu0
        %v7331 = vadd.f32 0.0, %v7330
        %7332 = vdwg.mxu0
        %7333 = vmatprep.subr.mxu0 %v3240
        %7334 = vmatpush1.msra.mxu0 %v3239
        %7335 = vmatprep.subr.mxu0 %v3232
        %7336 = vmatpush1.msra.mxu0 %v3231
        %7337 = vmatprep.subr.mxu0 %v3224
        %7338 = vmatpush1.msra.mxu0 %v3223
        %7339 = vmatprep.subr.mxu0 %v3216
        %7340 = vmatpush1.msra.mxu0 %v3215
        %7341 = vmatprep.subr.mxu0 %v3208
        %7342 = vmatpush1.msra.mxu0 %v3207
        %7343 = vmatprep.subr.mxu0 %v3200
        %7344 = vmatpush1.msra.mxu0 %v3199
        %7345 = vmatprep.subr.mxu0 %v3192
        %7346 = vmatpush1.msra.mxu0 %v3191
        %7347 = vmatprep.subr.mxu0 %v3184
        %7348 = vmatpush1.msra.mxu0 %v3183
        %7349 = vmatprep.subr.mxu0 %v3176
        %7350 = vmatpush1.msra.mxu0 %v3175
        %7351 = vmatprep.subr.mxu0 %v3168
        %7352 = vmatpush1.msra.mxu0 %v3167
        %7353 = vmatprep.subr.mxu0 %v3160
        %7354 = vmatpush1.msra.mxu0 %v3159
        %7355 = vmatprep.subr.mxu0 %v3152
        %7356 = vmatpush1.msra.mxu0 %v3151
        %7357 = vmatprep.subr.mxu0 %v3144
        %7358 = vmatpush1.msra.mxu0 %v3143
        %7359 = vmatprep.subr.mxu0 %v3136
        %7360 = vmatpush1.msra.mxu0 %v3135
        %7361 = vmatprep.subr.mxu0 %v3128
        %7362 = vmatpush1.msra.mxu0 %v3127
        %7363 = vmatprep.subr.mxu0 %v3120
        %7364 = vmatpush1.msra.mxu0 %v3119
        %7365 = vmatprep.subr.mxu0 %v3368
        %7366 = vmatpush2.msra.mxu0 %v3367
        %7367 = vmatprep.subr.mxu0 %v3360
        %7368 = vmatpush2.msra.mxu0 %v3359
        %7369 = vmatprep.subr.mxu0 %v3352
        %7370 = vmatpush2.msra.mxu0 %v3351
        %7371 = vmatprep.subr.mxu0 %v3344
        %7372 = vmatpush2.msra.mxu0 %v3343
        %7373 = vmatprep.subr.mxu0 %v3336
        %7374 = vmatpush2.msra.mxu0 %v3335
        %7375 = vmatprep.subr.mxu0 %v3328
        %7376 = vmatpush2.msra.mxu0 %v3327
        %7377 = vmatprep.subr.mxu0 %v3320
        %7378 = vmatpush2.msra.mxu0 %v3319
        %7379 = vmatprep.subr.mxu0 %v3312
        %7380 = vmatpush2.msra.mxu0 %v3311
        %7381 = vmatprep.subr.mxu0 %v3304
        %7382 = vmatpush2.msra.mxu0 %v3303
        %7383 = vmatprep.subr.mxu0 %v3296
        %7384 = vmatpush2.msra.mxu0 %v3295
        %7385 = vmatprep.subr.mxu0 %v3288
        %7386 = vmatpush2.msra.mxu0 %v3287
        %7387 = vmatprep.subr.mxu0 %v3280
        %7388 = vmatpush2.msra.mxu0 %v3279
        %7389 = vmatprep.subr.mxu0 %v3272
        %7390 = vmatpush2.msra.mxu0 %v3271
        %7391 = vmatprep.subr.mxu0 %v3264
        %7392 = vmatpush2.msra.mxu0 %v3263
        %7393 = vmatprep.subr.mxu0 %v3256
        %7394 = vmatpush2.msra.mxu0 %v3255
        %7395 = vmatprep.subr.mxu0 %v3248
        %7396 = vmatpush2.msra.mxu0 %v3247
        %7397 = vmatprep.mubr.f32.mxu0 %v4180
        %7398 = vmatmul.mubr.f32.gmra.mxu0 %v4179
        %v7399 = vpop.f32.mrf.mxu0
        %v7400 = vadd.f32 %v7245, %v7399
        %v7401 = vpop.f32.mrf.mxu0
        %v7402 = vadd.f32 %v7247, %v7401
        %7403 = vmatprep.mubr.f32.mxu0 %v4191
        %7404 = vmatmul.mubr.f32.gmra.mxu0 %v4190
        %v7405 = vpop.f32.mrf.mxu0
        %v7406 = vadd.f32 %v7251, %v7405
        %v7407 = vpop.f32.mrf.mxu0
        %v7408 = vadd.f32 %v7253, %v7407
        %7409 = vmatprep.mubr.f32.mxu0 %v4202
        %7410 = vmatmul.mubr.f32.gmra.mxu0 %v4201
        %v7411 = vpop.f32.mrf.mxu0
        %v7412 = vadd.f32 %v7257, %v7411
        %v7413 = vpop.f32.mrf.mxu0
        %v7414 = vadd.f32 %v7259, %v7413
        %7415 = vmatprep.mubr.f32.mxu0 %v4213
        %7416 = vmatmul.mubr.f32.gmra.mxu0 %v4212
        %v7417 = vpop.f32.mrf.mxu0
        %v7418 = vadd.f32 %v7263, %v7417
        %v7419 = vpop.f32.mrf.mxu0
        %v7420 = vadd.f32 %v7265, %v7419
        %7421 = vmatprep.mubr.f32.mxu0 %v4224
        %7422 = vmatmul.mubr.f32.gmra.mxu0 %v4223
        %v7423 = vpop.f32.mrf.mxu0
        %v7424 = vadd.f32 %v7269, %v7423
        %v7425 = vpop.f32.mrf.mxu0
        %v7426 = vadd.f32 %v7271, %v7425
        %7427 = vmatprep.mubr.f32.mxu0 %v4235
        %7428 = vmatmul.mubr.f32.gmra.mxu0 %v4234
        %v7429 = vpop.f32.mrf.mxu0
        %v7430 = vadd.f32 %v7275, %v7429
        %v7431 = vpop.f32.mrf.mxu0
        %v7432 = vadd.f32 %v7277, %v7431
        %7433 = vmatprep.mubr.f32.mxu0 %v4246
        %7434 = vmatmul.mubr.f32.gmra.mxu0 %v4245
        %v7435 = vpop.f32.mrf.mxu0
        %v7436 = vadd.f32 %v7281, %v7435
        %v7437 = vpop.f32.mrf.mxu0
        %v7438 = vadd.f32 %v7283, %v7437
        %7439 = vmatprep.mubr.f32.mxu0 %v4257
        %7440 = vmatmul.mubr.f32.gmra.mxu0 %v4256
        %v7441 = vpop.f32.mrf.mxu0
        %v7442 = vadd.f32 %v7287, %v7441
        %v7443 = vpop.f32.mrf.mxu0
        %v7444 = vadd.f32 %v7289, %v7443
        %7445 = vmatprep.mubr.f32.mxu0 %v4268
        %7446 = vmatmul.mubr.f32.gmra.mxu0 %v4267
        %v7447 = vpop.f32.mrf.mxu0
        %v7448 = vadd.f32 %v7293, %v7447
        %v7449 = vpop.f32.mrf.mxu0
        %v7450 = vadd.f32 %v7295, %v7449
        %7451 = vmatprep.mubr.f32.mxu0 %v4279
        %7452 = vmatmul.mubr.f32.gmra.mxu0 %v4278
        %v7453 = vpop.f32.mrf.mxu0
        %v7454 = vadd.f32 %v7299, %v7453
        %v7455 = vpop.f32.mrf.mxu0
        %v7456 = vadd.f32 %v7301, %v7455
        %7457 = vmatprep.mubr.f32.mxu0 %v4290
        %7458 = vmatmul.mubr.f32.gmra.mxu0 %v4289
        %v7459 = vpop.f32.mrf.mxu0
        %v7460 = vadd.f32 %v7305, %v7459
        %v7461 = vpop.f32.mrf.mxu0
        %v7462 = vadd.f32 %v7307, %v7461
        %7463 = vmatprep.mubr.f32.mxu0 %v4301
        %7464 = vmatmul.mubr.f32.gmra.mxu0 %v4300
        %v7465 = vpop.f32.mrf.mxu0
        %v7466 = vadd.f32 %v7311, %v7465
        %v7467 = vpop.f32.mrf.mxu0
        %v7468 = vadd.f32 %v7313, %v7467
        %7469 = vmatprep.mubr.f32.mxu0 %v4312
        %7470 = vmatmul.mubr.f32.gmra.mxu0 %v4311
        %v7471 = vpop.f32.mrf.mxu0
        %v7472 = vadd.f32 %v7317, %v7471
        %v7473 = vpop.f32.mrf.mxu0
        %v7474 = vadd.f32 %v7319, %v7473
        %7475 = vmatprep.mubr.f32.mxu0 %v4323
        %7476 = vmatmul.mubr.f32.gmra.mxu0 %v4322
        %v7477 = vpop.f32.mrf.mxu0
        %v7478 = vadd.f32 %v7323, %v7477
        %v7479 = vpop.f32.mrf.mxu0
        %v7480 = vadd.f32 %v7325, %v7479
        %7481 = vmatprep.mubr.f32.mxu0 %v4334
        %7482 = vmatmul.mubr.f32.gmra.mxu0 %v4333
        %v7483 = vpop.f32.mrf.mxu0
        %v7484 = vadd.f32 %v7329, %v7483
        %v7485 = vpop.f32.mrf.mxu0
        %v7486 = vadd.f32 %v7331, %v7485
        %7487 = vdwg.mxu0
        %7488 = vmatprep.subr.mxu0 %v3496
        %7489 = vmatpush1.msra.mxu0 %v3495
        %7490 = vmatprep.subr.mxu0 %v3488
        %7491 = vmatpush1.msra.mxu0 %v3487
        %7492 = vmatprep.subr.mxu0 %v3480
        %7493 = vmatpush1.msra.mxu0 %v3479
        %7494 = vmatprep.subr.mxu0 %v3472
        %7495 = vmatpush1.msra.mxu0 %v3471
        %7496 = vmatprep.subr.mxu0 %v3464
        %7497 = vmatpush1.msra.mxu0 %v3463
        %7498 = vmatprep.subr.mxu0 %v3456
        %7499 = vmatpush1.msra.mxu0 %v3455
        %7500 = vmatprep.subr.mxu0 %v3448
        %7501 = vmatpush1.msra.mxu0 %v3447
        %7502 = vmatprep.subr.mxu0 %v3440
        %7503 = vmatpush1.msra.mxu0 %v3439
        %7504 = vmatprep.subr.mxu0 %v3432
        %7505 = vmatpush1.msra.mxu0 %v3431
        %7506 = vmatprep.subr.mxu0 %v3424
        %7507 = vmatpush1.msra.mxu0 %v3423
        %7508 = vmatprep.subr.mxu0 %v3416
        %7509 = vmatpush1.msra.mxu0 %v3415
        %7510 = vmatprep.subr.mxu0 %v3408
        %7511 = vmatpush1.msra.mxu0 %v3407
        %7512 = vmatprep.subr.mxu0 %v3400
        %7513 = vmatpush1.msra.mxu0 %v3399
        %7514 = vmatprep.subr.mxu0 %v3392
        %7515 = vmatpush1.msra.mxu0 %v3391
        %7516 = vmatprep.subr.mxu0 %v3384
        %7517 = vmatpush1.msra.mxu0 %v3383
        %7518 = vmatprep.subr.mxu0 %v3376
        %7519 = vmatpush1.msra.mxu0 %v3375
        %7520 = vmatprep.subr.mxu0 %v3624
        %7521 = vmatpush2.msra.mxu0 %v3623
        %7522 = vmatprep.subr.mxu0 %v3616
        %7523 = vmatpush2.msra.mxu0 %v3615
        %7524 = vmatprep.subr.mxu0 %v3608
        %7525 = vmatpush2.msra.mxu0 %v3607
        %7526 = vmatprep.subr.mxu0 %v3600
        %7527 = vmatpush2.msra.mxu0 %v3599
        %7528 = vmatprep.subr.mxu0 %v3592
        %7529 = vmatpush2.msra.mxu0 %v3591
        %7530 = vmatprep.subr.mxu0 %v3584
        %7531 = vmatpush2.msra.mxu0 %v3583
        %7532 = vmatprep.subr.mxu0 %v3576
        %7533 = vmatpush2.msra.mxu0 %v3575
        %7534 = vmatprep.subr.mxu0 %v3568
        %7535 = vmatpush2.msra.mxu0 %v3567
        %7536 = vmatprep.subr.mxu0 %v3560
        %7537 = vmatpush2.msra.mxu0 %v3559
        %7538 = vmatprep.subr.mxu0 %v3552
        %7539 = vmatpush2.msra.mxu0 %v3551
        %7540 = vmatprep.subr.mxu0 %v3544
        %7541 = vmatpush2.msra.mxu0 %v3543
        %7542 = vmatprep.subr.mxu0 %v3536
        %7543 = vmatpush2.msra.mxu0 %v3535
        %7544 = vmatprep.subr.mxu0 %v3528
        %7545 = vmatpush2.msra.mxu0 %v3527
        %7546 = vmatprep.subr.mxu0 %v3520
        %7547 = vmatpush2.msra.mxu0 %v3519
        %7548 = vmatprep.subr.mxu0 %v3512
        %7549 = vmatpush2.msra.mxu0 %v3511
        %7550 = vmatprep.subr.mxu0 %v3504
        %7551 = vmatpush2.msra.mxu0 %v3503
        %7552 = vmatprep.mubr.f32.mxu0 %v4182
        %7553 = vmatmul.mubr.f32.gmra.mxu0 %v4181
        %v7554 = vpop.f32.mrf.mxu0
        %v7555 = vadd.f32 %v7400, %v7554
        %v7556 = vpop.f32.mrf.mxu0
        %v7557 = vadd.f32 %v7402, %v7556
        %7558 = vmatprep.mubr.f32.mxu0 %v4193
        %7559 = vmatmul.mubr.f32.gmra.mxu0 %v4192
        %v7560 = vpop.f32.mrf.mxu0
        %v7561 = vadd.f32 %v7406, %v7560
        %v7562 = vpop.f32.mrf.mxu0
        %v7563 = vadd.f32 %v7408, %v7562
        %7564 = vmatprep.mubr.f32.mxu0 %v4204
        %7565 = vmatmul.mubr.f32.gmra.mxu0 %v4203
        %v7566 = vpop.f32.mrf.mxu0
        %v7567 = vadd.f32 %v7412, %v7566
        %v7568 = vpop.f32.mrf.mxu0
        %v7569 = vadd.f32 %v7414, %v7568
        %7570 = vmatprep.mubr.f32.mxu0 %v4215
        %7571 = vmatmul.mubr.f32.gmra.mxu0 %v4214
        %v7572 = vpop.f32.mrf.mxu0
        %v7573 = vadd.f32 %v7418, %v7572
        %v7574 = vpop.f32.mrf.mxu0
        %v7575 = vadd.f32 %v7420, %v7574
        %7576 = vmatprep.mubr.f32.mxu0 %v4226
        %7577 = vmatmul.mubr.f32.gmra.mxu0 %v4225
        %v7578 = vpop.f32.mrf.mxu0
        %v7579 = vadd.f32 %v7424, %v7578
        %v7580 = vpop.f32.mrf.mxu0
        %v7581 = vadd.f32 %v7426, %v7580
        %7582 = vmatprep.mubr.f32.mxu0 %v4237
        %7583 = vmatmul.mubr.f32.gmra.mxu0 %v4236
        %v7584 = vpop.f32.mrf.mxu0
        %v7585 = vadd.f32 %v7430, %v7584
        %v7586 = vpop.f32.mrf.mxu0
        %v7587 = vadd.f32 %v7432, %v7586
        %7588 = vmatprep.mubr.f32.mxu0 %v4248
        %7589 = vmatmul.mubr.f32.gmra.mxu0 %v4247
        %v7590 = vpop.f32.mrf.mxu0
        %v7591 = vadd.f32 %v7436, %v7590
        %v7592 = vpop.f32.mrf.mxu0
        %v7593 = vadd.f32 %v7438, %v7592
        %7594 = vmatprep.mubr.f32.mxu0 %v4259
        %7595 = vmatmul.mubr.f32.gmra.mxu0 %v4258
        %v7596 = vpop.f32.mrf.mxu0
        %v7597 = vadd.f32 %v7442, %v7596
        %v7598 = vpop.f32.mrf.mxu0
        %v7599 = vadd.f32 %v7444, %v7598
        %7600 = vmatprep.mubr.f32.mxu0 %v4270
        %7601 = vmatmul.mubr.f32.gmra.mxu0 %v4269
        %v7602 = vpop.f32.mrf.mxu0
        %v7603 = vadd.f32 %v7448, %v7602
        %v7604 = vpop.f32.mrf.mxu0
        %v7605 = vadd.f32 %v7450, %v7604
        %7606 = vmatprep.mubr.f32.mxu0 %v4281
        %7607 = vmatmul.mubr.f32.gmra.mxu0 %v4280
        %v7608 = vpop.f32.mrf.mxu0
        %v7609 = vadd.f32 %v7454, %v7608
        %v7610 = vpop.f32.mrf.mxu0
        %v7611 = vadd.f32 %v7456, %v7610
        %7612 = vmatprep.mubr.f32.mxu0 %v4292
        %7613 = vmatmul.mubr.f32.gmra.mxu0 %v4291
        %v7614 = vpop.f32.mrf.mxu0
        %v7615 = vadd.f32 %v7460, %v7614
        %v7616 = vpop.f32.mrf.mxu0
        %v7617 = vadd.f32 %v7462, %v7616
        %7618 = vmatprep.mubr.f32.mxu0 %v4303
        %7619 = vmatmul.mubr.f32.gmra.mxu0 %v4302
        %v7620 = vpop.f32.mrf.mxu0
        %v7621 = vadd.f32 %v7466, %v7620
        %v7622 = vpop.f32.mrf.mxu0
        %v7623 = vadd.f32 %v7468, %v7622
        %7624 = vmatprep.mubr.f32.mxu0 %v4314
        %7625 = vmatmul.mubr.f32.gmra.mxu0 %v4313
        %v7626 = vpop.f32.mrf.mxu0
        %v7627 = vadd.f32 %v7472, %v7626
        %v7628 = vpop.f32.mrf.mxu0
        %v7629 = vadd.f32 %v7474, %v7628
        %7630 = vmatprep.mubr.f32.mxu0 %v4325
        %7631 = vmatmul.mubr.f32.gmra.mxu0 %v4324
        %v7632 = vpop.f32.mrf.mxu0
        %v7633 = vadd.f32 %v7478, %v7632
        %v7634 = vpop.f32.mrf.mxu0
        %v7635 = vadd.f32 %v7480, %v7634
        %7636 = vmatprep.mubr.f32.mxu0 %v4336
        %7637 = vmatmul.mubr.f32.gmra.mxu0 %v4335
        %v7638 = vpop.f32.mrf.mxu0
        %v7639 = vadd.f32 %v7484, %v7638
        %v7640 = vpop.f32.mrf.mxu0
        %v7641 = vadd.f32 %v7486, %v7640
        %7642 = vdwg.mxu0
        %7643 = vmatprep.subr.mxu0 %v3752
        %7644 = vmatpush1.msra.mxu0 %v3751
        %7645 = vmatprep.subr.mxu0 %v3744
        %7646 = vmatpush1.msra.mxu0 %v3743
        %7647 = vmatprep.subr.mxu0 %v3736
        %7648 = vmatpush1.msra.mxu0 %v3735
        %7649 = vmatprep.subr.mxu0 %v3728
        %7650 = vmatpush1.msra.mxu0 %v3727
        %7651 = vmatprep.subr.mxu0 %v3720
        %7652 = vmatpush1.msra.mxu0 %v3719
        %7653 = vmatprep.subr.mxu0 %v3712
        %7654 = vmatpush1.msra.mxu0 %v3711
        %7655 = vmatprep.subr.mxu0 %v3704
        %7656 = vmatpush1.msra.mxu0 %v3703
        %7657 = vmatprep.subr.mxu0 %v3696
        %7658 = vmatpush1.msra.mxu0 %v3695
        %7659 = vmatprep.subr.mxu0 %v3688
        %7660 = vmatpush1.msra.mxu0 %v3687
        %7661 = vmatprep.subr.mxu0 %v3680
        %7662 = vmatpush1.msra.mxu0 %v3679
        %7663 = vmatprep.subr.mxu0 %v3672
        %7664 = vmatpush1.msra.mxu0 %v3671
        %7665 = vmatprep.subr.mxu0 %v3664
        %7666 = vmatpush1.msra.mxu0 %v3663
        %7667 = vmatprep.subr.mxu0 %v3656
        %7668 = vmatpush1.msra.mxu0 %v3655
        %7669 = vmatprep.subr.mxu0 %v3648
        %7670 = vmatpush1.msra.mxu0 %v3647
        %7671 = vmatprep.subr.mxu0 %v3640
        %7672 = vmatpush1.msra.mxu0 %v3639
        %7673 = vmatprep.subr.mxu0 %v3632
        %7674 = vmatpush1.msra.mxu0 %v3631
        %7675 = vmatprep.subr.mxu0 %v3880
        %7676 = vmatpush2.msra.mxu0 %v3879
        %7677 = vmatprep.subr.mxu0 %v3872
        %7678 = vmatpush2.msra.mxu0 %v3871
        %7679 = vmatprep.subr.mxu0 %v3864
        %7680 = vmatpush2.msra.mxu0 %v3863
        %7681 = vmatprep.subr.mxu0 %v3856
        %7682 = vmatpush2.msra.mxu0 %v3855
        %7683 = vmatprep.subr.mxu0 %v3848
        %7684 = vmatpush2.msra.mxu0 %v3847
        %7685 = vmatprep.subr.mxu0 %v3840
        %7686 = vmatpush2.msra.mxu0 %v3839
        %7687 = vmatprep.subr.mxu0 %v3832
        %7688 = vmatpush2.msra.mxu0 %v3831
        %7689 = vmatprep.subr.mxu0 %v3824
        %7690 = vmatpush2.msra.mxu0 %v3823
        %7691 = vmatprep.subr.mxu0 %v3816
        %7692 = vmatpush2.msra.mxu0 %v3815
        %7693 = vmatprep.subr.mxu0 %v3808
        %7694 = vmatpush2.msra.mxu0 %v3807
        %7695 = vmatprep.subr.mxu0 %v3800
        %7696 = vmatpush2.msra.mxu0 %v3799
        %7697 = vmatprep.subr.mxu0 %v3792
        %7698 = vmatpush2.msra.mxu0 %v3791
        %7699 = vmatprep.subr.mxu0 %v3784
        %7700 = vmatpush2.msra.mxu0 %v3783
        %7701 = vmatprep.subr.mxu0 %v3776
        %7702 = vmatpush2.msra.mxu0 %v3775
        %7703 = vmatprep.subr.mxu0 %v3768
        %7704 = vmatpush2.msra.mxu0 %v3767
        %7705 = vmatprep.subr.mxu0 %v3760
        %7706 = vmatpush2.msra.mxu0 %v3759
        %7707 = vmatprep.mubr.f32.mxu0 %v4184
        %7708 = vmatmul.mubr.f32.gmra.mxu0 %v4183
        %v7709 = vpop.f32.mrf.mxu0
        %v7710 = vadd.f32 %v7555, %v7709
        %v7711 = vpop.f32.mrf.mxu0
        %v7712 = vadd.f32 %v7557, %v7711
        %7713 = vmatprep.mubr.f32.mxu0 %v4195
        %7714 = vmatmul.mubr.f32.gmra.mxu0 %v4194
        %v7715 = vpop.f32.mrf.mxu0
        %v7716 = vadd.f32 %v7561, %v7715
        %v7717 = vpop.f32.mrf.mxu0
        %v7718 = vadd.f32 %v7563, %v7717
        %7719 = vmatprep.mubr.f32.mxu0 %v4206
        %7720 = vmatmul.mubr.f32.gmra.mxu0 %v4205
        %v7721 = vpop.f32.mrf.mxu0
        %v7722 = vadd.f32 %v7567, %v7721
        %v7723 = vpop.f32.mrf.mxu0
        %v7724 = vadd.f32 %v7569, %v7723
        %7725 = vmatprep.mubr.f32.mxu0 %v4217
        %7726 = vmatmul.mubr.f32.gmra.mxu0 %v4216
        %v7727 = vpop.f32.mrf.mxu0
        %v7728 = vadd.f32 %v7573, %v7727
        %v7729 = vpop.f32.mrf.mxu0
        %v7730 = vadd.f32 %v7575, %v7729
        %7731 = vmatprep.mubr.f32.mxu0 %v4228
        %7732 = vmatmul.mubr.f32.gmra.mxu0 %v4227
        %v7733 = vpop.f32.mrf.mxu0
        %v7734 = vadd.f32 %v7579, %v7733
        %v7735 = vpop.f32.mrf.mxu0
        %v7736 = vadd.f32 %v7581, %v7735
        %7737 = vmatprep.mubr.f32.mxu0 %v4239
        %7738 = vmatmul.mubr.f32.gmra.mxu0 %v4238
        %v7739 = vpop.f32.mrf.mxu0
        %v7740 = vadd.f32 %v7585, %v7739
        %v7741 = vpop.f32.mrf.mxu0
        %v7742 = vadd.f32 %v7587, %v7741
        %7743 = vmatprep.mubr.f32.mxu0 %v4250
        %7744 = vmatmul.mubr.f32.gmra.mxu0 %v4249
        %v7745 = vpop.f32.mrf.mxu0
        %v7746 = vadd.f32 %v7591, %v7745
        %v7747 = vpop.f32.mrf.mxu0
        %v7748 = vadd.f32 %v7593, %v7747
        %7749 = vmatprep.mubr.f32.mxu0 %v4261
        %7750 = vmatmul.mubr.f32.gmra.mxu0 %v4260
        %v7751 = vpop.f32.mrf.mxu0
        %v7752 = vadd.f32 %v7597, %v7751
        %v7753 = vpop.f32.mrf.mxu0
        %v7754 = vadd.f32 %v7599, %v7753
        %7755 = vmatprep.mubr.f32.mxu0 %v4272
        %7756 = vmatmul.mubr.f32.gmra.mxu0 %v4271
        %v7757 = vpop.f32.mrf.mxu0
        %v7758 = vadd.f32 %v7603, %v7757
        %v7759 = vpop.f32.mrf.mxu0
        %v7760 = vadd.f32 %v7605, %v7759
        %7761 = vmatprep.mubr.f32.mxu0 %v4283
        %7762 = vmatmul.mubr.f32.gmra.mxu0 %v4282
        %v7763 = vpop.f32.mrf.mxu0
        %v7764 = vadd.f32 %v7609, %v7763
        %v7765 = vpop.f32.mrf.mxu0
        %v7766 = vadd.f32 %v7611, %v7765
        %7767 = vmatprep.mubr.f32.mxu0 %v4294
        %7768 = vmatmul.mubr.f32.gmra.mxu0 %v4293
        %v7769 = vpop.f32.mrf.mxu0
        %v7770 = vadd.f32 %v7615, %v7769
        %v7771 = vpop.f32.mrf.mxu0
        %v7772 = vadd.f32 %v7617, %v7771
        %7773 = vmatprep.mubr.f32.mxu0 %v4305
        %7774 = vmatmul.mubr.f32.gmra.mxu0 %v4304
        %v7775 = vpop.f32.mrf.mxu0
        %v7776 = vadd.f32 %v7621, %v7775
        %v7777 = vpop.f32.mrf.mxu0
        %v7778 = vadd.f32 %v7623, %v7777
        %7779 = vmatprep.mubr.f32.mxu0 %v4316
        %7780 = vmatmul.mubr.f32.gmra.mxu0 %v4315
        %v7781 = vpop.f32.mrf.mxu0
        %v7782 = vadd.f32 %v7627, %v7781
        %v7783 = vpop.f32.mrf.mxu0
        %v7784 = vadd.f32 %v7629, %v7783
        %7785 = vmatprep.mubr.f32.mxu0 %v4327
        %7786 = vmatmul.mubr.f32.gmra.mxu0 %v4326
        %v7787 = vpop.f32.mrf.mxu0
        %v7788 = vadd.f32 %v7633, %v7787
        %v7789 = vpop.f32.mrf.mxu0
        %v7790 = vadd.f32 %v7635, %v7789
        %7791 = vmatprep.mubr.f32.mxu0 %v4338
        %7792 = vmatmul.mubr.f32.gmra.mxu0 %v4337
        %v7793 = vpop.f32.mrf.mxu0
        %v7794 = vadd.f32 %v7639, %v7793
        %v7795 = vpop.f32.mrf.mxu0
        %v7796 = vadd.f32 %v7641, %v7795
        %7797 = vdwg.mxu0
        %7798 = vmatprep.subr.mxu0 %v4008
        %7799 = vmatpush1.msra.mxu0 %v4007
        %7800 = vmatprep.subr.mxu0 %v4000
        %7801 = vmatpush1.msra.mxu0 %v3999
        %7802 = vmatprep.subr.mxu0 %v3992
        %7803 = vmatpush1.msra.mxu0 %v3991
        %7804 = vmatprep.subr.mxu0 %v3984
        %7805 = vmatpush1.msra.mxu0 %v3983
        %7806 = vmatprep.subr.mxu0 %v3976
        %7807 = vmatpush1.msra.mxu0 %v3975
        %7808 = vmatprep.subr.mxu0 %v3968
        %7809 = vmatpush1.msra.mxu0 %v3967
        %7810 = vmatprep.subr.mxu0 %v3960
        %7811 = vmatpush1.msra.mxu0 %v3959
        %7812 = vmatprep.subr.mxu0 %v3952
        %7813 = vmatpush1.msra.mxu0 %v3951
        %7814 = vmatprep.subr.mxu0 %v3944
        %7815 = vmatpush1.msra.mxu0 %v3943
        %7816 = vmatprep.subr.mxu0 %v3936
        %7817 = vmatpush1.msra.mxu0 %v3935
        %7818 = vmatprep.subr.mxu0 %v3928
        %7819 = vmatpush1.msra.mxu0 %v3927
        %7820 = vmatprep.subr.mxu0 %v3920
        %7821 = vmatpush1.msra.mxu0 %v3919
        %7822 = vmatprep.subr.mxu0 %v3912
        %7823 = vmatpush1.msra.mxu0 %v3911
        %7824 = vmatprep.subr.mxu0 %v3904
        %7825 = vmatpush1.msra.mxu0 %v3903
        %7826 = vmatprep.subr.mxu0 %v3896
        %7827 = vmatpush1.msra.mxu0 %v3895
        %7828 = vmatprep.subr.mxu0 %v3888
        %7829 = vmatpush1.msra.mxu0 %v3887
        %7830 = vmatprep.subr.mxu0 %v4136
        %7831 = vmatpush2.msra.mxu0 %v4135
        %7832 = vmatprep.subr.mxu0 %v4128
        %7833 = vmatpush2.msra.mxu0 %v4127
        %7834 = vmatprep.subr.mxu0 %v4120
        %7835 = vmatpush2.msra.mxu0 %v4119
        %7836 = vmatprep.subr.mxu0 %v4112
        %7837 = vmatpush2.msra.mxu0 %v4111
        %7838 = vmatprep.subr.mxu0 %v4104
        %7839 = vmatpush2.msra.mxu0 %v4103
        %7840 = vmatprep.subr.mxu0 %v4096
        %7841 = vmatpush2.msra.mxu0 %v4095
        %7842 = vmatprep.subr.mxu0 %v4088
        %7843 = vmatpush2.msra.mxu0 %v4087
        %7844 = vmatprep.subr.mxu0 %v4080
        %7845 = vmatpush2.msra.mxu0 %v4079
        %7846 = vmatprep.subr.mxu0 %v4072
        %7847 = vmatpush2.msra.mxu0 %v4071
        %7848 = vmatprep.subr.mxu0 %v4064
        %7849 = vmatpush2.msra.mxu0 %v4063
        %7850 = vmatprep.subr.mxu0 %v4056
        %7851 = vmatpush2.msra.mxu0 %v4055
        %7852 = vmatprep.subr.mxu0 %v4048
        %7853 = vmatpush2.msra.mxu0 %v4047
        %7854 = vmatprep.subr.mxu0 %v4040
        %7855 = vmatpush2.msra.mxu0 %v4039
        %7856 = vmatprep.subr.mxu0 %v4032
        %7857 = vmatpush2.msra.mxu0 %v4031
        %7858 = vmatprep.subr.mxu0 %v4024
        %7859 = vmatpush2.msra.mxu0 %v4023
        %7860 = vmatprep.subr.mxu0 %v4016
        %7861 = vmatpush2.msra.mxu0 %v4015
        %7862 = vmatprep.mubr.f32.mxu0 %v4186
        %7863 = vmatmul.mubr.f32.gmra.mxu0 %v4185
        %v7864 = vpop.f32.mrf.mxu0
        %v7865 = vadd.f32 %v7710, %v7864
        %v7866 = vpop.f32.mrf.mxu0
        %v7867 = vadd.f32 %v7712, %v7866
        %7868 = vmatprep.mubr.f32.mxu0 %v4197
        %7869 = vmatmul.mubr.f32.gmra.mxu0 %v4196
        %v7870 = vpop.f32.mrf.mxu0
        %v7871 = vadd.f32 %v7716, %v7870
        %v7872 = vpop.f32.mrf.mxu0
        %v7873 = vadd.f32 %v7718, %v7872
        %7874 = vmatprep.mubr.f32.mxu0 %v4208
        %7875 = vmatmul.mubr.f32.gmra.mxu0 %v4207
        %v7876 = vpop.f32.mrf.mxu0
        %v7877 = vadd.f32 %v7722, %v7876
        %v7878 = vpop.f32.mrf.mxu0
        %v7879 = vadd.f32 %v7724, %v7878
        %7880 = vmatprep.mubr.f32.mxu0 %v4219
        %7881 = vmatmul.mubr.f32.gmra.mxu0 %v4218
        %v7882 = vpop.f32.mrf.mxu0
        %v7883 = vadd.f32 %v7728, %v7882
        %v7884 = vpop.f32.mrf.mxu0
        %v7885 = vadd.f32 %v7730, %v7884
        %7886 = vmatprep.mubr.f32.mxu0 %v4230
        %7887 = vmatmul.mubr.f32.gmra.mxu0 %v4229
        %v7888 = vpop.f32.mrf.mxu0
        %v7889 = vadd.f32 %v7734, %v7888
        %v7890 = vpop.f32.mrf.mxu0
        %v7891 = vadd.f32 %v7736, %v7890
        %7892 = vmatprep.mubr.f32.mxu0 %v4241
        %7893 = vmatmul.mubr.f32.gmra.mxu0 %v4240
        %v7894 = vpop.f32.mrf.mxu0
        %v7895 = vadd.f32 %v7740, %v7894
        %v7896 = vpop.f32.mrf.mxu0
        %v7897 = vadd.f32 %v7742, %v7896
        %7898 = vmatprep.mubr.f32.mxu0 %v4252
        %7899 = vmatmul.mubr.f32.gmra.mxu0 %v4251
        %v7900 = vpop.f32.mrf.mxu0
        %v7901 = vadd.f32 %v7746, %v7900
        %v7902 = vpop.f32.mrf.mxu0
        %v7903 = vadd.f32 %v7748, %v7902
        %7904 = vmatprep.mubr.f32.mxu0 %v4263
        %7905 = vmatmul.mubr.f32.gmra.mxu0 %v4262
        %v7906 = vpop.f32.mrf.mxu0
        %v7907 = vadd.f32 %v7752, %v7906
        %v7908 = vpop.f32.mrf.mxu0
        %v7909 = vadd.f32 %v7754, %v7908
        %7910 = vmatprep.mubr.f32.mxu0 %v4274
        %7911 = vmatmul.mubr.f32.gmra.mxu0 %v4273
        %v7912 = vpop.f32.mrf.mxu0
        %v7913 = vadd.f32 %v7758, %v7912
        %v7914 = vpop.f32.mrf.mxu0
        %v7915 = vadd.f32 %v7760, %v7914
        %7916 = vmatprep.mubr.f32.mxu0 %v4285
        %7917 = vmatmul.mubr.f32.gmra.mxu0 %v4284
        %v7918 = vpop.f32.mrf.mxu0
        %v7919 = vadd.f32 %v7764, %v7918
        %v7920 = vpop.f32.mrf.mxu0
        %v7921 = vadd.f32 %v7766, %v7920
        %7922 = vmatprep.mubr.f32.mxu0 %v4296
        %7923 = vmatmul.mubr.f32.gmra.mxu0 %v4295
        %v7924 = vpop.f32.mrf.mxu0
        %v7925 = vadd.f32 %v7770, %v7924
        %v7926 = vpop.f32.mrf.mxu0
        %v7927 = vadd.f32 %v7772, %v7926
        %7928 = vmatprep.mubr.f32.mxu0 %v4307
        %7929 = vmatmul.mubr.f32.gmra.mxu0 %v4306
        %v7930 = vpop.f32.mrf.mxu0
        %v7931 = vadd.f32 %v7776, %v7930
        %v7932 = vpop.f32.mrf.mxu0
        %v7933 = vadd.f32 %v7778, %v7932
        %7934 = vmatprep.mubr.f32.mxu0 %v4318
        %7935 = vmatmul.mubr.f32.gmra.mxu0 %v4317
        %v7936 = vpop.f32.mrf.mxu0
        %v7937 = vadd.f32 %v7782, %v7936
        %v7938 = vpop.f32.mrf.mxu0
        %v7939 = vadd.f32 %v7784, %v7938
        %7940 = vmatprep.mubr.f32.mxu0 %v4329
        %7941 = vmatmul.mubr.f32.gmra.mxu0 %v4328
        %v7942 = vpop.f32.mrf.mxu0
        %v7943 = vadd.f32 %v7788, %v7942
        %v7944 = vpop.f32.mrf.mxu0
        %v7945 = vadd.f32 %v7790, %v7944
        %7946 = vmatprep.mubr.f32.mxu0 %v4340
        %7947 = vmatmul.mubr.f32.gmra.mxu0 %v4339
        %v7948 = vpop.f32.mrf.mxu0
        %v7949 = vadd.f32 %v7794, %v7948
        %v7950 = vpop.f32.mrf.mxu0
        %v7951 = vadd.f32 %v7796, %v7950
        %7952 = vdwg.mxu0
        %7953 = vmatprep.subr.mxu0 0.0
        %7954 = vmatpush1.msra.mxu0 0.0
        %7955 = vmatprep.subr.mxu0 0.0
        %7956 = vmatpush1.msra.mxu0 0.0
        %7957 = vmatprep.subr.mxu0 0.0
        %7958 = vmatpush1.msra.mxu0 0.0
        %7959 = vmatprep.subr.mxu0 0.0
        %7960 = vmatpush1.msra.mxu0 0.0
        %7961 = vmatprep.subr.mxu0 0.0
        %7962 = vmatpush1.msra.mxu0 0.0
        %7963 = vmatprep.subr.mxu0 0.0
        %7964 = vmatpush1.msra.mxu0 0.0
        %7965 = vmatprep.subr.mxu0 0.0
        %7966 = vmatpush1.msra.mxu0 0.0
        %7967 = vmatprep.subr.mxu0 0.0
        %7968 = vmatpush1.msra.mxu0 0.0
        %7969 = vmatprep.subr.mxu0 0.0
        %7970 = vmatpush1.msra.mxu0 0.0
        %7971 = vmatprep.subr.mxu0 0.0
        %7972 = vmatpush1.msra.mxu0 0.0
        %7973 = vmatprep.subr.mxu0 0.0
        %7974 = vmatpush1.msra.mxu0 0.0
        %7975 = vmatprep.subr.mxu0 %v4176
        %7976 = vmatpush1.msra.mxu0 %v4175
        %7977 = vmatprep.subr.mxu0 %v4168
        %7978 = vmatpush1.msra.mxu0 %v4167
        %7979 = vmatprep.subr.mxu0 %v4160
        %7980 = vmatpush1.msra.mxu0 %v4159
        %7981 = vmatprep.subr.mxu0 %v4152
        %7982 = vmatpush1.msra.mxu0 %v4151
        %7983 = vmatprep.subr.mxu0 %v4144
        %7984 = vmatpush1.msra.mxu0 %v4143
        %7985 = vmatprep.subr.mxu0 0.0
        %7986 = vmatpush2.msra.mxu0 0.0
        %7987 = vmatprep.subr.mxu0 0.0
        %7988 = vmatpush2.msra.mxu0 0.0
        %7989 = vmatprep.subr.mxu0 0.0
        %7990 = vmatpush2.msra.mxu0 0.0
        %7991 = vmatprep.subr.mxu0 0.0
        %7992 = vmatpush2.msra.mxu0 0.0
        %7993 = vmatprep.subr.mxu0 0.0
        %7994 = vmatpush2.msra.mxu0 0.0
        %7995 = vmatprep.subr.mxu0 0.0
        %7996 = vmatpush2.msra.mxu0 0.0
        %7997 = vmatprep.subr.mxu0 0.0
        %7998 = vmatpush2.msra.mxu0 0.0
        %7999 = vmatprep.subr.mxu0 0.0
        %8000 = vmatpush2.msra.mxu0 0.0
        %8001 = vmatprep.subr.mxu0 0.0
        %8002 = vmatpush2.msra.mxu0 0.0
        %8003 = vmatprep.subr.mxu0 0.0
        %8004 = vmatpush2.msra.mxu0 0.0
        %8005 = vmatprep.subr.mxu0 0.0
        %8006 = vmatpush2.msra.mxu0 0.0
        %8007 = vmatprep.subr.mxu0 0.0
        %8008 = vmatpush2.msra.mxu0 0.0
        %8009 = vmatprep.subr.mxu0 0.0
        %8010 = vmatpush2.msra.mxu0 0.0
        %8011 = vmatprep.subr.mxu0 0.0
        %8012 = vmatpush2.msra.mxu0 0.0
        %8013 = vmatprep.subr.mxu0 0.0
        %8014 = vmatpush2.msra.mxu0 0.0
        %8015 = vmatprep.subr.mxu0 0.0
        %8016 = vmatpush2.msra.mxu0 0.0
        %8017 = vmatprep.mubr.f32.mxu0 0.0
        %8018 = vmatmul.mubr.f32.gmra.mxu0 %v4344
        %v8019 = vpop.f32.mrf.mxu0
        %v8020 = vadd.f32 %v7865, %v8019
        %v8021 = vpop.f32.mrf.mxu0
        %v8022 = vadd.f32 %v7867, %v8021
        %8023 = vmatprep.mubr.f32.mxu0 0.0
        %8024 = vmatmul.mubr.f32.gmra.mxu0 %v4347
        %v8025 = vpop.f32.mrf.mxu0
        %v8026 = vadd.f32 %v7871, %v8025
        %v8027 = vpop.f32.mrf.mxu0
        %v8028 = vadd.f32 %v7873, %v8027
        %8029 = vmatprep.mubr.f32.mxu0 0.0
        %8030 = vmatmul.mubr.f32.gmra.mxu0 %v4350
        %v8031 = vpop.f32.mrf.mxu0
        %v8032 = vadd.f32 %v7877, %v8031
        %v8033 = vpop.f32.mrf.mxu0
        %v8034 = vadd.f32 %v7879, %v8033
        %8035 = vmatprep.mubr.f32.mxu0 0.0
        %8036 = vmatmul.mubr.f32.gmra.mxu0 %v4353
        %v8037 = vpop.f32.mrf.mxu0
        %v8038 = vadd.f32 %v7883, %v8037
        %v8039 = vpop.f32.mrf.mxu0
        %v8040 = vadd.f32 %v7885, %v8039
        %8041 = vmatprep.mubr.f32.mxu0 0.0
        %8042 = vmatmul.mubr.f32.gmra.mxu0 %v4356
        %v8043 = vpop.f32.mrf.mxu0
        %v8044 = vadd.f32 %v7889, %v8043
        %v8045 = vpop.f32.mrf.mxu0
        %v8046 = vadd.f32 %v7891, %v8045
        %8047 = vmatprep.mubr.f32.mxu0 0.0
        %8048 = vmatmul.mubr.f32.gmra.mxu0 %v4359
        %v8049 = vpop.f32.mrf.mxu0
        %v8050 = vadd.f32 %v7895, %v8049
        %v8051 = vpop.f32.mrf.mxu0
        %v8052 = vadd.f32 %v7897, %v8051
        %8053 = vmatprep.mubr.f32.mxu0 0.0
        %8054 = vmatmul.mubr.f32.gmra.mxu0 %v4362
        %v8055 = vpop.f32.mrf.mxu0
        %v8056 = vadd.f32 %v7901, %v8055
        %v8057 = vpop.f32.mrf.mxu0
        %v8058 = vadd.f32 %v7903, %v8057
        %8059 = vmatprep.mubr.f32.mxu0 0.0
        %8060 = vmatmul.mubr.f32.gmra.mxu0 %v4365
        %v8061 = vpop.f32.mrf.mxu0
        %v8062 = vadd.f32 %v7907, %v8061
        %v8063 = vpop.f32.mrf.mxu0
        %v8064 = vadd.f32 %v7909, %v8063
        %8065 = vmatprep.mubr.f32.mxu0 0.0
        %8066 = vmatmul.mubr.f32.gmra.mxu0 %v4368
        %v8067 = vpop.f32.mrf.mxu0
        %v8068 = vadd.f32 %v7913, %v8067
        %v8069 = vpop.f32.mrf.mxu0
        %v8070 = vadd.f32 %v7915, %v8069
        %8071 = vmatprep.mubr.f32.mxu0 0.0
        %8072 = vmatmul.mubr.f32.gmra.mxu0 %v4371
        %v8073 = vpop.f32.mrf.mxu0
        %v8074 = vadd.f32 %v7919, %v8073
        %v8075 = vpop.f32.mrf.mxu0
        %v8076 = vadd.f32 %v7921, %v8075
        %8077 = vmatprep.mubr.f32.mxu0 0.0
        %8078 = vmatmul.mubr.f32.gmra.mxu0 %v4374
        %v8079 = vpop.f32.mrf.mxu0
        %v8080 = vadd.f32 %v7925, %v8079
        %v8081 = vpop.f32.mrf.mxu0
        %v8082 = vadd.f32 %v7927, %v8081
        %8083 = vmatprep.mubr.f32.mxu0 0.0
        %8084 = vmatmul.mubr.f32.gmra.mxu0 %v4377
        %v8085 = vpop.f32.mrf.mxu0
        %v8086 = vadd.f32 %v7931, %v8085
        %v8087 = vpop.f32.mrf.mxu0
        %v8088 = vadd.f32 %v7933, %v8087
        %8089 = vmatprep.mubr.f32.mxu0 0.0
        %8090 = vmatmul.mubr.f32.gmra.mxu0 %v4380
        %v8091 = vpop.f32.mrf.mxu0
        %v8092 = vadd.f32 %v7937, %v8091
        %v8093 = vpop.f32.mrf.mxu0
        %v8094 = vadd.f32 %v7939, %v8093
        %8095 = vmatprep.mubr.f32.mxu0 0.0
        %8096 = vmatmul.mubr.f32.gmra.mxu0 %v4383
        %v8097 = vpop.f32.mrf.mxu0
        %v8098 = vadd.f32 %v7943, %v8097
        %v8099 = vpop.f32.mrf.mxu0
        %v8100 = vadd.f32 %v7945, %v8099
        %8101 = vmatprep.mubr.f32.mxu0 0.0
        %8102 = vmatmul.mubr.f32.gmra.mxu0 %v4386
        %v8103 = vpop.f32.mrf.mxu0
        %v8104 = vadd.f32 %v7949, %v8103
        %v8105 = vpop.f32.mrf.mxu0
        %v8106 = vadd.f32 %v7951, %v8105
        %8107 = vdwg.mxu0
        %v8108 = vmul.f32 %v5230, %v864
        %v8109 = vmul.f32 %v5232, %v865
        %v8110 = vmul.f32 %v6160, %v866
        %v8111 = vmul.f32 %v6162, %v867
        %v8112 = vmul.f32 %v7090, %v868
        %v8113 = vmul.f32 %v7092, %v869
        %v8114 = vmul.f32 %v8020, %v870
        %v8115 = vmul.f32 %v8022, %v871
        %v8116 = vmul.f32 %v5236, %v872
        %v8117 = vmul.f32 %v5238, %v873
        %v8118 = vmul.f32 %v6166, %v874
        %v8119 = vmul.f32 %v6168, %v875
        %v8120 = vmul.f32 %v7096, %v876
        %v8121 = vmul.f32 %v7098, %v877
        %v8122 = vmul.f32 %v8026, %v878
        %v8123 = vmul.f32 %v8028, %v879
        %v8124 = vmul.f32 %v5242, %v880
        %v8125 = vmul.f32 %v5244, %v881
        %v8126 = vmul.f32 %v6172, %v882
        %v8127 = vmul.f32 %v6174, %v883
        %v8128 = vmul.f32 %v7102, %v884
        %v8129 = vmul.f32 %v7104, %v885
        %v8130 = vmul.f32 %v8032, %v886
        %v8131 = vmul.f32 %v8034, %v887
        %v8132 = vmul.f32 %v5248, %v888
        %v8133 = vmul.f32 %v5250, %v889
        %v8134 = vmul.f32 %v6178, %v890
        %v8135 = vmul.f32 %v6180, %v891
        %v8136 = vmul.f32 %v7108, %v892
        %v8137 = vmul.f32 %v7110, %v893
        %v8138 = vmul.f32 %v8038, %v894
        %v8139 = vmul.f32 %v8040, %v895
        %v8140 = vmul.f32 %v5254, %v896
        %v8141 = vmul.f32 %v5256, %v897
        %v8142 = vmul.f32 %v6184, %v898
        %v8143 = vmul.f32 %v6186, %v899
        %v8144 = vmul.f32 %v7114, %v900
        %v8145 = vmul.f32 %v7116, %v901
        %v8146 = vmul.f32 %v8044, %v902
        %v8147 = vmul.f32 %v8046, %v903
        %v8148 = vadd.f32 %v8108, %v8116
        %v8149 = vadd.f32 %v8148, %v8124
        %v8150 = vadd.f32 %v8149, %v8132
        %v8151 = vadd.f32 %v8150, %v8140
        %v8152 = vrot.slane %v8151, 4
        %v8153 = vadd.f32 %v8151, %v8152
        %v8154 = vrot.slane %v8153, 2
        %v8155 = vadd.f32 %v8153, %v8154
        %v8156 = vrot.slane %v8155, 1
        %v8157 = vadd.f32 %v8155, %v8156
        %v8158 = vadd.f32 %v8109, %v8117
        %v8159 = vadd.f32 %v8158, %v8125
        %v8160 = vadd.f32 %v8159, %v8133
        %v8161 = vadd.f32 %v8160, %v8141
        %v8162 = vrot.slane %v8161, 4
        %v8163 = vadd.f32 %v8161, %v8162
        %v8164 = vrot.slane %v8163, 2
        %v8165 = vadd.f32 %v8163, %v8164
        %v8166 = vrot.slane %v8165, 1
        %v8167 = vadd.f32 %v8165, %v8166
        %v8168 = vadd.f32 %v8110, %v8118
        %v8169 = vadd.f32 %v8168, %v8126
        %v8170 = vadd.f32 %v8169, %v8134
        %v8171 = vadd.f32 %v8170, %v8142
        %v8172 = vrot.slane %v8171, 4
        %v8173 = vadd.f32 %v8171, %v8172
        %v8174 = vrot.slane %v8173, 2
        %v8175 = vadd.f32 %v8173, %v8174
        %v8176 = vrot.slane %v8175, 1
        %v8177 = vadd.f32 %v8175, %v8176
        %v8178 = vadd.f32 %v8111, %v8119
        %v8179 = vadd.f32 %v8178, %v8127
        %v8180 = vadd.f32 %v8179, %v8135
        %v8181 = vadd.f32 %v8180, %v8143
        %v8182 = vrot.slane %v8181, 4
        %v8183 = vadd.f32 %v8181, %v8182
        %v8184 = vrot.slane %v8183, 2
        %v8185 = vadd.f32 %v8183, %v8184
        %v8186 = vrot.slane %v8185, 1
        %v8187 = vadd.f32 %v8185, %v8186
        %v8188 = vadd.f32 %v8112, %v8120
        %v8189 = vadd.f32 %v8188, %v8128
        %v8190 = vadd.f32 %v8189, %v8136
        %v8191 = vadd.f32 %v8190, %v8144
        %v8192 = vrot.slane %v8191, 4
        %v8193 = vadd.f32 %v8191, %v8192
        %v8194 = vrot.slane %v8193, 2
        %v8195 = vadd.f32 %v8193, %v8194
        %v8196 = vrot.slane %v8195, 1
        %v8197 = vadd.f32 %v8195, %v8196
        %v8198 = vadd.f32 %v8113, %v8121
        %v8199 = vadd.f32 %v8198, %v8129
        %v8200 = vadd.f32 %v8199, %v8137
        %v8201 = vadd.f32 %v8200, %v8145
        %v8202 = vrot.slane %v8201, 4
        %v8203 = vadd.f32 %v8201, %v8202
        %v8204 = vrot.slane %v8203, 2
        %v8205 = vadd.f32 %v8203, %v8204
        %v8206 = vrot.slane %v8205, 1
        %v8207 = vadd.f32 %v8205, %v8206
        %v8208 = vadd.f32 %v8114, %v8122
        %v8209 = vadd.f32 %v8208, %v8130
        %v8210 = vadd.f32 %v8209, %v8138
        %v8211 = vadd.f32 %v8210, %v8146
        %v8212 = vrot.slane %v8211, 4
        %v8213 = vadd.f32 %v8211, %v8212
        %v8214 = vrot.slane %v8213, 2
        %v8215 = vadd.f32 %v8213, %v8214
        %v8216 = vrot.slane %v8215, 1
        %v8217 = vadd.f32 %v8215, %v8216
        %v8218 = vadd.f32 %v8115, %v8123
        %v8219 = vadd.f32 %v8218, %v8131
        %v8220 = vadd.f32 %v8219, %v8139
        %v8221 = vadd.f32 %v8220, %v8147
        %v8222 = vrot.slane %v8221, 4
        %v8223 = vadd.f32 %v8221, %v8222
        %v8224 = vrot.slane %v8223, 2
        %v8225 = vadd.f32 %v8223, %v8224
        %v8226 = vrot.slane %v8225, 1
        %v8227 = vadd.f32 %v8225, %v8226
        %v8228 = vmul.f32 %v5260, %v864
        %v8229 = vmul.f32 %v5262, %v865
        %v8230 = vmul.f32 %v6190, %v866
        %v8231 = vmul.f32 %v6192, %v867
        %v8232 = vmul.f32 %v7120, %v868
        %v8233 = vmul.f32 %v7122, %v869
        %v8234 = vmul.f32 %v8050, %v870
        %v8235 = vmul.f32 %v8052, %v871
        %v8236 = vmul.f32 %v5266, %v872
        %v8237 = vmul.f32 %v5268, %v873
        %v8238 = vmul.f32 %v6196, %v874
        %v8239 = vmul.f32 %v6198, %v875
        %v8240 = vmul.f32 %v7126, %v876
        %v8241 = vmul.f32 %v7128, %v877
        %v8242 = vmul.f32 %v8056, %v878
        %v8243 = vmul.f32 %v8058, %v879
        %v8244 = vmul.f32 %v5272, %v880
        %v8245 = vmul.f32 %v5274, %v881
        %v8246 = vmul.f32 %v6202, %v882
        %v8247 = vmul.f32 %v6204, %v883
        %v8248 = vmul.f32 %v7132, %v884
        %v8249 = vmul.f32 %v7134, %v885
        %v8250 = vmul.f32 %v8062, %v886
        %v8251 = vmul.f32 %v8064, %v887
        %v8252 = vmul.f32 %v5278, %v888
        %v8253 = vmul.f32 %v5280, %v889
        %v8254 = vmul.f32 %v6208, %v890
        %v8255 = vmul.f32 %v6210, %v891
        %v8256 = vmul.f32 %v7138, %v892
        %v8257 = vmul.f32 %v7140, %v893
        %v8258 = vmul.f32 %v8068, %v894
        %v8259 = vmul.f32 %v8070, %v895
        %v8260 = vmul.f32 %v5284, %v896
        %v8261 = vmul.f32 %v5286, %v897
        %v8262 = vmul.f32 %v6214, %v898
        %v8263 = vmul.f32 %v6216, %v899
        %v8264 = vmul.f32 %v7144, %v900
        %v8265 = vmul.f32 %v7146, %v901
        %v8266 = vmul.f32 %v8074, %v902
        %v8267 = vmul.f32 %v8076, %v903
        %v8268 = vadd.f32 %v8228, %v8236
        %v8269 = vadd.f32 %v8268, %v8244
        %v8270 = vadd.f32 %v8269, %v8252
        %v8271 = vadd.f32 %v8270, %v8260
        %v8272 = vrot.slane %v8271, 4
        %v8273 = vadd.f32 %v8271, %v8272
        %v8274 = vrot.slane %v8273, 2
        %v8275 = vadd.f32 %v8273, %v8274
        %v8276 = vrot.slane %v8275, 1
        %v8277 = vadd.f32 %v8275, %v8276
        %v8278 = vadd.f32 %v8229, %v8237
        %v8279 = vadd.f32 %v8278, %v8245
        %v8280 = vadd.f32 %v8279, %v8253
        %v8281 = vadd.f32 %v8280, %v8261
        %v8282 = vrot.slane %v8281, 4
        %v8283 = vadd.f32 %v8281, %v8282
        %v8284 = vrot.slane %v8283, 2
        %v8285 = vadd.f32 %v8283, %v8284
        %v8286 = vrot.slane %v8285, 1
        %v8287 = vadd.f32 %v8285, %v8286
        %v8288 = vadd.f32 %v8230, %v8238
        %v8289 = vadd.f32 %v8288, %v8246
        %v8290 = vadd.f32 %v8289, %v8254
        %v8291 = vadd.f32 %v8290, %v8262
        %v8292 = vrot.slane %v8291, 4
        %v8293 = vadd.f32 %v8291, %v8292
        %v8294 = vrot.slane %v8293, 2
        %v8295 = vadd.f32 %v8293, %v8294
        %v8296 = vrot.slane %v8295, 1
        %v8297 = vadd.f32 %v8295, %v8296
        %v8298 = vadd.f32 %v8231, %v8239
        %v8299 = vadd.f32 %v8298, %v8247
        %v8300 = vadd.f32 %v8299, %v8255
        %v8301 = vadd.f32 %v8300, %v8263
        %v8302 = vrot.slane %v8301, 4
        %v8303 = vadd.f32 %v8301, %v8302
        %v8304 = vrot.slane %v8303, 2
        %v8305 = vadd.f32 %v8303, %v8304
        %v8306 = vrot.slane %v8305, 1
        %v8307 = vadd.f32 %v8305, %v8306
        %v8308 = vadd.f32 %v8232, %v8240
        %v8309 = vadd.f32 %v8308, %v8248
        %v8310 = vadd.f32 %v8309, %v8256
        %v8311 = vadd.f32 %v8310, %v8264
        %v8312 = vrot.slane %v8311, 4
        %v8313 = vadd.f32 %v8311, %v8312
        %v8314 = vrot.slane %v8313, 2
        %v8315 = vadd.f32 %v8313, %v8314
        %v8316 = vrot.slane %v8315, 1
        %v8317 = vadd.f32 %v8315, %v8316
        %v8318 = vadd.f32 %v8233, %v8241
        %v8319 = vadd.f32 %v8318, %v8249
        %v8320 = vadd.f32 %v8319, %v8257
        %v8321 = vadd.f32 %v8320, %v8265
        %v8322 = vrot.slane %v8321, 4
        %v8323 = vadd.f32 %v8321, %v8322
        %v8324 = vrot.slane %v8323, 2
        %v8325 = vadd.f32 %v8323, %v8324
        %v8326 = vrot.slane %v8325, 1
        %v8327 = vadd.f32 %v8325, %v8326
        %v8328 = vadd.f32 %v8234, %v8242
        %v8329 = vadd.f32 %v8328, %v8250
        %v8330 = vadd.f32 %v8329, %v8258
        %v8331 = vadd.f32 %v8330, %v8266
        %v8332 = vrot.slane %v8331, 4
        %v8333 = vadd.f32 %v8331, %v8332
        %v8334 = vrot.slane %v8333, 2
        %v8335 = vadd.f32 %v8333, %v8334
        %v8336 = vrot.slane %v8335, 1
        %v8337 = vadd.f32 %v8335, %v8336
        %v8338 = vadd.f32 %v8235, %v8243
        %v8339 = vadd.f32 %v8338, %v8251
        %v8340 = vadd.f32 %v8339, %v8259
        %v8341 = vadd.f32 %v8340, %v8267
        %v8342 = vrot.slane %v8341, 4
        %v8343 = vadd.f32 %v8341, %v8342
        %v8344 = vrot.slane %v8343, 2
        %v8345 = vadd.f32 %v8343, %v8344
        %v8346 = vrot.slane %v8345, 1
        %v8347 = vadd.f32 %v8345, %v8346
        %v8348 = vmul.f32 %v5290, %v864
        %v8349 = vmul.f32 %v5292, %v865
        %v8350 = vmul.f32 %v6220, %v866
        %v8351 = vmul.f32 %v6222, %v867
        %v8352 = vmul.f32 %v7150, %v868
        %v8353 = vmul.f32 %v7152, %v869
        %v8354 = vmul.f32 %v8080, %v870
        %v8355 = vmul.f32 %v8082, %v871
        %v8356 = vmul.f32 %v5296, %v872
        %v8357 = vmul.f32 %v5298, %v873
        %v8358 = vmul.f32 %v6226, %v874
        %v8359 = vmul.f32 %v6228, %v875
        %v8360 = vmul.f32 %v7156, %v876
        %v8361 = vmul.f32 %v7158, %v877
        %v8362 = vmul.f32 %v8086, %v878
        %v8363 = vmul.f32 %v8088, %v879
        %v8364 = vmul.f32 %v5302, %v880
        %v8365 = vmul.f32 %v5304, %v881
        %v8366 = vmul.f32 %v6232, %v882
        %v8367 = vmul.f32 %v6234, %v883
        %v8368 = vmul.f32 %v7162, %v884
        %v8369 = vmul.f32 %v7164, %v885
        %v8370 = vmul.f32 %v8092, %v886
        %v8371 = vmul.f32 %v8094, %v887
        %v8372 = vmul.f32 %v5308, %v888
        %v8373 = vmul.f32 %v5310, %v889
        %v8374 = vmul.f32 %v6238, %v890
        %v8375 = vmul.f32 %v6240, %v891
        %v8376 = vmul.f32 %v7168, %v892
        %v8377 = vmul.f32 %v7170, %v893
        %v8378 = vmul.f32 %v8098, %v894
        %v8379 = vmul.f32 %v8100, %v895
        %v8380 = vmul.f32 %v5314, %v896
        %v8381 = vmul.f32 %v5316, %v897
        %v8382 = vmul.f32 %v6244, %v898
        %v8383 = vmul.f32 %v6246, %v899
        %v8384 = vmul.f32 %v7174, %v900
        %v8385 = vmul.f32 %v7176, %v901
        %v8386 = vmul.f32 %v8104, %v902
        %v8387 = vmul.f32 %v8106, %v903
        %v8388 = vadd.f32 %v8348, %v8356
        %v8389 = vadd.f32 %v8388, %v8364
        %v8390 = vadd.f32 %v8389, %v8372
        %v8391 = vadd.f32 %v8390, %v8380
        %v8392 = vrot.slane %v8391, 4
        %v8393 = vadd.f32 %v8391, %v8392
        %v8394 = vrot.slane %v8393, 2
        %v8395 = vadd.f32 %v8393, %v8394
        %v8396 = vrot.slane %v8395, 1
        %v8397 = vadd.f32 %v8395, %v8396
        %v8398 = vadd.f32 %v8349, %v8357
        %v8399 = vadd.f32 %v8398, %v8365
        %v8400 = vadd.f32 %v8399, %v8373
        %v8401 = vadd.f32 %v8400, %v8381
        %v8402 = vrot.slane %v8401, 4
        %v8403 = vadd.f32 %v8401, %v8402
        %v8404 = vrot.slane %v8403, 2
        %v8405 = vadd.f32 %v8403, %v8404
        %v8406 = vrot.slane %v8405, 1
        %v8407 = vadd.f32 %v8405, %v8406
        %v8408 = vadd.f32 %v8350, %v8358
        %v8409 = vadd.f32 %v8408, %v8366
        %v8410 = vadd.f32 %v8409, %v8374
        %v8411 = vadd.f32 %v8410, %v8382
        %v8412 = vrot.slane %v8411, 4
        %v8413 = vadd.f32 %v8411, %v8412
        %v8414 = vrot.slane %v8413, 2
        %v8415 = vadd.f32 %v8413, %v8414
        %v8416 = vrot.slane %v8415, 1
        %v8417 = vadd.f32 %v8415, %v8416
        %v8418 = vadd.f32 %v8351, %v8359
        %v8419 = vadd.f32 %v8418, %v8367
        %v8420 = vadd.f32 %v8419, %v8375
        %v8421 = vadd.f32 %v8420, %v8383
        %v8422 = vrot.slane %v8421, 4
        %v8423 = vadd.f32 %v8421, %v8422
        %v8424 = vrot.slane %v8423, 2
        %v8425 = vadd.f32 %v8423, %v8424
        %v8426 = vrot.slane %v8425, 1
        %v8427 = vadd.f32 %v8425, %v8426
        %v8428 = vadd.f32 %v8352, %v8360
        %v8429 = vadd.f32 %v8428, %v8368
        %v8430 = vadd.f32 %v8429, %v8376
        %v8431 = vadd.f32 %v8430, %v8384
        %v8432 = vrot.slane %v8431, 4
        %v8433 = vadd.f32 %v8431, %v8432
        %v8434 = vrot.slane %v8433, 2
        %v8435 = vadd.f32 %v8433, %v8434
        %v8436 = vrot.slane %v8435, 1
        %v8437 = vadd.f32 %v8435, %v8436
        %v8438 = vadd.f32 %v8353, %v8361
        %v8439 = vadd.f32 %v8438, %v8369
        %v8440 = vadd.f32 %v8439, %v8377
        %v8441 = vadd.f32 %v8440, %v8385
        %v8442 = vrot.slane %v8441, 4
        %v8443 = vadd.f32 %v8441, %v8442
        %v8444 = vrot.slane %v8443, 2
        %v8445 = vadd.f32 %v8443, %v8444
        %v8446 = vrot.slane %v8445, 1
        %v8447 = vadd.f32 %v8445, %v8446
        %v8448 = vadd.f32 %v8354, %v8362
        %v8449 = vadd.f32 %v8448, %v8370
        %v8450 = vadd.f32 %v8449, %v8378
        %v8451 = vadd.f32 %v8450, %v8386
        %v8452 = vrot.slane %v8451, 4
        %v8453 = vadd.f32 %v8451, %v8452
        %v8454 = vrot.slane %v8453, 2
        %v8455 = vadd.f32 %v8453, %v8454
        %v8456 = vrot.slane %v8455, 1
        %v8457 = vadd.f32 %v8455, %v8456
        %v8458 = vadd.f32 %v8355, %v8363
        %v8459 = vadd.f32 %v8458, %v8371
        %v8460 = vadd.f32 %v8459, %v8379
        %v8461 = vadd.f32 %v8460, %v8387
        %v8462 = vrot.slane %v8461, 4
        %v8463 = vadd.f32 %v8461, %v8462
        %v8464 = vrot.slane %v8463, 2
        %v8465 = vadd.f32 %v8463, %v8464
        %v8466 = vrot.slane %v8465, 1
        %v8467 = vadd.f32 %v8465, %v8466
        %vm8468 = vcmask 1040384
        %v8469 = vsel %vm8468, %v8157, %v8277
        %v8470 = vsel %vm8468, %v8167, %v8287
        %v8471 = vsel %vm8468, %v8177, %v8297
        %v8472 = vsel %vm8468, %v8187, %v8307
        %v8473 = vsel %vm8468, %v8197, %v8317
        %v8474 = vsel %vm8468, %v8207, %v8327
        %v8475 = vsel %vm8468, %v8217, %v8337
        %v8476 = vsel %vm8468, %v8227, %v8347
        %vm8477 = vcmask 1041408
        %v8478 = vsel %vm8477, %v8469, %v8397
        %v8479 = vsel %vm8477, %v8470, %v8407
        %v8480 = vsel %vm8477, %v8471, %v8417
        %v8481 = vsel %vm8477, %v8472, %v8427
        %v8482 = vsel %vm8477, %v8473, %v8437
        %v8483 = vsel %vm8477, %v8474, %v8447
        %v8484 = vsel %vm8477, %v8475, %v8457
        %v8485 = vsel %vm8477, %v8476, %v8467
        %v8494 = vcombine.low %v8478, %v8479
        %v8495 = vcombine.low %v8480, %v8481
        %v8496 = vcombine.low %v8482, %v8483
        %v8497 = vcombine.low %v8484, %v8485
        %8502 = vst [vmem:[%s174] sm:$0x77] %v8494
        %8503 = vst [vmem:[%s174 + $0x8] sm:$0x77] %v8495
        %8504 = vst [vmem:[%s174 + $0x10] sm:$0x77] %v8496
        %8505 = vst [vmem:[%s174 + $0x18] sm:$0x77] %v8497
        %s8506 = sand.u32 %s75, 1
        %s8507 = scalar_lea.sflag [#allocation4], %s8506
        %s8508 = sand.u32 %s75, 1
        %s8509 = smul.addr %s8508, 32
        %s8510 = scalar_lea.vmem [#allocation7], %s8509
        // Predicated region
        $region37: #{tpu_custom_call.1} parent=27 // pred_check
          %p8511 = pneg %p85
        $region38: #{tpu_custom_call.1} parent=27 // pred_check_branch
          %8513 = sbr.rel (%p8511) target = $region40
        $region39: #{tpu_custom_call.1} parent=27 // pred_region
          %s8514 = smul.u32 8, %s20
          %s8516 = ssub.s32 512, 512
          %8517 = vsyncadd %s8507, %s8516
          %s8518 = smul.addr %s8514, 64
          %s8519 = scalar_lea.hbm %s2, %s8518
          %s8521 = sshll.u32 %s8510, 4
          %s8522 = int_to_ptr.vmem [resolvable:$true] %s8521
          %8524 = dma.vmem_to_hbm [thread:$0]  %s8522, 512, %s8519, %s8507
        $region40: #{tpu_custom_call.1} parent=27 // pred_fallthru
          _
      $region28: #{tpu_custom_call.1} parent=5 // pred_fallthru
        _
      %p8525 = scmp.le.s32.totalorder 2, %s15
      // Predicated region
      $region41: #{tpu_custom_call.1} parent=5 // pred_check
        %p8526 = pneg %p8525
      $region42: #{tpu_custom_call.1} parent=5 // pred_check_branch
        %8528 = sbr.rel (%p8526) target = $region44
      $region43: #{tpu_custom_call.1} parent=5 // pred_region
        %s8529 = ssub.s32 %s15, 2
        // Predicated region
        $region45: #{tpu_custom_call.1} parent=43 // pred_check
          %p8530 = pneg %p91
        $region46: #{tpu_custom_call.1} parent=43 // pred_check_branch
          %8532 = sbr.rel (%p8530) target = $region48
        $region47: #{tpu_custom_call.1} parent=43 // pred_region
          %s8533 = sand.u32 %s76, 1
          %s8534 = scalar_lea.sflag [#allocation4], %s8533
          %s8535 = sand.u32 %s76, 1
          %s8536 = smul.addr %s8535, 32
          %s8537 = scalar_lea.vmem [#allocation7], %s8536
          %8538 = dma.done %s8534, 512
        $region48: #{tpu_custom_call.1} parent=43 // pred_fallthru
          _
      $region44: #{tpu_custom_call.1} parent=5 // pred_fallthru
        _
    $region6: #{tpu_custom_call.1} parent=1 // loop_footer
      %s19 = sadd.s32 1, %s15
    $region7: #{tpu_custom_call.1} parent=1 // loop_footer_branch
      %14 = sbr.rel target = $region3
    $region8: #{tpu_custom_call.1} parent=1 // loop_exit
      _
    %8539 = vsyncpa [#allocation3], 1
    %s8540 = scalar_lea.sflag [#allocation3], 1
    %8541 = vsyncpa %s8540, 1
    %8542 = vsyncpa [#allocation6], 1
    %8543 = vsyncpa [#allocation4], 1
    %s8544 = scalar_lea.sflag [#allocation4], 1
    %8545 = vsyncpa %s8544, 1

</llo_original>
